<compile_context>
chip_gen: v5e
topology: v5e:2x2
jax: 0.10.0
libtpu: 0.0.40
codegen_flags: <defaults>
</compile_context>

<pallas_src>
import numpy as np
import jax
import jax.numpy as jnp
from jax import lax
from jax.experimental import pallas as pl
from jax.experimental.pallas import tpu as pltpu

MAX_LEVELS = 5

_K1 = np.array([1., 4., 6., 4., 1.], dtype=np.float64)      # binomial 1-D kernel
_K5 = (np.outer(_K1, _K1) / 256.0).astype(np.float32)       # == PyTorch KERNEL


# ----------------------------------------------------------------------------
# Static (numpy) per-level operators: reflect pad + separable filter + stride
# folded into small dense matrices (applied on the MXU inside the kernel).
# ----------------------------------------------------------------------------
def _reflect(q, n):
    if q < 0:
        return -q
    if q >= n:
        return 2 * (n - 1) - q
    return q


def _down_matrix(n):
    """(n//2, n): D @ x == reflect-pad-2 + 5-tap [1,4,6,4,1]/16 + stride-2."""
    n2 = n // 2
    m = np.zeros((n2, n), dtype=np.float64)
    for r2 in range(n2):
        for t in range(5):
            m[r2, _reflect(2 * r2 + t - 2, n)] += _K1[t] / 16.0
    return m.astype(np.float32)


def _up_matrix(n):
    """(n, n//2): U @ d == zero-stuff d to length n, reflect-pad-2, 5-tap [1,4,6,4,1]/8."""
    m = np.zeros((n, n // 2), dtype=np.float64)
    for r in range(n):
        for t in range(5):
            s = _reflect(r + t - 2, n)
            if s % 2 == 0:          # only even (non-stuffed) positions carry data
                m[r, s // 2] += _K1[t] / 8.0
    return m.astype(np.float32)


# ----------------------------------------------------------------------------
# Fused kernel: all pyramid levels for one block of Pt planes (img & tgt).
# ----------------------------------------------------------------------------
def _make_laploss_kernel(Pt, H, W, max_levels):
    def kernel(*refs):
        img_ref, tgt_ref = refs[0], refs[1]
        mat_refs = refs[2:2 + 4 * max_levels]
        loss_ref = refs[2 + 4 * max_levels]

        cur_i = img_ref[...]          # (Pt, H, W) f32
        cur_t = tgt_ref[...]
        total = jnp.zeros((1, 1), jnp.float32)

        h, w = H, W
        for lvl in range(max_levels):
            dh, dwt, uh, uwt = (r[...] for r in mat_refs[4 * lvl:4 * lvl + 4])
            h2, w2 = h // 2, w // 2
            dh_b = jnp.broadcast_to(dh[None], (Pt, h2, h))    # (Pt,h2,h)
            dwt_b = jnp.broadcast_to(dwt[None], (Pt, w, w2))  # (Pt,w,w2)
            uh_b = jnp.broadcast_to(uh[None], (Pt, h, h2))    # (Pt,h,h2)
            uwt_b = jnp.broadcast_to(uwt[None], (Pt, w2, w))  # (Pt,w2,w)

            def level(x):
                # Gaussian filter + stride-2 downsample (rows, then cols) — MXU.
                r = jnp.einsum('prh,phw->prw', dh_b, x,
                               preferred_element_type=jnp.float32)
                d = jnp.einsum('prw,pwc->prc', r, dwt_b,
                               preferred_element_type=jnp.float32)
                # Polyphase upsample (== zero-stuff + 4*K conv) — MXU.
                u = jnp.einsum('pah,phw->paw', uh_b, d,
                               preferred_element_type=jnp.float32)
                up = jnp.einsum('paw,pwc->pac', u, uwt_b,
                                preferred_element_type=jnp.float32)
                return d, up

            d_i, up_i = level(cur_i)
            d_t, up_t = level(cur_t)
            # (cur_i - up_i) - (cur_t - up_t), L1-reduced with 2^level weight.
            diff = (cur_i - up_i) - (cur_t - up_t)
            s2d = jnp.sum(jnp.abs(diff), axis=0)                       # (h, w)
            total = total + (2.0 ** lvl) * jnp.sum(s2d, axis=(0, 1), keepdims=True)
            cur_i, cur_t, h, w = d_i, d_t, h2, w2

        # Lane-dense partial-sum tile; scalar is read back from [0, 0].
        loss_ref[...] = jnp.broadcast_to(total[None], loss_ref.shape)
    return kernel


# ----------------------------------------------------------------------------
# Host-side wrapper
# ----------------------------------------------------------------------------
def _pad_divide_by(x, d):           # centered zero pad H, W up to multiples of d
    N, C, H, W = x.shape
    new_h = H if H % d == 0 else H + d - H % d
    new_w = W if W % d == 0 else W + d - W % d
    lh, uh = (new_h - H) // 2, (new_h - H) - (new_h - H) // 2
    lw, uw = (new_w - W) // 2, (new_w - W) - (new_w - W) // 2
    return jnp.pad(x, ((0, 0), (0, 0), (lh, uh), (lw, uw)))


def _choose_plane_block(P, H, W, budget_bytes=1 << 20):
    # ~1 MiB of planes per image per block: with double-buffering + in-kernel
    # temporaries this stays well inside v7x's 64 MiB VMEM (and v5e/v6e).
    plane_bytes = H * W * 4
    return int(max(1, min(P, budget_bytes // max(plane_bytes, 1))))


def lap_loss(img, tgt, max_levels=MAX_LEVELS, normalize=True):
    # TODO(synk): mask path of L1_mask not implemented (forward default mask=None).
    img_p = _pad_divide_by(img.astype(jnp.float32), 32)
    tgt_p = _pad_divide_by(tgt.astype(jnp.float32), 32)
    N, C, H, W = tgt_p.shape
    P = N * C
    planes_i = img_p.reshape(P, H, W)
    planes_t = tgt_p.reshape(P, H, W)

    # Per-level row/col operators (reflect pad + filter + stride folded in).
    mats = []
    h, w = H, W
    for _ in range(max_levels):
        assert h >= 4 and w >= 4 and h % 2 == 0 and w % 2 == 0, (
            "LapLoss: every pyramid level needs even H, W >= 4 (reflect pad 2)")
        mats += [jnp.asarray(_down_matrix(h)), jnp.asarray(_down_matrix(w).T),
                 jnp.asarray(_up_matrix(h)), jnp.asarray(_up_matrix(w).T)]
        h, w = h // 2, w // 2

    Pt = _choose_plane_block(P, H, W)
    G = pl.cdiv(P, Pt)
    P_pad = G * Pt
    if P_pad != P:                  # zero planes contribute exactly 0 loss
        zpad = jnp.zeros((P_pad - P, H, W), jnp.float32)
        planes_i = jnp.concatenate([planes_i, zpad], axis=0)
        planes_t = jnp.concatenate([planes_t, zpad], axis=0)

    img_spec = pl.BlockSpec((Pt, H, W), lambda g: (g, 0, 0))
    mat_specs = [pl.BlockSpec(m.shape, lambda g: (0, 0)) for m in mats]

    partials = pl.pallas_call(
        _make_laploss_kernel(Pt, H, W, max_levels),
        out_shape=jax.ShapeDtypeStruct((G, 8, 128), jnp.float32),
        grid=(G,),
        in_specs=[img_spec, img_spec] + mat_specs,
        out_specs=pl.BlockSpec((1, 8, 128), lambda g: (g, 0, 0)),
        compiler_params=pltpu.CompilerParams(
            dimension_semantics=("parallel",),
            vmem_limit_bytes=32 * 1024 * 1024),
    )(planes_i, planes_t, *mats)

    loss = jnp.sum(partials[:, 0, 0])
    if normalize:
        return loss / jnp.float32(N * C * H * W)
    return loss


# ----------------------------------------------------------------------------
# Pure-JAX reference (lax.conv based) for the correctness check
# ----------------------------------------------------------------------------
def _ref_conv_gauss(x, scale):
    N, C, H, W = x.shape
    xp = jnp.pad(x, ((0, 0), (0, 0), (2, 2), (2, 2)), mode='reflect')
    k = jnp.tile(jnp.asarray(_K5 * scale)[None, None], (C, 1, 1, 1))
    return lax.conv_general_dilated(
        xp, k, window_strides=(1, 1), padding='VALID',
        dimension_numbers=('NCHW', 'OIHW', 'NCHW'), feature_group_count=C)


def _zero_stuff(d):
    P, h, w = d.shape
    z = jnp.zeros_like(d)
    cols = jnp.stack([d, z], axis=-1).reshape(P, h, 2 * w)
    return jnp.stack([cols, jnp.zeros_like(cols)], axis=-2).reshape(P, 2 * h, 2 * w)


def _ref_lap_loss(img, tgt, max_levels=MAX_LEVELS):
    img_p = _pad_divide_by(img.astype(jnp.float32), 32)
    tgt_p = _pad_divide_by(tgt.astype(jnp.float32), 32)
    N, C, Hp, Wp = tgt_p.shape

    def pyramid(x):
        cur, pyr = x, []
        for _ in range(max_levels):
            filt = _ref_conv_gauss(cur, 1.0)
            down = filt[:, :, ::2, ::2]
            h2, w2 = down.shape[2], down.shape[3]
            upz = _zero_stuff(down.reshape(N * C, h2, w2)).reshape(N, C, 2 * h2, 2 * w2)
            up = _ref_conv_gauss(upz, 4.0)
            pyr.append(cur - up)
            cur = down
        return pyr

    pi, pt = pyramid(img_p), pyramid(tgt_p)
    loss = sum((2.0 ** lvl) * jnp.sum(jnp.abs(a - b))
               for lvl, (a, b) in enumerate(zip(pi, pt)))
    return loss / jnp.float32(N * C * Hp * Wp)


if __name__ == "__main__":
    key = jax.random.PRNGKey(0)
    k1, k2 = jax.random.split(key)
    # batch=2, channels=3, spatial=48 -> padded to 64 (multiple of 32) so that
    # the smallest pyramid level (4x4) still admits reflect padding of 2,
    # exactly as required by the PyTorch module.
    img = jax.random.normal(k1, (2, 3, 48, 48), dtype=jnp.float32)
    tgt = jax.random.normal(k2, (2, 3, 48, 48), dtype=jnp.float32)

    loss_fn = jax.jit(lap_loss)
    out = jax.block_until_ready(loss_fn(img, tgt))
    ref = jax.block_until_ready(_ref_lap_loss(img, tgt))
    np.testing.assert_allclose(np.asarray(out), np.asarray(ref), rtol=2e-3, atol=2e-4)
    print("KERNEL_OK")
</pallas_src>

<mosaic_0001>
module attributes {stable_mosaic.version = 11 : i64} {
  func.func @kernel(%arg0: i32, %arg1: memref<6x64x64xf32, #tpu.memory_space<vmem>>, %arg2: memref<6x64x64xf32, #tpu.memory_space<vmem>>, %arg3: memref<32x64xf32, #tpu.memory_space<vmem>>, %arg4: memref<64x32xf32, #tpu.memory_space<vmem>>, %arg5: memref<64x32xf32, #tpu.memory_space<vmem>>, %arg6: memref<32x64xf32, #tpu.memory_space<vmem>>, %arg7: memref<16x32xf32, #tpu.memory_space<vmem>>, %arg8: memref<32x16xf32, #tpu.memory_space<vmem>>, %arg9: memref<32x16xf32, #tpu.memory_space<vmem>>, %arg10: memref<16x32xf32, #tpu.memory_space<vmem>>, %arg11: memref<8x16xf32, #tpu.memory_space<vmem>>, %arg12: memref<16x8xf32, #tpu.memory_space<vmem>>, %arg13: memref<16x8xf32, #tpu.memory_space<vmem>>, %arg14: memref<8x16xf32, #tpu.memory_space<vmem>>, %arg15: memref<4x8xf32, #tpu.memory_space<vmem>>, %arg16: memref<8x4xf32, #tpu.memory_space<vmem>>, %arg17: memref<8x4xf32, #tpu.memory_space<vmem>>, %arg18: memref<4x8xf32, #tpu.memory_space<vmem>>, %arg19: memref<2x4xf32, #tpu.memory_space<vmem>>, %arg20: memref<4x2xf32, #tpu.memory_space<vmem>>, %arg21: memref<4x2xf32, #tpu.memory_space<vmem>>, %arg22: memref<2x4xf32, #tpu.memory_space<vmem>>, %arg23: memref<1x8x128xf32, #tpu.memory_space<vmem>>) attributes {dimension_semantics = [#tpu.dimension_semantics<parallel>], iteration_bounds = array<i64: 1>, scalar_prefetch = 0 : i64, scratch_operands = 0 : i64, tpu.core_type = #tpu.core_type<tc>, window_params = [{transform_indices = @transform_0, window_bounds = array<i64: 6, 64, 64>}, {transform_indices = @transform_1, window_bounds = array<i64: 6, 64, 64>}, {pipeline_mode = #tpu.pipeline_mode<synchronous>, transform_indices = @transform_2, window_bounds = array<i64: 32, 64>}, {pipeline_mode = #tpu.pipeline_mode<synchronous>, transform_indices = @transform_3, window_bounds = array<i64: 64, 32>}, {pipeline_mode = #tpu.pipeline_mode<synchronous>, transform_indices = @transform_4, window_bounds = array<i64: 64, 32>}, {pipeline_mode = #tpu.pipeline_mode<synchronous>, transform_indices = @transform_5, window_bounds = array<i64: 32, 64>}, {pipeline_mode = #tpu.pipeline_mode<synchronous>, transform_indices = @transform_6, window_bounds = array<i64: 16, 32>}, {pipeline_mode = #tpu.pipeline_mode<synchronous>, transform_indices = @transform_7, window_bounds = array<i64: 32, 16>}, {pipeline_mode = #tpu.pipeline_mode<synchronous>, transform_indices = @transform_8, window_bounds = array<i64: 32, 16>}, {pipeline_mode = #tpu.pipeline_mode<synchronous>, transform_indices = @transform_9, window_bounds = array<i64: 16, 32>}, {pipeline_mode = #tpu.pipeline_mode<synchronous>, transform_indices = @transform_10, window_bounds = array<i64: 8, 16>}, {pipeline_mode = #tpu.pipeline_mode<synchronous>, transform_indices = @transform_11, window_bounds = array<i64: 16, 8>}, {pipeline_mode = #tpu.pipeline_mode<synchronous>, transform_indices = @transform_12, window_bounds = array<i64: 16, 8>}, {pipeline_mode = #tpu.pipeline_mode<synchronous>, transform_indices = @transform_13, window_bounds = array<i64: 8, 16>}, {pipeline_mode = #tpu.pipeline_mode<synchronous>, transform_indices = @transform_14, window_bounds = array<i64: 4, 8>}, {pipeline_mode = #tpu.pipeline_mode<synchronous>, transform_indices = @transform_15, window_bounds = array<i64: 8, 4>}, {pipeline_mode = #tpu.pipeline_mode<synchronous>, transform_indices = @transform_16, window_bounds = array<i64: 8, 4>}, {pipeline_mode = #tpu.pipeline_mode<synchronous>, transform_indices = @transform_17, window_bounds = array<i64: 4, 8>}, {pipeline_mode = #tpu.pipeline_mode<synchronous>, transform_indices = @transform_18, window_bounds = array<i64: 2, 4>}, {pipeline_mode = #tpu.pipeline_mode<synchronous>, transform_indices = @transform_19, window_bounds = array<i64: 4, 2>}, {pipeline_mode = #tpu.pipeline_mode<synchronous>, transform_indices = @transform_20, window_bounds = array<i64: 4, 2>}, {pipeline_mode = #tpu.pipeline_mode<synchronous>, transform_indices = @transform_21, window_bounds = array<i64: 2, 4>}, {transform_indices = @transform_22, window_bounds = array<i64: 1, 8, 128>}]} {
    %c0 = arith.constant 0 : index
    %c0_0 = arith.constant 0 : index
    %c0_1 = arith.constant 0 : index
    %0 = vector.load %arg1[%c0, %c0_0, %c0_1] : memref<6x64x64xf32, #tpu.memory_space<vmem>>, vector<6x64x64xf32>
    %c0_2 = arith.constant 0 : index
    %c0_3 = arith.constant 0 : index
    %c0_4 = arith.constant 0 : index
    %1 = vector.load %arg2[%c0_2, %c0_3, %c0_4] : memref<6x64x64xf32, #tpu.memory_space<vmem>>, vector<6x64x64xf32>
    %cst = arith.constant 0.000000e+00 : f32
    %2 = vector.broadcast %cst : f32 to vector<1x1xf32>
    %c0_5 = arith.constant 0 : index
    %c0_6 = arith.constant 0 : index
    %3 = vector.load %arg3[%c0_5, %c0_6] : memref<32x64xf32, #tpu.memory_space<vmem>>, vector<32x64xf32>
    %c0_7 = arith.constant 0 : index
    %c0_8 = arith.constant 0 : index
    %4 = vector.load %arg4[%c0_7, %c0_8] : memref<64x32xf32, #tpu.memory_space<vmem>>, vector<64x32xf32>
    %c0_9 = arith.constant 0 : index
    %c0_10 = arith.constant 0 : index
    %5 = vector.load %arg5[%c0_9, %c0_10] : memref<64x32xf32, #tpu.memory_space<vmem>>, vector<64x32xf32>
    %c0_11 = arith.constant 0 : index
    %c0_12 = arith.constant 0 : index
    %6 = vector.load %arg6[%c0_11, %c0_12] : memref<32x64xf32, #tpu.memory_space<vmem>>, vector<32x64xf32>
    %7 = vector.shape_cast %3 : vector<32x64xf32> to vector<1x32x64xf32>
    %8 = vector.shape_cast %7 : vector<1x32x64xf32> to vector<1x32x64xf32>
    %9 = vector.broadcast %8 : vector<1x32x64xf32> to vector<6x32x64xf32>
    %10 = vector.shape_cast %4 : vector<64x32xf32> to vector<1x64x32xf32>
    %11 = vector.shape_cast %10 : vector<1x64x32xf32> to vector<1x64x32xf32>
    %12 = vector.broadcast %11 : vector<1x64x32xf32> to vector<6x64x32xf32>
    %13 = vector.shape_cast %5 : vector<64x32xf32> to vector<1x64x32xf32>
    %14 = vector.shape_cast %13 : vector<1x64x32xf32> to vector<1x64x32xf32>
    %15 = vector.broadcast %14 : vector<1x64x32xf32> to vector<6x64x32xf32>
    %16 = vector.shape_cast %6 : vector<32x64xf32> to vector<1x32x64xf32>
    %17 = vector.shape_cast %16 : vector<1x32x64xf32> to vector<1x32x64xf32>
    %18 = vector.broadcast %17 : vector<1x32x64xf32> to vector<6x32x64xf32>
    "tpu.trace_start"() <{level = 10 : i32, message = "prh,phw->prw"}> : () -> ()
    %cst_13 = arith.constant dense<0.000000e+00> : vector<6x32x64xf32>
    %19 = tpu.matmul %9, %0, %cst_13 {dimension_numbers = #tpu.dot_dimension_numbers<[2], [1], [1], [2], [0, 0, 0, 1, 1, 2], [0], [0]>} : vector<6x32x64xf32>, vector<6x64x64xf32>, vector<6x32x64xf32> -> vector<6x32x64xf32>
    "tpu.trace_stop"() : () -> ()
    "tpu.trace_start"() <{level = 10 : i32, message = "prw,pwc->prc"}> : () -> ()
    %cst_14 = arith.constant dense<0.000000e+00> : vector<6x32x32xf32>
    %20 = tpu.matmul %19, %12, %cst_14 {dimension_numbers = #tpu.dot_dimension_numbers<[2], [1], [1], [2], [0, 0, 0, 1, 1, 2], [0], [0]>} : vector<6x32x64xf32>, vector<6x64x32xf32>, vector<6x32x32xf32> -> vector<6x32x32xf32>
    "tpu.trace_stop"() : () -> ()
    "tpu.trace_start"() <{level = 10 : i32, message = "pah,phw->paw"}> : () -> ()
    %cst_15 = arith.constant dense<0.000000e+00> : vector<6x64x32xf32>
    %21 = tpu.matmul %15, %20, %cst_15 {dimension_numbers = #tpu.dot_dimension_numbers<[2], [1], [1], [2], [0, 0, 0, 1, 1, 2], [0], [0]>} : vector<6x64x32xf32>, vector<6x32x32xf32>, vector<6x64x32xf32> -> vector<6x64x32xf32>
    "tpu.trace_stop"() : () -> ()
    "tpu.trace_start"() <{level = 10 : i32, message = "paw,pwc->pac"}> : () -> ()
    %cst_16 = arith.constant dense<0.000000e+00> : vector<6x64x64xf32>
    %22 = tpu.matmul %21, %18, %cst_16 {dimension_numbers = #tpu.dot_dimension_numbers<[2], [1], [1], [2], [0, 0, 0, 1, 1, 2], [0], [0]>} : vector<6x64x32xf32>, vector<6x32x64xf32>, vector<6x64x64xf32> -> vector<6x64x64xf32>
    "tpu.trace_stop"() : () -> ()
    "tpu.trace_start"() <{level = 10 : i32, message = "prh,phw->prw"}> : () -> ()
    %cst_17 = arith.constant dense<0.000000e+00> : vector<6x32x64xf32>
    %23 = tpu.matmul %9, %1, %cst_17 {dimension_numbers = #tpu.dot_dimension_numbers<[2], [1], [1], [2], [0, 0, 0, 1, 1, 2], [0], [0]>} : vector<6x32x64xf32>, vector<6x64x64xf32>, vector<6x32x64xf32> -> vector<6x32x64xf32>
    "tpu.trace_stop"() : () -> ()
    "tpu.trace_start"() <{level = 10 : i32, message = "prw,pwc->prc"}> : () -> ()
    %cst_18 = arith.constant dense<0.000000e+00> : vector<6x32x32xf32>
    %24 = tpu.matmul %23, %12, %cst_18 {dimension_numbers = #tpu.dot_dimension_numbers<[2], [1], [1], [2], [0, 0, 0, 1, 1, 2], [0], [0]>} : vector<6x32x64xf32>, vector<6x64x32xf32>, vector<6x32x32xf32> -> vector<6x32x32xf32>
    "tpu.trace_stop"() : () -> ()
    "tpu.trace_start"() <{level = 10 : i32, message = "pah,phw->paw"}> : () -> ()
    %cst_19 = arith.constant dense<0.000000e+00> : vector<6x64x32xf32>
    %25 = tpu.matmul %15, %24, %cst_19 {dimension_numbers = #tpu.dot_dimension_numbers<[2], [1], [1], [2], [0, 0, 0, 1, 1, 2], [0], [0]>} : vector<6x64x32xf32>, vector<6x32x32xf32>, vector<6x64x32xf32> -> vector<6x64x32xf32>
    "tpu.trace_stop"() : () -> ()
    "tpu.trace_start"() <{level = 10 : i32, message = "paw,pwc->pac"}> : () -> ()
    %cst_20 = arith.constant dense<0.000000e+00> : vector<6x64x64xf32>
    %26 = tpu.matmul %25, %18, %cst_20 {dimension_numbers = #tpu.dot_dimension_numbers<[2], [1], [1], [2], [0, 0, 0, 1, 1, 2], [0], [0]>} : vector<6x64x32xf32>, vector<6x32x64xf32>, vector<6x64x64xf32> -> vector<6x64x64xf32>
    "tpu.trace_stop"() : () -> ()
    %27 = arith.subf %0, %22 : vector<6x64x64xf32>
    %28 = arith.subf %1, %26 : vector<6x64x64xf32>
    %29 = arith.subf %27, %28 : vector<6x64x64xf32>
    %30 = math.absf %29 : vector<6x64x64xf32>
    %cst_21 = arith.constant dense<0.000000e+00> : vector<64x64xf32>
    %31 = vector.multi_reduction <add>, %30, %cst_21 [0] : vector<6x64x64xf32> to vector<64x64xf32>
    %32 = vector.shape_cast %31 : vector<64x64xf32> to vector<1x64x64xf32>
    %cst_22 = arith.constant dense<0.000000e+00> : vector<1xf32>
    %33 = vector.multi_reduction <add>, %32, %cst_22 [1, 2] : vector<1x64x64xf32> to vector<1xf32>
    %34 = vector.shape_cast %33 : vector<1xf32> to vector<1x1x1xf32>
    %35 = vector.extract %34[0, 0, 0] : f32 from vector<1x1x1xf32>
    %36 = vector.broadcast %35 : f32 to vector<1x1xf32>
    %cst_23 = arith.constant 1.000000e+00 : f32
    %37 = vector.broadcast %cst_23 : f32 to vector<1x1xf32>
    %38 = arith.mulf %37, %36 : vector<1x1xf32>
    %39 = arith.addf %2, %38 : vector<1x1xf32>
    %c0_24 = arith.constant 0 : index
    %c0_25 = arith.constant 0 : index
    %40 = vector.load %arg7[%c0_24, %c0_25] : memref<16x32xf32, #tpu.memory_space<vmem>>, vector<16x32xf32>
    %c0_26 = arith.constant 0 : index
    %c0_27 = arith.constant 0 : index
    %41 = vector.load %arg8[%c0_26, %c0_27] : memref<32x16xf32, #tpu.memory_space<vmem>>, vector<32x16xf32>
    %c0_28 = arith.constant 0 : index
    %c0_29 = arith.constant 0 : index
    %42 = vector.load %arg9[%c0_28, %c0_29] : memref<32x16xf32, #tpu.memory_space<vmem>>, vector<32x16xf32>
    %c0_30 = arith.constant 0 : index
    %c0_31 = arith.constant 0 : index
    %43 = vector.load %arg10[%c0_30, %c0_31] : memref<16x32xf32, #tpu.memory_space<vmem>>, vector<16x32xf32>
    %44 = vector.shape_cast %40 : vector<16x32xf32> to vector<1x16x32xf32>
    %45 = vector.shape_cast %44 : vector<1x16x32xf32> to vector<1x16x32xf32>
    %46 = vector.broadcast %45 : vector<1x16x32xf32> to vector<6x16x32xf32>
    %47 = vector.shape_cast %41 : vector<32x16xf32> to vector<1x32x16xf32>
    %48 = vector.shape_cast %47 : vector<1x32x16xf32> to vector<1x32x16xf32>
    %49 = vector.broadcast %48 : vector<1x32x16xf32> to vector<6x32x16xf32>
    %50 = vector.shape_cast %42 : vector<32x16xf32> to vector<1x32x16xf32>
    %51 = vector.shape_cast %50 : vector<1x32x16xf32> to vector<1x32x16xf32>
    %52 = vector.broadcast %51 : vector<1x32x16xf32> to vector<6x32x16xf32>
    %53 = vector.shape_cast %43 : vector<16x32xf32> to vector<1x16x32xf32>
    %54 = vector.shape_cast %53 : vector<1x16x32xf32> to vector<1x16x32xf32>
    %55 = vector.broadcast %54 : vector<1x16x32xf32> to vector<6x16x32xf32>
    "tpu.trace_start"() <{level = 10 : i32, message = "prh,phw->prw"}> : () -> ()
    %cst_32 = arith.constant dense<0.000000e+00> : vector<6x16x32xf32>
    %56 = tpu.matmul %46, %20, %cst_32 {dimension_numbers = #tpu.dot_dimension_numbers<[2], [1], [1], [2], [0, 0, 0, 1, 1, 2], [0], [0]>} : vector<6x16x32xf32>, vector<6x32x32xf32>, vector<6x16x32xf32> -> vector<6x16x32xf32>
    "tpu.trace_stop"() : () -> ()
    "tpu.trace_start"() <{level = 10 : i32, message = "prw,pwc->prc"}> : () -> ()
    %cst_33 = arith.constant dense<0.000000e+00> : vector<6x16x16xf32>
    %57 = tpu.matmul %56, %49, %cst_33 {dimension_numbers = #tpu.dot_dimension_numbers<[2], [1], [1], [2], [0, 0, 0, 1, 1, 2], [0], [0]>} : vector<6x16x32xf32>, vector<6x32x16xf32>, vector<6x16x16xf32> -> vector<6x16x16xf32>
    "tpu.trace_stop"() : () -> ()
    "tpu.trace_start"() <{level = 10 : i32, message = "pah,phw->paw"}> : () -> ()
    %cst_34 = arith.constant dense<0.000000e+00> : vector<6x32x16xf32>
    %58 = tpu.matmul %52, %57, %cst_34 {dimension_numbers = #tpu.dot_dimension_numbers<[2], [1], [1], [2], [0, 0, 0, 1, 1, 2], [0], [0]>} : vector<6x32x16xf32>, vector<6x16x16xf32>, vector<6x32x16xf32> -> vector<6x32x16xf32>
    "tpu.trace_stop"() : () -> ()
    "tpu.trace_start"() <{level = 10 : i32, message = "paw,pwc->pac"}> : () -> ()
    %cst_35 = arith.constant dense<0.000000e+00> : vector<6x32x32xf32>
    %59 = tpu.matmul %58, %55, %cst_35 {dimension_numbers = #tpu.dot_dimension_numbers<[2], [1], [1], [2], [0, 0, 0, 1, 1, 2], [0], [0]>} : vector<6x32x16xf32>, vector<6x16x32xf32>, vector<6x32x32xf32> -> vector<6x32x32xf32>
    "tpu.trace_stop"() : () -> ()
    "tpu.trace_start"() <{level = 10 : i32, message = "prh,phw->prw"}> : () -> ()
    %cst_36 = arith.constant dense<0.000000e+00> : vector<6x16x32xf32>
    %60 = tpu.matmul %46, %24, %cst_36 {dimension_numbers = #tpu.dot_dimension_numbers<[2], [1], [1], [2], [0, 0, 0, 1, 1, 2], [0], [0]>} : vector<6x16x32xf32>, vector<6x32x32xf32>, vector<6x16x32xf32> -> vector<6x16x32xf32>
    "tpu.trace_stop"() : () -> ()
    "tpu.trace_start"() <{level = 10 : i32, message = "prw,pwc->prc"}> : () -> ()
    %cst_37 = arith.constant dense<0.000000e+00> : vector<6x16x16xf32>
    %61 = tpu.matmul %60, %49, %cst_37 {dimension_numbers = #tpu.dot_dimension_numbers<[2], [1], [1], [2], [0, 0, 0, 1, 1, 2], [0], [0]>} : vector<6x16x32xf32>, vector<6x32x16xf32>, vector<6x16x16xf32> -> vector<6x16x16xf32>
    "tpu.trace_stop"() : () -> ()
    "tpu.trace_start"() <{level = 10 : i32, message = "pah,phw->paw"}> : () -> ()
    %cst_38 = arith.constant dense<0.000000e+00> : vector<6x32x16xf32>
    %62 = tpu.matmul %52, %61, %cst_38 {dimension_numbers = #tpu.dot_dimension_numbers<[2], [1], [1], [2], [0, 0, 0, 1, 1, 2], [0], [0]>} : vector<6x32x16xf32>, vector<6x16x16xf32>, vector<6x32x16xf32> -> vector<6x32x16xf32>
    "tpu.trace_stop"() : () -> ()
    "tpu.trace_start"() <{level = 10 : i32, message = "paw,pwc->pac"}> : () -> ()
    %cst_39 = arith.constant dense<0.000000e+00> : vector<6x32x32xf32>
    %63 = tpu.matmul %62, %55, %cst_39 {dimension_numbers = #tpu.dot_dimension_numbers<[2], [1], [1], [2], [0, 0, 0, 1, 1, 2], [0], [0]>} : vector<6x32x16xf32>, vector<6x16x32xf32>, vector<6x32x32xf32> -> vector<6x32x32xf32>
    "tpu.trace_stop"() : () -> ()
    %64 = arith.subf %20, %59 : vector<6x32x32xf32>
    %65 = arith.subf %24, %63 : vector<6x32x32xf32>
    %66 = arith.subf %64, %65 : vector<6x32x32xf32>
    %67 = math.absf %66 : vector<6x32x32xf32>
    %cst_40 = arith.constant dense<0.000000e+00> : vector<32x32xf32>
    %68 = vector.multi_reduction <add>, %67, %cst_40 [0] : vector<6x32x32xf32> to vector<32x32xf32>
    %69 = vector.shape_cast %68 : vector<32x32xf32> to vector<1x32x32xf32>
    %cst_41 = arith.constant dense<0.000000e+00> : vector<1xf32>
    %70 = vector.multi_reduction <add>, %69, %cst_41 [1, 2] : vector<1x32x32xf32> to vector<1xf32>
    %71 = vector.shape_cast %70 : vector<1xf32> to vector<1x1x1xf32>
    %72 = vector.extract %71[0, 0, 0] : f32 from vector<1x1x1xf32>
    %73 = vector.broadcast %72 : f32 to vector<1x1xf32>
    %cst_42 = arith.constant 2.000000e+00 : f32
    %74 = vector.broadcast %cst_42 : f32 to vector<1x1xf32>
    %75 = arith.mulf %74, %73 : vector<1x1xf32>
    %76 = arith.addf %39, %75 : vector<1x1xf32>
    %c0_43 = arith.constant 0 : index
    %c0_44 = arith.constant 0 : index
    %77 = vector.load %arg11[%c0_43, %c0_44] : memref<8x16xf32, #tpu.memory_space<vmem>>, vector<8x16xf32>
    %c0_45 = arith.constant 0 : index
    %c0_46 = arith.constant 0 : index
    %78 = vector.load %arg12[%c0_45, %c0_46] : memref<16x8xf32, #tpu.memory_space<vmem>>, vector<16x8xf32>
    %c0_47 = arith.constant 0 : index
    %c0_48 = arith.constant 0 : index
    %79 = vector.load %arg13[%c0_47, %c0_48] : memref<16x8xf32, #tpu.memory_space<vmem>>, vector<16x8xf32>
    %c0_49 = arith.constant 0 : index
    %c0_50 = arith.constant 0 : index
    %80 = vector.load %arg14[%c0_49, %c0_50] : memref<8x16xf32, #tpu.memory_space<vmem>>, vector<8x16xf32>
    %81 = vector.shape_cast %77 : vector<8x16xf32> to vector<1x8x16xf32>
    %82 = vector.shape_cast %81 : vector<1x8x16xf32> to vector<1x8x16xf32>
    %83 = vector.broadcast %82 : vector<1x8x16xf32> to vector<6x8x16xf32>
    %84 = vector.shape_cast %78 : vector<16x8xf32> to vector<1x16x8xf32>
    %85 = vector.shape_cast %84 : vector<1x16x8xf32> to vector<1x16x8xf32>
    %86 = vector.broadcast %85 : vector<1x16x8xf32> to vector<6x16x8xf32>
    %87 = vector.shape_cast %79 : vector<16x8xf32> to vector<1x16x8xf32>
    %88 = vector.shape_cast %87 : vector<1x16x8xf32> to vector<1x16x8xf32>
    %89 = vector.broadcast %88 : vector<1x16x8xf32> to vector<6x16x8xf32>
    %90 = vector.shape_cast %80 : vector<8x16xf32> to vector<1x8x16xf32>
    %91 = vector.shape_cast %90 : vector<1x8x16xf32> to vector<1x8x16xf32>
    %92 = vector.broadcast %91 : vector<1x8x16xf32> to vector<6x8x16xf32>
    "tpu.trace_start"() <{level = 10 : i32, message = "prh,phw->prw"}> : () -> ()
    %cst_51 = arith.constant dense<0.000000e+00> : vector<6x8x16xf32>
    %93 = tpu.matmul %83, %57, %cst_51 {dimension_numbers = #tpu.dot_dimension_numbers<[2], [1], [1], [2], [0, 0, 0, 1, 1, 2], [0], [0]>} : vector<6x8x16xf32>, vector<6x16x16xf32>, vector<6x8x16xf32> -> vector<6x8x16xf32>
    "tpu.trace_stop"() : () -> ()
    "tpu.trace_start"() <{level = 10 : i32, message = "prw,pwc->prc"}> : () -> ()
    %cst_52 = arith.constant dense<0.000000e+00> : vector<6x8x8xf32>
    %94 = tpu.matmul %93, %86, %cst_52 {dimension_numbers = #tpu.dot_dimension_numbers<[2], [1], [1], [2], [0, 0, 0, 1, 1, 2], [0], [0]>} : vector<6x8x16xf32>, vector<6x16x8xf32>, vector<6x8x8xf32> -> vector<6x8x8xf32>
    "tpu.trace_stop"() : () -> ()
    "tpu.trace_start"() <{level = 10 : i32, message = "pah,phw->paw"}> : () -> ()
    %cst_53 = arith.constant dense<0.000000e+00> : vector<6x16x8xf32>
    %95 = tpu.matmul %89, %94, %cst_53 {dimension_numbers = #tpu.dot_dimension_numbers<[2], [1], [1], [2], [0, 0, 0, 1, 1, 2], [0], [0]>} : vector<6x16x8xf32>, vector<6x8x8xf32>, vector<6x16x8xf32> -> vector<6x16x8xf32>
    "tpu.trace_stop"() : () -> ()
    "tpu.trace_start"() <{level = 10 : i32, message = "paw,pwc->pac"}> : () -> ()
    %cst_54 = arith.constant dense<0.000000e+00> : vector<6x16x16xf32>
    %96 = tpu.matmul %95, %92, %cst_54 {dimension_numbers = #tpu.dot_dimension_numbers<[2], [1], [1], [2], [0, 0, 0, 1, 1, 2], [0], [0]>} : vector<6x16x8xf32>, vector<6x8x16xf32>, vector<6x16x16xf32> -> vector<6x16x16xf32>
    "tpu.trace_stop"() : () -> ()
    "tpu.trace_start"() <{level = 10 : i32, message = "prh,phw->prw"}> : () -> ()
    %cst_55 = arith.constant dense<0.000000e+00> : vector<6x8x16xf32>
    %97 = tpu.matmul %83, %61, %cst_55 {dimension_numbers = #tpu.dot_dimension_numbers<[2], [1], [1], [2], [0, 0, 0, 1, 1, 2], [0], [0]>} : vector<6x8x16xf32>, vector<6x16x16xf32>, vector<6x8x16xf32> -> vector<6x8x16xf32>
    "tpu.trace_stop"() : () -> ()
    "tpu.trace_start"() <{level = 10 : i32, message = "prw,pwc->prc"}> : () -> ()
    %cst_56 = arith.constant dense<0.000000e+00> : vector<6x8x8xf32>
    %98 = tpu.matmul %97, %86, %cst_56 {dimension_numbers = #tpu.dot_dimension_numbers<[2], [1], [1], [2], [0, 0, 0, 1, 1, 2], [0], [0]>} : vector<6x8x16xf32>, vector<6x16x8xf32>, vector<6x8x8xf32> -> vector<6x8x8xf32>
    "tpu.trace_stop"() : () -> ()
    "tpu.trace_start"() <{level = 10 : i32, message = "pah,phw->paw"}> : () -> ()
    %cst_57 = arith.constant dense<0.000000e+00> : vector<6x16x8xf32>
    %99 = tpu.matmul %89, %98, %cst_57 {dimension_numbers = #tpu.dot_dimension_numbers<[2], [1], [1], [2], [0, 0, 0, 1, 1, 2], [0], [0]>} : vector<6x16x8xf32>, vector<6x8x8xf32>, vector<6x16x8xf32> -> vector<6x16x8xf32>
    "tpu.trace_stop"() : () -> ()
    "tpu.trace_start"() <{level = 10 : i32, message = "paw,pwc->pac"}> : () -> ()
    %cst_58 = arith.constant dense<0.000000e+00> : vector<6x16x16xf32>
    %100 = tpu.matmul %99, %92, %cst_58 {dimension_numbers = #tpu.dot_dimension_numbers<[2], [1], [1], [2], [0, 0, 0, 1, 1, 2], [0], [0]>} : vector<6x16x8xf32>, vector<6x8x16xf32>, vector<6x16x16xf32> -> vector<6x16x16xf32>
    "tpu.trace_stop"() : () -> ()
    %101 = arith.subf %57, %96 : vector<6x16x16xf32>
    %102 = arith.subf %61, %100 : vector<6x16x16xf32>
    %103 = arith.subf %101, %102 : vector<6x16x16xf32>
    %104 = math.absf %103 : vector<6x16x16xf32>
    %cst_59 = arith.constant dense<0.000000e+00> : vector<16x16xf32>
    %105 = vector.multi_reduction <add>, %104, %cst_59 [0] : vector<6x16x16xf32> to vector<16x16xf32>
    %106 = vector.shape_cast %105 : vector<16x16xf32> to vector<1x16x16xf32>
    %cst_60 = arith.constant dense<0.000000e+00> : vector<1xf32>
    %107 = vector.multi_reduction <add>, %106, %cst_60 [1, 2] : vector<1x16x16xf32> to vector<1xf32>
    %108 = vector.shape_cast %107 : vector<1xf32> to vector<1x1x1xf32>
    %109 = vector.extract %108[0, 0, 0] : f32 from vector<1x1x1xf32>
    %110 = vector.broadcast %109 : f32 to vector<1x1xf32>
    %cst_61 = arith.constant 4.000000e+00 : f32
    %111 = vector.broadcast %cst_61 : f32 to vector<1x1xf32>
    %112 = arith.mulf %111, %110 : vector<1x1xf32>
    %113 = arith.addf %76, %112 : vector<1x1xf32>
    %c0_62 = arith.constant 0 : index
    %c0_63 = arith.constant 0 : index
    %114 = vector.load %arg15[%c0_62, %c0_63] : memref<4x8xf32, #tpu.memory_space<vmem>>, vector<4x8xf32>
    %c0_64 = arith.constant 0 : index
    %c0_65 = arith.constant 0 : index
    %115 = vector.load %arg16[%c0_64, %c0_65] : memref<8x4xf32, #tpu.memory_space<vmem>>, vector<8x4xf32>
    %c0_66 = arith.constant 0 : index
    %c0_67 = arith.constant 0 : index
    %116 = vector.load %arg17[%c0_66, %c0_67] : memref<8x4xf32, #tpu.memory_space<vmem>>, vector<8x4xf32>
    %c0_68 = arith.constant 0 : index
    %c0_69 = arith.constant 0 : index
    %117 = vector.load %arg18[%c0_68, %c0_69] : memref<4x8xf32, #tpu.memory_space<vmem>>, vector<4x8xf32>
    %118 = vector.shape_cast %114 : vector<4x8xf32> to vector<1x4x8xf32>
    %119 = vector.shape_cast %118 : vector<1x4x8xf32> to vector<1x4x8xf32>
    %120 = vector.broadcast %119 : vector<1x4x8xf32> to vector<6x4x8xf32>
    %121 = vector.shape_cast %115 : vector<8x4xf32> to vector<1x8x4xf32>
    %122 = vector.shape_cast %121 : vector<1x8x4xf32> to vector<1x8x4xf32>
    %123 = vector.broadcast %122 : vector<1x8x4xf32> to vector<6x8x4xf32>
    %124 = vector.shape_cast %116 : vector<8x4xf32> to vector<1x8x4xf32>
    %125 = vector.shape_cast %124 : vector<1x8x4xf32> to vector<1x8x4xf32>
    %126 = vector.broadcast %125 : vector<1x8x4xf32> to vector<6x8x4xf32>
    %127 = vector.shape_cast %117 : vector<4x8xf32> to vector<1x4x8xf32>
    %128 = vector.shape_cast %127 : vector<1x4x8xf32> to vector<1x4x8xf32>
    %129 = vector.broadcast %128 : vector<1x4x8xf32> to vector<6x4x8xf32>
    "tpu.trace_start"() <{level = 10 : i32, message = "prh,phw->prw"}> : () -> ()
    %cst_70 = arith.constant dense<0.000000e+00> : vector<6x4x8xf32>
    %130 = tpu.matmul %120, %94, %cst_70 {dimension_numbers = #tpu.dot_dimension_numbers<[2], [1], [1], [2], [0, 0, 0, 1, 1, 2], [0], [0]>} : vector<6x4x8xf32>, vector<6x8x8xf32>, vector<6x4x8xf32> -> vector<6x4x8xf32>
    "tpu.trace_stop"() : () -> ()
    "tpu.trace_start"() <{level = 10 : i32, message = "prw,pwc->prc"}> : () -> ()
    %cst_71 = arith.constant dense<0.000000e+00> : vector<6x4x4xf32>
    %131 = tpu.matmul %130, %123, %cst_71 {dimension_numbers = #tpu.dot_dimension_numbers<[2], [1], [1], [2], [0, 0, 0, 1, 1, 2], [0], [0]>} : vector<6x4x8xf32>, vector<6x8x4xf32>, vector<6x4x4xf32> -> vector<6x4x4xf32>
    "tpu.trace_stop"() : () -> ()
    "tpu.trace_start"() <{level = 10 : i32, message = "pah,phw->paw"}> : () -> ()
    %cst_72 = arith.constant dense<0.000000e+00> : vector<6x8x4xf32>
    %132 = tpu.matmul %126, %131, %cst_72 {dimension_numbers = #tpu.dot_dimension_numbers<[2], [1], [1], [2], [0, 0, 0, 1, 1, 2], [0], [0]>} : vector<6x8x4xf32>, vector<6x4x4xf32>, vector<6x8x4xf32> -> vector<6x8x4xf32>
    "tpu.trace_stop"() : () -> ()
    "tpu.trace_start"() <{level = 10 : i32, message = "paw,pwc->pac"}> : () -> ()
    %cst_73 = arith.constant dense<0.000000e+00> : vector<6x8x8xf32>
    %133 = tpu.matmul %132, %129, %cst_73 {dimension_numbers = #tpu.dot_dimension_numbers<[2], [1], [1], [2], [0, 0, 0, 1, 1, 2], [0], [0]>} : vector<6x8x4xf32>, vector<6x4x8xf32>, vector<6x8x8xf32> -> vector<6x8x8xf32>
    "tpu.trace_stop"() : () -> ()
    "tpu.trace_start"() <{level = 10 : i32, message = "prh,phw->prw"}> : () -> ()
    %cst_74 = arith.constant dense<0.000000e+00> : vector<6x4x8xf32>
    %134 = tpu.matmul %120, %98, %cst_74 {dimension_numbers = #tpu.dot_dimension_numbers<[2], [1], [1], [2], [0, 0, 0, 1, 1, 2], [0], [0]>} : vector<6x4x8xf32>, vector<6x8x8xf32>, vector<6x4x8xf32> -> vector<6x4x8xf32>
    "tpu.trace_stop"() : () -> ()
    "tpu.trace_start"() <{level = 10 : i32, message = "prw,pwc->prc"}> : () -> ()
    %cst_75 = arith.constant dense<0.000000e+00> : vector<6x4x4xf32>
    %135 = tpu.matmul %134, %123, %cst_75 {dimension_numbers = #tpu.dot_dimension_numbers<[2], [1], [1], [2], [0, 0, 0, 1, 1, 2], [0], [0]>} : vector<6x4x8xf32>, vector<6x8x4xf32>, vector<6x4x4xf32> -> vector<6x4x4xf32>
    "tpu.trace_stop"() : () -> ()
    "tpu.trace_start"() <{level = 10 : i32, message = "pah,phw->paw"}> : () -> ()
    %cst_76 = arith.constant dense<0.000000e+00> : vector<6x8x4xf32>
    %136 = tpu.matmul %126, %135, %cst_76 {dimension_numbers = #tpu.dot_dimension_numbers<[2], [1], [1], [2], [0, 0, 0, 1, 1, 2], [0], [0]>} : vector<6x8x4xf32>, vector<6x4x4xf32>, vector<6x8x4xf32> -> vector<6x8x4xf32>
    "tpu.trace_stop"() : () -> ()
    "tpu.trace_start"() <{level = 10 : i32, message = "paw,pwc->pac"}> : () -> ()
    %cst_77 = arith.constant dense<0.000000e+00> : vector<6x8x8xf32>
    %137 = tpu.matmul %136, %129, %cst_77 {dimension_numbers = #tpu.dot_dimension_numbers<[2], [1], [1], [2], [0, 0, 0, 1, 1, 2], [0], [0]>} : vector<6x8x4xf32>, vector<6x4x8xf32>, vector<6x8x8xf32> -> vector<6x8x8xf32>
    "tpu.trace_stop"() : () -> ()
    %138 = arith.subf %94, %133 : vector<6x8x8xf32>
    %139 = arith.subf %98, %137 : vector<6x8x8xf32>
    %140 = arith.subf %138, %139 : vector<6x8x8xf32>
    %141 = math.absf %140 : vector<6x8x8xf32>
    %cst_78 = arith.constant dense<0.000000e+00> : vector<8x8xf32>
    %142 = vector.multi_reduction <add>, %141, %cst_78 [0] : vector<6x8x8xf32> to vector<8x8xf32>
    %143 = vector.shape_cast %142 : vector<8x8xf32> to vector<1x8x8xf32>
    %cst_79 = arith.constant dense<0.000000e+00> : vector<1xf32>
    %144 = vector.multi_reduction <add>, %143, %cst_79 [1, 2] : vector<1x8x8xf32> to vector<1xf32>
    %145 = vector.shape_cast %144 : vector<1xf32> to vector<1x1x1xf32>
    %146 = vector.extract %145[0, 0, 0] : f32 from vector<1x1x1xf32>
    %147 = vector.broadcast %146 : f32 to vector<1x1xf32>
    %cst_80 = arith.constant 8.000000e+00 : f32
    %148 = vector.broadcast %cst_80 : f32 to vector<1x1xf32>
    %149 = arith.mulf %148, %147 : vector<1x1xf32>
    %150 = arith.addf %113, %149 : vector<1x1xf32>
    %c0_81 = arith.constant 0 : index
    %c0_82 = arith.constant 0 : index
    %151 = vector.load %arg19[%c0_81, %c0_82] : memref<2x4xf32, #tpu.memory_space<vmem>>, vector<2x4xf32>
    %c0_83 = arith.constant 0 : index
    %c0_84 = arith.constant 0 : index
    %152 = vector.load %arg20[%c0_83, %c0_84] : memref<4x2xf32, #tpu.memory_space<vmem>>, vector<4x2xf32>
    %c0_85 = arith.constant 0 : index
    %c0_86 = arith.constant 0 : index
    %153 = vector.load %arg21[%c0_85, %c0_86] : memref<4x2xf32, #tpu.memory_space<vmem>>, vector<4x2xf32>
    %c0_87 = arith.constant 0 : index
    %c0_88 = arith.constant 0 : index
    %154 = vector.load %arg22[%c0_87, %c0_88] : memref<2x4xf32, #tpu.memory_space<vmem>>, vector<2x4xf32>
    %155 = vector.shape_cast %151 : vector<2x4xf32> to vector<1x2x4xf32>
    %156 = vector.shape_cast %155 : vector<1x2x4xf32> to vector<1x2x4xf32>
    %157 = vector.broadcast %156 : vector<1x2x4xf32> to vector<6x2x4xf32>
    %158 = vector.shape_cast %152 : vector<4x2xf32> to vector<1x4x2xf32>
    %159 = vector.shape_cast %158 : vector<1x4x2xf32> to vector<1x4x2xf32>
    %160 = vector.broadcast %159 : vector<1x4x2xf32> to vector<6x4x2xf32>
    %161 = vector.shape_cast %153 : vector<4x2xf32> to vector<1x4x2xf32>
    %162 = vector.shape_cast %161 : vector<1x4x2xf32> to vector<1x4x2xf32>
    %163 = vector.broadcast %162 : vector<1x4x2xf32> to vector<6x4x2xf32>
    %164 = vector.shape_cast %154 : vector<2x4xf32> to vector<1x2x4xf32>
    %165 = vector.shape_cast %164 : vector<1x2x4xf32> to vector<1x2x4xf32>
    %166 = vector.broadcast %165 : vector<1x2x4xf32> to vector<6x2x4xf32>
    "tpu.trace_start"() <{level = 10 : i32, message = "prh,phw->prw"}> : () -> ()
    %cst_89 = arith.constant dense<0.000000e+00> : vector<6x2x4xf32>
    %167 = tpu.matmul %157, %131, %cst_89 {dimension_numbers = #tpu.dot_dimension_numbers<[2], [1], [1], [2], [0, 0, 0, 1, 1, 2], [0], [0]>} : vector<6x2x4xf32>, vector<6x4x4xf32>, vector<6x2x4xf32> -> vector<6x2x4xf32>
    "tpu.trace_stop"() : () -> ()
    "tpu.trace_start"() <{level = 10 : i32, message = "prw,pwc->prc"}> : () -> ()
    %cst_90 = arith.constant dense<0.000000e+00> : vector<6x2x2xf32>
    %168 = tpu.matmul %167, %160, %cst_90 {dimension_numbers = #tpu.dot_dimension_numbers<[2], [1], [1], [2], [0, 0, 0, 1, 1, 2], [0], [0]>} : vector<6x2x4xf32>, vector<6x4x2xf32>, vector<6x2x2xf32> -> vector<6x2x2xf32>
    "tpu.trace_stop"() : () -> ()
    "tpu.trace_start"() <{level = 10 : i32, message = "pah,phw->paw"}> : () -> ()
    %cst_91 = arith.constant dense<0.000000e+00> : vector<6x4x2xf32>
    %169 = tpu.matmul %163, %168, %cst_91 {dimension_numbers = #tpu.dot_dimension_numbers<[2], [1], [1], [2], [0, 0, 0, 1, 1, 2], [0], [0]>} : vector<6x4x2xf32>, vector<6x2x2xf32>, vector<6x4x2xf32> -> vector<6x4x2xf32>
    "tpu.trace_stop"() : () -> ()
    "tpu.trace_start"() <{level = 10 : i32, message = "paw,pwc->pac"}> : () -> ()
    %cst_92 = arith.constant dense<0.000000e+00> : vector<6x4x4xf32>
    %170 = tpu.matmul %169, %166, %cst_92 {dimension_numbers = #tpu.dot_dimension_numbers<[2], [1], [1], [2], [0, 0, 0, 1, 1, 2], [0], [0]>} : vector<6x4x2xf32>, vector<6x2x4xf32>, vector<6x4x4xf32> -> vector<6x4x4xf32>
    "tpu.trace_stop"() : () -> ()
    "tpu.trace_start"() <{level = 10 : i32, message = "prh,phw->prw"}> : () -> ()
    %cst_93 = arith.constant dense<0.000000e+00> : vector<6x2x4xf32>
    %171 = tpu.matmul %157, %135, %cst_93 {dimension_numbers = #tpu.dot_dimension_numbers<[2], [1], [1], [2], [0, 0, 0, 1, 1, 2], [0], [0]>} : vector<6x2x4xf32>, vector<6x4x4xf32>, vector<6x2x4xf32> -> vector<6x2x4xf32>
    "tpu.trace_stop"() : () -> ()
    "tpu.trace_start"() <{level = 10 : i32, message = "prw,pwc->prc"}> : () -> ()
    %cst_94 = arith.constant dense<0.000000e+00> : vector<6x2x2xf32>
    %172 = tpu.matmul %171, %160, %cst_94 {dimension_numbers = #tpu.dot_dimension_numbers<[2], [1], [1], [2], [0, 0, 0, 1, 1, 2], [0], [0]>} : vector<6x2x4xf32>, vector<6x4x2xf32>, vector<6x2x2xf32> -> vector<6x2x2xf32>
    "tpu.trace_stop"() : () -> ()
    "tpu.trace_start"() <{level = 10 : i32, message = "pah,phw->paw"}> : () -> ()
    %cst_95 = arith.constant dense<0.000000e+00> : vector<6x4x2xf32>
    %173 = tpu.matmul %163, %172, %cst_95 {dimension_numbers = #tpu.dot_dimension_numbers<[2], [1], [1], [2], [0, 0, 0, 1, 1, 2], [0], [0]>} : vector<6x4x2xf32>, vector<6x2x2xf32>, vector<6x4x2xf32> -> vector<6x4x2xf32>
    "tpu.trace_stop"() : () -> ()
    "tpu.trace_start"() <{level = 10 : i32, message = "paw,pwc->pac"}> : () -> ()
    %cst_96 = arith.constant dense<0.000000e+00> : vector<6x4x4xf32>
    %174 = tpu.matmul %173, %166, %cst_96 {dimension_numbers = #tpu.dot_dimension_numbers<[2], [1], [1], [2], [0, 0, 0, 1, 1, 2], [0], [0]>} : vector<6x4x2xf32>, vector<6x2x4xf32>, vector<6x4x4xf32> -> vector<6x4x4xf32>
    "tpu.trace_stop"() : () -> ()
    %175 = arith.subf %131, %170 : vector<6x4x4xf32>
    %176 = arith.subf %135, %174 : vector<6x4x4xf32>
    %177 = arith.subf %175, %176 : vector<6x4x4xf32>
    %178 = math.absf %177 : vector<6x4x4xf32>
    %cst_97 = arith.constant dense<0.000000e+00> : vector<4x4xf32>
    %179 = vector.multi_reduction <add>, %178, %cst_97 [0] : vector<6x4x4xf32> to vector<4x4xf32>
    %180 = vector.shape_cast %179 : vector<4x4xf32> to vector<1x4x4xf32>
    %cst_98 = arith.constant dense<0.000000e+00> : vector<1xf32>
    %181 = vector.multi_reduction <add>, %180, %cst_98 [1, 2] : vector<1x4x4xf32> to vector<1xf32>
    %182 = vector.shape_cast %181 : vector<1xf32> to vector<1x1x1xf32>
    %183 = vector.extract %182[0, 0, 0] : f32 from vector<1x1x1xf32>
    %184 = vector.broadcast %183 : f32 to vector<1x1xf32>
    %cst_99 = arith.constant 1.600000e+01 : f32
    %185 = vector.broadcast %cst_99 : f32 to vector<1x1xf32>
    %186 = arith.mulf %185, %184 : vector<1x1xf32>
    %187 = arith.addf %150, %186 : vector<1x1xf32>
    %188 = vector.shape_cast %187 : vector<1x1xf32> to vector<1x1x1xf32>
    %189 = vector.shape_cast %188 : vector<1x1x1xf32> to vector<1x1x1xf32>
    %190 = vector.broadcast %189 : vector<1x1x1xf32> to vector<1x8x128xf32>
    %c0_100 = arith.constant 0 : index
    %c0_101 = arith.constant 0 : index
    %c0_102 = arith.constant 0 : index
    %191 = vector.load %arg23[%c0_100, %c0_101, %c0_102] : memref<1x8x128xf32, #tpu.memory_space<vmem>>, vector<1x8x128xf32>
    tpu.vector_store %arg23[%c0_100, %c0_101, %c0_102], %190 {strides = array<i32>} : memref<1x8x128xf32, #tpu.memory_space<vmem>>, vector<1x8x128xf32>,
    return
  }
  func.func @transform_0(%arg0: i32) -> (i32, i32, i32) {
    %c0_i32 = arith.constant 0 : i32
    %c0_i32_0 = arith.constant 0 : i32
    %c0_i32_1 = arith.constant 0 : i32
    return %arg0, %c0_i32, %c0_i32_0 : i32, i32, i32
  }
  func.func @transform_1(%arg0: i32) -> (i32, i32, i32) {
    %c0_i32 = arith.constant 0 : i32
    %c0_i32_0 = arith.constant 0 : i32
    %c0_i32_1 = arith.constant 0 : i32
    return %arg0, %c0_i32, %c0_i32_0 : i32, i32, i32
  }
  func.func @transform_2(%arg0: i32) -> (i32, i32) {
    %c0_i32 = arith.constant 0 : i32
    %c0_i32_0 = arith.constant 0 : i32
    %c0_i32_1 = arith.constant 0 : i32
    return %c0_i32, %c0_i32_0 : i32, i32
  }
  func.func @transform_3(%arg0: i32) -> (i32, i32) {
    %c0_i32 = arith.constant 0 : i32
    %c0_i32_0 = arith.constant 0 : i32
    %c0_i32_1 = arith.constant 0 : i32
    return %c0_i32, %c0_i32_0 : i32, i32
  }
  func.func @transform_4(%arg0: i32) -> (i32, i32) {
    %c0_i32 = arith.constant 0 : i32
    %c0_i32_0 = arith.constant 0 : i32
    %c0_i32_1 = arith.constant 0 : i32
    return %c0_i32, %c0_i32_0 : i32, i32
  }
  func.func @transform_5(%arg0: i32) -> (i32, i32) {
    %c0_i32 = arith.constant 0 : i32
    %c0_i32_0 = arith.constant 0 : i32
    %c0_i32_1 = arith.constant 0 : i32
    return %c0_i32, %c0_i32_0 : i32, i32
  }
  func.func @transform_6(%arg0: i32) -> (i32, i32) {
    %c0_i32 = arith.constant 0 : i32
    %c0_i32_0 = arith.constant 0 : i32
    %c0_i32_1 = arith.constant 0 : i32
    return %c0_i32, %c0_i32_0 : i32, i32
  }
  func.func @transform_7(%arg0: i32) -> (i32, i32) {
    %c0_i32 = arith.constant 0 : i32
    %c0_i32_0 = arith.constant 0 : i32
    %c0_i32_1 = arith.constant 0 : i32
    return %c0_i32, %c0_i32_0 : i32, i32
  }
  func.func @transform_8(%arg0: i32) -> (i32, i32) {
    %c0_i32 = arith.constant 0 : i32
    %c0_i32_0 = arith.constant 0 : i32
    %c0_i32_1 = arith.constant 0 : i32
    return %c0_i32, %c0_i32_0 : i32, i32
  }
  func.func @transform_9(%arg0: i32) -> (i32, i32) {
    %c0_i32 = arith.constant 0 : i32
    %c0_i32_0 = arith.constant 0 : i32
    %c0_i32_1 = arith.constant 0 : i32
    return %c0_i32, %c0_i32_0 : i32, i32
  }
  func.func @transform_10(%arg0: i32) -> (i32, i32) {
    %c0_i32 = arith.constant 0 : i32
    %c0_i32_0 = arith.constant 0 : i32
    %c0_i32_1 = arith.constant 0 : i32
    return %c0_i32, %c0_i32_0 : i32, i32
  }
  func.func @transform_11(%arg0: i32) -> (i32, i32) {
    %c0_i32 = arith.constant 0 : i32
    %c0_i32_0 = arith.constant 0 : i32
    %c0_i32_1 = arith.constant 0 : i32
    return %c0_i32, %c0_i32_0 : i32, i32
  }
  func.func @transform_12(%arg0: i32) -> (i32, i32) {
    %c0_i32 = arith.constant 0 : i32
    %c0_i32_0 = arith.constant 0 : i32
    %c0_i32_1 = arith.constant 0 : i32
    return %c0_i32, %c0_i32_0 : i32, i32
  }
  func.func @transform_13(%arg0: i32) -> (i32, i32) {
    %c0_i32 = arith.constant 0 : i32
    %c0_i32_0 = arith.constant 0 : i32
    %c0_i32_1 = arith.constant 0 : i32
    return %c0_i32, %c0_i32_0 : i32, i32
  }
  func.func @transform_14(%arg0: i32) -> (i32, i32) {
    %c0_i32 = arith.constant 0 : i32
    %c0_i32_0 = arith.constant 0 : i32
    %c0_i32_1 = arith.constant 0 : i32
    return %c0_i32, %c0_i32_0 : i32, i32
  }
  func.func @transform_15(%arg0: i32) -> (i32, i32) {
    %c0_i32 = arith.constant 0 : i32
    %c0_i32_0 = arith.constant 0 : i32
    %c0_i32_1 = arith.constant 0 : i32
    return %c0_i32, %c0_i32_0 : i32, i32
  }
  func.func @transform_16(%arg0: i32) -> (i32, i32) {
    %c0_i32 = arith.constant 0 : i32
    %c0_i32_0 = arith.constant 0 : i32
    %c0_i32_1 = arith.constant 0 : i32
    return %c0_i32, %c0_i32_0 : i32, i32
  }
  func.func @transform_17(%arg0: i32) -> (i32, i32) {
    %c0_i32 = arith.constant 0 : i32
    %c0_i32_0 = arith.constant 0 : i32
    %c0_i32_1 = arith.constant 0 : i32
    return %c0_i32, %c0_i32_0 : i32, i32
  }
  func.func @transform_18(%arg0: i32) -> (i32, i32) {
    %c0_i32 = arith.constant 0 : i32
    %c0_i32_0 = arith.constant 0 : i32
    %c0_i32_1 = arith.constant 0 : i32
    return %c0_i32, %c0_i32_0 : i32, i32
  }
  func.func @transform_19(%arg0: i32) -> (i32, i32) {
    %c0_i32 = arith.constant 0 : i32
    %c0_i32_0 = arith.constant 0 : i32
    %c0_i32_1 = arith.constant 0 : i32
    return %c0_i32, %c0_i32_0 : i32, i32
  }
  func.func @transform_20(%arg0: i32) -> (i32, i32) {
    %c0_i32 = arith.constant 0 : i32
    %c0_i32_0 = arith.constant 0 : i32
    %c0_i32_1 = arith.constant 0 : i32
    return %c0_i32, %c0_i32_0 : i32, i32
  }
  func.func @transform_21(%arg0: i32) -> (i32, i32) {
    %c0_i32 = arith.constant 0 : i32
    %c0_i32_0 = arith.constant 0 : i32
    %c0_i32_1 = arith.constant 0 : i32
    return %c0_i32, %c0_i32_0 : i32, i32
  }
  func.func @transform_22(%arg0: i32) -> (i32, i32, i32) {
    %c0_i32 = arith.constant 0 : i32
    %c0_i32_0 = arith.constant 0 : i32
    %c0_i32_1 = arith.constant 0 : i32
    return %arg0, %c0_i32, %c0_i32_0 : i32, i32, i32
  }
}

</mosaic_0001>

<llo_original>
// kernel: lap_loss.1
$region0: #{lap_loss.1}
  #allocation0 [shape = 'u32[]', space=smem, size = 0x4, offset = 0x4, fixed_abs, tag = 'smem constant byte address 0x4 - core index']
  #allocation1 [shape = 'u32[72,128]{1,0:T(1,128)}', space=vmem, size = 0x9000, scoped, tag = 'internal scratch']
  %s0 = inlined_call_operand.vmem [shape: f32[6,64,64], index: 0, kind: input, shape index: {}]
  %s1 = inlined_call_operand.vmem [shape: f32[6,64,64], index: 1, kind: input, shape index: {}]
  %s2 = inlined_call_operand.vmem [shape: f32[32,64], index: 2, kind: input, shape index: {}]
  %s3 = inlined_call_operand.vmem [shape: f32[64,32], index: 3, kind: input, shape index: {}]
  %s4 = inlined_call_operand.vmem [shape: f32[64,32], index: 4, kind: input, shape index: {}]
  %s5 = inlined_call_operand.vmem [shape: f32[32,64], index: 5, kind: input, shape index: {}]
  %s6 = inlined_call_operand.vmem [shape: f32[16,32], index: 6, kind: input, shape index: {}]
  %s7 = inlined_call_operand.vmem [shape: f32[32,16], index: 7, kind: input, shape index: {}]
  %s8 = inlined_call_operand.vmem [shape: f32[32,16], index: 8, kind: input, shape index: {}]
  %s9 = inlined_call_operand.vmem [shape: f32[16,32], index: 9, kind: input, shape index: {}]
  %s10 = inlined_call_operand.vmem [shape: f32[8,16], index: 10, kind: input, shape index: {}]
  %s11 = inlined_call_operand.vmem [shape: f32[16,8], index: 11, kind: input, shape index: {}]
  %s12 = inlined_call_operand.vmem [shape: f32[16,8], index: 12, kind: input, shape index: {}]
  %s13 = inlined_call_operand.vmem [shape: f32[8,16], index: 13, kind: input, shape index: {}]
  %s14 = inlined_call_operand.vmem [shape: f32[4,8], index: 14, kind: input, shape index: {}]
  %s15 = inlined_call_operand.vmem [shape: f32[8,4], index: 15, kind: input, shape index: {}]
  %s16 = inlined_call_operand.vmem [shape: f32[8,4], index: 16, kind: input, shape index: {}]
  %s17 = inlined_call_operand.vmem [shape: f32[4,8], index: 17, kind: input, shape index: {}]
  %s18 = inlined_call_operand.vmem [shape: f32[2,4], index: 18, kind: input, shape index: {}]
  %s19 = inlined_call_operand.vmem [shape: f32[4,2], index: 19, kind: input, shape index: {}]
  %s20 = inlined_call_operand.vmem [shape: f32[4,2], index: 20, kind: input, shape index: {}]
  %s21 = inlined_call_operand.vmem [shape: f32[2,4], index: 21, kind: input, shape index: {}]
  %s22 = inlined_call_operand.vmem [shape: f32[1,8,128], index: 22, kind: output, shape index: {}]
  %s23 = sld [smem:[#allocation0]]
  $region98: #{lap_loss.1} parent=0
    _
  %s25 = ssub.s32 1, %s23
  %s26 = scalar_select 0, %s25, %s23
  // Predicated region
  $region2: #{lap_loss.1} parent=0 // pred_check
    _
  $region3: #{lap_loss.1} parent=0 // pred_check_branch
    %28 = sbr.rel (0) target = $region5
  $region4: #{lap_loss.1} parent=0 // pred_region
    _
  $region5: #{lap_loss.1} parent=0 // pred_fallthru
    _
  // Predicated region
  $region6: #{lap_loss.1} parent=0 // pred_check
    _
  $region7: #{lap_loss.1} parent=0 // pred_check_branch
    %30 = sbr.rel (0) target = $region9
  $region8: #{lap_loss.1} parent=0 // pred_region
    _
  $region9: #{lap_loss.1} parent=0 // pred_fallthru
    _
  // Predicated region
  $region10: #{lap_loss.1} parent=0 // pred_check
    _
  $region11: #{lap_loss.1} parent=0 // pred_check_branch
    %32 = sbr.rel (0) target = $region13
  $region12: #{lap_loss.1} parent=0 // pred_region
    _
  $region13: #{lap_loss.1} parent=0 // pred_fallthru
    _
  // Predicated region
  $region14: #{lap_loss.1} parent=0 // pred_check
    _
  $region15: #{lap_loss.1} parent=0 // pred_check_branch
    %34 = sbr.rel (0) target = $region17
  $region16: #{lap_loss.1} parent=0 // pred_region
    _
  $region17: #{lap_loss.1} parent=0 // pred_fallthru
    _
  // Predicated region
  $region18: #{lap_loss.1} parent=0 // pred_check
    _
  $region19: #{lap_loss.1} parent=0 // pred_check_branch
    %36 = sbr.rel (0) target = $region21
  $region20: #{lap_loss.1} parent=0 // pred_region
    _
  $region21: #{lap_loss.1} parent=0 // pred_fallthru
    _
  // Predicated region
  $region22: #{lap_loss.1} parent=0 // pred_check
    _
  $region23: #{lap_loss.1} parent=0 // pred_check_branch
    %38 = sbr.rel (0) target = $region25
  $region24: #{lap_loss.1} parent=0 // pred_region
    _
  $region25: #{lap_loss.1} parent=0 // pred_fallthru
    _
  // Predicated region
  $region26: #{lap_loss.1} parent=0 // pred_check
    _
  $region27: #{lap_loss.1} parent=0 // pred_check_branch
    %40 = sbr.rel (0) target = $region29
  $region28: #{lap_loss.1} parent=0 // pred_region
    _
  $region29: #{lap_loss.1} parent=0 // pred_fallthru
    _
  // Predicated region
  $region30: #{lap_loss.1} parent=0 // pred_check
    _
  $region31: #{lap_loss.1} parent=0 // pred_check_branch
    %42 = sbr.rel (0) target = $region33
  $region32: #{lap_loss.1} parent=0 // pred_region
    _
  $region33: #{lap_loss.1} parent=0 // pred_fallthru
    _
  // Predicated region
  $region34: #{lap_loss.1} parent=0 // pred_check
    _
  $region35: #{lap_loss.1} parent=0 // pred_check_branch
    %44 = sbr.rel (0) target = $region37
  $region36: #{lap_loss.1} parent=0 // pred_region
    _
  $region37: #{lap_loss.1} parent=0 // pred_fallthru
    _
  // Predicated region
  $region38: #{lap_loss.1} parent=0 // pred_check
    _
  $region39: #{lap_loss.1} parent=0 // pred_check_branch
    %46 = sbr.rel (0) target = $region41
  $region40: #{lap_loss.1} parent=0 // pred_region
    _
  $region41: #{lap_loss.1} parent=0 // pred_fallthru
    _
  // Predicated region
  $region42: #{lap_loss.1} parent=0 // pred_check
    _
  $region43: #{lap_loss.1} parent=0 // pred_check_branch
    %48 = sbr.rel (0) target = $region45
  $region44: #{lap_loss.1} parent=0 // pred_region
    _
  $region45: #{lap_loss.1} parent=0 // pred_fallthru
    _
  // Predicated region
  $region46: #{lap_loss.1} parent=0 // pred_check
    _
  $region47: #{lap_loss.1} parent=0 // pred_check_branch
    %50 = sbr.rel (0) target = $region49
  $region48: #{lap_loss.1} parent=0 // pred_region
    _
  $region49: #{lap_loss.1} parent=0 // pred_fallthru
    _
  // Predicated region
  $region50: #{lap_loss.1} parent=0 // pred_check
    _
  $region51: #{lap_loss.1} parent=0 // pred_check_branch
    %52 = sbr.rel (0) target = $region53
  $region52: #{lap_loss.1} parent=0 // pred_region
    _
  $region53: #{lap_loss.1} parent=0 // pred_fallthru
    _
  // Predicated region
  $region54: #{lap_loss.1} parent=0 // pred_check
    _
  $region55: #{lap_loss.1} parent=0 // pred_check_branch
    %54 = sbr.rel (0) target = $region57
  $region56: #{lap_loss.1} parent=0 // pred_region
    _
  $region57: #{lap_loss.1} parent=0 // pred_fallthru
    _
  // Predicated region
  $region58: #{lap_loss.1} parent=0 // pred_check
    _
  $region59: #{lap_loss.1} parent=0 // pred_check_branch
    %56 = sbr.rel (0) target = $region61
  $region60: #{lap_loss.1} parent=0 // pred_region
    _
  $region61: #{lap_loss.1} parent=0 // pred_fallthru
    _
  // Predicated region
  $region62: #{lap_loss.1} parent=0 // pred_check
    _
  $region63: #{lap_loss.1} parent=0 // pred_check_branch
    %58 = sbr.rel (0) target = $region65
  $region64: #{lap_loss.1} parent=0 // pred_region
    _
  $region65: #{lap_loss.1} parent=0 // pred_fallthru
    _
  // Predicated region
  $region66: #{lap_loss.1} parent=0 // pred_check
    _
  $region67: #{lap_loss.1} parent=0 // pred_check_branch
    %60 = sbr.rel (0) target = $region69
  $region68: #{lap_loss.1} parent=0 // pred_region
    _
  $region69: #{lap_loss.1} parent=0 // pred_fallthru
    _
  // Predicated region
  $region70: #{lap_loss.1} parent=0 // pred_check
    _
  $region71: #{lap_loss.1} parent=0 // pred_check_branch
    %62 = sbr.rel (0) target = $region73
  $region72: #{lap_loss.1} parent=0 // pred_region
    _
  $region73: #{lap_loss.1} parent=0 // pred_fallthru
    _
  // Predicated region
  $region74: #{lap_loss.1} parent=0 // pred_check
    _
  $region75: #{lap_loss.1} parent=0 // pred_check_branch
    %64 = sbr.rel (0) target = $region77
  $region76: #{lap_loss.1} parent=0 // pred_region
    _
  $region77: #{lap_loss.1} parent=0 // pred_fallthru
    _
  // Predicated region
  $region78: #{lap_loss.1} parent=0 // pred_check
    _
  $region79: #{lap_loss.1} parent=0 // pred_check_branch
    %66 = sbr.rel (0) target = $region81
  $region80: #{lap_loss.1} parent=0 // pred_region
    _
  $region81: #{lap_loss.1} parent=0 // pred_fallthru
    _
  // Predicated region
  $region82: #{lap_loss.1} parent=0 // pred_check
    _
  $region83: #{lap_loss.1} parent=0 // pred_check_branch
    %68 = sbr.rel (0) target = $region85
  $region84: #{lap_loss.1} parent=0 // pred_region
    _
  $region85: #{lap_loss.1} parent=0 // pred_fallthru
    _
  // Predicated region
  $region86: #{lap_loss.1} parent=0 // pred_check
    _
  $region87: #{lap_loss.1} parent=0 // pred_check_branch
    %70 = sbr.rel (0) target = $region89
  $region88: #{lap_loss.1} parent=0 // pred_region
    _
  $region89: #{lap_loss.1} parent=0 // pred_fallthru
    _
  %v71 = vld [vmem:[%s0] sm:$0xff]
  %v72 = vld [vmem:[%s0 + $0x8] sm:$0xff]
  %v73 = vld [vmem:[%s0 + $0x10] sm:$0xff]
  %v74 = vld [vmem:[%s0 + $0x18] sm:$0xff]
  %v75 = vld [vmem:[%s0 + $0x20] sm:$0xff]
  %v76 = vld [vmem:[%s0 + $0x28] sm:$0xff]
  %v77 = vld [vmem:[%s0 + $0x30] sm:$0xff]
  %v78 = vld [vmem:[%s0 + $0x38] sm:$0xff]
  %v79 = vld [vmem:[%s0 + $0x40] sm:$0xff]
  %v80 = vld [vmem:[%s0 + $0x48] sm:$0xff]
  %v81 = vld [vmem:[%s0 + $0x50] sm:$0xff]
  %v82 = vld [vmem:[%s0 + $0x58] sm:$0xff]
  %v83 = vld [vmem:[%s0 + $0x60] sm:$0xff]
  %v84 = vld [vmem:[%s0 + $0x68] sm:$0xff]
  %v85 = vld [vmem:[%s0 + $0x70] sm:$0xff]
  %v86 = vld [vmem:[%s0 + $0x78] sm:$0xff]
  %v87 = vld [vmem:[%s0 + $0x80] sm:$0xff]
  %v88 = vld [vmem:[%s0 + $0x88] sm:$0xff]
  %v89 = vld [vmem:[%s0 + $0x90] sm:$0xff]
  %v90 = vld [vmem:[%s0 + $0x98] sm:$0xff]
  %v91 = vld [vmem:[%s0 + $0xa0] sm:$0xff]
  %v92 = vld [vmem:[%s0 + $0xa8] sm:$0xff]
  %v93 = vld [vmem:[%s0 + $0xb0] sm:$0xff]
  %v94 = vld [vmem:[%s0 + $0xb8] sm:$0xff]
  %v95 = vld [vmem:[%s0 + $0xc0] sm:$0xff]
  %v96 = vld [vmem:[%s0 + $0xc8] sm:$0xff]
  %v97 = vld [vmem:[%s0 + $0xd0] sm:$0xff]
  %v98 = vld [vmem:[%s0 + $0xd8] sm:$0xff]
  %v99 = vld [vmem:[%s0 + $0xe0] sm:$0xff]
  %v100 = vld [vmem:[%s0 + $0xe8] sm:$0xff]
  %v101 = vld [vmem:[%s0 + $0xf0] sm:$0xff]
  %v102 = vld [vmem:[%s0 + $0xf8] sm:$0xff]
  %v103 = vld [vmem:[%s0 + $0x100] sm:$0xff]
  %v104 = vld [vmem:[%s0 + $0x108] sm:$0xff]
  %v105 = vld [vmem:[%s0 + $0x110] sm:$0xff]
  %v106 = vld [vmem:[%s0 + $0x118] sm:$0xff]
  %v107 = vld [vmem:[%s0 + $0x120] sm:$0xff]
  %v108 = vld [vmem:[%s0 + $0x128] sm:$0xff]
  %v109 = vld [vmem:[%s0 + $0x130] sm:$0xff]
  %v110 = vld [vmem:[%s0 + $0x138] sm:$0xff]
  %v111 = vld [vmem:[%s0 + $0x140] sm:$0xff]
  %v112 = vld [vmem:[%s0 + $0x148] sm:$0xff]
  %v113 = vld [vmem:[%s0 + $0x150] sm:$0xff]
  %v114 = vld [vmem:[%s0 + $0x158] sm:$0xff]
  %v115 = vld [vmem:[%s0 + $0x160] sm:$0xff]
  %v116 = vld [vmem:[%s0 + $0x168] sm:$0xff]
  %v117 = vld [vmem:[%s0 + $0x170] sm:$0xff]
  %v118 = vld [vmem:[%s0 + $0x178] sm:$0xff]
  %v119 = vld [vmem:[%s1] sm:$0xff]
  %v120 = vld [vmem:[%s1 + $0x8] sm:$0xff]
  %v121 = vld [vmem:[%s1 + $0x10] sm:$0xff]
  %v122 = vld [vmem:[%s1 + $0x18] sm:$0xff]
  %v123 = vld [vmem:[%s1 + $0x20] sm:$0xff]
  %v124 = vld [vmem:[%s1 + $0x28] sm:$0xff]
  %v125 = vld [vmem:[%s1 + $0x30] sm:$0xff]
  %v126 = vld [vmem:[%s1 + $0x38] sm:$0xff]
  %v127 = vld [vmem:[%s1 + $0x40] sm:$0xff]
  %v128 = vld [vmem:[%s1 + $0x48] sm:$0xff]
  %v129 = vld [vmem:[%s1 + $0x50] sm:$0xff]
  %v130 = vld [vmem:[%s1 + $0x58] sm:$0xff]
  %v131 = vld [vmem:[%s1 + $0x60] sm:$0xff]
  %v132 = vld [vmem:[%s1 + $0x68] sm:$0xff]
  %v133 = vld [vmem:[%s1 + $0x70] sm:$0xff]
  %v134 = vld [vmem:[%s1 + $0x78] sm:$0xff]
  %v135 = vld [vmem:[%s1 + $0x80] sm:$0xff]
  %v136 = vld [vmem:[%s1 + $0x88] sm:$0xff]
  %v137 = vld [vmem:[%s1 + $0x90] sm:$0xff]
  %v138 = vld [vmem:[%s1 + $0x98] sm:$0xff]
  %v139 = vld [vmem:[%s1 + $0xa0] sm:$0xff]
  %v140 = vld [vmem:[%s1 + $0xa8] sm:$0xff]
  %v141 = vld [vmem:[%s1 + $0xb0] sm:$0xff]
  %v142 = vld [vmem:[%s1 + $0xb8] sm:$0xff]
  %v143 = vld [vmem:[%s1 + $0xc0] sm:$0xff]
  %v144 = vld [vmem:[%s1 + $0xc8] sm:$0xff]
  %v145 = vld [vmem:[%s1 + $0xd0] sm:$0xff]
  %v146 = vld [vmem:[%s1 + $0xd8] sm:$0xff]
  %v147 = vld [vmem:[%s1 + $0xe0] sm:$0xff]
  %v148 = vld [vmem:[%s1 + $0xe8] sm:$0xff]
  %v149 = vld [vmem:[%s1 + $0xf0] sm:$0xff]
  %v150 = vld [vmem:[%s1 + $0xf8] sm:$0xff]
  %v151 = vld [vmem:[%s1 + $0x100] sm:$0xff]
  %v152 = vld [vmem:[%s1 + $0x108] sm:$0xff]
  %v153 = vld [vmem:[%s1 + $0x110] sm:$0xff]
  %v154 = vld [vmem:[%s1 + $0x118] sm:$0xff]
  %v155 = vld [vmem:[%s1 + $0x120] sm:$0xff]
  %v156 = vld [vmem:[%s1 + $0x128] sm:$0xff]
  %v157 = vld [vmem:[%s1 + $0x130] sm:$0xff]
  %v158 = vld [vmem:[%s1 + $0x138] sm:$0xff]
  %v159 = vld [vmem:[%s1 + $0x140] sm:$0xff]
  %v160 = vld [vmem:[%s1 + $0x148] sm:$0xff]
  %v161 = vld [vmem:[%s1 + $0x150] sm:$0xff]
  %v162 = vld [vmem:[%s1 + $0x158] sm:$0xff]
  %v163 = vld [vmem:[%s1 + $0x160] sm:$0xff]
  %v164 = vld [vmem:[%s1 + $0x168] sm:$0xff]
  %v165 = vld [vmem:[%s1 + $0x170] sm:$0xff]
  %v166 = vld [vmem:[%s1 + $0x178] sm:$0xff]
  %v167 = vld [vmem:[%s2] sm:$0xff]
  %v168 = vld [vmem:[%s2 + $0x8] sm:$0xff]
  %v169 = vld [vmem:[%s2 + $0x10] sm:$0xff]
  %v170 = vld [vmem:[%s2 + $0x18] sm:$0xff]
  %v171 = vld [vmem:[%s3] sm:$0xff]
  %v172 = vld [vmem:[%s3 + $0x8] sm:$0xff]
  %v173 = vld [vmem:[%s3 + $0x10] sm:$0xff]
  %v174 = vld [vmem:[%s3 + $0x18] sm:$0xff]
  %v175 = vld [vmem:[%s3 + $0x20] sm:$0xff]
  %v176 = vld [vmem:[%s3 + $0x28] sm:$0xff]
  %v177 = vld [vmem:[%s3 + $0x30] sm:$0xff]
  %v178 = vld [vmem:[%s3 + $0x38] sm:$0xff]
  %v179 = vld [vmem:[%s4] sm:$0xff]
  %v180 = vld [vmem:[%s4 + $0x8] sm:$0xff]
  %v181 = vld [vmem:[%s4 + $0x10] sm:$0xff]
  %v182 = vld [vmem:[%s4 + $0x18] sm:$0xff]
  %v183 = vld [vmem:[%s4 + $0x20] sm:$0xff]
  %v184 = vld [vmem:[%s4 + $0x28] sm:$0xff]
  %v185 = vld [vmem:[%s4 + $0x30] sm:$0xff]
  %v186 = vld [vmem:[%s4 + $0x38] sm:$0xff]
  %v187 = vld [vmem:[%s5] sm:$0xff]
  %v188 = vld [vmem:[%s5 + $0x8] sm:$0xff]
  %v189 = vld [vmem:[%s5 + $0x10] sm:$0xff]
  %v190 = vld [vmem:[%s5 + $0x18] sm:$0xff]
  %vm191 = vcmask 523264
  %v193 = vsel %vm191, %v167, 0
  %v196 = vsel %vm191, %v168, 0
  %v199 = vsel %vm191, %v169, 0
  %v202 = vsel %vm191, %v170, 0
  %204 = vmatpush.msra.mxu0 0.0
  %205 = vmatpush.msra.mxu0 0.0
  %206 = vmatpush.msra.mxu0 0.0
  %207 = vmatpush.msra.mxu0 0.0
  %208 = vmatpush.msra.mxu0 0.0
  %209 = vmatpush.msra.mxu0 0.0
  %210 = vmatpush.msra.mxu0 0.0
  %211 = vmatpush.msra.mxu0 0.0
  %212 = vmatpush.msra.mxu0 %v78
  %213 = vmatpush.msra.mxu0 %v77
  %214 = vmatpush.msra.mxu0 %v76
  %215 = vmatpush.msra.mxu0 %v75
  %216 = vmatpush.msra.mxu0 %v74
  %217 = vmatpush.msra.mxu0 %v73
  %218 = vmatpush.msra.mxu0 %v72
  %219 = vmatpush.msra.mxu0 %v71
  %220 = vmatmul.f32.gmra.mxu0 %v193
  %v221 = vpop.f32.mrf.mxu0
  %v222 = vadd.f32 0.0, %v221
  %223 = vmatmul.f32.gmra.mxu0 %v196
  %v224 = vpop.f32.mrf.mxu0
  %v225 = vadd.f32 0.0, %v224
  %226 = vmatmul.f32.gmra.mxu0 %v199
  %v227 = vpop.f32.mrf.mxu0
  %v228 = vadd.f32 0.0, %v227
  %229 = vmatmul.f32.gmra.mxu0 %v202
  %v230 = vpop.f32.mrf.mxu0
  %v231 = vadd.f32 0.0, %v230
  %232 = vdwg.mxu0
  %233 = vmatpush.msra.mxu0 0.0
  %234 = vmatpush.msra.mxu0 0.0
  %235 = vmatpush.msra.mxu0 0.0
  %236 = vmatpush.msra.mxu0 0.0
  %237 = vmatpush.msra.mxu0 0.0
  %238 = vmatpush.msra.mxu0 0.0
  %239 = vmatpush.msra.mxu0 0.0
  %240 = vmatpush.msra.mxu0 0.0
  %241 = vmatpush.msra.mxu0 %v86
  %242 = vmatpush.msra.mxu0 %v85
  %243 = vmatpush.msra.mxu0 %v84
  %244 = vmatpush.msra.mxu0 %v83
  %245 = vmatpush.msra.mxu0 %v82
  %246 = vmatpush.msra.mxu0 %v81
  %247 = vmatpush.msra.mxu0 %v80
  %248 = vmatpush.msra.mxu0 %v79
  %249 = vmatmul.f32.gmra.mxu0 %v193
  %v250 = vpop.f32.mrf.mxu0
  %v251 = vadd.f32 0.0, %v250
  %252 = vmatmul.f32.gmra.mxu0 %v196
  %v253 = vpop.f32.mrf.mxu0
  %v254 = vadd.f32 0.0, %v253
  %255 = vmatmul.f32.gmra.mxu0 %v199
  %v256 = vpop.f32.mrf.mxu0
  %v257 = vadd.f32 0.0, %v256
  %258 = vmatmul.f32.gmra.mxu0 %v202
  %v259 = vpop.f32.mrf.mxu0
  %v260 = vadd.f32 0.0, %v259
  %261 = vdwg.mxu0
  %262 = vmatpush.msra.mxu0 0.0
  %263 = vmatpush.msra.mxu0 0.0
  %264 = vmatpush.msra.mxu0 0.0
  %265 = vmatpush.msra.mxu0 0.0
  %266 = vmatpush.msra.mxu0 0.0
  %267 = vmatpush.msra.mxu0 0.0
  %268 = vmatpush.msra.mxu0 0.0
  %269 = vmatpush.msra.mxu0 0.0
  %270 = vmatpush.msra.mxu0 %v94
  %271 = vmatpush.msra.mxu0 %v93
  %272 = vmatpush.msra.mxu0 %v92
  %273 = vmatpush.msra.mxu0 %v91
  %274 = vmatpush.msra.mxu0 %v90
  %275 = vmatpush.msra.mxu0 %v89
  %276 = vmatpush.msra.mxu0 %v88
  %277 = vmatpush.msra.mxu0 %v87
  %278 = vmatmul.f32.gmra.mxu0 %v193
  %v279 = vpop.f32.mrf.mxu0
  %v280 = vadd.f32 0.0, %v279
  %281 = vmatmul.f32.gmra.mxu0 %v196
  %v282 = vpop.f32.mrf.mxu0
  %v283 = vadd.f32 0.0, %v282
  %284 = vmatmul.f32.gmra.mxu0 %v199
  %v285 = vpop.f32.mrf.mxu0
  %v286 = vadd.f32 0.0, %v285
  %287 = vmatmul.f32.gmra.mxu0 %v202
  %v288 = vpop.f32.mrf.mxu0
  %v289 = vadd.f32 0.0, %v288
  %290 = vdwg.mxu0
  %291 = vmatpush.msra.mxu0 0.0
  %292 = vmatpush.msra.mxu0 0.0
  %293 = vmatpush.msra.mxu0 0.0
  %294 = vmatpush.msra.mxu0 0.0
  %295 = vmatpush.msra.mxu0 0.0
  %296 = vmatpush.msra.mxu0 0.0
  %297 = vmatpush.msra.mxu0 0.0
  %298 = vmatpush.msra.mxu0 0.0
  %299 = vmatpush.msra.mxu0 %v102
  %300 = vmatpush.msra.mxu0 %v101
  %301 = vmatpush.msra.mxu0 %v100
  %302 = vmatpush.msra.mxu0 %v99
  %303 = vmatpush.msra.mxu0 %v98
  %304 = vmatpush.msra.mxu0 %v97
  %305 = vmatpush.msra.mxu0 %v96
  %306 = vmatpush.msra.mxu0 %v95
  %307 = vmatmul.f32.gmra.mxu0 %v193
  %v308 = vpop.f32.mrf.mxu0
  %v309 = vadd.f32 0.0, %v308
  %310 = vmatmul.f32.gmra.mxu0 %v196
  %v311 = vpop.f32.mrf.mxu0
  %v312 = vadd.f32 0.0, %v311
  %313 = vmatmul.f32.gmra.mxu0 %v199
  %v314 = vpop.f32.mrf.mxu0
  %v315 = vadd.f32 0.0, %v314
  %316 = vmatmul.f32.gmra.mxu0 %v202
  %v317 = vpop.f32.mrf.mxu0
  %v318 = vadd.f32 0.0, %v317
  %319 = vdwg.mxu0
  %320 = vmatpush.msra.mxu0 0.0
  %321 = vmatpush.msra.mxu0 0.0
  %322 = vmatpush.msra.mxu0 0.0
  %323 = vmatpush.msra.mxu0 0.0
  %324 = vmatpush.msra.mxu0 0.0
  %325 = vmatpush.msra.mxu0 0.0
  %326 = vmatpush.msra.mxu0 0.0
  %327 = vmatpush.msra.mxu0 0.0
  %328 = vmatpush.msra.mxu0 %v110
  %329 = vmatpush.msra.mxu0 %v109
  %330 = vmatpush.msra.mxu0 %v108
  %331 = vmatpush.msra.mxu0 %v107
  %332 = vmatpush.msra.mxu0 %v106
  %333 = vmatpush.msra.mxu0 %v105
  %334 = vmatpush.msra.mxu0 %v104
  %335 = vmatpush.msra.mxu0 %v103
  %336 = vmatmul.f32.gmra.mxu0 %v193
  %v337 = vpop.f32.mrf.mxu0
  %v338 = vadd.f32 0.0, %v337
  %339 = vmatmul.f32.gmra.mxu0 %v196
  %v340 = vpop.f32.mrf.mxu0
  %v341 = vadd.f32 0.0, %v340
  %342 = vmatmul.f32.gmra.mxu0 %v199
  %v343 = vpop.f32.mrf.mxu0
  %v344 = vadd.f32 0.0, %v343
  %345 = vmatmul.f32.gmra.mxu0 %v202
  %v346 = vpop.f32.mrf.mxu0
  %v347 = vadd.f32 0.0, %v346
  %348 = vdwg.mxu0
  %349 = vmatpush.msra.mxu0 0.0
  %350 = vmatpush.msra.mxu0 0.0
  %351 = vmatpush.msra.mxu0 0.0
  %352 = vmatpush.msra.mxu0 0.0
  %353 = vmatpush.msra.mxu0 0.0
  %354 = vmatpush.msra.mxu0 0.0
  %355 = vmatpush.msra.mxu0 0.0
  %356 = vmatpush.msra.mxu0 0.0
  %357 = vmatpush.msra.mxu0 %v118
  %358 = vmatpush.msra.mxu0 %v117
  %359 = vmatpush.msra.mxu0 %v116
  %360 = vmatpush.msra.mxu0 %v115
  %361 = vmatpush.msra.mxu0 %v114
  %362 = vmatpush.msra.mxu0 %v113
  %363 = vmatpush.msra.mxu0 %v112
  %364 = vmatpush.msra.mxu0 %v111
  %365 = vmatmul.f32.gmra.mxu0 %v193
  %v366 = vpop.f32.mrf.mxu0
  %v367 = vadd.f32 0.0, %v366
  %368 = vmatmul.f32.gmra.mxu0 %v196
  %v369 = vpop.f32.mrf.mxu0
  %v370 = vadd.f32 0.0, %v369
  %371 = vmatmul.f32.gmra.mxu0 %v199
  %v372 = vpop.f32.mrf.mxu0
  %v373 = vadd.f32 0.0, %v372
  %374 = vmatmul.f32.gmra.mxu0 %v202
  %v375 = vpop.f32.mrf.mxu0
  %v376 = vadd.f32 0.0, %v375
  %377 = vdwg.mxu0
  %v379 = vsel %vm191, %v222, 0
  %v382 = vsel %vm191, %v225, 0
  %v385 = vsel %vm191, %v228, 0
  %v388 = vsel %vm191, %v231, 0
  %390 = vmatpush.msra.mxu0 0.0
  %391 = vmatpush.msra.mxu0 0.0
  %392 = vmatpush.msra.mxu0 0.0
  %393 = vmatpush.msra.mxu0 0.0
  %394 = vmatpush.msra.mxu0 0.0
  %395 = vmatpush.msra.mxu0 0.0
  %396 = vmatpush.msra.mxu0 0.0
  %397 = vmatpush.msra.mxu0 0.0
  %398 = vmatpush.msra.mxu0 %v178
  %399 = vmatpush.msra.mxu0 %v177
  %400 = vmatpush.msra.mxu0 %v176
  %401 = vmatpush.msra.mxu0 %v175
  %402 = vmatpush.msra.mxu0 %v174
  %403 = vmatpush.msra.mxu0 %v173
  %404 = vmatpush.msra.mxu0 %v172
  %405 = vmatpush.msra.mxu0 %v171
  %406 = vmatmul.f32.gmra.mxu0 %v379
  %v407 = vpop.f32.mrf.mxu0
  %v408 = vadd.f32 0.0, %v407
  %409 = vmatmul.f32.gmra.mxu0 %v382
  %v410 = vpop.f32.mrf.mxu0
  %v411 = vadd.f32 0.0, %v410
  %412 = vmatmul.f32.gmra.mxu0 %v385
  %v413 = vpop.f32.mrf.mxu0
  %v414 = vadd.f32 0.0, %v413
  %415 = vmatmul.f32.gmra.mxu0 %v388
  %v416 = vpop.f32.mrf.mxu0
  %v417 = vadd.f32 0.0, %v416
  %418 = vdwg.mxu0
  %v420 = vsel %vm191, %v251, 0
  %v423 = vsel %vm191, %v254, 0
  %v426 = vsel %vm191, %v257, 0
  %v429 = vsel %vm191, %v260, 0
  %431 = vmatpush.msra.mxu0 0.0
  %432 = vmatpush.msra.mxu0 0.0
  %433 = vmatpush.msra.mxu0 0.0
  %434 = vmatpush.msra.mxu0 0.0
  %435 = vmatpush.msra.mxu0 0.0
  %436 = vmatpush.msra.mxu0 0.0
  %437 = vmatpush.msra.mxu0 0.0
  %438 = vmatpush.msra.mxu0 0.0
  %439 = vmatpush.msra.mxu0 %v178
  %440 = vmatpush.msra.mxu0 %v177
  %441 = vmatpush.msra.mxu0 %v176
  %442 = vmatpush.msra.mxu0 %v175
  %443 = vmatpush.msra.mxu0 %v174
  %444 = vmatpush.msra.mxu0 %v173
  %445 = vmatpush.msra.mxu0 %v172
  %446 = vmatpush.msra.mxu0 %v171
  %447 = vmatmul.f32.gmra.mxu0 %v420
  %v448 = vpop.f32.mrf.mxu0
  %v449 = vadd.f32 0.0, %v448
  %450 = vmatmul.f32.gmra.mxu0 %v423
  %v451 = vpop.f32.mrf.mxu0
  %v452 = vadd.f32 0.0, %v451
  %453 = vmatmul.f32.gmra.mxu0 %v426
  %v454 = vpop.f32.mrf.mxu0
  %v455 = vadd.f32 0.0, %v454
  %456 = vmatmul.f32.gmra.mxu0 %v429
  %v457 = vpop.f32.mrf.mxu0
  %v458 = vadd.f32 0.0, %v457
  %459 = vdwg.mxu0
  %v461 = vsel %vm191, %v280, 0
  %v464 = vsel %vm191, %v283, 0
  %v467 = vsel %vm191, %v286, 0
  %v470 = vsel %vm191, %v289, 0
  %472 = vmatpush.msra.mxu0 0.0
  %473 = vmatpush.msra.mxu0 0.0
  %474 = vmatpush.msra.mxu0 0.0
  %475 = vmatpush.msra.mxu0 0.0
  %476 = vmatpush.msra.mxu0 0.0
  %477 = vmatpush.msra.mxu0 0.0
  %478 = vmatpush.msra.mxu0 0.0
  %479 = vmatpush.msra.mxu0 0.0
  %480 = vmatpush.msra.mxu0 %v178
  %481 = vmatpush.msra.mxu0 %v177
  %482 = vmatpush.msra.mxu0 %v176
  %483 = vmatpush.msra.mxu0 %v175
  %484 = vmatpush.msra.mxu0 %v174
  %485 = vmatpush.msra.mxu0 %v173
  %486 = vmatpush.msra.mxu0 %v172
  %487 = vmatpush.msra.mxu0 %v171
  %488 = vmatmul.f32.gmra.mxu0 %v461
  %v489 = vpop.f32.mrf.mxu0
  %v490 = vadd.f32 0.0, %v489
  %491 = vmatmul.f32.gmra.mxu0 %v464
  %v492 = vpop.f32.mrf.mxu0
  %v493 = vadd.f32 0.0, %v492
  %494 = vmatmul.f32.gmra.mxu0 %v467
  %v495 = vpop.f32.mrf.mxu0
  %v496 = vadd.f32 0.0, %v495
  %497 = vmatmul.f32.gmra.mxu0 %v470
  %v498 = vpop.f32.mrf.mxu0
  %v499 = vadd.f32 0.0, %v498
  %500 = vdwg.mxu0
  %v502 = vsel %vm191, %v309, 0
  %v505 = vsel %vm191, %v312, 0
  %v508 = vsel %vm191, %v315, 0
  %v511 = vsel %vm191, %v318, 0
  %513 = vmatpush.msra.mxu0 0.0
  %514 = vmatpush.msra.mxu0 0.0
  %515 = vmatpush.msra.mxu0 0.0
  %516 = vmatpush.msra.mxu0 0.0
  %517 = vmatpush.msra.mxu0 0.0
  %518 = vmatpush.msra.mxu0 0.0
  %519 = vmatpush.msra.mxu0 0.0
  %520 = vmatpush.msra.mxu0 0.0
  %521 = vmatpush.msra.mxu0 %v178
  %522 = vmatpush.msra.mxu0 %v177
  %523 = vmatpush.msra.mxu0 %v176
  %524 = vmatpush.msra.mxu0 %v175
  %525 = vmatpush.msra.mxu0 %v174
  %526 = vmatpush.msra.mxu0 %v173
  %527 = vmatpush.msra.mxu0 %v172
  %528 = vmatpush.msra.mxu0 %v171
  %529 = vmatmul.f32.gmra.mxu0 %v502
  %v530 = vpop.f32.mrf.mxu0
  %v531 = vadd.f32 0.0, %v530
  %532 = vmatmul.f32.gmra.mxu0 %v505
  %v533 = vpop.f32.mrf.mxu0
  %v534 = vadd.f32 0.0, %v533
  %535 = vmatmul.f32.gmra.mxu0 %v508
  %v536 = vpop.f32.mrf.mxu0
  %v537 = vadd.f32 0.0, %v536
  %538 = vmatmul.f32.gmra.mxu0 %v511
  %v539 = vpop.f32.mrf.mxu0
  %v540 = vadd.f32 0.0, %v539
  %541 = vdwg.mxu0
  %v543 = vsel %vm191, %v338, 0
  %v546 = vsel %vm191, %v341, 0
  %v549 = vsel %vm191, %v344, 0
  %v552 = vsel %vm191, %v347, 0
  %554 = vmatpush.msra.mxu0 0.0
  %555 = vmatpush.msra.mxu0 0.0
  %556 = vmatpush.msra.mxu0 0.0
  %557 = vmatpush.msra.mxu0 0.0
  %558 = vmatpush.msra.mxu0 0.0
  %559 = vmatpush.msra.mxu0 0.0
  %560 = vmatpush.msra.mxu0 0.0
  %561 = vmatpush.msra.mxu0 0.0
  %562 = vmatpush.msra.mxu0 %v178
  %563 = vmatpush.msra.mxu0 %v177
  %564 = vmatpush.msra.mxu0 %v176
  %565 = vmatpush.msra.mxu0 %v175
  %566 = vmatpush.msra.mxu0 %v174
  %567 = vmatpush.msra.mxu0 %v173
  %568 = vmatpush.msra.mxu0 %v172
  %569 = vmatpush.msra.mxu0 %v171
  %570 = vmatmul.f32.gmra.mxu0 %v543
  %v571 = vpop.f32.mrf.mxu0
  %v572 = vadd.f32 0.0, %v571
  %573 = vmatmul.f32.gmra.mxu0 %v546
  %v574 = vpop.f32.mrf.mxu0
  %v575 = vadd.f32 0.0, %v574
  %576 = vmatmul.f32.gmra.mxu0 %v549
  %v577 = vpop.f32.mrf.mxu0
  %v578 = vadd.f32 0.0, %v577
  %579 = vmatmul.f32.gmra.mxu0 %v552
  %v580 = vpop.f32.mrf.mxu0
  %v581 = vadd.f32 0.0, %v580
  %582 = vdwg.mxu0
  %v584 = vsel %vm191, %v367, 0
  %v587 = vsel %vm191, %v370, 0
  %v590 = vsel %vm191, %v373, 0
  %v593 = vsel %vm191, %v376, 0
  %595 = vmatpush.msra.mxu0 0.0
  %596 = vmatpush.msra.mxu0 0.0
  %597 = vmatpush.msra.mxu0 0.0
  %598 = vmatpush.msra.mxu0 0.0
  %599 = vmatpush.msra.mxu0 0.0
  %600 = vmatpush.msra.mxu0 0.0
  %601 = vmatpush.msra.mxu0 0.0
  %602 = vmatpush.msra.mxu0 0.0
  %603 = vmatpush.msra.mxu0 %v178
  %604 = vmatpush.msra.mxu0 %v177
  %605 = vmatpush.msra.mxu0 %v176
  %606 = vmatpush.msra.mxu0 %v175
  %607 = vmatpush.msra.mxu0 %v174
  %608 = vmatpush.msra.mxu0 %v173
  %609 = vmatpush.msra.mxu0 %v172
  %610 = vmatpush.msra.mxu0 %v171
  %611 = vmatmul.f32.gmra.mxu0 %v584
  %v612 = vpop.f32.mrf.mxu0
  %v613 = vadd.f32 0.0, %v612
  %614 = vmatmul.f32.gmra.mxu0 %v587
  %v615 = vpop.f32.mrf.mxu0
  %v616 = vadd.f32 0.0, %v615
  %617 = vmatmul.f32.gmra.mxu0 %v590
  %v618 = vpop.f32.mrf.mxu0
  %v619 = vadd.f32 0.0, %v618
  %620 = vmatmul.f32.gmra.mxu0 %v593
  %v621 = vpop.f32.mrf.mxu0
  %v622 = vadd.f32 0.0, %v621
  %623 = vdwg.mxu0
  %vm624 = vcmask 261120
  %v626 = vsel %vm624, %v179, 0
  %v629 = vsel %vm624, %v180, 0
  %v632 = vsel %vm624, %v181, 0
  %v635 = vsel %vm624, %v182, 0
  %v638 = vsel %vm624, %v183, 0
  %v641 = vsel %vm624, %v184, 0
  %v644 = vsel %vm624, %v185, 0
  %v647 = vsel %vm624, %v186, 0
  %649 = vmatpush.msra.mxu0 0.0
  %650 = vmatpush.msra.mxu0 0.0
  %651 = vmatpush.msra.mxu0 0.0
  %652 = vmatpush.msra.mxu0 0.0
  %653 = vmatpush.msra.mxu0 0.0
  %654 = vmatpush.msra.mxu0 0.0
  %655 = vmatpush.msra.mxu0 0.0
  %656 = vmatpush.msra.mxu0 0.0
  %657 = vmatpush.msra.mxu0 0.0
  %658 = vmatpush.msra.mxu0 0.0
  %659 = vmatpush.msra.mxu0 0.0
  %660 = vmatpush.msra.mxu0 0.0
  %661 = vmatpush.msra.mxu0 %v417
  %662 = vmatpush.msra.mxu0 %v414
  %663 = vmatpush.msra.mxu0 %v411
  %664 = vmatpush.msra.mxu0 %v408
  %665 = vmatmul.f32.gmra.mxu0 %v626
  %v666 = vpop.f32.mrf.mxu0
  %v667 = vadd.f32 0.0, %v666
  %668 = vmatmul.f32.gmra.mxu0 %v629
  %v669 = vpop.f32.mrf.mxu0
  %v670 = vadd.f32 0.0, %v669
  %671 = vmatmul.f32.gmra.mxu0 %v632
  %v672 = vpop.f32.mrf.mxu0
  %v673 = vadd.f32 0.0, %v672
  %674 = vmatmul.f32.gmra.mxu0 %v635
  %v675 = vpop.f32.mrf.mxu0
  %v676 = vadd.f32 0.0, %v675
  %677 = vmatmul.f32.gmra.mxu0 %v638
  %v678 = vpop.f32.mrf.mxu0
  %v679 = vadd.f32 0.0, %v678
  %680 = vmatmul.f32.gmra.mxu0 %v641
  %v681 = vpop.f32.mrf.mxu0
  %v682 = vadd.f32 0.0, %v681
  %683 = vmatmul.f32.gmra.mxu0 %v644
  %v684 = vpop.f32.mrf.mxu0
  %v685 = vadd.f32 0.0, %v684
  %686 = vmatmul.f32.gmra.mxu0 %v647
  %v687 = vpop.f32.mrf.mxu0
  %v688 = vadd.f32 0.0, %v687
  %689 = vdwg.mxu0
  %690 = vmatpush.msra.mxu0 0.0
  %691 = vmatpush.msra.mxu0 0.0
  %692 = vmatpush.msra.mxu0 0.0
  %693 = vmatpush.msra.mxu0 0.0
  %694 = vmatpush.msra.mxu0 0.0
  %695 = vmatpush.msra.mxu0 0.0
  %696 = vmatpush.msra.mxu0 0.0
  %697 = vmatpush.msra.mxu0 0.0
  %698 = vmatpush.msra.mxu0 0.0
  %699 = vmatpush.msra.mxu0 0.0
  %700 = vmatpush.msra.mxu0 0.0
  %701 = vmatpush.msra.mxu0 0.0
  %702 = vmatpush.msra.mxu0 %v458
  %703 = vmatpush.msra.mxu0 %v455
  %704 = vmatpush.msra.mxu0 %v452
  %705 = vmatpush.msra.mxu0 %v449
  %706 = vmatmul.f32.gmra.mxu0 %v626
  %v707 = vpop.f32.mrf.mxu0
  %v708 = vadd.f32 0.0, %v707
  %709 = vmatmul.f32.gmra.mxu0 %v629
  %v710 = vpop.f32.mrf.mxu0
  %v711 = vadd.f32 0.0, %v710
  %712 = vmatmul.f32.gmra.mxu0 %v632
  %v713 = vpop.f32.mrf.mxu0
  %v714 = vadd.f32 0.0, %v713
  %715 = vmatmul.f32.gmra.mxu0 %v635
  %v716 = vpop.f32.mrf.mxu0
  %v717 = vadd.f32 0.0, %v716
  %718 = vmatmul.f32.gmra.mxu0 %v638
  %v719 = vpop.f32.mrf.mxu0
  %v720 = vadd.f32 0.0, %v719
  %721 = vmatmul.f32.gmra.mxu0 %v641
  %v722 = vpop.f32.mrf.mxu0
  %v723 = vadd.f32 0.0, %v722
  %724 = vmatmul.f32.gmra.mxu0 %v644
  %v725 = vpop.f32.mrf.mxu0
  %v726 = vadd.f32 0.0, %v725
  %727 = vmatmul.f32.gmra.mxu0 %v647
  %v728 = vpop.f32.mrf.mxu0
  %v729 = vadd.f32 0.0, %v728
  %730 = vdwg.mxu0
  %731 = vmatpush.msra.mxu0 0.0
  %732 = vmatpush.msra.mxu0 0.0
  %733 = vmatpush.msra.mxu0 0.0
  %734 = vmatpush.msra.mxu0 0.0
  %735 = vmatpush.msra.mxu0 0.0
  %736 = vmatpush.msra.mxu0 0.0
  %737 = vmatpush.msra.mxu0 0.0
  %738 = vmatpush.msra.mxu0 0.0
  %739 = vmatpush.msra.mxu0 0.0
  %740 = vmatpush.msra.mxu0 0.0
  %741 = vmatpush.msra.mxu0 0.0
  %742 = vmatpush.msra.mxu0 0.0
  %743 = vmatpush.msra.mxu0 %v499
  %744 = vmatpush.msra.mxu0 %v496
  %745 = vmatpush.msra.mxu0 %v493
  %746 = vmatpush.msra.mxu0 %v490
  %747 = vmatmul.f32.gmra.mxu0 %v626
  %v748 = vpop.f32.mrf.mxu0
  %v749 = vadd.f32 0.0, %v748
  %750 = vmatmul.f32.gmra.mxu0 %v629
  %v751 = vpop.f32.mrf.mxu0
  %v752 = vadd.f32 0.0, %v751
  %753 = vmatmul.f32.gmra.mxu0 %v632
  %v754 = vpop.f32.mrf.mxu0
  %v755 = vadd.f32 0.0, %v754
  %756 = vmatmul.f32.gmra.mxu0 %v635
  %v757 = vpop.f32.mrf.mxu0
  %v758 = vadd.f32 0.0, %v757
  %759 = vmatmul.f32.gmra.mxu0 %v638
  %v760 = vpop.f32.mrf.mxu0
  %v761 = vadd.f32 0.0, %v760
  %762 = vmatmul.f32.gmra.mxu0 %v641
  %v763 = vpop.f32.mrf.mxu0
  %v764 = vadd.f32 0.0, %v763
  %765 = vmatmul.f32.gmra.mxu0 %v644
  %v766 = vpop.f32.mrf.mxu0
  %v767 = vadd.f32 0.0, %v766
  %768 = vmatmul.f32.gmra.mxu0 %v647
  %v769 = vpop.f32.mrf.mxu0
  %v770 = vadd.f32 0.0, %v769
  %771 = vdwg.mxu0
  %772 = vmatpush.msra.mxu0 0.0
  %773 = vmatpush.msra.mxu0 0.0
  %774 = vmatpush.msra.mxu0 0.0
  %775 = vmatpush.msra.mxu0 0.0
  %776 = vmatpush.msra.mxu0 0.0
  %777 = vmatpush.msra.mxu0 0.0
  %778 = vmatpush.msra.mxu0 0.0
  %779 = vmatpush.msra.mxu0 0.0
  %780 = vmatpush.msra.mxu0 0.0
  %781 = vmatpush.msra.mxu0 0.0
  %782 = vmatpush.msra.mxu0 0.0
  %783 = vmatpush.msra.mxu0 0.0
  %784 = vmatpush.msra.mxu0 %v540
  %785 = vmatpush.msra.mxu0 %v537
  %786 = vmatpush.msra.mxu0 %v534
  %787 = vmatpush.msra.mxu0 %v531
  %788 = vmatmul.f32.gmra.mxu0 %v626
  %v789 = vpop.f32.mrf.mxu0
  %v790 = vadd.f32 0.0, %v789
  %791 = vmatmul.f32.gmra.mxu0 %v629
  %v792 = vpop.f32.mrf.mxu0
  %v793 = vadd.f32 0.0, %v792
  %794 = vmatmul.f32.gmra.mxu0 %v632
  %v795 = vpop.f32.mrf.mxu0
  %v796 = vadd.f32 0.0, %v795
  %797 = vmatmul.f32.gmra.mxu0 %v635
  %v798 = vpop.f32.mrf.mxu0
  %v799 = vadd.f32 0.0, %v798
  %800 = vmatmul.f32.gmra.mxu0 %v638
  %v801 = vpop.f32.mrf.mxu0
  %v802 = vadd.f32 0.0, %v801
  %803 = vmatmul.f32.gmra.mxu0 %v641
  %v804 = vpop.f32.mrf.mxu0
  %v805 = vadd.f32 0.0, %v804
  %806 = vmatmul.f32.gmra.mxu0 %v644
  %v807 = vpop.f32.mrf.mxu0
  %v808 = vadd.f32 0.0, %v807
  %809 = vmatmul.f32.gmra.mxu0 %v647
  %v810 = vpop.f32.mrf.mxu0
  %v811 = vadd.f32 0.0, %v810
  %812 = vdwg.mxu0
  %813 = vmatpush.msra.mxu0 0.0
  %814 = vmatpush.msra.mxu0 0.0
  %815 = vmatpush.msra.mxu0 0.0
  %816 = vmatpush.msra.mxu0 0.0
  %817 = vmatpush.msra.mxu0 0.0
  %818 = vmatpush.msra.mxu0 0.0
  %819 = vmatpush.msra.mxu0 0.0
  %820 = vmatpush.msra.mxu0 0.0
  %821 = vmatpush.msra.mxu0 0.0
  %822 = vmatpush.msra.mxu0 0.0
  %823 = vmatpush.msra.mxu0 0.0
  %824 = vmatpush.msra.mxu0 0.0
  %825 = vmatpush.msra.mxu0 %v581
  %826 = vmatpush.msra.mxu0 %v578
  %827 = vmatpush.msra.mxu0 %v575
  %828 = vmatpush.msra.mxu0 %v572
  %829 = vmatmul.f32.gmra.mxu0 %v626
  %v830 = vpop.f32.mrf.mxu0
  %v831 = vadd.f32 0.0, %v830
  %832 = vmatmul.f32.gmra.mxu0 %v629
  %v833 = vpop.f32.mrf.mxu0
  %v834 = vadd.f32 0.0, %v833
  %835 = vmatmul.f32.gmra.mxu0 %v632
  %v836 = vpop.f32.mrf.mxu0
  %v837 = vadd.f32 0.0, %v836
  %838 = vmatmul.f32.gmra.mxu0 %v635
  %v839 = vpop.f32.mrf.mxu0
  %v840 = vadd.f32 0.0, %v839
  %841 = vmatmul.f32.gmra.mxu0 %v638
  %v842 = vpop.f32.mrf.mxu0
  %v843 = vadd.f32 0.0, %v842
  %844 = vmatmul.f32.gmra.mxu0 %v641
  %v845 = vpop.f32.mrf.mxu0
  %v846 = vadd.f32 0.0, %v845
  %847 = vmatmul.f32.gmra.mxu0 %v644
  %v848 = vpop.f32.mrf.mxu0
  %v849 = vadd.f32 0.0, %v848
  %850 = vmatmul.f32.gmra.mxu0 %v647
  %v851 = vpop.f32.mrf.mxu0
  %v852 = vadd.f32 0.0, %v851
  %853 = vdwg.mxu0
  %854 = vmatpush.msra.mxu0 0.0
  %855 = vmatpush.msra.mxu0 0.0
  %856 = vmatpush.msra.mxu0 0.0
  %857 = vmatpush.msra.mxu0 0.0
  %858 = vmatpush.msra.mxu0 0.0
  %859 = vmatpush.msra.mxu0 0.0
  %860 = vmatpush.msra.mxu0 0.0
  %861 = vmatpush.msra.mxu0 0.0
  %862 = vmatpush.msra.mxu0 0.0
  %863 = vmatpush.msra.mxu0 0.0
  %864 = vmatpush.msra.mxu0 0.0
  %865 = vmatpush.msra.mxu0 0.0
  %866 = vmatpush.msra.mxu0 %v622
  %867 = vmatpush.msra.mxu0 %v619
  %868 = vmatpush.msra.mxu0 %v616
  %869 = vmatpush.msra.mxu0 %v613
  %870 = vmatmul.f32.gmra.mxu0 %v626
  %v871 = vpop.f32.mrf.mxu0
  %v872 = vadd.f32 0.0, %v871
  %873 = vmatmul.f32.gmra.mxu0 %v629
  %v874 = vpop.f32.mrf.mxu0
  %v875 = vadd.f32 0.0, %v874
  %876 = vmatmul.f32.gmra.mxu0 %v632
  %v877 = vpop.f32.mrf.mxu0
  %v878 = vadd.f32 0.0, %v877
  %879 = vmatmul.f32.gmra.mxu0 %v635
  %v880 = vpop.f32.mrf.mxu0
  %v881 = vadd.f32 0.0, %v880
  %882 = vmatmul.f32.gmra.mxu0 %v638
  %v883 = vpop.f32.mrf.mxu0
  %v884 = vadd.f32 0.0, %v883
  %885 = vmatmul.f32.gmra.mxu0 %v641
  %v886 = vpop.f32.mrf.mxu0
  %v887 = vadd.f32 0.0, %v886
  %888 = vmatmul.f32.gmra.mxu0 %v644
  %v889 = vpop.f32.mrf.mxu0
  %v890 = vadd.f32 0.0, %v889
  %891 = vmatmul.f32.gmra.mxu0 %v647
  %v892 = vpop.f32.mrf.mxu0
  %v893 = vadd.f32 0.0, %v892
  %894 = vdwg.mxu0
  %v896 = vsel %vm624, %v667, 0
  %v899 = vsel %vm624, %v670, 0
  %v902 = vsel %vm624, %v673, 0
  %v905 = vsel %vm624, %v676, 0
  %v908 = vsel %vm624, %v679, 0
  %v911 = vsel %vm624, %v682, 0
  %v914 = vsel %vm624, %v685, 0
  %v917 = vsel %vm624, %v688, 0
  %919 = vmatpush.msra.mxu0 0.0
  %920 = vmatpush.msra.mxu0 0.0
  %921 = vmatpush.msra.mxu0 0.0
  %922 = vmatpush.msra.mxu0 0.0
  %923 = vmatpush.msra.mxu0 0.0
  %924 = vmatpush.msra.mxu0 0.0
  %925 = vmatpush.msra.mxu0 0.0
  %926 = vmatpush.msra.mxu0 0.0
  %927 = vmatpush.msra.mxu0 0.0
  %928 = vmatpush.msra.mxu0 0.0
  %929 = vmatpush.msra.mxu0 0.0
  %930 = vmatpush.msra.mxu0 0.0
  %931 = vmatpush.msra.mxu0 %v190
  %932 = vmatpush.msra.mxu0 %v189
  %933 = vmatpush.msra.mxu0 %v188
  %934 = vmatpush.msra.mxu0 %v187
  %935 = vmatmul.f32.gmra.mxu0 %v896
  %v936 = vpop.f32.mrf.mxu0
  %v937 = vadd.f32 0.0, %v936
  %938 = vmatmul.f32.gmra.mxu0 %v899
  %v939 = vpop.f32.mrf.mxu0
  %v940 = vadd.f32 0.0, %v939
  %941 = vmatmul.f32.gmra.mxu0 %v902
  %v942 = vpop.f32.mrf.mxu0
  %v943 = vadd.f32 0.0, %v942
  %944 = vmatmul.f32.gmra.mxu0 %v905
  %v945 = vpop.f32.mrf.mxu0
  %v946 = vadd.f32 0.0, %v945
  %947 = vmatmul.f32.gmra.mxu0 %v908
  %v948 = vpop.f32.mrf.mxu0
  %v949 = vadd.f32 0.0, %v948
  %950 = vmatmul.f32.gmra.mxu0 %v911
  %v951 = vpop.f32.mrf.mxu0
  %v952 = vadd.f32 0.0, %v951
  %953 = vmatmul.f32.gmra.mxu0 %v914
  %v954 = vpop.f32.mrf.mxu0
  %v955 = vadd.f32 0.0, %v954
  %956 = vmatmul.f32.gmra.mxu0 %v917
  %v957 = vpop.f32.mrf.mxu0
  %v958 = vadd.f32 0.0, %v957
  %959 = vdwg.mxu0
  %v961 = vsel %vm624, %v708, 0
  %v964 = vsel %vm624, %v711, 0
  %v967 = vsel %vm624, %v714, 0
  %v970 = vsel %vm624, %v717, 0
  %v973 = vsel %vm624, %v720, 0
  %v976 = vsel %vm624, %v723, 0
  %v979 = vsel %vm624, %v726, 0
  %v982 = vsel %vm624, %v729, 0
  %984 = vmatpush.msra.mxu0 0.0
  %985 = vmatpush.msra.mxu0 0.0
  %986 = vmatpush.msra.mxu0 0.0
  %987 = vmatpush.msra.mxu0 0.0
  %988 = vmatpush.msra.mxu0 0.0
  %989 = vmatpush.msra.mxu0 0.0
  %990 = vmatpush.msra.mxu0 0.0
  %991 = vmatpush.msra.mxu0 0.0
  %992 = vmatpush.msra.mxu0 0.0
  %993 = vmatpush.msra.mxu0 0.0
  %994 = vmatpush.msra.mxu0 0.0
  %995 = vmatpush.msra.mxu0 0.0
  %996 = vmatpush.msra.mxu0 %v190
  %997 = vmatpush.msra.mxu0 %v189
  %998 = vmatpush.msra.mxu0 %v188
  %999 = vmatpush.msra.mxu0 %v187
  %1000 = vmatmul.f32.gmra.mxu0 %v961
  %v1001 = vpop.f32.mrf.mxu0
  %v1002 = vadd.f32 0.0, %v1001
  %1003 = vmatmul.f32.gmra.mxu0 %v964
  %v1004 = vpop.f32.mrf.mxu0
  %v1005 = vadd.f32 0.0, %v1004
  %1006 = vmatmul.f32.gmra.mxu0 %v967
  %v1007 = vpop.f32.mrf.mxu0
  %v1008 = vadd.f32 0.0, %v1007
  %1009 = vmatmul.f32.gmra.mxu0 %v970
  %v1010 = vpop.f32.mrf.mxu0
  %v1011 = vadd.f32 0.0, %v1010
  %1012 = vmatmul.f32.gmra.mxu0 %v973
  %v1013 = vpop.f32.mrf.mxu0
  %v1014 = vadd.f32 0.0, %v1013
  %1015 = vmatmul.f32.gmra.mxu0 %v976
  %v1016 = vpop.f32.mrf.mxu0
  %v1017 = vadd.f32 0.0, %v1016
  %1018 = vmatmul.f32.gmra.mxu0 %v979
  %v1019 = vpop.f32.mrf.mxu0
  %v1020 = vadd.f32 0.0, %v1019
  %1021 = vmatmul.f32.gmra.mxu0 %v982
  %v1022 = vpop.f32.mrf.mxu0
  %v1023 = vadd.f32 0.0, %v1022
  %1024 = vdwg.mxu0
  %v1026 = vsel %vm624, %v749, 0
  %v1029 = vsel %vm624, %v752, 0
  %v1032 = vsel %vm624, %v755, 0
  %v1035 = vsel %vm624, %v758, 0
  %v1038 = vsel %vm624, %v761, 0
  %v1041 = vsel %vm624, %v764, 0
  %v1044 = vsel %vm624, %v767, 0
  %v1047 = vsel %vm624, %v770, 0
  %1049 = vmatpush.msra.mxu0 0.0
  %1050 = vmatpush.msra.mxu0 0.0
  %1051 = vmatpush.msra.mxu0 0.0
  %1052 = vmatpush.msra.mxu0 0.0
  %1053 = vmatpush.msra.mxu0 0.0
  %1054 = vmatpush.msra.mxu0 0.0
  %1055 = vmatpush.msra.mxu0 0.0
  %1056 = vmatpush.msra.mxu0 0.0
  %1057 = vmatpush.msra.mxu0 0.0
  %1058 = vmatpush.msra.mxu0 0.0
  %1059 = vmatpush.msra.mxu0 0.0
  %1060 = vmatpush.msra.mxu0 0.0
  %1061 = vmatpush.msra.mxu0 %v190
  %1062 = vmatpush.msra.mxu0 %v189
  %1063 = vmatpush.msra.mxu0 %v188
  %1064 = vmatpush.msra.mxu0 %v187
  %1065 = vmatmul.f32.gmra.mxu0 %v1026
  %v1066 = vpop.f32.mrf.mxu0
  %v1067 = vadd.f32 0.0, %v1066
  %1068 = vmatmul.f32.gmra.mxu0 %v1029
  %v1069 = vpop.f32.mrf.mxu0
  %v1070 = vadd.f32 0.0, %v1069
  %1071 = vmatmul.f32.gmra.mxu0 %v1032
  %v1072 = vpop.f32.mrf.mxu0
  %v1073 = vadd.f32 0.0, %v1072
  %1074 = vmatmul.f32.gmra.mxu0 %v1035
  %v1075 = vpop.f32.mrf.mxu0
  %v1076 = vadd.f32 0.0, %v1075
  %1077 = vmatmul.f32.gmra.mxu0 %v1038
  %v1078 = vpop.f32.mrf.mxu0
  %v1079 = vadd.f32 0.0, %v1078
  %1080 = vmatmul.f32.gmra.mxu0 %v1041
  %v1081 = vpop.f32.mrf.mxu0
  %v1082 = vadd.f32 0.0, %v1081
  %1083 = vmatmul.f32.gmra.mxu0 %v1044
  %v1084 = vpop.f32.mrf.mxu0
  %v1085 = vadd.f32 0.0, %v1084
  %1086 = vmatmul.f32.gmra.mxu0 %v1047
  %v1087 = vpop.f32.mrf.mxu0
  %v1088 = vadd.f32 0.0, %v1087
  %1089 = vdwg.mxu0
  %v1091 = vsel %vm624, %v790, 0
  %v1094 = vsel %vm624, %v793, 0
  %v1097 = vsel %vm624, %v796, 0
  %v1100 = vsel %vm624, %v799, 0
  %v1103 = vsel %vm624, %v802, 0
  %v1106 = vsel %vm624, %v805, 0
  %v1109 = vsel %vm624, %v808, 0
  %v1112 = vsel %vm624, %v811, 0
  %1114 = vmatpush.msra.mxu0 0.0
  %1115 = vmatpush.msra.mxu0 0.0
  %1116 = vmatpush.msra.mxu0 0.0
  %1117 = vmatpush.msra.mxu0 0.0
  %1118 = vmatpush.msra.mxu0 0.0
  %1119 = vmatpush.msra.mxu0 0.0
  %1120 = vmatpush.msra.mxu0 0.0
  %1121 = vmatpush.msra.mxu0 0.0
  %1122 = vmatpush.msra.mxu0 0.0
  %1123 = vmatpush.msra.mxu0 0.0
  %1124 = vmatpush.msra.mxu0 0.0
  %1125 = vmatpush.msra.mxu0 0.0
  %1126 = vmatpush.msra.mxu0 %v190
  %1127 = vmatpush.msra.mxu0 %v189
  %1128 = vmatpush.msra.mxu0 %v188
  %1129 = vmatpush.msra.mxu0 %v187
  %1130 = vmatmul.f32.gmra.mxu0 %v1091
  %v1131 = vpop.f32.mrf.mxu0
  %v1132 = vadd.f32 0.0, %v1131
  %1133 = vmatmul.f32.gmra.mxu0 %v1094
  %v1134 = vpop.f32.mrf.mxu0
  %v1135 = vadd.f32 0.0, %v1134
  %1136 = vmatmul.f32.gmra.mxu0 %v1097
  %v1137 = vpop.f32.mrf.mxu0
  %v1138 = vadd.f32 0.0, %v1137
  %1139 = vmatmul.f32.gmra.mxu0 %v1100
  %v1140 = vpop.f32.mrf.mxu0
  %v1141 = vadd.f32 0.0, %v1140
  %1142 = vmatmul.f32.gmra.mxu0 %v1103
  %v1143 = vpop.f32.mrf.mxu0
  %v1144 = vadd.f32 0.0, %v1143
  %1145 = vmatmul.f32.gmra.mxu0 %v1106
  %v1146 = vpop.f32.mrf.mxu0
  %v1147 = vadd.f32 0.0, %v1146
  %1148 = vmatmul.f32.gmra.mxu0 %v1109
  %v1149 = vpop.f32.mrf.mxu0
  %v1150 = vadd.f32 0.0, %v1149
  %1151 = vmatmul.f32.gmra.mxu0 %v1112
  %v1152 = vpop.f32.mrf.mxu0
  %v1153 = vadd.f32 0.0, %v1152
  %1154 = vdwg.mxu0
  %v1156 = vsel %vm624, %v831, 0
  %v1159 = vsel %vm624, %v834, 0
  %v1162 = vsel %vm624, %v837, 0
  %v1165 = vsel %vm624, %v840, 0
  %v1168 = vsel %vm624, %v843, 0
  %v1171 = vsel %vm624, %v846, 0
  %v1174 = vsel %vm624, %v849, 0
  %v1177 = vsel %vm624, %v852, 0
  %1179 = vmatpush.msra.mxu0 0.0
  %1180 = vmatpush.msra.mxu0 0.0
  %1181 = vmatpush.msra.mxu0 0.0
  %1182 = vmatpush.msra.mxu0 0.0
  %1183 = vmatpush.msra.mxu0 0.0
  %1184 = vmatpush.msra.mxu0 0.0
  %1185 = vmatpush.msra.mxu0 0.0
  %1186 = vmatpush.msra.mxu0 0.0
  %1187 = vmatpush.msra.mxu0 0.0
  %1188 = vmatpush.msra.mxu0 0.0
  %1189 = vmatpush.msra.mxu0 0.0
  %1190 = vmatpush.msra.mxu0 0.0
  %1191 = vmatpush.msra.mxu0 %v190
  %1192 = vmatpush.msra.mxu0 %v189
  %1193 = vmatpush.msra.mxu0 %v188
  %1194 = vmatpush.msra.mxu0 %v187
  %1195 = vmatmul.f32.gmra.mxu0 %v1156
  %v1196 = vpop.f32.mrf.mxu0
  %v1197 = vadd.f32 0.0, %v1196
  %1198 = vmatmul.f32.gmra.mxu0 %v1159
  %v1199 = vpop.f32.mrf.mxu0
  %v1200 = vadd.f32 0.0, %v1199
  %1201 = vmatmul.f32.gmra.mxu0 %v1162
  %v1202 = vpop.f32.mrf.mxu0
  %v1203 = vadd.f32 0.0, %v1202
  %1204 = vmatmul.f32.gmra.mxu0 %v1165
  %v1205 = vpop.f32.mrf.mxu0
  %v1206 = vadd.f32 0.0, %v1205
  %1207 = vmatmul.f32.gmra.mxu0 %v1168
  %v1208 = vpop.f32.mrf.mxu0
  %v1209 = vadd.f32 0.0, %v1208
  %1210 = vmatmul.f32.gmra.mxu0 %v1171
  %v1211 = vpop.f32.mrf.mxu0
  %v1212 = vadd.f32 0.0, %v1211
  %1213 = vmatmul.f32.gmra.mxu0 %v1174
  %v1214 = vpop.f32.mrf.mxu0
  %v1215 = vadd.f32 0.0, %v1214
  %1216 = vmatmul.f32.gmra.mxu0 %v1177
  %v1217 = vpop.f32.mrf.mxu0
  %v1218 = vadd.f32 0.0, %v1217
  %1219 = vdwg.mxu0
  %v1221 = vsel %vm624, %v872, 0
  %v1224 = vsel %vm624, %v875, 0
  %v1227 = vsel %vm624, %v878, 0
  %v1230 = vsel %vm624, %v881, 0
  %v1233 = vsel %vm624, %v884, 0
  %v1236 = vsel %vm624, %v887, 0
  %v1239 = vsel %vm624, %v890, 0
  %v1242 = vsel %vm624, %v893, 0
  %1244 = vmatpush.msra.mxu0 0.0
  %1245 = vmatpush.msra.mxu0 0.0
  %1246 = vmatpush.msra.mxu0 0.0
  %1247 = vmatpush.msra.mxu0 0.0
  %1248 = vmatpush.msra.mxu0 0.0
  %1249 = vmatpush.msra.mxu0 0.0
  %1250 = vmatpush.msra.mxu0 0.0
  %1251 = vmatpush.msra.mxu0 0.0
  %1252 = vmatpush.msra.mxu0 0.0
  %1253 = vmatpush.msra.mxu0 0.0
  %1254 = vmatpush.msra.mxu0 0.0
  %1255 = vmatpush.msra.mxu0 0.0
  %1256 = vmatpush.msra.mxu0 %v190
  %1257 = vmatpush.msra.mxu0 %v189
  %1258 = vmatpush.msra.mxu0 %v188
  %1259 = vmatpush.msra.mxu0 %v187
  %1260 = vmatmul.f32.gmra.mxu0 %v1221
  %v1261 = vpop.f32.mrf.mxu0
  %v1262 = vadd.f32 0.0, %v1261
  %1263 = vmatmul.f32.gmra.mxu0 %v1224
  %v1264 = vpop.f32.mrf.mxu0
  %v1265 = vadd.f32 0.0, %v1264
  %1266 = vmatmul.f32.gmra.mxu0 %v1227
  %v1267 = vpop.f32.mrf.mxu0
  %v1268 = vadd.f32 0.0, %v1267
  %1269 = vmatmul.f32.gmra.mxu0 %v1230
  %v1270 = vpop.f32.mrf.mxu0
  %v1271 = vadd.f32 0.0, %v1270
  %1272 = vmatmul.f32.gmra.mxu0 %v1233
  %v1273 = vpop.f32.mrf.mxu0
  %v1274 = vadd.f32 0.0, %v1273
  %1275 = vmatmul.f32.gmra.mxu0 %v1236
  %v1276 = vpop.f32.mrf.mxu0
  %v1277 = vadd.f32 0.0, %v1276
  %1278 = vmatmul.f32.gmra.mxu0 %v1239
  %v1279 = vpop.f32.mrf.mxu0
  %v1280 = vadd.f32 0.0, %v1279
  %1281 = vmatmul.f32.gmra.mxu0 %v1242
  %v1282 = vpop.f32.mrf.mxu0
  %v1283 = vadd.f32 0.0, %v1282
  %1284 = vdwg.mxu0
  %1285 = vmatpush.msra.mxu0 0.0
  %1286 = vmatpush.msra.mxu0 0.0
  %1287 = vmatpush.msra.mxu0 0.0
  %1288 = vmatpush.msra.mxu0 0.0
  %1289 = vmatpush.msra.mxu0 0.0
  %1290 = vmatpush.msra.mxu0 0.0
  %1291 = vmatpush.msra.mxu0 0.0
  %1292 = vmatpush.msra.mxu0 0.0
  %1293 = vmatpush.msra.mxu0 %v126
  %1294 = vmatpush.msra.mxu0 %v125
  %1295 = vmatpush.msra.mxu0 %v124
  %1296 = vmatpush.msra.mxu0 %v123
  %1297 = vmatpush.msra.mxu0 %v122
  %1298 = vmatpush.msra.mxu0 %v121
  %1299 = vmatpush.msra.mxu0 %v120
  %1300 = vmatpush.msra.mxu0 %v119
  %1301 = vmatmul.f32.gmra.mxu0 %v193
  %v1302 = vpop.f32.mrf.mxu0
  %v1303 = vadd.f32 0.0, %v1302
  %1304 = vmatmul.f32.gmra.mxu0 %v196
  %v1305 = vpop.f32.mrf.mxu0
  %v1306 = vadd.f32 0.0, %v1305
  %1307 = vmatmul.f32.gmra.mxu0 %v199
  %v1308 = vpop.f32.mrf.mxu0
  %v1309 = vadd.f32 0.0, %v1308
  %1310 = vmatmul.f32.gmra.mxu0 %v202
  %v1311 = vpop.f32.mrf.mxu0
  %v1312 = vadd.f32 0.0, %v1311
  %1313 = vdwg.mxu0
  %1314 = vmatpush.msra.mxu0 0.0
  %1315 = vmatpush.msra.mxu0 0.0
  %1316 = vmatpush.msra.mxu0 0.0
  %1317 = vmatpush.msra.mxu0 0.0
  %1318 = vmatpush.msra.mxu0 0.0
  %1319 = vmatpush.msra.mxu0 0.0
  %1320 = vmatpush.msra.mxu0 0.0
  %1321 = vmatpush.msra.mxu0 0.0
  %1322 = vmatpush.msra.mxu0 %v134
  %1323 = vmatpush.msra.mxu0 %v133
  %1324 = vmatpush.msra.mxu0 %v132
  %1325 = vmatpush.msra.mxu0 %v131
  %1326 = vmatpush.msra.mxu0 %v130
  %1327 = vmatpush.msra.mxu0 %v129
  %1328 = vmatpush.msra.mxu0 %v128
  %1329 = vmatpush.msra.mxu0 %v127
  %1330 = vmatmul.f32.gmra.mxu0 %v193
  %v1331 = vpop.f32.mrf.mxu0
  %v1332 = vadd.f32 0.0, %v1331
  %1333 = vmatmul.f32.gmra.mxu0 %v196
  %v1334 = vpop.f32.mrf.mxu0
  %v1335 = vadd.f32 0.0, %v1334
  %1336 = vmatmul.f32.gmra.mxu0 %v199
  %v1337 = vpop.f32.mrf.mxu0
  %v1338 = vadd.f32 0.0, %v1337
  %1339 = vmatmul.f32.gmra.mxu0 %v202
  %v1340 = vpop.f32.mrf.mxu0
  %v1341 = vadd.f32 0.0, %v1340
  %1342 = vdwg.mxu0
  %1343 = vmatpush.msra.mxu0 0.0
  %1344 = vmatpush.msra.mxu0 0.0
  %1345 = vmatpush.msra.mxu0 0.0
  %1346 = vmatpush.msra.mxu0 0.0
  %1347 = vmatpush.msra.mxu0 0.0
  %1348 = vmatpush.msra.mxu0 0.0
  %1349 = vmatpush.msra.mxu0 0.0
  %1350 = vmatpush.msra.mxu0 0.0
  %1351 = vmatpush.msra.mxu0 %v142
  %1352 = vmatpush.msra.mxu0 %v141
  %1353 = vmatpush.msra.mxu0 %v140
  %1354 = vmatpush.msra.mxu0 %v139
  %1355 = vmatpush.msra.mxu0 %v138
  %1356 = vmatpush.msra.mxu0 %v137
  %1357 = vmatpush.msra.mxu0 %v136
  %1358 = vmatpush.msra.mxu0 %v135
  %1359 = vmatmul.f32.gmra.mxu0 %v193
  %v1360 = vpop.f32.mrf.mxu0
  %v1361 = vadd.f32 0.0, %v1360
  %1362 = vmatmul.f32.gmra.mxu0 %v196
  %v1363 = vpop.f32.mrf.mxu0
  %v1364 = vadd.f32 0.0, %v1363
  %1365 = vmatmul.f32.gmra.mxu0 %v199
  %v1366 = vpop.f32.mrf.mxu0
  %v1367 = vadd.f32 0.0, %v1366
  %1368 = vmatmul.f32.gmra.mxu0 %v202
  %v1369 = vpop.f32.mrf.mxu0
  %v1370 = vadd.f32 0.0, %v1369
  %1371 = vdwg.mxu0
  %1372 = vmatpush.msra.mxu0 0.0
  %1373 = vmatpush.msra.mxu0 0.0
  %1374 = vmatpush.msra.mxu0 0.0
  %1375 = vmatpush.msra.mxu0 0.0
  %1376 = vmatpush.msra.mxu0 0.0
  %1377 = vmatpush.msra.mxu0 0.0
  %1378 = vmatpush.msra.mxu0 0.0
  %1379 = vmatpush.msra.mxu0 0.0
  %1380 = vmatpush.msra.mxu0 %v150
  %1381 = vmatpush.msra.mxu0 %v149
  %1382 = vmatpush.msra.mxu0 %v148
  %1383 = vmatpush.msra.mxu0 %v147
  %1384 = vmatpush.msra.mxu0 %v146
  %1385 = vmatpush.msra.mxu0 %v145
  %1386 = vmatpush.msra.mxu0 %v144
  %1387 = vmatpush.msra.mxu0 %v143
  %1388 = vmatmul.f32.gmra.mxu0 %v193
  %v1389 = vpop.f32.mrf.mxu0
  %v1390 = vadd.f32 0.0, %v1389
  %1391 = vmatmul.f32.gmra.mxu0 %v196
  %v1392 = vpop.f32.mrf.mxu0
  %v1393 = vadd.f32 0.0, %v1392
  %1394 = vmatmul.f32.gmra.mxu0 %v199
  %v1395 = vpop.f32.mrf.mxu0
  %v1396 = vadd.f32 0.0, %v1395
  %1397 = vmatmul.f32.gmra.mxu0 %v202
  %v1398 = vpop.f32.mrf.mxu0
  %v1399 = vadd.f32 0.0, %v1398
  %1400 = vdwg.mxu0
  %1401 = vmatpush.msra.mxu0 0.0
  %1402 = vmatpush.msra.mxu0 0.0
  %1403 = vmatpush.msra.mxu0 0.0
  %1404 = vmatpush.msra.mxu0 0.0
  %1405 = vmatpush.msra.mxu0 0.0
  %1406 = vmatpush.msra.mxu0 0.0
  %1407 = vmatpush.msra.mxu0 0.0
  %1408 = vmatpush.msra.mxu0 0.0
  %1409 = vmatpush.msra.mxu0 %v158
  %1410 = vmatpush.msra.mxu0 %v157
  %1411 = vmatpush.msra.mxu0 %v156
  %1412 = vmatpush.msra.mxu0 %v155
  %1413 = vmatpush.msra.mxu0 %v154
  %1414 = vmatpush.msra.mxu0 %v153
  %1415 = vmatpush.msra.mxu0 %v152
  %1416 = vmatpush.msra.mxu0 %v151
  %1417 = vmatmul.f32.gmra.mxu0 %v193
  %v1418 = vpop.f32.mrf.mxu0
  %v1419 = vadd.f32 0.0, %v1418
  %1420 = vmatmul.f32.gmra.mxu0 %v196
  %v1421 = vpop.f32.mrf.mxu0
  %v1422 = vadd.f32 0.0, %v1421
  %1423 = vmatmul.f32.gmra.mxu0 %v199
  %v1424 = vpop.f32.mrf.mxu0
  %v1425 = vadd.f32 0.0, %v1424
  %1426 = vmatmul.f32.gmra.mxu0 %v202
  %v1427 = vpop.f32.mrf.mxu0
  %v1428 = vadd.f32 0.0, %v1427
  %1429 = vdwg.mxu0
  %1430 = vmatpush.msra.mxu0 0.0
  %1431 = vmatpush.msra.mxu0 0.0
  %1432 = vmatpush.msra.mxu0 0.0
  %1433 = vmatpush.msra.mxu0 0.0
  %1434 = vmatpush.msra.mxu0 0.0
  %1435 = vmatpush.msra.mxu0 0.0
  %1436 = vmatpush.msra.mxu0 0.0
  %1437 = vmatpush.msra.mxu0 0.0
  %1438 = vmatpush.msra.mxu0 %v166
  %1439 = vmatpush.msra.mxu0 %v165
  %1440 = vmatpush.msra.mxu0 %v164
  %1441 = vmatpush.msra.mxu0 %v163
  %1442 = vmatpush.msra.mxu0 %v162
  %1443 = vmatpush.msra.mxu0 %v161
  %1444 = vmatpush.msra.mxu0 %v160
  %1445 = vmatpush.msra.mxu0 %v159
  %1446 = vmatmul.f32.gmra.mxu0 %v193
  %v1447 = vpop.f32.mrf.mxu0
  %v1448 = vadd.f32 0.0, %v1447
  %1449 = vmatmul.f32.gmra.mxu0 %v196
  %v1450 = vpop.f32.mrf.mxu0
  %v1451 = vadd.f32 0.0, %v1450
  %1452 = vmatmul.f32.gmra.mxu0 %v199
  %v1453 = vpop.f32.mrf.mxu0
  %v1454 = vadd.f32 0.0, %v1453
  %1455 = vmatmul.f32.gmra.mxu0 %v202
  %v1456 = vpop.f32.mrf.mxu0
  %v1457 = vadd.f32 0.0, %v1456
  %1458 = vdwg.mxu0
  %v1460 = vsel %vm191, %v1303, 0
  %v1463 = vsel %vm191, %v1306, 0
  %v1466 = vsel %vm191, %v1309, 0
  %v1469 = vsel %vm191, %v1312, 0
  %1471 = vmatpush.msra.mxu0 0.0
  %1472 = vmatpush.msra.mxu0 0.0
  %1473 = vmatpush.msra.mxu0 0.0
  %1474 = vmatpush.msra.mxu0 0.0
  %1475 = vmatpush.msra.mxu0 0.0
  %1476 = vmatpush.msra.mxu0 0.0
  %1477 = vmatpush.msra.mxu0 0.0
  %1478 = vmatpush.msra.mxu0 0.0
  %1479 = vmatpush.msra.mxu0 %v178
  %1480 = vmatpush.msra.mxu0 %v177
  %1481 = vmatpush.msra.mxu0 %v176
  %1482 = vmatpush.msra.mxu0 %v175
  %1483 = vmatpush.msra.mxu0 %v174
  %1484 = vmatpush.msra.mxu0 %v173
  %1485 = vmatpush.msra.mxu0 %v172
  %1486 = vmatpush.msra.mxu0 %v171
  %1487 = vmatmul.f32.gmra.mxu0 %v1460
  %v1488 = vpop.f32.mrf.mxu0
  %v1489 = vadd.f32 0.0, %v1488
  %1490 = vmatmul.f32.gmra.mxu0 %v1463
  %v1491 = vpop.f32.mrf.mxu0
  %v1492 = vadd.f32 0.0, %v1491
  %1493 = vmatmul.f32.gmra.mxu0 %v1466
  %v1494 = vpop.f32.mrf.mxu0
  %v1495 = vadd.f32 0.0, %v1494
  %1496 = vmatmul.f32.gmra.mxu0 %v1469
  %v1497 = vpop.f32.mrf.mxu0
  %v1498 = vadd.f32 0.0, %v1497
  %1499 = vdwg.mxu0
  %v1501 = vsel %vm191, %v1332, 0
  %v1504 = vsel %vm191, %v1335, 0
  %v1507 = vsel %vm191, %v1338, 0
  %v1510 = vsel %vm191, %v1341, 0
  %1512 = vmatpush.msra.mxu0 0.0
  %1513 = vmatpush.msra.mxu0 0.0
  %1514 = vmatpush.msra.mxu0 0.0
  %1515 = vmatpush.msra.mxu0 0.0
  %1516 = vmatpush.msra.mxu0 0.0
  %1517 = vmatpush.msra.mxu0 0.0
  %1518 = vmatpush.msra.mxu0 0.0
  %1519 = vmatpush.msra.mxu0 0.0
  %1520 = vmatpush.msra.mxu0 %v178
  %1521 = vmatpush.msra.mxu0 %v177
  %1522 = vmatpush.msra.mxu0 %v176
  %1523 = vmatpush.msra.mxu0 %v175
  %1524 = vmatpush.msra.mxu0 %v174
  %1525 = vmatpush.msra.mxu0 %v173
  %1526 = vmatpush.msra.mxu0 %v172
  %1527 = vmatpush.msra.mxu0 %v171
  %1528 = vmatmul.f32.gmra.mxu0 %v1501
  %v1529 = vpop.f32.mrf.mxu0
  %v1530 = vadd.f32 0.0, %v1529
  %1531 = vmatmul.f32.gmra.mxu0 %v1504
  %v1532 = vpop.f32.mrf.mxu0
  %v1533 = vadd.f32 0.0, %v1532
  %1534 = vmatmul.f32.gmra.mxu0 %v1507
  %v1535 = vpop.f32.mrf.mxu0
  %v1536 = vadd.f32 0.0, %v1535
  %1537 = vmatmul.f32.gmra.mxu0 %v1510
  %v1538 = vpop.f32.mrf.mxu0
  %v1539 = vadd.f32 0.0, %v1538
  %1540 = vdwg.mxu0
  %v1542 = vsel %vm191, %v1361, 0
  %v1545 = vsel %vm191, %v1364, 0
  %v1548 = vsel %vm191, %v1367, 0
  %v1551 = vsel %vm191, %v1370, 0
  %1553 = vmatpush.msra.mxu0 0.0
  %1554 = vmatpush.msra.mxu0 0.0
  %1555 = vmatpush.msra.mxu0 0.0
  %1556 = vmatpush.msra.mxu0 0.0
  %1557 = vmatpush.msra.mxu0 0.0
  %1558 = vmatpush.msra.mxu0 0.0
  %1559 = vmatpush.msra.mxu0 0.0
  %1560 = vmatpush.msra.mxu0 0.0
  %1561 = vmatpush.msra.mxu0 %v178
  %1562 = vmatpush.msra.mxu0 %v177
  %1563 = vmatpush.msra.mxu0 %v176
  %1564 = vmatpush.msra.mxu0 %v175
  %1565 = vmatpush.msra.mxu0 %v174
  %1566 = vmatpush.msra.mxu0 %v173
  %1567 = vmatpush.msra.mxu0 %v172
  %1568 = vmatpush.msra.mxu0 %v171
  %1569 = vmatmul.f32.gmra.mxu0 %v1542
  %v1570 = vpop.f32.mrf.mxu0
  %v1571 = vadd.f32 0.0, %v1570
  %1572 = vmatmul.f32.gmra.mxu0 %v1545
  %v1573 = vpop.f32.mrf.mxu0
  %v1574 = vadd.f32 0.0, %v1573
  %1575 = vmatmul.f32.gmra.mxu0 %v1548
  %v1576 = vpop.f32.mrf.mxu0
  %v1577 = vadd.f32 0.0, %v1576
  %1578 = vmatmul.f32.gmra.mxu0 %v1551
  %v1579 = vpop.f32.mrf.mxu0
  %v1580 = vadd.f32 0.0, %v1579
  %1581 = vdwg.mxu0
  %v1583 = vsel %vm191, %v1390, 0
  %v1586 = vsel %vm191, %v1393, 0
  %v1589 = vsel %vm191, %v1396, 0
  %v1592 = vsel %vm191, %v1399, 0
  %1594 = vmatpush.msra.mxu0 0.0
  %1595 = vmatpush.msra.mxu0 0.0
  %1596 = vmatpush.msra.mxu0 0.0
  %1597 = vmatpush.msra.mxu0 0.0
  %1598 = vmatpush.msra.mxu0 0.0
  %1599 = vmatpush.msra.mxu0 0.0
  %1600 = vmatpush.msra.mxu0 0.0
  %1601 = vmatpush.msra.mxu0 0.0
  %1602 = vmatpush.msra.mxu0 %v178
  %1603 = vmatpush.msra.mxu0 %v177
  %1604 = vmatpush.msra.mxu0 %v176
  %1605 = vmatpush.msra.mxu0 %v175
  %1606 = vmatpush.msra.mxu0 %v174
  %1607 = vmatpush.msra.mxu0 %v173
  %1608 = vmatpush.msra.mxu0 %v172
  %1609 = vmatpush.msra.mxu0 %v171
  %1610 = vmatmul.f32.gmra.mxu0 %v1583
  %v1611 = vpop.f32.mrf.mxu0
  %v1612 = vadd.f32 0.0, %v1611
  %1613 = vmatmul.f32.gmra.mxu0 %v1586
  %v1614 = vpop.f32.mrf.mxu0
  %v1615 = vadd.f32 0.0, %v1614
  %1616 = vmatmul.f32.gmra.mxu0 %v1589
  %v1617 = vpop.f32.mrf.mxu0
  %v1618 = vadd.f32 0.0, %v1617
  %1619 = vmatmul.f32.gmra.mxu0 %v1592
  %v1620 = vpop.f32.mrf.mxu0
  %v1621 = vadd.f32 0.0, %v1620
  %1622 = vdwg.mxu0
  %v1624 = vsel %vm191, %v1419, 0
  %v1627 = vsel %vm191, %v1422, 0
  %v1630 = vsel %vm191, %v1425, 0
  %v1633 = vsel %vm191, %v1428, 0
  %1635 = vmatpush.msra.mxu0 0.0
  %1636 = vmatpush.msra.mxu0 0.0
  %1637 = vmatpush.msra.mxu0 0.0
  %1638 = vmatpush.msra.mxu0 0.0
  %1639 = vmatpush.msra.mxu0 0.0
  %1640 = vmatpush.msra.mxu0 0.0
  %1641 = vmatpush.msra.mxu0 0.0
  %1642 = vmatpush.msra.mxu0 0.0
  %1643 = vmatpush.msra.mxu0 %v178
  %1644 = vmatpush.msra.mxu0 %v177
  %1645 = vmatpush.msra.mxu0 %v176
  %1646 = vmatpush.msra.mxu0 %v175
  %1647 = vmatpush.msra.mxu0 %v174
  %1648 = vmatpush.msra.mxu0 %v173
  %1649 = vmatpush.msra.mxu0 %v172
  %1650 = vmatpush.msra.mxu0 %v171
  %1651 = vmatmul.f32.gmra.mxu0 %v1624
  %v1652 = vpop.f32.mrf.mxu0
  %v1653 = vadd.f32 0.0, %v1652
  %1654 = vmatmul.f32.gmra.mxu0 %v1627
  %v1655 = vpop.f32.mrf.mxu0
  %v1656 = vadd.f32 0.0, %v1655
  %1657 = vmatmul.f32.gmra.mxu0 %v1630
  %v1658 = vpop.f32.mrf.mxu0
  %v1659 = vadd.f32 0.0, %v1658
  %1660 = vmatmul.f32.gmra.mxu0 %v1633
  %v1661 = vpop.f32.mrf.mxu0
  %v1662 = vadd.f32 0.0, %v1661
  %1663 = vdwg.mxu0
  %v1665 = vsel %vm191, %v1448, 0
  %v1668 = vsel %vm191, %v1451, 0
  %v1671 = vsel %vm191, %v1454, 0
  %v1674 = vsel %vm191, %v1457, 0
  %1676 = vmatpush.msra.mxu0 0.0
  %1677 = vmatpush.msra.mxu0 0.0
  %1678 = vmatpush.msra.mxu0 0.0
  %1679 = vmatpush.msra.mxu0 0.0
  %1680 = vmatpush.msra.mxu0 0.0
  %1681 = vmatpush.msra.mxu0 0.0
  %1682 = vmatpush.msra.mxu0 0.0
  %1683 = vmatpush.msra.mxu0 0.0
  %1684 = vmatpush.msra.mxu0 %v178
  %1685 = vmatpush.msra.mxu0 %v177
  %1686 = vmatpush.msra.mxu0 %v176
  %1687 = vmatpush.msra.mxu0 %v175
  %1688 = vmatpush.msra.mxu0 %v174
  %1689 = vmatpush.msra.mxu0 %v173
  %1690 = vmatpush.msra.mxu0 %v172
  %1691 = vmatpush.msra.mxu0 %v171
  %1692 = vmatmul.f32.gmra.mxu0 %v1665
  %v1693 = vpop.f32.mrf.mxu0
  %v1694 = vadd.f32 0.0, %v1693
  %1695 = vmatmul.f32.gmra.mxu0 %v1668
  %v1696 = vpop.f32.mrf.mxu0
  %v1697 = vadd.f32 0.0, %v1696
  %1698 = vmatmul.f32.gmra.mxu0 %v1671
  %v1699 = vpop.f32.mrf.mxu0
  %v1700 = vadd.f32 0.0, %v1699
  %1701 = vmatmul.f32.gmra.mxu0 %v1674
  %v1702 = vpop.f32.mrf.mxu0
  %v1703 = vadd.f32 0.0, %v1702
  %1704 = vdwg.mxu0
  %1705 = vmatpush.msra.mxu0 0.0
  %1706 = vmatpush.msra.mxu0 0.0
  %1707 = vmatpush.msra.mxu0 0.0
  %1708 = vmatpush.msra.mxu0 0.0
  %1709 = vmatpush.msra.mxu0 0.0
  %1710 = vmatpush.msra.mxu0 0.0
  %1711 = vmatpush.msra.mxu0 0.0
  %1712 = vmatpush.msra.mxu0 0.0
  %1713 = vmatpush.msra.mxu0 0.0
  %1714 = vmatpush.msra.mxu0 0.0
  %1715 = vmatpush.msra.mxu0 0.0
  %1716 = vmatpush.msra.mxu0 0.0
  %1717 = vmatpush.msra.mxu0 %v1498
  %1718 = vmatpush.msra.mxu0 %v1495
  %1719 = vmatpush.msra.mxu0 %v1492
  %1720 = vmatpush.msra.mxu0 %v1489
  %1721 = vmatmul.f32.gmra.mxu0 %v626
  %v1722 = vpop.f32.mrf.mxu0
  %v1723 = vadd.f32 0.0, %v1722
  %1724 = vmatmul.f32.gmra.mxu0 %v629
  %v1725 = vpop.f32.mrf.mxu0
  %v1726 = vadd.f32 0.0, %v1725
  %1727 = vmatmul.f32.gmra.mxu0 %v632
  %v1728 = vpop.f32.mrf.mxu0
  %v1729 = vadd.f32 0.0, %v1728
  %1730 = vmatmul.f32.gmra.mxu0 %v635
  %v1731 = vpop.f32.mrf.mxu0
  %v1732 = vadd.f32 0.0, %v1731
  %1733 = vmatmul.f32.gmra.mxu0 %v638
  %v1734 = vpop.f32.mrf.mxu0
  %v1735 = vadd.f32 0.0, %v1734
  %1736 = vmatmul.f32.gmra.mxu0 %v641
  %v1737 = vpop.f32.mrf.mxu0
  %v1738 = vadd.f32 0.0, %v1737
  %1739 = vmatmul.f32.gmra.mxu0 %v644
  %v1740 = vpop.f32.mrf.mxu0
  %v1741 = vadd.f32 0.0, %v1740
  %1742 = vmatmul.f32.gmra.mxu0 %v647
  %v1743 = vpop.f32.mrf.mxu0
  %v1744 = vadd.f32 0.0, %v1743
  %1745 = vdwg.mxu0
  %1746 = vmatpush.msra.mxu0 0.0
  %1747 = vmatpush.msra.mxu0 0.0
  %1748 = vmatpush.msra.mxu0 0.0
  %1749 = vmatpush.msra.mxu0 0.0
  %1750 = vmatpush.msra.mxu0 0.0
  %1751 = vmatpush.msra.mxu0 0.0
  %1752 = vmatpush.msra.mxu0 0.0
  %1753 = vmatpush.msra.mxu0 0.0
  %1754 = vmatpush.msra.mxu0 0.0
  %1755 = vmatpush.msra.mxu0 0.0
  %1756 = vmatpush.msra.mxu0 0.0
  %1757 = vmatpush.msra.mxu0 0.0
  %1758 = vmatpush.msra.mxu0 %v1539
  %1759 = vmatpush.msra.mxu0 %v1536
  %1760 = vmatpush.msra.mxu0 %v1533
  %1761 = vmatpush.msra.mxu0 %v1530
  %1762 = vmatmul.f32.gmra.mxu0 %v626
  %v1763 = vpop.f32.mrf.mxu0
  %v1764 = vadd.f32 0.0, %v1763
  %1765 = vmatmul.f32.gmra.mxu0 %v629
  %v1766 = vpop.f32.mrf.mxu0
  %v1767 = vadd.f32 0.0, %v1766
  %1768 = vmatmul.f32.gmra.mxu0 %v632
  %v1769 = vpop.f32.mrf.mxu0
  %v1770 = vadd.f32 0.0, %v1769
  %1771 = vmatmul.f32.gmra.mxu0 %v635
  %v1772 = vpop.f32.mrf.mxu0
  %v1773 = vadd.f32 0.0, %v1772
  %1774 = vmatmul.f32.gmra.mxu0 %v638
  %v1775 = vpop.f32.mrf.mxu0
  %v1776 = vadd.f32 0.0, %v1775
  %1777 = vmatmul.f32.gmra.mxu0 %v641
  %v1778 = vpop.f32.mrf.mxu0
  %v1779 = vadd.f32 0.0, %v1778
  %1780 = vmatmul.f32.gmra.mxu0 %v644
  %v1781 = vpop.f32.mrf.mxu0
  %v1782 = vadd.f32 0.0, %v1781
  %1783 = vmatmul.f32.gmra.mxu0 %v647
  %v1784 = vpop.f32.mrf.mxu0
  %v1785 = vadd.f32 0.0, %v1784
  %1786 = vdwg.mxu0
  %1787 = vmatpush.msra.mxu0 0.0
  %1788 = vmatpush.msra.mxu0 0.0
  %1789 = vmatpush.msra.mxu0 0.0
  %1790 = vmatpush.msra.mxu0 0.0
  %1791 = vmatpush.msra.mxu0 0.0
  %1792 = vmatpush.msra.mxu0 0.0
  %1793 = vmatpush.msra.mxu0 0.0
  %1794 = vmatpush.msra.mxu0 0.0
  %1795 = vmatpush.msra.mxu0 0.0
  %1796 = vmatpush.msra.mxu0 0.0
  %1797 = vmatpush.msra.mxu0 0.0
  %1798 = vmatpush.msra.mxu0 0.0
  %1799 = vmatpush.msra.mxu0 %v1580
  %1800 = vmatpush.msra.mxu0 %v1577
  %1801 = vmatpush.msra.mxu0 %v1574
  %1802 = vmatpush.msra.mxu0 %v1571
  %1803 = vmatmul.f32.gmra.mxu0 %v626
  %v1804 = vpop.f32.mrf.mxu0
  %v1805 = vadd.f32 0.0, %v1804
  %1806 = vmatmul.f32.gmra.mxu0 %v629
  %v1807 = vpop.f32.mrf.mxu0
  %v1808 = vadd.f32 0.0, %v1807
  %1809 = vmatmul.f32.gmra.mxu0 %v632
  %v1810 = vpop.f32.mrf.mxu0
  %v1811 = vadd.f32 0.0, %v1810
  %1812 = vmatmul.f32.gmra.mxu0 %v635
  %v1813 = vpop.f32.mrf.mxu0
  %v1814 = vadd.f32 0.0, %v1813
  %1815 = vmatmul.f32.gmra.mxu0 %v638
  %v1816 = vpop.f32.mrf.mxu0
  %v1817 = vadd.f32 0.0, %v1816
  %1818 = vmatmul.f32.gmra.mxu0 %v641
  %v1819 = vpop.f32.mrf.mxu0
  %v1820 = vadd.f32 0.0, %v1819
  %1821 = vmatmul.f32.gmra.mxu0 %v644
  %v1822 = vpop.f32.mrf.mxu0
  %v1823 = vadd.f32 0.0, %v1822
  %1824 = vmatmul.f32.gmra.mxu0 %v647
  %v1825 = vpop.f32.mrf.mxu0
  %v1826 = vadd.f32 0.0, %v1825
  %1827 = vdwg.mxu0
  %1828 = vmatpush.msra.mxu0 0.0
  %1829 = vmatpush.msra.mxu0 0.0
  %1830 = vmatpush.msra.mxu0 0.0
  %1831 = vmatpush.msra.mxu0 0.0
  %1832 = vmatpush.msra.mxu0 0.0
  %1833 = vmatpush.msra.mxu0 0.0
  %1834 = vmatpush.msra.mxu0 0.0
  %1835 = vmatpush.msra.mxu0 0.0
  %1836 = vmatpush.msra.mxu0 0.0
  %1837 = vmatpush.msra.mxu0 0.0
  %1838 = vmatpush.msra.mxu0 0.0
  %1839 = vmatpush.msra.mxu0 0.0
  %1840 = vmatpush.msra.mxu0 %v1621
  %1841 = vmatpush.msra.mxu0 %v1618
  %1842 = vmatpush.msra.mxu0 %v1615
  %1843 = vmatpush.msra.mxu0 %v1612
  %1844 = vmatmul.f32.gmra.mxu0 %v626
  %v1845 = vpop.f32.mrf.mxu0
  %v1846 = vadd.f32 0.0, %v1845
  %1847 = vmatmul.f32.gmra.mxu0 %v629
  %v1848 = vpop.f32.mrf.mxu0
  %v1849 = vadd.f32 0.0, %v1848
  %1850 = vmatmul.f32.gmra.mxu0 %v632
  %v1851 = vpop.f32.mrf.mxu0
  %v1852 = vadd.f32 0.0, %v1851
  %1853 = vmatmul.f32.gmra.mxu0 %v635
  %v1854 = vpop.f32.mrf.mxu0
  %v1855 = vadd.f32 0.0, %v1854
  %1856 = vmatmul.f32.gmra.mxu0 %v638
  %v1857 = vpop.f32.mrf.mxu0
  %v1858 = vadd.f32 0.0, %v1857
  %1859 = vmatmul.f32.gmra.mxu0 %v641
  %v1860 = vpop.f32.mrf.mxu0
  %v1861 = vadd.f32 0.0, %v1860
  %1862 = vmatmul.f32.gmra.mxu0 %v644
  %v1863 = vpop.f32.mrf.mxu0
  %v1864 = vadd.f32 0.0, %v1863
  %1865 = vmatmul.f32.gmra.mxu0 %v647
  %v1866 = vpop.f32.mrf.mxu0
  %v1867 = vadd.f32 0.0, %v1866
  %1868 = vdwg.mxu0
  %1869 = vmatpush.msra.mxu0 0.0
  %1870 = vmatpush.msra.mxu0 0.0
  %1871 = vmatpush.msra.mxu0 0.0
  %1872 = vmatpush.msra.mxu0 0.0
  %1873 = vmatpush.msra.mxu0 0.0
  %1874 = vmatpush.msra.mxu0 0.0
  %1875 = vmatpush.msra.mxu0 0.0
  %1876 = vmatpush.msra.mxu0 0.0
  %1877 = vmatpush.msra.mxu0 0.0
  %1878 = vmatpush.msra.mxu0 0.0
  %1879 = vmatpush.msra.mxu0 0.0
  %1880 = vmatpush.msra.mxu0 0.0
  %1881 = vmatpush.msra.mxu0 %v1662
  %1882 = vmatpush.msra.mxu0 %v1659
  %1883 = vmatpush.msra.mxu0 %v1656
  %1884 = vmatpush.msra.mxu0 %v1653
  %1885 = vmatmul.f32.gmra.mxu0 %v626
  %v1886 = vpop.f32.mrf.mxu0
  %v1887 = vadd.f32 0.0, %v1886
  %1888 = vmatmul.f32.gmra.mxu0 %v629
  %v1889 = vpop.f32.mrf.mxu0
  %v1890 = vadd.f32 0.0, %v1889
  %1891 = vmatmul.f32.gmra.mxu0 %v632
  %v1892 = vpop.f32.mrf.mxu0
  %v1893 = vadd.f32 0.0, %v1892
  %1894 = vmatmul.f32.gmra.mxu0 %v635
  %v1895 = vpop.f32.mrf.mxu0
  %v1896 = vadd.f32 0.0, %v1895
  %1897 = vmatmul.f32.gmra.mxu0 %v638
  %v1898 = vpop.f32.mrf.mxu0
  %v1899 = vadd.f32 0.0, %v1898
  %1900 = vmatmul.f32.gmra.mxu0 %v641
  %v1901 = vpop.f32.mrf.mxu0
  %v1902 = vadd.f32 0.0, %v1901
  %1903 = vmatmul.f32.gmra.mxu0 %v644
  %v1904 = vpop.f32.mrf.mxu0
  %v1905 = vadd.f32 0.0, %v1904
  %1906 = vmatmul.f32.gmra.mxu0 %v647
  %v1907 = vpop.f32.mrf.mxu0
  %v1908 = vadd.f32 0.0, %v1907
  %1909 = vdwg.mxu0
  %1910 = vmatpush.msra.mxu0 0.0
  %1911 = vmatpush.msra.mxu0 0.0
  %1912 = vmatpush.msra.mxu0 0.0
  %1913 = vmatpush.msra.mxu0 0.0
  %1914 = vmatpush.msra.mxu0 0.0
  %1915 = vmatpush.msra.mxu0 0.0
  %1916 = vmatpush.msra.mxu0 0.0
  %1917 = vmatpush.msra.mxu0 0.0
  %1918 = vmatpush.msra.mxu0 0.0
  %1919 = vmatpush.msra.mxu0 0.0
  %1920 = vmatpush.msra.mxu0 0.0
  %1921 = vmatpush.msra.mxu0 0.0
  %1922 = vmatpush.msra.mxu0 %v1703
  %1923 = vmatpush.msra.mxu0 %v1700
  %1924 = vmatpush.msra.mxu0 %v1697
  %1925 = vmatpush.msra.mxu0 %v1694
  %1926 = vmatmul.f32.gmra.mxu0 %v626
  %v1927 = vpop.f32.mrf.mxu0
  %v1928 = vadd.f32 0.0, %v1927
  %1929 = vmatmul.f32.gmra.mxu0 %v629
  %v1930 = vpop.f32.mrf.mxu0
  %v1931 = vadd.f32 0.0, %v1930
  %1932 = vmatmul.f32.gmra.mxu0 %v632
  %v1933 = vpop.f32.mrf.mxu0
  %v1934 = vadd.f32 0.0, %v1933
  %1935 = vmatmul.f32.gmra.mxu0 %v635
  %v1936 = vpop.f32.mrf.mxu0
  %v1937 = vadd.f32 0.0, %v1936
  %1938 = vmatmul.f32.gmra.mxu0 %v638
  %v1939 = vpop.f32.mrf.mxu0
  %v1940 = vadd.f32 0.0, %v1939
  %1941 = vmatmul.f32.gmra.mxu0 %v641
  %v1942 = vpop.f32.mrf.mxu0
  %v1943 = vadd.f32 0.0, %v1942
  %1944 = vmatmul.f32.gmra.mxu0 %v644
  %v1945 = vpop.f32.mrf.mxu0
  %v1946 = vadd.f32 0.0, %v1945
  %1947 = vmatmul.f32.gmra.mxu0 %v647
  %v1948 = vpop.f32.mrf.mxu0
  %v1949 = vadd.f32 0.0, %v1948
  %1950 = vdwg.mxu0
  %v1952 = vsel %vm624, %v1723, 0
  %v1955 = vsel %vm624, %v1726, 0
  %v1958 = vsel %vm624, %v1729, 0
  %v1961 = vsel %vm624, %v1732, 0
  %v1964 = vsel %vm624, %v1735, 0
  %v1967 = vsel %vm624, %v1738, 0
  %v1970 = vsel %vm624, %v1741, 0
  %v1973 = vsel %vm624, %v1744, 0
  %1975 = vmatpush.msra.mxu0 0.0
  %1976 = vmatpush.msra.mxu0 0.0
  %1977 = vmatpush.msra.mxu0 0.0
  %1978 = vmatpush.msra.mxu0 0.0
  %1979 = vmatpush.msra.mxu0 0.0
  %1980 = vmatpush.msra.mxu0 0.0
  %1981 = vmatpush.msra.mxu0 0.0
  %1982 = vmatpush.msra.mxu0 0.0
  %1983 = vmatpush.msra.mxu0 0.0
  %1984 = vmatpush.msra.mxu0 0.0
  %1985 = vmatpush.msra.mxu0 0.0
  %1986 = vmatpush.msra.mxu0 0.0
  %1987 = vmatpush.msra.mxu0 %v190
  %1988 = vmatpush.msra.mxu0 %v189
  %1989 = vmatpush.msra.mxu0 %v188
  %1990 = vmatpush.msra.mxu0 %v187
  %1991 = vmatmul.f32.gmra.mxu0 %v1952
  %v1992 = vpop.f32.mrf.mxu0
  %v1993 = vadd.f32 0.0, %v1992
  %1994 = vmatmul.f32.gmra.mxu0 %v1955
  %v1995 = vpop.f32.mrf.mxu0
  %v1996 = vadd.f32 0.0, %v1995
  %1997 = vmatmul.f32.gmra.mxu0 %v1958
  %v1998 = vpop.f32.mrf.mxu0
  %v1999 = vadd.f32 0.0, %v1998
  %2000 = vmatmul.f32.gmra.mxu0 %v1961
  %v2001 = vpop.f32.mrf.mxu0
  %v2002 = vadd.f32 0.0, %v2001
  %2003 = vmatmul.f32.gmra.mxu0 %v1964
  %v2004 = vpop.f32.mrf.mxu0
  %v2005 = vadd.f32 0.0, %v2004
  %2006 = vmatmul.f32.gmra.mxu0 %v1967
  %v2007 = vpop.f32.mrf.mxu0
  %v2008 = vadd.f32 0.0, %v2007
  %2009 = vmatmul.f32.gmra.mxu0 %v1970
  %v2010 = vpop.f32.mrf.mxu0
  %v2011 = vadd.f32 0.0, %v2010
  %2012 = vmatmul.f32.gmra.mxu0 %v1973
  %v2013 = vpop.f32.mrf.mxu0
  %v2014 = vadd.f32 0.0, %v2013
  %2015 = vdwg.mxu0
  %v2017 = vsel %vm624, %v1764, 0
  %v2020 = vsel %vm624, %v1767, 0
  %v2023 = vsel %vm624, %v1770, 0
  %v2026 = vsel %vm624, %v1773, 0
  %v2029 = vsel %vm624, %v1776, 0
  %v2032 = vsel %vm624, %v1779, 0
  %v2035 = vsel %vm624, %v1782, 0
  %v2038 = vsel %vm624, %v1785, 0
  %2040 = vmatpush.msra.mxu0 0.0
  %2041 = vmatpush.msra.mxu0 0.0
  %2042 = vmatpush.msra.mxu0 0.0
  %2043 = vmatpush.msra.mxu0 0.0
  %2044 = vmatpush.msra.mxu0 0.0
  %2045 = vmatpush.msra.mxu0 0.0
  %2046 = vmatpush.msra.mxu0 0.0
  %2047 = vmatpush.msra.mxu0 0.0
  %2048 = vmatpush.msra.mxu0 0.0
  %2049 = vmatpush.msra.mxu0 0.0
  %2050 = vmatpush.msra.mxu0 0.0
  %2051 = vmatpush.msra.mxu0 0.0
  %2052 = vmatpush.msra.mxu0 %v190
  %2053 = vmatpush.msra.mxu0 %v189
  %2054 = vmatpush.msra.mxu0 %v188
  %2055 = vmatpush.msra.mxu0 %v187
  %2056 = vmatmul.f32.gmra.mxu0 %v2017
  %v2057 = vpop.f32.mrf.mxu0
  %v2058 = vadd.f32 0.0, %v2057
  %2059 = vmatmul.f32.gmra.mxu0 %v2020
  %v2060 = vpop.f32.mrf.mxu0
  %v2061 = vadd.f32 0.0, %v2060
  %2062 = vmatmul.f32.gmra.mxu0 %v2023
  %v2063 = vpop.f32.mrf.mxu0
  %v2064 = vadd.f32 0.0, %v2063
  %2065 = vmatmul.f32.gmra.mxu0 %v2026
  %v2066 = vpop.f32.mrf.mxu0
  %v2067 = vadd.f32 0.0, %v2066
  %2068 = vmatmul.f32.gmra.mxu0 %v2029
  %v2069 = vpop.f32.mrf.mxu0
  %v2070 = vadd.f32 0.0, %v2069
  %2071 = vmatmul.f32.gmra.mxu0 %v2032
  %v2072 = vpop.f32.mrf.mxu0
  %v2073 = vadd.f32 0.0, %v2072
  %2074 = vmatmul.f32.gmra.mxu0 %v2035
  %v2075 = vpop.f32.mrf.mxu0
  %v2076 = vadd.f32 0.0, %v2075
  %2077 = vmatmul.f32.gmra.mxu0 %v2038
  %v2078 = vpop.f32.mrf.mxu0
  %v2079 = vadd.f32 0.0, %v2078
  %2080 = vdwg.mxu0
  %v2082 = vsel %vm624, %v1805, 0
  %v2085 = vsel %vm624, %v1808, 0
  %v2088 = vsel %vm624, %v1811, 0
  %v2091 = vsel %vm624, %v1814, 0
  %v2094 = vsel %vm624, %v1817, 0
  %v2097 = vsel %vm624, %v1820, 0
  %v2100 = vsel %vm624, %v1823, 0
  %v2103 = vsel %vm624, %v1826, 0
  %2105 = vmatpush.msra.mxu0 0.0
  %2106 = vmatpush.msra.mxu0 0.0
  %2107 = vmatpush.msra.mxu0 0.0
  %2108 = vmatpush.msra.mxu0 0.0
  %2109 = vmatpush.msra.mxu0 0.0
  %2110 = vmatpush.msra.mxu0 0.0
  %2111 = vmatpush.msra.mxu0 0.0
  %2112 = vmatpush.msra.mxu0 0.0
  %2113 = vmatpush.msra.mxu0 0.0
  %2114 = vmatpush.msra.mxu0 0.0
  %2115 = vmatpush.msra.mxu0 0.0
  %2116 = vmatpush.msra.mxu0 0.0
  %2117 = vmatpush.msra.mxu0 %v190
  %2118 = vmatpush.msra.mxu0 %v189
  %2119 = vmatpush.msra.mxu0 %v188
  %2120 = vmatpush.msra.mxu0 %v187
  %2121 = vmatmul.f32.gmra.mxu0 %v2082
  %v2122 = vpop.f32.mrf.mxu0
  %v2123 = vadd.f32 0.0, %v2122
  %2124 = vmatmul.f32.gmra.mxu0 %v2085
  %v2125 = vpop.f32.mrf.mxu0
  %v2126 = vadd.f32 0.0, %v2125
  %2127 = vmatmul.f32.gmra.mxu0 %v2088
  %v2128 = vpop.f32.mrf.mxu0
  %v2129 = vadd.f32 0.0, %v2128
  %2130 = vmatmul.f32.gmra.mxu0 %v2091
  %v2131 = vpop.f32.mrf.mxu0
  %v2132 = vadd.f32 0.0, %v2131
  %2133 = vmatmul.f32.gmra.mxu0 %v2094
  %v2134 = vpop.f32.mrf.mxu0
  %v2135 = vadd.f32 0.0, %v2134
  %2136 = vmatmul.f32.gmra.mxu0 %v2097
  %v2137 = vpop.f32.mrf.mxu0
  %v2138 = vadd.f32 0.0, %v2137
  %2139 = vmatmul.f32.gmra.mxu0 %v2100
  %v2140 = vpop.f32.mrf.mxu0
  %v2141 = vadd.f32 0.0, %v2140
  %2142 = vmatmul.f32.gmra.mxu0 %v2103
  %v2143 = vpop.f32.mrf.mxu0
  %v2144 = vadd.f32 0.0, %v2143
  %2145 = vdwg.mxu0
  %v2147 = vsel %vm624, %v1846, 0
  %v2150 = vsel %vm624, %v1849, 0
  %v2153 = vsel %vm624, %v1852, 0
  %v2156 = vsel %vm624, %v1855, 0
  %v2159 = vsel %vm624, %v1858, 0
  %v2162 = vsel %vm624, %v1861, 0
  %v2165 = vsel %vm624, %v1864, 0
  %v2168 = vsel %vm624, %v1867, 0
  %2170 = vmatpush.msra.mxu0 0.0
  %2171 = vmatpush.msra.mxu0 0.0
  %2172 = vmatpush.msra.mxu0 0.0
  %2173 = vmatpush.msra.mxu0 0.0
  %2174 = vmatpush.msra.mxu0 0.0
  %2175 = vmatpush.msra.mxu0 0.0
  %2176 = vmatpush.msra.mxu0 0.0
  %2177 = vmatpush.msra.mxu0 0.0
  %2178 = vmatpush.msra.mxu0 0.0
  %2179 = vmatpush.msra.mxu0 0.0
  %2180 = vmatpush.msra.mxu0 0.0
  %2181 = vmatpush.msra.mxu0 0.0
  %2182 = vmatpush.msra.mxu0 %v190
  %2183 = vmatpush.msra.mxu0 %v189
  %2184 = vmatpush.msra.mxu0 %v188
  %2185 = vmatpush.msra.mxu0 %v187
  %2186 = vmatmul.f32.gmra.mxu0 %v2147
  %v2187 = vpop.f32.mrf.mxu0
  %v2188 = vadd.f32 0.0, %v2187
  %2189 = vmatmul.f32.gmra.mxu0 %v2150
  %v2190 = vpop.f32.mrf.mxu0
  %v2191 = vadd.f32 0.0, %v2190
  %2192 = vmatmul.f32.gmra.mxu0 %v2153
  %v2193 = vpop.f32.mrf.mxu0
  %v2194 = vadd.f32 0.0, %v2193
  %2195 = vmatmul.f32.gmra.mxu0 %v2156
  %v2196 = vpop.f32.mrf.mxu0
  %v2197 = vadd.f32 0.0, %v2196
  %2198 = vmatmul.f32.gmra.mxu0 %v2159
  %v2199 = vpop.f32.mrf.mxu0
  %v2200 = vadd.f32 0.0, %v2199
  %2201 = vmatmul.f32.gmra.mxu0 %v2162
  %v2202 = vpop.f32.mrf.mxu0
  %v2203 = vadd.f32 0.0, %v2202
  %2204 = vmatmul.f32.gmra.mxu0 %v2165
  %v2205 = vpop.f32.mrf.mxu0
  %v2206 = vadd.f32 0.0, %v2205
  %2207 = vmatmul.f32.gmra.mxu0 %v2168
  %v2208 = vpop.f32.mrf.mxu0
  %v2209 = vadd.f32 0.0, %v2208
  %2210 = vdwg.mxu0
  %v2212 = vsel %vm624, %v1887, 0
  %v2215 = vsel %vm624, %v1890, 0
  %v2218 = vsel %vm624, %v1893, 0
  %v2221 = vsel %vm624, %v1896, 0
  %v2224 = vsel %vm624, %v1899, 0
  %v2227 = vsel %vm624, %v1902, 0
  %v2230 = vsel %vm624, %v1905, 0
  %v2233 = vsel %vm624, %v1908, 0
  %2235 = vmatpush.msra.mxu0 0.0
  %2236 = vmatpush.msra.mxu0 0.0
  %2237 = vmatpush.msra.mxu0 0.0
  %2238 = vmatpush.msra.mxu0 0.0
  %2239 = vmatpush.msra.mxu0 0.0
  %2240 = vmatpush.msra.mxu0 0.0
  %2241 = vmatpush.msra.mxu0 0.0
  %2242 = vmatpush.msra.mxu0 0.0
  %2243 = vmatpush.msra.mxu0 0.0
  %2244 = vmatpush.msra.mxu0 0.0
  %2245 = vmatpush.msra.mxu0 0.0
  %2246 = vmatpush.msra.mxu0 0.0
  %2247 = vmatpush.msra.mxu0 %v190
  %2248 = vmatpush.msra.mxu0 %v189
  %2249 = vmatpush.msra.mxu0 %v188
  %2250 = vmatpush.msra.mxu0 %v187
  %2251 = vmatmul.f32.gmra.mxu0 %v2212
  %v2252 = vpop.f32.mrf.mxu0
  %v2253 = vadd.f32 0.0, %v2252
  %2254 = vmatmul.f32.gmra.mxu0 %v2215
  %v2255 = vpop.f32.mrf.mxu0
  %v2256 = vadd.f32 0.0, %v2255
  %2257 = vmatmul.f32.gmra.mxu0 %v2218
  %v2258 = vpop.f32.mrf.mxu0
  %v2259 = vadd.f32 0.0, %v2258
  %2260 = vmatmul.f32.gmra.mxu0 %v2221
  %v2261 = vpop.f32.mrf.mxu0
  %v2262 = vadd.f32 0.0, %v2261
  %2263 = vmatmul.f32.gmra.mxu0 %v2224
  %v2264 = vpop.f32.mrf.mxu0
  %v2265 = vadd.f32 0.0, %v2264
  %2266 = vmatmul.f32.gmra.mxu0 %v2227
  %v2267 = vpop.f32.mrf.mxu0
  %v2268 = vadd.f32 0.0, %v2267
  %2269 = vmatmul.f32.gmra.mxu0 %v2230
  %v2270 = vpop.f32.mrf.mxu0
  %v2271 = vadd.f32 0.0, %v2270
  %2272 = vmatmul.f32.gmra.mxu0 %v2233
  %v2273 = vpop.f32.mrf.mxu0
  %v2274 = vadd.f32 0.0, %v2273
  %2275 = vdwg.mxu0
  %v2277 = vsel %vm624, %v1928, 0
  %v2280 = vsel %vm624, %v1931, 0
  %v2283 = vsel %vm624, %v1934, 0
  %v2286 = vsel %vm624, %v1937, 0
  %v2289 = vsel %vm624, %v1940, 0
  %v2292 = vsel %vm624, %v1943, 0
  %v2295 = vsel %vm624, %v1946, 0
  %v2298 = vsel %vm624, %v1949, 0
  %2300 = vmatpush.msra.mxu0 0.0
  %2301 = vmatpush.msra.mxu0 0.0
  %2302 = vmatpush.msra.mxu0 0.0
  %2303 = vmatpush.msra.mxu0 0.0
  %2304 = vmatpush.msra.mxu0 0.0
  %2305 = vmatpush.msra.mxu0 0.0
  %2306 = vmatpush.msra.mxu0 0.0
  %2307 = vmatpush.msra.mxu0 0.0
  %2308 = vmatpush.msra.mxu0 0.0
  %2309 = vmatpush.msra.mxu0 0.0
  %2310 = vmatpush.msra.mxu0 0.0
  %2311 = vmatpush.msra.mxu0 0.0
  %2312 = vmatpush.msra.mxu0 %v190
  %2313 = vmatpush.msra.mxu0 %v189
  %2314 = vmatpush.msra.mxu0 %v188
  %2315 = vmatpush.msra.mxu0 %v187
  %2316 = vmatmul.f32.gmra.mxu0 %v2277
  %v2317 = vpop.f32.mrf.mxu0
  %v2318 = vadd.f32 0.0, %v2317
  %2319 = vmatmul.f32.gmra.mxu0 %v2280
  %v2320 = vpop.f32.mrf.mxu0
  %v2321 = vadd.f32 0.0, %v2320
  %2322 = vmatmul.f32.gmra.mxu0 %v2283
  %v2323 = vpop.f32.mrf.mxu0
  %v2324 = vadd.f32 0.0, %v2323
  %2325 = vmatmul.f32.gmra.mxu0 %v2286
  %v2326 = vpop.f32.mrf.mxu0
  %v2327 = vadd.f32 0.0, %v2326
  %2328 = vmatmul.f32.gmra.mxu0 %v2289
  %v2329 = vpop.f32.mrf.mxu0
  %v2330 = vadd.f32 0.0, %v2329
  %2331 = vmatmul.f32.gmra.mxu0 %v2292
  %v2332 = vpop.f32.mrf.mxu0
  %v2333 = vadd.f32 0.0, %v2332
  %2334 = vmatmul.f32.gmra.mxu0 %v2295
  %v2335 = vpop.f32.mrf.mxu0
  %v2336 = vadd.f32 0.0, %v2335
  %2337 = vmatmul.f32.gmra.mxu0 %v2298
  %v2338 = vpop.f32.mrf.mxu0
  %v2339 = vadd.f32 0.0, %v2338
  %2340 = vdwg.mxu0
  %v2341 = vsub.f32 %v71, %v937
  %v2342 = vsub.f32 %v72, %v940
  %v2343 = vsub.f32 %v73, %v943
  %v2344 = vsub.f32 %v74, %v946
  %v2345 = vsub.f32 %v75, %v949
  %v2346 = vsub.f32 %v76, %v952
  %v2347 = vsub.f32 %v77, %v955
  %v2348 = vsub.f32 %v78, %v958
  %v2349 = vsub.f32 %v79, %v1002
  %v2350 = vsub.f32 %v80, %v1005
  %v2351 = vsub.f32 %v81, %v1008
  %v2352 = vsub.f32 %v82, %v1011
  %v2353 = vsub.f32 %v83, %v1014
  %v2354 = vsub.f32 %v84, %v1017
  %v2355 = vsub.f32 %v85, %v1020
  %v2356 = vsub.f32 %v86, %v1023
  %v2357 = vsub.f32 %v87, %v1067
  %v2358 = vsub.f32 %v88, %v1070
  %v2359 = vsub.f32 %v89, %v1073
  %v2360 = vsub.f32 %v90, %v1076
  %v2361 = vsub.f32 %v91, %v1079
  %v2362 = vsub.f32 %v92, %v1082
  %v2363 = vsub.f32 %v93, %v1085
  %v2364 = vsub.f32 %v94, %v1088
  %v2365 = vsub.f32 %v95, %v1132
  %v2366 = vsub.f32 %v96, %v1135
  %v2367 = vsub.f32 %v97, %v1138
  %v2368 = vsub.f32 %v98, %v1141
  %v2369 = vsub.f32 %v99, %v1144
  %v2370 = vsub.f32 %v100, %v1147
  %v2371 = vsub.f32 %v101, %v1150
  %v2372 = vsub.f32 %v102, %v1153
  %v2373 = vsub.f32 %v103, %v1197
  %v2374 = vsub.f32 %v104, %v1200
  %v2375 = vsub.f32 %v105, %v1203
  %v2376 = vsub.f32 %v106, %v1206
  %v2377 = vsub.f32 %v107, %v1209
  %v2378 = vsub.f32 %v108, %v1212
  %v2379 = vsub.f32 %v109, %v1215
  %v2380 = vsub.f32 %v110, %v1218
  %v2381 = vsub.f32 %v111, %v1262
  %v2382 = vsub.f32 %v112, %v1265
  %v2383 = vsub.f32 %v113, %v1268
  %v2384 = vsub.f32 %v114, %v1271
  %v2385 = vsub.f32 %v115, %v1274
  %v2386 = vsub.f32 %v116, %v1277
  %v2387 = vsub.f32 %v117, %v1280
  %v2388 = vsub.f32 %v118, %v1283
  %v2389 = vsub.f32 %v119, %v1993
  %v2390 = vsub.f32 %v120, %v1996
  %v2391 = vsub.f32 %v121, %v1999
  %v2392 = vsub.f32 %v122, %v2002
  %v2393 = vsub.f32 %v123, %v2005
  %v2394 = vsub.f32 %v124, %v2008
  %v2395 = vsub.f32 %v125, %v2011
  %v2396 = vsub.f32 %v126, %v2014
  %v2397 = vsub.f32 %v127, %v2058
  %v2398 = vsub.f32 %v128, %v2061
  %v2399 = vsub.f32 %v129, %v2064
  %v2400 = vsub.f32 %v130, %v2067
  %v2401 = vsub.f32 %v131, %v2070
  %v2402 = vsub.f32 %v132, %v2073
  %v2403 = vsub.f32 %v133, %v2076
  %v2404 = vsub.f32 %v134, %v2079
  %v2405 = vsub.f32 %v135, %v2123
  %v2406 = vsub.f32 %v136, %v2126
  %v2407 = vsub.f32 %v137, %v2129
  %v2408 = vsub.f32 %v138, %v2132
  %v2409 = vsub.f32 %v139, %v2135
  %v2410 = vsub.f32 %v140, %v2138
  %v2411 = vsub.f32 %v141, %v2141
  %v2412 = vsub.f32 %v142, %v2144
  %v2413 = vsub.f32 %v143, %v2188
  %v2414 = vsub.f32 %v144, %v2191
  %v2415 = vsub.f32 %v145, %v2194
  %v2416 = vsub.f32 %v146, %v2197
  %v2417 = vsub.f32 %v147, %v2200
  %v2418 = vsub.f32 %v148, %v2203
  %v2419 = vsub.f32 %v149, %v2206
  %v2420 = vsub.f32 %v150, %v2209
  %v2421 = vsub.f32 %v151, %v2253
  %v2422 = vsub.f32 %v152, %v2256
  %v2423 = vsub.f32 %v153, %v2259
  %v2424 = vsub.f32 %v154, %v2262
  %v2425 = vsub.f32 %v155, %v2265
  %v2426 = vsub.f32 %v156, %v2268
  %v2427 = vsub.f32 %v157, %v2271
  %v2428 = vsub.f32 %v158, %v2274
  %v2429 = vsub.f32 %v159, %v2318
  %v2430 = vsub.f32 %v160, %v2321
  %v2431 = vsub.f32 %v161, %v2324
  %v2432 = vsub.f32 %v162, %v2327
  %v2433 = vsub.f32 %v163, %v2330
  %v2434 = vsub.f32 %v164, %v2333
  %v2435 = vsub.f32 %v165, %v2336
  %v2436 = vsub.f32 %v166, %v2339
  %v2437 = vsub.f32 %v2341, %v2389
  %v2438 = vsub.f32 %v2342, %v2390
  %v2439 = vsub.f32 %v2343, %v2391
  %v2440 = vsub.f32 %v2344, %v2392
  %v2441 = vsub.f32 %v2345, %v2393
  %v2442 = vsub.f32 %v2346, %v2394
  %v2443 = vsub.f32 %v2347, %v2395
  %v2444 = vsub.f32 %v2348, %v2396
  %v2445 = vsub.f32 %v2349, %v2397
  %v2446 = vsub.f32 %v2350, %v2398
  %v2447 = vsub.f32 %v2351, %v2399
  %v2448 = vsub.f32 %v2352, %v2400
  %v2449 = vsub.f32 %v2353, %v2401
  %v2450 = vsub.f32 %v2354, %v2402
  %v2451 = vsub.f32 %v2355, %v2403
  %v2452 = vsub.f32 %v2356, %v2404
  %v2453 = vsub.f32 %v2357, %v2405
  %v2454 = vsub.f32 %v2358, %v2406
  %v2455 = vsub.f32 %v2359, %v2407
  %v2456 = vsub.f32 %v2360, %v2408
  %v2457 = vsub.f32 %v2361, %v2409
  %v2458 = vsub.f32 %v2362, %v2410
  %v2459 = vsub.f32 %v2363, %v2411
  %v2460 = vsub.f32 %v2364, %v2412
  %v2461 = vsub.f32 %v2365, %v2413
  %v2462 = vsub.f32 %v2366, %v2414
  %v2463 = vsub.f32 %v2367, %v2415
  %v2464 = vsub.f32 %v2368, %v2416
  %v2465 = vsub.f32 %v2369, %v2417
  %v2466 = vsub.f32 %v2370, %v2418
  %v2467 = vsub.f32 %v2371, %v2419
  %v2468 = vsub.f32 %v2372, %v2420
  %v2469 = vsub.f32 %v2373, %v2421
  %v2470 = vsub.f32 %v2374, %v2422
  %v2471 = vsub.f32 %v2375, %v2423
  %v2472 = vsub.f32 %v2376, %v2424
  %v2473 = vsub.f32 %v2377, %v2425
  %v2474 = vsub.f32 %v2378, %v2426
  %v2475 = vsub.f32 %v2379, %v2427
  %v2476 = vsub.f32 %v2380, %v2428
  %v2477 = vsub.f32 %v2381, %v2429
  %v2478 = vsub.f32 %v2382, %v2430
  %v2479 = vsub.f32 %v2383, %v2431
  %v2480 = vsub.f32 %v2384, %v2432
  %v2481 = vsub.f32 %v2385, %v2433
  %v2482 = vsub.f32 %v2386, %v2434
  %v2483 = vsub.f32 %v2387, %v2435
  %v2484 = vsub.f32 %v2388, %v2436
  %v2485 = vand.u32 2147483647, %v2437
  %v2486 = vand.u32 2147483647, %v2438
  %v2487 = vand.u32 2147483647, %v2439
  %v2488 = vand.u32 2147483647, %v2440
  %v2489 = vand.u32 2147483647, %v2441
  %v2490 = vand.u32 2147483647, %v2442
  %v2491 = vand.u32 2147483647, %v2443
  %v2492 = vand.u32 2147483647, %v2444
  %v2493 = vand.u32 2147483647, %v2445
  %v2494 = vand.u32 2147483647, %v2446
  %v2495 = vand.u32 2147483647, %v2447
  %v2496 = vand.u32 2147483647, %v2448
  %v2497 = vand.u32 2147483647, %v2449
  %v2498 = vand.u32 2147483647, %v2450
  %v2499 = vand.u32 2147483647, %v2451
  %v2500 = vand.u32 2147483647, %v2452
  %v2501 = vand.u32 2147483647, %v2453
  %v2502 = vand.u32 2147483647, %v2454
  %v2503 = vand.u32 2147483647, %v2455
  %v2504 = vand.u32 2147483647, %v2456
  %v2505 = vand.u32 2147483647, %v2457
  %v2506 = vand.u32 2147483647, %v2458
  %v2507 = vand.u32 2147483647, %v2459
  %v2508 = vand.u32 2147483647, %v2460
  %v2509 = vand.u32 2147483647, %v2461
  %v2510 = vand.u32 2147483647, %v2462
  %v2511 = vand.u32 2147483647, %v2463
  %v2512 = vand.u32 2147483647, %v2464
  %v2513 = vand.u32 2147483647, %v2465
  %v2514 = vand.u32 2147483647, %v2466
  %v2515 = vand.u32 2147483647, %v2467
  %v2516 = vand.u32 2147483647, %v2468
  %v2517 = vand.u32 2147483647, %v2469
  %v2518 = vand.u32 2147483647, %v2470
  %v2519 = vand.u32 2147483647, %v2471
  %v2520 = vand.u32 2147483647, %v2472
  %v2521 = vand.u32 2147483647, %v2473
  %v2522 = vand.u32 2147483647, %v2474
  %v2523 = vand.u32 2147483647, %v2475
  %v2524 = vand.u32 2147483647, %v2476
  %v2525 = vand.u32 2147483647, %v2477
  %v2526 = vand.u32 2147483647, %v2478
  %v2527 = vand.u32 2147483647, %v2479
  %v2528 = vand.u32 2147483647, %v2480
  %v2529 = vand.u32 2147483647, %v2481
  %v2530 = vand.u32 2147483647, %v2482
  %v2531 = vand.u32 2147483647, %v2483
  %v2532 = vand.u32 2147483647, %v2484
  %v2533 = vsel %vm191, %v2485, 0.0
  %v2534 = vsel %vm191, %v2493, 0.0
  %v2535 = vadd.f32 %v2533, %v2534
  %v2536 = vsel %vm191, %v2501, 0.0
  %v2537 = vadd.f32 %v2535, %v2536
  %v2538 = vsel %vm191, %v2509, 0.0
  %v2539 = vadd.f32 %v2537, %v2538
  %v2540 = vsel %vm191, %v2517, 0.0
  %v2541 = vadd.f32 %v2539, %v2540
  %v2542 = vsel %vm191, %v2525, 0.0
  %v2543 = vadd.f32 %v2541, %v2542
  %v2544 = vsel %vm191, %v2486, 0.0
  %v2545 = vsel %vm191, %v2494, 0.0
  %v2546 = vadd.f32 %v2544, %v2545
  %v2547 = vsel %vm191, %v2502, 0.0
  %v2548 = vadd.f32 %v2546, %v2547
  %v2549 = vsel %vm191, %v2510, 0.0
  %v2550 = vadd.f32 %v2548, %v2549
  %v2551 = vsel %vm191, %v2518, 0.0
  %v2552 = vadd.f32 %v2550, %v2551
  %v2553 = vsel %vm191, %v2526, 0.0
  %v2554 = vadd.f32 %v2552, %v2553
  %v2555 = vsel %vm191, %v2487, 0.0
  %v2556 = vsel %vm191, %v2495, 0.0
  %v2557 = vadd.f32 %v2555, %v2556
  %v2558 = vsel %vm191, %v2503, 0.0
  %v2559 = vadd.f32 %v2557, %v2558
  %v2560 = vsel %vm191, %v2511, 0.0
  %v2561 = vadd.f32 %v2559, %v2560
  %v2562 = vsel %vm191, %v2519, 0.0
  %v2563 = vadd.f32 %v2561, %v2562
  %v2564 = vsel %vm191, %v2527, 0.0
  %v2565 = vadd.f32 %v2563, %v2564
  %v2566 = vsel %vm191, %v2488, 0.0
  %v2567 = vsel %vm191, %v2496, 0.0
  %v2568 = vadd.f32 %v2566, %v2567
  %v2569 = vsel %vm191, %v2504, 0.0
  %v2570 = vadd.f32 %v2568, %v2569
  %v2571 = vsel %vm191, %v2512, 0.0
  %v2572 = vadd.f32 %v2570, %v2571
  %v2573 = vsel %vm191, %v2520, 0.0
  %v2574 = vadd.f32 %v2572, %v2573
  %v2575 = vsel %vm191, %v2528, 0.0
  %v2576 = vadd.f32 %v2574, %v2575
  %v2577 = vsel %vm191, %v2489, 0.0
  %v2578 = vsel %vm191, %v2497, 0.0
  %v2579 = vadd.f32 %v2577, %v2578
  %v2580 = vsel %vm191, %v2505, 0.0
  %v2581 = vadd.f32 %v2579, %v2580
  %v2582 = vsel %vm191, %v2513, 0.0
  %v2583 = vadd.f32 %v2581, %v2582
  %v2584 = vsel %vm191, %v2521, 0.0
  %v2585 = vadd.f32 %v2583, %v2584
  %v2586 = vsel %vm191, %v2529, 0.0
  %v2587 = vadd.f32 %v2585, %v2586
  %v2588 = vsel %vm191, %v2490, 0.0
  %v2589 = vsel %vm191, %v2498, 0.0
  %v2590 = vadd.f32 %v2588, %v2589
  %v2591 = vsel %vm191, %v2506, 0.0
  %v2592 = vadd.f32 %v2590, %v2591
  %v2593 = vsel %vm191, %v2514, 0.0
  %v2594 = vadd.f32 %v2592, %v2593
  %v2595 = vsel %vm191, %v2522, 0.0
  %v2596 = vadd.f32 %v2594, %v2595
  %v2597 = vsel %vm191, %v2530, 0.0
  %v2598 = vadd.f32 %v2596, %v2597
  %v2599 = vsel %vm191, %v2491, 0.0
  %v2600 = vsel %vm191, %v2499, 0.0
  %v2601 = vadd.f32 %v2599, %v2600
  %v2602 = vsel %vm191, %v2507, 0.0
  %v2603 = vadd.f32 %v2601, %v2602
  %v2604 = vsel %vm191, %v2515, 0.0
  %v2605 = vadd.f32 %v2603, %v2604
  %v2606 = vsel %vm191, %v2523, 0.0
  %v2607 = vadd.f32 %v2605, %v2606
  %v2608 = vsel %vm191, %v2531, 0.0
  %v2609 = vadd.f32 %v2607, %v2608
  %v2610 = vsel %vm191, %v2492, 0.0
  %v2611 = vsel %vm191, %v2500, 0.0
  %v2612 = vadd.f32 %v2610, %v2611
  %v2613 = vsel %vm191, %v2508, 0.0
  %v2614 = vadd.f32 %v2612, %v2613
  %v2615 = vsel %vm191, %v2516, 0.0
  %v2616 = vadd.f32 %v2614, %v2615
  %v2617 = vsel %vm191, %v2524, 0.0
  %v2618 = vadd.f32 %v2616, %v2617
  %v2619 = vsel %vm191, %v2532, 0.0
  %v2620 = vadd.f32 %v2618, %v2619
  %v2621 = vsel %vm191, %v2543, 0.0
  %v2622 = vsel %vm191, %v2554, 0.0
  %v2623 = vadd.f32 %v2621, %v2622
  %v2624 = vsel %vm191, %v2565, 0.0
  %v2625 = vadd.f32 %v2623, %v2624
  %v2626 = vsel %vm191, %v2576, 0.0
  %v2627 = vadd.f32 %v2625, %v2626
  %v2628 = vsel %vm191, %v2587, 0.0
  %v2629 = vadd.f32 %v2627, %v2628
  %v2630 = vsel %vm191, %v2598, 0.0
  %v2631 = vadd.f32 %v2629, %v2630
  %v2632 = vsel %vm191, %v2609, 0.0
  %v2633 = vadd.f32 %v2631, %v2632
  %v2634 = vsel %vm191, %v2620, 0.0
  %v2635 = vadd.f32 %v2633, %v2634
  %2636 = vadd.xlane.f32.xlu0 %v2635
  %v2637 = vpop.xlane.xlu0 %2636
  %v2638 = vrot.slane %v2637, 4
  %v2639 = vadd.f32 %v2637, %v2638
  %v2640 = vrot.slane %v2639, 2
  %v2641 = vadd.f32 %v2639, %v2640
  %v2642 = vrot.slane %v2641, 1
  %v2643 = vadd.f32 %v2641, %v2642
  %s2644 = vtos %v2643
  %v2645 = vstv %s2644
  %v2646 = vadd.f32 %v2645, 0.0
  %v2647 = vld [vmem:[%s6] sm:$0xff]
  %v2648 = vld [vmem:[%s6 + $0x8] sm:$0xff]
  %v2649 = vld [vmem:[%s7] sm:$0xff]
  %v2650 = vld [vmem:[%s7 + $0x8] sm:$0xff]
  %v2651 = vld [vmem:[%s7 + $0x10] sm:$0xff]
  %v2652 = vld [vmem:[%s7 + $0x18] sm:$0xff]
  %v2653 = vld [vmem:[%s8] sm:$0xff]
  %v2654 = vld [vmem:[%s8 + $0x8] sm:$0xff]
  %v2655 = vld [vmem:[%s8 + $0x10] sm:$0xff]
  %v2656 = vld [vmem:[%s8 + $0x18] sm:$0xff]
  %v2657 = vld [vmem:[%s9] sm:$0xff]
  %v2658 = vld [vmem:[%s9 + $0x8] sm:$0xff]
  %v2660 = vsel %vm624, %v2647, 0
  %v2663 = vsel %vm624, %v2648, 0
  %2665 = vmatpush.msra.mxu0 0.0
  %2666 = vmatpush.msra.mxu0 0.0
  %2667 = vmatpush.msra.mxu0 0.0
  %2668 = vmatpush.msra.mxu0 0.0
  %2669 = vmatpush.msra.mxu0 0.0
  %2670 = vmatpush.msra.mxu0 0.0
  %2671 = vmatpush.msra.mxu0 0.0
  %2672 = vmatpush.msra.mxu0 0.0
  %2673 = vmatpush.msra.mxu0 0.0
  %2674 = vmatpush.msra.mxu0 0.0
  %2675 = vmatpush.msra.mxu0 0.0
  %2676 = vmatpush.msra.mxu0 0.0
  %2677 = vmatpush.msra.mxu0 %v417
  %2678 = vmatpush.msra.mxu0 %v414
  %2679 = vmatpush.msra.mxu0 %v411
  %2680 = vmatpush.msra.mxu0 %v408
  %2681 = vmatmul.f32.gmra.mxu0 %v2660
  %v2682 = vpop.f32.mrf.mxu0
  %v2683 = vadd.f32 0.0, %v2682
  %2684 = vmatmul.f32.gmra.mxu0 %v2663
  %v2685 = vpop.f32.mrf.mxu0
  %v2686 = vadd.f32 0.0, %v2685
  %2687 = vdwg.mxu0
  %2688 = vmatpush.msra.mxu0 0.0
  %2689 = vmatpush.msra.mxu0 0.0
  %2690 = vmatpush.msra.mxu0 0.0
  %2691 = vmatpush.msra.mxu0 0.0
  %2692 = vmatpush.msra.mxu0 0.0
  %2693 = vmatpush.msra.mxu0 0.0
  %2694 = vmatpush.msra.mxu0 0.0
  %2695 = vmatpush.msra.mxu0 0.0
  %2696 = vmatpush.msra.mxu0 0.0
  %2697 = vmatpush.msra.mxu0 0.0
  %2698 = vmatpush.msra.mxu0 0.0
  %2699 = vmatpush.msra.mxu0 0.0
  %2700 = vmatpush.msra.mxu0 %v458
  %2701 = vmatpush.msra.mxu0 %v455
  %2702 = vmatpush.msra.mxu0 %v452
  %2703 = vmatpush.msra.mxu0 %v449
  %2704 = vmatmul.f32.gmra.mxu0 %v2660
  %v2705 = vpop.f32.mrf.mxu0
  %v2706 = vadd.f32 0.0, %v2705
  %2707 = vmatmul.f32.gmra.mxu0 %v2663
  %v2708 = vpop.f32.mrf.mxu0
  %v2709 = vadd.f32 0.0, %v2708
  %2710 = vdwg.mxu0
  %2711 = vmatpush.msra.mxu0 0.0
  %2712 = vmatpush.msra.mxu0 0.0
  %2713 = vmatpush.msra.mxu0 0.0
  %2714 = vmatpush.msra.mxu0 0.0
  %2715 = vmatpush.msra.mxu0 0.0
  %2716 = vmatpush.msra.mxu0 0.0
  %2717 = vmatpush.msra.mxu0 0.0
  %2718 = vmatpush.msra.mxu0 0.0
  %2719 = vmatpush.msra.mxu0 0.0
  %2720 = vmatpush.msra.mxu0 0.0
  %2721 = vmatpush.msra.mxu0 0.0
  %2722 = vmatpush.msra.mxu0 0.0
  %2723 = vmatpush.msra.mxu0 %v499
  %2724 = vmatpush.msra.mxu0 %v496
  %2725 = vmatpush.msra.mxu0 %v493
  %2726 = vmatpush.msra.mxu0 %v490
  %2727 = vmatmul.f32.gmra.mxu0 %v2660
  %v2728 = vpop.f32.mrf.mxu0
  %v2729 = vadd.f32 0.0, %v2728
  %2730 = vmatmul.f32.gmra.mxu0 %v2663
  %v2731 = vpop.f32.mrf.mxu0
  %v2732 = vadd.f32 0.0, %v2731
  %2733 = vdwg.mxu0
  %2734 = vmatpush.msra.mxu0 0.0
  %2735 = vmatpush.msra.mxu0 0.0
  %2736 = vmatpush.msra.mxu0 0.0
  %2737 = vmatpush.msra.mxu0 0.0
  %2738 = vmatpush.msra.mxu0 0.0
  %2739 = vmatpush.msra.mxu0 0.0
  %2740 = vmatpush.msra.mxu0 0.0
  %2741 = vmatpush.msra.mxu0 0.0
  %2742 = vmatpush.msra.mxu0 0.0
  %2743 = vmatpush.msra.mxu0 0.0
  %2744 = vmatpush.msra.mxu0 0.0
  %2745 = vmatpush.msra.mxu0 0.0
  %2746 = vmatpush.msra.mxu0 %v540
  %2747 = vmatpush.msra.mxu0 %v537
  %2748 = vmatpush.msra.mxu0 %v534
  %2749 = vmatpush.msra.mxu0 %v531
  %2750 = vmatmul.f32.gmra.mxu0 %v2660
  %v2751 = vpop.f32.mrf.mxu0
  %v2752 = vadd.f32 0.0, %v2751
  %2753 = vmatmul.f32.gmra.mxu0 %v2663
  %v2754 = vpop.f32.mrf.mxu0
  %v2755 = vadd.f32 0.0, %v2754
  %2756 = vdwg.mxu0
  %2757 = vmatpush.msra.mxu0 0.0
  %2758 = vmatpush.msra.mxu0 0.0
  %2759 = vmatpush.msra.mxu0 0.0
  %2760 = vmatpush.msra.mxu0 0.0
  %2761 = vmatpush.msra.mxu0 0.0
  %2762 = vmatpush.msra.mxu0 0.0
  %2763 = vmatpush.msra.mxu0 0.0
  %2764 = vmatpush.msra.mxu0 0.0
  %2765 = vmatpush.msra.mxu0 0.0
  %2766 = vmatpush.msra.mxu0 0.0
  %2767 = vmatpush.msra.mxu0 0.0
  %2768 = vmatpush.msra.mxu0 0.0
  %2769 = vmatpush.msra.mxu0 %v581
  %2770 = vmatpush.msra.mxu0 %v578
  %2771 = vmatpush.msra.mxu0 %v575
  %2772 = vmatpush.msra.mxu0 %v572
  %2773 = vmatmul.f32.gmra.mxu0 %v2660
  %v2774 = vpop.f32.mrf.mxu0
  %v2775 = vadd.f32 0.0, %v2774
  %2776 = vmatmul.f32.gmra.mxu0 %v2663
  %v2777 = vpop.f32.mrf.mxu0
  %v2778 = vadd.f32 0.0, %v2777
  %2779 = vdwg.mxu0
  %2780 = vmatpush.msra.mxu0 0.0
  %2781 = vmatpush.msra.mxu0 0.0
  %2782 = vmatpush.msra.mxu0 0.0
  %2783 = vmatpush.msra.mxu0 0.0
  %2784 = vmatpush.msra.mxu0 0.0
  %2785 = vmatpush.msra.mxu0 0.0
  %2786 = vmatpush.msra.mxu0 0.0
  %2787 = vmatpush.msra.mxu0 0.0
  %2788 = vmatpush.msra.mxu0 0.0
  %2789 = vmatpush.msra.mxu0 0.0
  %2790 = vmatpush.msra.mxu0 0.0
  %2791 = vmatpush.msra.mxu0 0.0
  %2792 = vmatpush.msra.mxu0 %v622
  %2793 = vmatpush.msra.mxu0 %v619
  %2794 = vmatpush.msra.mxu0 %v616
  %2795 = vmatpush.msra.mxu0 %v613
  %2796 = vmatmul.f32.gmra.mxu0 %v2660
  %v2797 = vpop.f32.mrf.mxu0
  %v2798 = vadd.f32 0.0, %v2797
  %2799 = vmatmul.f32.gmra.mxu0 %v2663
  %v2800 = vpop.f32.mrf.mxu0
  %v2801 = vadd.f32 0.0, %v2800
  %2802 = vdwg.mxu0
  %v2804 = vsel %vm624, %v2683, 0
  %v2807 = vsel %vm624, %v2686, 0
  %2809 = vmatpush.msra.mxu0 0.0
  %2810 = vmatpush.msra.mxu0 0.0
  %2811 = vmatpush.msra.mxu0 0.0
  %2812 = vmatpush.msra.mxu0 0.0
  %2813 = vmatpush.msra.mxu0 0.0
  %2814 = vmatpush.msra.mxu0 0.0
  %2815 = vmatpush.msra.mxu0 0.0
  %2816 = vmatpush.msra.mxu0 0.0
  %2817 = vmatpush.msra.mxu0 0.0
  %2818 = vmatpush.msra.mxu0 0.0
  %2819 = vmatpush.msra.mxu0 0.0
  %2820 = vmatpush.msra.mxu0 0.0
  %2821 = vmatpush.msra.mxu0 %v2652
  %2822 = vmatpush.msra.mxu0 %v2651
  %2823 = vmatpush.msra.mxu0 %v2650
  %2824 = vmatpush.msra.mxu0 %v2649
  %2825 = vmatmul.f32.gmra.mxu0 %v2804
  %v2826 = vpop.f32.mrf.mxu0
  %v2827 = vadd.f32 0.0, %v2826
  %2828 = vmatmul.f32.gmra.mxu0 %v2807
  %v2829 = vpop.f32.mrf.mxu0
  %v2830 = vadd.f32 0.0, %v2829
  %2831 = vdwg.mxu0
  %v2833 = vsel %vm624, %v2706, 0
  %v2836 = vsel %vm624, %v2709, 0
  %2838 = vmatpush.msra.mxu0 0.0
  %2839 = vmatpush.msra.mxu0 0.0
  %2840 = vmatpush.msra.mxu0 0.0
  %2841 = vmatpush.msra.mxu0 0.0
  %2842 = vmatpush.msra.mxu0 0.0
  %2843 = vmatpush.msra.mxu0 0.0
  %2844 = vmatpush.msra.mxu0 0.0
  %2845 = vmatpush.msra.mxu0 0.0
  %2846 = vmatpush.msra.mxu0 0.0
  %2847 = vmatpush.msra.mxu0 0.0
  %2848 = vmatpush.msra.mxu0 0.0
  %2849 = vmatpush.msra.mxu0 0.0
  %2850 = vmatpush.msra.mxu0 %v2652
  %2851 = vmatpush.msra.mxu0 %v2651
  %2852 = vmatpush.msra.mxu0 %v2650
  %2853 = vmatpush.msra.mxu0 %v2649
  %2854 = vmatmul.f32.gmra.mxu0 %v2833
  %v2855 = vpop.f32.mrf.mxu0
  %v2856 = vadd.f32 0.0, %v2855
  %2857 = vmatmul.f32.gmra.mxu0 %v2836
  %v2858 = vpop.f32.mrf.mxu0
  %v2859 = vadd.f32 0.0, %v2858
  %2860 = vdwg.mxu0
  %v2862 = vsel %vm624, %v2729, 0
  %v2865 = vsel %vm624, %v2732, 0
  %2867 = vmatpush.msra.mxu0 0.0
  %2868 = vmatpush.msra.mxu0 0.0
  %2869 = vmatpush.msra.mxu0 0.0
  %2870 = vmatpush.msra.mxu0 0.0
  %2871 = vmatpush.msra.mxu0 0.0
  %2872 = vmatpush.msra.mxu0 0.0
  %2873 = vmatpush.msra.mxu0 0.0
  %2874 = vmatpush.msra.mxu0 0.0
  %2875 = vmatpush.msra.mxu0 0.0
  %2876 = vmatpush.msra.mxu0 0.0
  %2877 = vmatpush.msra.mxu0 0.0
  %2878 = vmatpush.msra.mxu0 0.0
  %2879 = vmatpush.msra.mxu0 %v2652
  %2880 = vmatpush.msra.mxu0 %v2651
  %2881 = vmatpush.msra.mxu0 %v2650
  %2882 = vmatpush.msra.mxu0 %v2649
  %2883 = vmatmul.f32.gmra.mxu0 %v2862
  %v2884 = vpop.f32.mrf.mxu0
  %v2885 = vadd.f32 0.0, %v2884
  %2886 = vmatmul.f32.gmra.mxu0 %v2865
  %v2887 = vpop.f32.mrf.mxu0
  %v2888 = vadd.f32 0.0, %v2887
  %2889 = vdwg.mxu0
  %v2891 = vsel %vm624, %v2752, 0
  %v2894 = vsel %vm624, %v2755, 0
  %2896 = vmatpush.msra.mxu0 0.0
  %2897 = vmatpush.msra.mxu0 0.0
  %2898 = vmatpush.msra.mxu0 0.0
  %2899 = vmatpush.msra.mxu0 0.0
  %2900 = vmatpush.msra.mxu0 0.0
  %2901 = vmatpush.msra.mxu0 0.0
  %2902 = vmatpush.msra.mxu0 0.0
  %2903 = vmatpush.msra.mxu0 0.0
  %2904 = vmatpush.msra.mxu0 0.0
  %2905 = vmatpush.msra.mxu0 0.0
  %2906 = vmatpush.msra.mxu0 0.0
  %2907 = vmatpush.msra.mxu0 0.0
  %2908 = vmatpush.msra.mxu0 %v2652
  %2909 = vmatpush.msra.mxu0 %v2651
  %2910 = vmatpush.msra.mxu0 %v2650
  %2911 = vmatpush.msra.mxu0 %v2649
  %2912 = vmatmul.f32.gmra.mxu0 %v2891
  %v2913 = vpop.f32.mrf.mxu0
  %v2914 = vadd.f32 0.0, %v2913
  %2915 = vmatmul.f32.gmra.mxu0 %v2894
  %v2916 = vpop.f32.mrf.mxu0
  %v2917 = vadd.f32 0.0, %v2916
  %2918 = vdwg.mxu0
  %v2920 = vsel %vm624, %v2775, 0
  %v2923 = vsel %vm624, %v2778, 0
  %2925 = vmatpush.msra.mxu0 0.0
  %2926 = vmatpush.msra.mxu0 0.0
  %2927 = vmatpush.msra.mxu0 0.0
  %2928 = vmatpush.msra.mxu0 0.0
  %2929 = vmatpush.msra.mxu0 0.0
  %2930 = vmatpush.msra.mxu0 0.0
  %2931 = vmatpush.msra.mxu0 0.0
  %2932 = vmatpush.msra.mxu0 0.0
  %2933 = vmatpush.msra.mxu0 0.0
  %2934 = vmatpush.msra.mxu0 0.0
  %2935 = vmatpush.msra.mxu0 0.0
  %2936 = vmatpush.msra.mxu0 0.0
  %2937 = vmatpush.msra.mxu0 %v2652
  %2938 = vmatpush.msra.mxu0 %v2651
  %2939 = vmatpush.msra.mxu0 %v2650
  %2940 = vmatpush.msra.mxu0 %v2649
  %2941 = vmatmul.f32.gmra.mxu0 %v2920
  %v2942 = vpop.f32.mrf.mxu0
  %v2943 = vadd.f32 0.0, %v2942
  %2944 = vmatmul.f32.gmra.mxu0 %v2923
  %v2945 = vpop.f32.mrf.mxu0
  %v2946 = vadd.f32 0.0, %v2945
  %2947 = vdwg.mxu0
  %v2949 = vsel %vm624, %v2798, 0
  %v2952 = vsel %vm624, %v2801, 0
  %2954 = vmatpush.msra.mxu0 0.0
  %2955 = vmatpush.msra.mxu0 0.0
  %2956 = vmatpush.msra.mxu0 0.0
  %2957 = vmatpush.msra.mxu0 0.0
  %2958 = vmatpush.msra.mxu0 0.0
  %2959 = vmatpush.msra.mxu0 0.0
  %2960 = vmatpush.msra.mxu0 0.0
  %2961 = vmatpush.msra.mxu0 0.0
  %2962 = vmatpush.msra.mxu0 0.0
  %2963 = vmatpush.msra.mxu0 0.0
  %2964 = vmatpush.msra.mxu0 0.0
  %2965 = vmatpush.msra.mxu0 0.0
  %2966 = vmatpush.msra.mxu0 %v2652
  %2967 = vmatpush.msra.mxu0 %v2651
  %2968 = vmatpush.msra.mxu0 %v2650
  %2969 = vmatpush.msra.mxu0 %v2649
  %2970 = vmatmul.f32.gmra.mxu0 %v2949
  %v2971 = vpop.f32.mrf.mxu0
  %v2972 = vadd.f32 0.0, %v2971
  %2973 = vmatmul.f32.gmra.mxu0 %v2952
  %v2974 = vpop.f32.mrf.mxu0
  %v2975 = vadd.f32 0.0, %v2974
  %2976 = vdwg.mxu0
  %vm2977 = vcmask 130048
  %v2979 = vsel %vm2977, %v2653, 0
  %v2982 = vsel %vm2977, %v2654, 0
  %v2985 = vsel %vm2977, %v2655, 0
  %v2988 = vsel %vm2977, %v2656, 0
  %2990 = vmatpush.msra.mxu0 0.0
  %2991 = vmatpush.msra.mxu0 0.0
  %2992 = vmatpush.msra.mxu0 0.0
  %2993 = vmatpush.msra.mxu0 0.0
  %2994 = vmatpush.msra.mxu0 0.0
  %2995 = vmatpush.msra.mxu0 0.0
  %2996 = vmatpush.msra.mxu0 0.0
  %2997 = vmatpush.msra.mxu0 0.0
  %2998 = vmatpush.msra.mxu0 0.0
  %2999 = vmatpush.msra.mxu0 0.0
  %3000 = vmatpush.msra.mxu0 0.0
  %3001 = vmatpush.msra.mxu0 0.0
  %3002 = vmatpush.msra.mxu0 0.0
  %3003 = vmatpush.msra.mxu0 0.0
  %3004 = vmatpush.msra.mxu0 %v2830
  %3005 = vmatpush.msra.mxu0 %v2827
  %3006 = vmatmul.f32.gmra.mxu0 %v2979
  %v3007 = vpop.f32.mrf.mxu0
  %v3008 = vadd.f32 0.0, %v3007
  %3009 = vmatmul.f32.gmra.mxu0 %v2982
  %v3010 = vpop.f32.mrf.mxu0
  %v3011 = vadd.f32 0.0, %v3010
  %3012 = vmatmul.f32.gmra.mxu0 %v2985
  %v3013 = vpop.f32.mrf.mxu0
  %v3014 = vadd.f32 0.0, %v3013
  %3015 = vmatmul.f32.gmra.mxu0 %v2988
  %v3016 = vpop.f32.mrf.mxu0
  %v3017 = vadd.f32 0.0, %v3016
  %3018 = vdwg.mxu0
  %3019 = vmatpush.msra.mxu0 0.0
  %3020 = vmatpush.msra.mxu0 0.0
  %3021 = vmatpush.msra.mxu0 0.0
  %3022 = vmatpush.msra.mxu0 0.0
  %3023 = vmatpush.msra.mxu0 0.0
  %3024 = vmatpush.msra.mxu0 0.0
  %3025 = vmatpush.msra.mxu0 0.0
  %3026 = vmatpush.msra.mxu0 0.0
  %3027 = vmatpush.msra.mxu0 0.0
  %3028 = vmatpush.msra.mxu0 0.0
  %3029 = vmatpush.msra.mxu0 0.0
  %3030 = vmatpush.msra.mxu0 0.0
  %3031 = vmatpush.msra.mxu0 0.0
  %3032 = vmatpush.msra.mxu0 0.0
  %3033 = vmatpush.msra.mxu0 %v2859
  %3034 = vmatpush.msra.mxu0 %v2856
  %3035 = vmatmul.f32.gmra.mxu0 %v2979
  %v3036 = vpop.f32.mrf.mxu0
  %v3037 = vadd.f32 0.0, %v3036
  %3038 = vmatmul.f32.gmra.mxu0 %v2982
  %v3039 = vpop.f32.mrf.mxu0
  %v3040 = vadd.f32 0.0, %v3039
  %3041 = vmatmul.f32.gmra.mxu0 %v2985
  %v3042 = vpop.f32.mrf.mxu0
  %v3043 = vadd.f32 0.0, %v3042
  %3044 = vmatmul.f32.gmra.mxu0 %v2988
  %v3045 = vpop.f32.mrf.mxu0
  %v3046 = vadd.f32 0.0, %v3045
  %3047 = vdwg.mxu0
  %3048 = vmatpush.msra.mxu0 0.0
  %3049 = vmatpush.msra.mxu0 0.0
  %3050 = vmatpush.msra.mxu0 0.0
  %3051 = vmatpush.msra.mxu0 0.0
  %3052 = vmatpush.msra.mxu0 0.0
  %3053 = vmatpush.msra.mxu0 0.0
  %3054 = vmatpush.msra.mxu0 0.0
  %3055 = vmatpush.msra.mxu0 0.0
  %3056 = vmatpush.msra.mxu0 0.0
  %3057 = vmatpush.msra.mxu0 0.0
  %3058 = vmatpush.msra.mxu0 0.0
  %3059 = vmatpush.msra.mxu0 0.0
  %3060 = vmatpush.msra.mxu0 0.0
  %3061 = vmatpush.msra.mxu0 0.0
  %3062 = vmatpush.msra.mxu0 %v2888
  %3063 = vmatpush.msra.mxu0 %v2885
  %3064 = vmatmul.f32.gmra.mxu0 %v2979
  %v3065 = vpop.f32.mrf.mxu0
  %v3066 = vadd.f32 0.0, %v3065
  %3067 = vmatmul.f32.gmra.mxu0 %v2982
  %v3068 = vpop.f32.mrf.mxu0
  %v3069 = vadd.f32 0.0, %v3068
  %3070 = vmatmul.f32.gmra.mxu0 %v2985
  %v3071 = vpop.f32.mrf.mxu0
  %v3072 = vadd.f32 0.0, %v3071
  %3073 = vmatmul.f32.gmra.mxu0 %v2988
  %v3074 = vpop.f32.mrf.mxu0
  %v3075 = vadd.f32 0.0, %v3074
  %3076 = vdwg.mxu0
  %3077 = vmatpush.msra.mxu0 0.0
  %3078 = vmatpush.msra.mxu0 0.0
  %3079 = vmatpush.msra.mxu0 0.0
  %3080 = vmatpush.msra.mxu0 0.0
  %3081 = vmatpush.msra.mxu0 0.0
  %3082 = vmatpush.msra.mxu0 0.0
  %3083 = vmatpush.msra.mxu0 0.0
  %3084 = vmatpush.msra.mxu0 0.0
  %3085 = vmatpush.msra.mxu0 0.0
  %3086 = vmatpush.msra.mxu0 0.0
  %3087 = vmatpush.msra.mxu0 0.0
  %3088 = vmatpush.msra.mxu0 0.0
  %3089 = vmatpush.msra.mxu0 0.0
  %3090 = vmatpush.msra.mxu0 0.0
  %3091 = vmatpush.msra.mxu0 %v2917
  %3092 = vmatpush.msra.mxu0 %v2914
  %3093 = vmatmul.f32.gmra.mxu0 %v2979
  %v3094 = vpop.f32.mrf.mxu0
  %v3095 = vadd.f32 0.0, %v3094
  %3096 = vmatmul.f32.gmra.mxu0 %v2982
  %v3097 = vpop.f32.mrf.mxu0
  %v3098 = vadd.f32 0.0, %v3097
  %3099 = vmatmul.f32.gmra.mxu0 %v2985
  %v3100 = vpop.f32.mrf.mxu0
  %v3101 = vadd.f32 0.0, %v3100
  %3102 = vmatmul.f32.gmra.mxu0 %v2988
  %v3103 = vpop.f32.mrf.mxu0
  %v3104 = vadd.f32 0.0, %v3103
  %3105 = vdwg.mxu0
  %3106 = vmatpush.msra.mxu0 0.0
  %3107 = vmatpush.msra.mxu0 0.0
  %3108 = vmatpush.msra.mxu0 0.0
  %3109 = vmatpush.msra.mxu0 0.0
  %3110 = vmatpush.msra.mxu0 0.0
  %3111 = vmatpush.msra.mxu0 0.0
  %3112 = vmatpush.msra.mxu0 0.0
  %3113 = vmatpush.msra.mxu0 0.0
  %3114 = vmatpush.msra.mxu0 0.0
  %3115 = vmatpush.msra.mxu0 0.0
  %3116 = vmatpush.msra.mxu0 0.0
  %3117 = vmatpush.msra.mxu0 0.0
  %3118 = vmatpush.msra.mxu0 0.0
  %3119 = vmatpush.msra.mxu0 0.0
  %3120 = vmatpush.msra.mxu0 %v2946
  %3121 = vmatpush.msra.mxu0 %v2943
  %3122 = vmatmul.f32.gmra.mxu0 %v2979
  %v3123 = vpop.f32.mrf.mxu0
  %v3124 = vadd.f32 0.0, %v3123
  %3125 = vmatmul.f32.gmra.mxu0 %v2982
  %v3126 = vpop.f32.mrf.mxu0
  %v3127 = vadd.f32 0.0, %v3126
  %3128 = vmatmul.f32.gmra.mxu0 %v2985
  %v3129 = vpop.f32.mrf.mxu0
  %v3130 = vadd.f32 0.0, %v3129
  %3131 = vmatmul.f32.gmra.mxu0 %v2988
  %v3132 = vpop.f32.mrf.mxu0
  %v3133 = vadd.f32 0.0, %v3132
  %3134 = vdwg.mxu0
  %3135 = vmatpush.msra.mxu0 0.0
  %3136 = vmatpush.msra.mxu0 0.0
  %3137 = vmatpush.msra.mxu0 0.0
  %3138 = vmatpush.msra.mxu0 0.0
  %3139 = vmatpush.msra.mxu0 0.0
  %3140 = vmatpush.msra.mxu0 0.0
  %3141 = vmatpush.msra.mxu0 0.0
  %3142 = vmatpush.msra.mxu0 0.0
  %3143 = vmatpush.msra.mxu0 0.0
  %3144 = vmatpush.msra.mxu0 0.0
  %3145 = vmatpush.msra.mxu0 0.0
  %3146 = vmatpush.msra.mxu0 0.0
  %3147 = vmatpush.msra.mxu0 0.0
  %3148 = vmatpush.msra.mxu0 0.0
  %3149 = vmatpush.msra.mxu0 %v2975
  %3150 = vmatpush.msra.mxu0 %v2972
  %3151 = vmatmul.f32.gmra.mxu0 %v2979
  %v3152 = vpop.f32.mrf.mxu0
  %v3153 = vadd.f32 0.0, %v3152
  %3154 = vmatmul.f32.gmra.mxu0 %v2982
  %v3155 = vpop.f32.mrf.mxu0
  %v3156 = vadd.f32 0.0, %v3155
  %3157 = vmatmul.f32.gmra.mxu0 %v2985
  %v3158 = vpop.f32.mrf.mxu0
  %v3159 = vadd.f32 0.0, %v3158
  %3160 = vmatmul.f32.gmra.mxu0 %v2988
  %v3161 = vpop.f32.mrf.mxu0
  %v3162 = vadd.f32 0.0, %v3161
  %3163 = vdwg.mxu0
  %v3165 = vsel %vm2977, %v3008, 0
  %v3168 = vsel %vm2977, %v3011, 0
  %v3171 = vsel %vm2977, %v3014, 0
  %v3174 = vsel %vm2977, %v3017, 0
  %3176 = vmatpush.msra.mxu0 0.0
  %3177 = vmatpush.msra.mxu0 0.0
  %3178 = vmatpush.msra.mxu0 0.0
  %3179 = vmatpush.msra.mxu0 0.0
  %3180 = vmatpush.msra.mxu0 0.0
  %3181 = vmatpush.msra.mxu0 0.0
  %3182 = vmatpush.msra.mxu0 0.0
  %3183 = vmatpush.msra.mxu0 0.0
  %3184 = vmatpush.msra.mxu0 0.0
  %3185 = vmatpush.msra.mxu0 0.0
  %3186 = vmatpush.msra.mxu0 0.0
  %3187 = vmatpush.msra.mxu0 0.0
  %3188 = vmatpush.msra.mxu0 0.0
  %3189 = vmatpush.msra.mxu0 0.0
  %3190 = vmatpush.msra.mxu0 %v2658
  %3191 = vmatpush.msra.mxu0 %v2657
  %3192 = vmatmul.f32.gmra.mxu0 %v3165
  %v3193 = vpop.f32.mrf.mxu0
  %v3194 = vadd.f32 0.0, %v3193
  %3195 = vmatmul.f32.gmra.mxu0 %v3168
  %v3196 = vpop.f32.mrf.mxu0
  %v3197 = vadd.f32 0.0, %v3196
  %3198 = vmatmul.f32.gmra.mxu0 %v3171
  %v3199 = vpop.f32.mrf.mxu0
  %v3200 = vadd.f32 0.0, %v3199
  %3201 = vmatmul.f32.gmra.mxu0 %v3174
  %v3202 = vpop.f32.mrf.mxu0
  %v3203 = vadd.f32 0.0, %v3202
  %3204 = vdwg.mxu0
  %v3206 = vsel %vm2977, %v3037, 0
  %v3209 = vsel %vm2977, %v3040, 0
  %v3212 = vsel %vm2977, %v3043, 0
  %v3215 = vsel %vm2977, %v3046, 0
  %3217 = vmatpush.msra.mxu0 0.0
  %3218 = vmatpush.msra.mxu0 0.0
  %3219 = vmatpush.msra.mxu0 0.0
  %3220 = vmatpush.msra.mxu0 0.0
  %3221 = vmatpush.msra.mxu0 0.0
  %3222 = vmatpush.msra.mxu0 0.0
  %3223 = vmatpush.msra.mxu0 0.0
  %3224 = vmatpush.msra.mxu0 0.0
  %3225 = vmatpush.msra.mxu0 0.0
  %3226 = vmatpush.msra.mxu0 0.0
  %3227 = vmatpush.msra.mxu0 0.0
  %3228 = vmatpush.msra.mxu0 0.0
  %3229 = vmatpush.msra.mxu0 0.0
  %3230 = vmatpush.msra.mxu0 0.0
  %3231 = vmatpush.msra.mxu0 %v2658
  %3232 = vmatpush.msra.mxu0 %v2657
  %3233 = vmatmul.f32.gmra.mxu0 %v3206
  %v3234 = vpop.f32.mrf.mxu0
  %v3235 = vadd.f32 0.0, %v3234
  %3236 = vmatmul.f32.gmra.mxu0 %v3209
  %v3237 = vpop.f32.mrf.mxu0
  %v3238 = vadd.f32 0.0, %v3237
  %3239 = vmatmul.f32.gmra.mxu0 %v3212
  %v3240 = vpop.f32.mrf.mxu0
  %v3241 = vadd.f32 0.0, %v3240
  %3242 = vmatmul.f32.gmra.mxu0 %v3215
  %v3243 = vpop.f32.mrf.mxu0
  %v3244 = vadd.f32 0.0, %v3243
  %3245 = vdwg.mxu0
  %v3247 = vsel %vm2977, %v3066, 0
  %v3250 = vsel %vm2977, %v3069, 0
  %v3253 = vsel %vm2977, %v3072, 0
  %v3256 = vsel %vm2977, %v3075, 0
  %3258 = vmatpush.msra.mxu0 0.0
  %3259 = vmatpush.msra.mxu0 0.0
  %3260 = vmatpush.msra.mxu0 0.0
  %3261 = vmatpush.msra.mxu0 0.0
  %3262 = vmatpush.msra.mxu0 0.0
  %3263 = vmatpush.msra.mxu0 0.0
  %3264 = vmatpush.msra.mxu0 0.0
  %3265 = vmatpush.msra.mxu0 0.0
  %3266 = vmatpush.msra.mxu0 0.0
  %3267 = vmatpush.msra.mxu0 0.0
  %3268 = vmatpush.msra.mxu0 0.0
  %3269 = vmatpush.msra.mxu0 0.0
  %3270 = vmatpush.msra.mxu0 0.0
  %3271 = vmatpush.msra.mxu0 0.0
  %3272 = vmatpush.msra.mxu0 %v2658
  %3273 = vmatpush.msra.mxu0 %v2657
  %3274 = vmatmul.f32.gmra.mxu0 %v3247
  %v3275 = vpop.f32.mrf.mxu0
  %v3276 = vadd.f32 0.0, %v3275
  %3277 = vmatmul.f32.gmra.mxu0 %v3250
  %v3278 = vpop.f32.mrf.mxu0
  %v3279 = vadd.f32 0.0, %v3278
  %3280 = vmatmul.f32.gmra.mxu0 %v3253
  %v3281 = vpop.f32.mrf.mxu0
  %v3282 = vadd.f32 0.0, %v3281
  %3283 = vmatmul.f32.gmra.mxu0 %v3256
  %v3284 = vpop.f32.mrf.mxu0
  %v3285 = vadd.f32 0.0, %v3284
  %3286 = vdwg.mxu0
  %v3288 = vsel %vm2977, %v3095, 0
  %v3291 = vsel %vm2977, %v3098, 0
  %v3294 = vsel %vm2977, %v3101, 0
  %v3297 = vsel %vm2977, %v3104, 0
  %3299 = vmatpush.msra.mxu0 0.0
  %3300 = vmatpush.msra.mxu0 0.0
  %3301 = vmatpush.msra.mxu0 0.0
  %3302 = vmatpush.msra.mxu0 0.0
  %3303 = vmatpush.msra.mxu0 0.0
  %3304 = vmatpush.msra.mxu0 0.0
  %3305 = vmatpush.msra.mxu0 0.0
  %3306 = vmatpush.msra.mxu0 0.0
  %3307 = vmatpush.msra.mxu0 0.0
  %3308 = vmatpush.msra.mxu0 0.0
  %3309 = vmatpush.msra.mxu0 0.0
  %3310 = vmatpush.msra.mxu0 0.0
  %3311 = vmatpush.msra.mxu0 0.0
  %3312 = vmatpush.msra.mxu0 0.0
  %3313 = vmatpush.msra.mxu0 %v2658
  %3314 = vmatpush.msra.mxu0 %v2657
  %3315 = vmatmul.f32.gmra.mxu0 %v3288
  %v3316 = vpop.f32.mrf.mxu0
  %v3317 = vadd.f32 0.0, %v3316
  %3318 = vmatmul.f32.gmra.mxu0 %v3291
  %v3319 = vpop.f32.mrf.mxu0
  %v3320 = vadd.f32 0.0, %v3319
  %3321 = vmatmul.f32.gmra.mxu0 %v3294
  %v3322 = vpop.f32.mrf.mxu0
  %v3323 = vadd.f32 0.0, %v3322
  %3324 = vmatmul.f32.gmra.mxu0 %v3297
  %v3325 = vpop.f32.mrf.mxu0
  %v3326 = vadd.f32 0.0, %v3325
  %3327 = vdwg.mxu0
  %v3329 = vsel %vm2977, %v3124, 0
  %v3332 = vsel %vm2977, %v3127, 0
  %v3335 = vsel %vm2977, %v3130, 0
  %v3338 = vsel %vm2977, %v3133, 0
  %3340 = vmatpush.msra.mxu0 0.0
  %3341 = vmatpush.msra.mxu0 0.0
  %3342 = vmatpush.msra.mxu0 0.0
  %3343 = vmatpush.msra.mxu0 0.0
  %3344 = vmatpush.msra.mxu0 0.0
  %3345 = vmatpush.msra.mxu0 0.0
  %3346 = vmatpush.msra.mxu0 0.0
  %3347 = vmatpush.msra.mxu0 0.0
  %3348 = vmatpush.msra.mxu0 0.0
  %3349 = vmatpush.msra.mxu0 0.0
  %3350 = vmatpush.msra.mxu0 0.0
  %3351 = vmatpush.msra.mxu0 0.0
  %3352 = vmatpush.msra.mxu0 0.0
  %3353 = vmatpush.msra.mxu0 0.0
  %3354 = vmatpush.msra.mxu0 %v2658
  %3355 = vmatpush.msra.mxu0 %v2657
  %3356 = vmatmul.f32.gmra.mxu0 %v3329
  %v3357 = vpop.f32.mrf.mxu0
  %v3358 = vadd.f32 0.0, %v3357
  %3359 = vmatmul.f32.gmra.mxu0 %v3332
  %v3360 = vpop.f32.mrf.mxu0
  %v3361 = vadd.f32 0.0, %v3360
  %3362 = vmatmul.f32.gmra.mxu0 %v3335
  %v3363 = vpop.f32.mrf.mxu0
  %v3364 = vadd.f32 0.0, %v3363
  %3365 = vmatmul.f32.gmra.mxu0 %v3338
  %v3366 = vpop.f32.mrf.mxu0
  %v3367 = vadd.f32 0.0, %v3366
  %3368 = vdwg.mxu0
  %v3370 = vsel %vm2977, %v3153, 0
  %v3373 = vsel %vm2977, %v3156, 0
  %v3376 = vsel %vm2977, %v3159, 0
  %v3379 = vsel %vm2977, %v3162, 0
  %3381 = vmatpush.msra.mxu0 0.0
  %3382 = vmatpush.msra.mxu0 0.0
  %3383 = vmatpush.msra.mxu0 0.0
  %3384 = vmatpush.msra.mxu0 0.0
  %3385 = vmatpush.msra.mxu0 0.0
  %3386 = vmatpush.msra.mxu0 0.0
  %3387 = vmatpush.msra.mxu0 0.0
  %3388 = vmatpush.msra.mxu0 0.0
  %3389 = vmatpush.msra.mxu0 0.0
  %3390 = vmatpush.msra.mxu0 0.0
  %3391 = vmatpush.msra.mxu0 0.0
  %3392 = vmatpush.msra.mxu0 0.0
  %3393 = vmatpush.msra.mxu0 0.0
  %3394 = vmatpush.msra.mxu0 0.0
  %3395 = vmatpush.msra.mxu0 %v2658
  %3396 = vmatpush.msra.mxu0 %v2657
  %3397 = vmatmul.f32.gmra.mxu0 %v3370
  %v3398 = vpop.f32.mrf.mxu0
  %v3399 = vadd.f32 0.0, %v3398
  %3400 = vmatmul.f32.gmra.mxu0 %v3373
  %v3401 = vpop.f32.mrf.mxu0
  %v3402 = vadd.f32 0.0, %v3401
  %3403 = vmatmul.f32.gmra.mxu0 %v3376
  %v3404 = vpop.f32.mrf.mxu0
  %v3405 = vadd.f32 0.0, %v3404
  %3406 = vmatmul.f32.gmra.mxu0 %v3379
  %v3407 = vpop.f32.mrf.mxu0
  %v3408 = vadd.f32 0.0, %v3407
  %3409 = vdwg.mxu0
  %3410 = vmatpush.msra.mxu0 0.0
  %3411 = vmatpush.msra.mxu0 0.0
  %3412 = vmatpush.msra.mxu0 0.0
  %3413 = vmatpush.msra.mxu0 0.0
  %3414 = vmatpush.msra.mxu0 0.0
  %3415 = vmatpush.msra.mxu0 0.0
  %3416 = vmatpush.msra.mxu0 0.0
  %3417 = vmatpush.msra.mxu0 0.0
  %3418 = vmatpush.msra.mxu0 0.0
  %3419 = vmatpush.msra.mxu0 0.0
  %3420 = vmatpush.msra.mxu0 0.0
  %3421 = vmatpush.msra.mxu0 0.0
  %3422 = vmatpush.msra.mxu0 %v1498
  %3423 = vmatpush.msra.mxu0 %v1495
  %3424 = vmatpush.msra.mxu0 %v1492
  %3425 = vmatpush.msra.mxu0 %v1489
  %3426 = vmatmul.f32.gmra.mxu0 %v2660
  %v3427 = vpop.f32.mrf.mxu0
  %v3428 = vadd.f32 0.0, %v3427
  %3429 = vmatmul.f32.gmra.mxu0 %v2663
  %v3430 = vpop.f32.mrf.mxu0
  %v3431 = vadd.f32 0.0, %v3430
  %3432 = vdwg.mxu0
  %3433 = vmatpush.msra.mxu0 0.0
  %3434 = vmatpush.msra.mxu0 0.0
  %3435 = vmatpush.msra.mxu0 0.0
  %3436 = vmatpush.msra.mxu0 0.0
  %3437 = vmatpush.msra.mxu0 0.0
  %3438 = vmatpush.msra.mxu0 0.0
  %3439 = vmatpush.msra.mxu0 0.0
  %3440 = vmatpush.msra.mxu0 0.0
  %3441 = vmatpush.msra.mxu0 0.0
  %3442 = vmatpush.msra.mxu0 0.0
  %3443 = vmatpush.msra.mxu0 0.0
  %3444 = vmatpush.msra.mxu0 0.0
  %3445 = vmatpush.msra.mxu0 %v1539
  %3446 = vmatpush.msra.mxu0 %v1536
  %3447 = vmatpush.msra.mxu0 %v1533
  %3448 = vmatpush.msra.mxu0 %v1530
  %3449 = vmatmul.f32.gmra.mxu0 %v2660
  %v3450 = vpop.f32.mrf.mxu0
  %v3451 = vadd.f32 0.0, %v3450
  %3452 = vmatmul.f32.gmra.mxu0 %v2663
  %v3453 = vpop.f32.mrf.mxu0
  %v3454 = vadd.f32 0.0, %v3453
  %3455 = vdwg.mxu0
  %3456 = vmatpush.msra.mxu0 0.0
  %3457 = vmatpush.msra.mxu0 0.0
  %3458 = vmatpush.msra.mxu0 0.0
  %3459 = vmatpush.msra.mxu0 0.0
  %3460 = vmatpush.msra.mxu0 0.0
  %3461 = vmatpush.msra.mxu0 0.0
  %3462 = vmatpush.msra.mxu0 0.0
  %3463 = vmatpush.msra.mxu0 0.0
  %3464 = vmatpush.msra.mxu0 0.0
  %3465 = vmatpush.msra.mxu0 0.0
  %3466 = vmatpush.msra.mxu0 0.0
  %3467 = vmatpush.msra.mxu0 0.0
  %3468 = vmatpush.msra.mxu0 %v1580
  %3469 = vmatpush.msra.mxu0 %v1577
  %3470 = vmatpush.msra.mxu0 %v1574
  %3471 = vmatpush.msra.mxu0 %v1571
  %3472 = vmatmul.f32.gmra.mxu0 %v2660
  %v3473 = vpop.f32.mrf.mxu0
  %v3474 = vadd.f32 0.0, %v3473
  %3475 = vmatmul.f32.gmra.mxu0 %v2663
  %v3476 = vpop.f32.mrf.mxu0
  %v3477 = vadd.f32 0.0, %v3476
  %3478 = vdwg.mxu0
  %3479 = vmatpush.msra.mxu0 0.0
  %3480 = vmatpush.msra.mxu0 0.0
  %3481 = vmatpush.msra.mxu0 0.0
  %3482 = vmatpush.msra.mxu0 0.0
  %3483 = vmatpush.msra.mxu0 0.0
  %3484 = vmatpush.msra.mxu0 0.0
  %3485 = vmatpush.msra.mxu0 0.0
  %3486 = vmatpush.msra.mxu0 0.0
  %3487 = vmatpush.msra.mxu0 0.0
  %3488 = vmatpush.msra.mxu0 0.0
  %3489 = vmatpush.msra.mxu0 0.0
  %3490 = vmatpush.msra.mxu0 0.0
  %3491 = vmatpush.msra.mxu0 %v1621
  %3492 = vmatpush.msra.mxu0 %v1618
  %3493 = vmatpush.msra.mxu0 %v1615
  %3494 = vmatpush.msra.mxu0 %v1612
  %3495 = vmatmul.f32.gmra.mxu0 %v2660
  %v3496 = vpop.f32.mrf.mxu0
  %v3497 = vadd.f32 0.0, %v3496
  %3498 = vmatmul.f32.gmra.mxu0 %v2663
  %v3499 = vpop.f32.mrf.mxu0
  %v3500 = vadd.f32 0.0, %v3499
  %3501 = vdwg.mxu0
  %3502 = vmatpush.msra.mxu0 0.0
  %3503 = vmatpush.msra.mxu0 0.0
  %3504 = vmatpush.msra.mxu0 0.0
  %3505 = vmatpush.msra.mxu0 0.0
  %3506 = vmatpush.msra.mxu0 0.0
  %3507 = vmatpush.msra.mxu0 0.0
  %3508 = vmatpush.msra.mxu0 0.0
  %3509 = vmatpush.msra.mxu0 0.0
  %3510 = vmatpush.msra.mxu0 0.0
  %3511 = vmatpush.msra.mxu0 0.0
  %3512 = vmatpush.msra.mxu0 0.0
  %3513 = vmatpush.msra.mxu0 0.0
  %3514 = vmatpush.msra.mxu0 %v1662
  %3515 = vmatpush.msra.mxu0 %v1659
  %3516 = vmatpush.msra.mxu0 %v1656
  %3517 = vmatpush.msra.mxu0 %v1653
  %3518 = vmatmul.f32.gmra.mxu0 %v2660
  %v3519 = vpop.f32.mrf.mxu0
  %v3520 = vadd.f32 0.0, %v3519
  %3521 = vmatmul.f32.gmra.mxu0 %v2663
  %v3522 = vpop.f32.mrf.mxu0
  %v3523 = vadd.f32 0.0, %v3522
  %3524 = vdwg.mxu0
  %3525 = vmatpush.msra.mxu0 0.0
  %3526 = vmatpush.msra.mxu0 0.0
  %3527 = vmatpush.msra.mxu0 0.0
  %3528 = vmatpush.msra.mxu0 0.0
  %3529 = vmatpush.msra.mxu0 0.0
  %3530 = vmatpush.msra.mxu0 0.0
  %3531 = vmatpush.msra.mxu0 0.0
  %3532 = vmatpush.msra.mxu0 0.0
  %3533 = vmatpush.msra.mxu0 0.0
  %3534 = vmatpush.msra.mxu0 0.0
  %3535 = vmatpush.msra.mxu0 0.0
  %3536 = vmatpush.msra.mxu0 0.0
  %3537 = vmatpush.msra.mxu0 %v1703
  %3538 = vmatpush.msra.mxu0 %v1700
  %3539 = vmatpush.msra.mxu0 %v1697
  %3540 = vmatpush.msra.mxu0 %v1694
  %3541 = vmatmul.f32.gmra.mxu0 %v2660
  %v3542 = vpop.f32.mrf.mxu0
  %v3543 = vadd.f32 0.0, %v3542
  %3544 = vmatmul.f32.gmra.mxu0 %v2663
  %v3545 = vpop.f32.mrf.mxu0
  %v3546 = vadd.f32 0.0, %v3545
  %3547 = vdwg.mxu0
  %v3549 = vsel %vm624, %v3428, 0
  %v3552 = vsel %vm624, %v3431, 0
  %3554 = vmatpush.msra.mxu0 0.0
  %3555 = vmatpush.msra.mxu0 0.0
  %3556 = vmatpush.msra.mxu0 0.0
  %3557 = vmatpush.msra.mxu0 0.0
  %3558 = vmatpush.msra.mxu0 0.0
  %3559 = vmatpush.msra.mxu0 0.0
  %3560 = vmatpush.msra.mxu0 0.0
  %3561 = vmatpush.msra.mxu0 0.0
  %3562 = vmatpush.msra.mxu0 0.0
  %3563 = vmatpush.msra.mxu0 0.0
  %3564 = vmatpush.msra.mxu0 0.0
  %3565 = vmatpush.msra.mxu0 0.0
  %3566 = vmatpush.msra.mxu0 %v2652
  %3567 = vmatpush.msra.mxu0 %v2651
  %3568 = vmatpush.msra.mxu0 %v2650
  %3569 = vmatpush.msra.mxu0 %v2649
  %3570 = vmatmul.f32.gmra.mxu0 %v3549
  %v3571 = vpop.f32.mrf.mxu0
  %v3572 = vadd.f32 0.0, %v3571
  %3573 = vmatmul.f32.gmra.mxu0 %v3552
  %v3574 = vpop.f32.mrf.mxu0
  %v3575 = vadd.f32 0.0, %v3574
  %3576 = vdwg.mxu0
  %v3578 = vsel %vm624, %v3451, 0
  %v3581 = vsel %vm624, %v3454, 0
  %3583 = vmatpush.msra.mxu0 0.0
  %3584 = vmatpush.msra.mxu0 0.0
  %3585 = vmatpush.msra.mxu0 0.0
  %3586 = vmatpush.msra.mxu0 0.0
  %3587 = vmatpush.msra.mxu0 0.0
  %3588 = vmatpush.msra.mxu0 0.0
  %3589 = vmatpush.msra.mxu0 0.0
  %3590 = vmatpush.msra.mxu0 0.0
  %3591 = vmatpush.msra.mxu0 0.0
  %3592 = vmatpush.msra.mxu0 0.0
  %3593 = vmatpush.msra.mxu0 0.0
  %3594 = vmatpush.msra.mxu0 0.0
  %3595 = vmatpush.msra.mxu0 %v2652
  %3596 = vmatpush.msra.mxu0 %v2651
  %3597 = vmatpush.msra.mxu0 %v2650
  %3598 = vmatpush.msra.mxu0 %v2649
  %3599 = vmatmul.f32.gmra.mxu0 %v3578
  %v3600 = vpop.f32.mrf.mxu0
  %v3601 = vadd.f32 0.0, %v3600
  %3602 = vmatmul.f32.gmra.mxu0 %v3581
  %v3603 = vpop.f32.mrf.mxu0
  %v3604 = vadd.f32 0.0, %v3603
  %3605 = vdwg.mxu0
  %v3607 = vsel %vm624, %v3474, 0
  %v3610 = vsel %vm624, %v3477, 0
  %3612 = vmatpush.msra.mxu0 0.0
  %3613 = vmatpush.msra.mxu0 0.0
  %3614 = vmatpush.msra.mxu0 0.0
  %3615 = vmatpush.msra.mxu0 0.0
  %3616 = vmatpush.msra.mxu0 0.0
  %3617 = vmatpush.msra.mxu0 0.0
  %3618 = vmatpush.msra.mxu0 0.0
  %3619 = vmatpush.msra.mxu0 0.0
  %3620 = vmatpush.msra.mxu0 0.0
  %3621 = vmatpush.msra.mxu0 0.0
  %3622 = vmatpush.msra.mxu0 0.0
  %3623 = vmatpush.msra.mxu0 0.0
  %3624 = vmatpush.msra.mxu0 %v2652
  %3625 = vmatpush.msra.mxu0 %v2651
  %3626 = vmatpush.msra.mxu0 %v2650
  %3627 = vmatpush.msra.mxu0 %v2649
  %3628 = vmatmul.f32.gmra.mxu0 %v3607
  %v3629 = vpop.f32.mrf.mxu0
  %v3630 = vadd.f32 0.0, %v3629
  %3631 = vmatmul.f32.gmra.mxu0 %v3610
  %v3632 = vpop.f32.mrf.mxu0
  %v3633 = vadd.f32 0.0, %v3632
  %3634 = vdwg.mxu0
  %v3636 = vsel %vm624, %v3497, 0
  %v3639 = vsel %vm624, %v3500, 0
  %3641 = vmatpush.msra.mxu0 0.0
  %3642 = vmatpush.msra.mxu0 0.0
  %3643 = vmatpush.msra.mxu0 0.0
  %3644 = vmatpush.msra.mxu0 0.0
  %3645 = vmatpush.msra.mxu0 0.0
  %3646 = vmatpush.msra.mxu0 0.0
  %3647 = vmatpush.msra.mxu0 0.0
  %3648 = vmatpush.msra.mxu0 0.0
  %3649 = vmatpush.msra.mxu0 0.0
  %3650 = vmatpush.msra.mxu0 0.0
  %3651 = vmatpush.msra.mxu0 0.0
  %3652 = vmatpush.msra.mxu0 0.0
  %3653 = vmatpush.msra.mxu0 %v2652
  %3654 = vmatpush.msra.mxu0 %v2651
  %3655 = vmatpush.msra.mxu0 %v2650
  %3656 = vmatpush.msra.mxu0 %v2649
  %3657 = vmatmul.f32.gmra.mxu0 %v3636
  %v3658 = vpop.f32.mrf.mxu0
  %v3659 = vadd.f32 0.0, %v3658
  %3660 = vmatmul.f32.gmra.mxu0 %v3639
  %v3661 = vpop.f32.mrf.mxu0
  %v3662 = vadd.f32 0.0, %v3661
  %3663 = vdwg.mxu0
  %v3665 = vsel %vm624, %v3520, 0
  %v3668 = vsel %vm624, %v3523, 0
  %3670 = vmatpush.msra.mxu0 0.0
  %3671 = vmatpush.msra.mxu0 0.0
  %3672 = vmatpush.msra.mxu0 0.0
  %3673 = vmatpush.msra.mxu0 0.0
  %3674 = vmatpush.msra.mxu0 0.0
  %3675 = vmatpush.msra.mxu0 0.0
  %3676 = vmatpush.msra.mxu0 0.0
  %3677 = vmatpush.msra.mxu0 0.0
  %3678 = vmatpush.msra.mxu0 0.0
  %3679 = vmatpush.msra.mxu0 0.0
  %3680 = vmatpush.msra.mxu0 0.0
  %3681 = vmatpush.msra.mxu0 0.0
  %3682 = vmatpush.msra.mxu0 %v2652
  %3683 = vmatpush.msra.mxu0 %v2651
  %3684 = vmatpush.msra.mxu0 %v2650
  %3685 = vmatpush.msra.mxu0 %v2649
  %3686 = vmatmul.f32.gmra.mxu0 %v3665
  %v3687 = vpop.f32.mrf.mxu0
  %v3688 = vadd.f32 0.0, %v3687
  %3689 = vmatmul.f32.gmra.mxu0 %v3668
  %v3690 = vpop.f32.mrf.mxu0
  %v3691 = vadd.f32 0.0, %v3690
  %3692 = vdwg.mxu0
  %v3694 = vsel %vm624, %v3543, 0
  %v3697 = vsel %vm624, %v3546, 0
  %3699 = vmatpush.msra.mxu0 0.0
  %3700 = vmatpush.msra.mxu0 0.0
  %3701 = vmatpush.msra.mxu0 0.0
  %3702 = vmatpush.msra.mxu0 0.0
  %3703 = vmatpush.msra.mxu0 0.0
  %3704 = vmatpush.msra.mxu0 0.0
  %3705 = vmatpush.msra.mxu0 0.0
  %3706 = vmatpush.msra.mxu0 0.0
  %3707 = vmatpush.msra.mxu0 0.0
  %3708 = vmatpush.msra.mxu0 0.0
  %3709 = vmatpush.msra.mxu0 0.0
  %3710 = vmatpush.msra.mxu0 0.0
  %3711 = vmatpush.msra.mxu0 %v2652
  %3712 = vmatpush.msra.mxu0 %v2651
  %3713 = vmatpush.msra.mxu0 %v2650
  %3714 = vmatpush.msra.mxu0 %v2649
  %3715 = vmatmul.f32.gmra.mxu0 %v3694
  %v3716 = vpop.f32.mrf.mxu0
  %v3717 = vadd.f32 0.0, %v3716
  %3718 = vmatmul.f32.gmra.mxu0 %v3697
  %v3719 = vpop.f32.mrf.mxu0
  %v3720 = vadd.f32 0.0, %v3719
  %3721 = vdwg.mxu0
  %3722 = vmatpush.msra.mxu0 0.0
  %3723 = vmatpush.msra.mxu0 0.0
  %3724 = vmatpush.msra.mxu0 0.0
  %3725 = vmatpush.msra.mxu0 0.0
  %3726 = vmatpush.msra.mxu0 0.0
  %3727 = vmatpush.msra.mxu0 0.0
  %3728 = vmatpush.msra.mxu0 0.0
  %3729 = vmatpush.msra.mxu0 0.0
  %3730 = vmatpush.msra.mxu0 0.0
  %3731 = vmatpush.msra.mxu0 0.0
  %3732 = vmatpush.msra.mxu0 0.0
  %3733 = vmatpush.msra.mxu0 0.0
  %3734 = vmatpush.msra.mxu0 0.0
  %3735 = vmatpush.msra.mxu0 0.0
  %3736 = vmatpush.msra.mxu0 %v3575
  %3737 = vmatpush.msra.mxu0 %v3572
  %3738 = vmatmul.f32.gmra.mxu0 %v2979
  %v3739 = vpop.f32.mrf.mxu0
  %v3740 = vadd.f32 0.0, %v3739
  %3741 = vmatmul.f32.gmra.mxu0 %v2982
  %v3742 = vpop.f32.mrf.mxu0
  %v3743 = vadd.f32 0.0, %v3742
  %3744 = vmatmul.f32.gmra.mxu0 %v2985
  %v3745 = vpop.f32.mrf.mxu0
  %v3746 = vadd.f32 0.0, %v3745
  %3747 = vmatmul.f32.gmra.mxu0 %v2988
  %v3748 = vpop.f32.mrf.mxu0
  %v3749 = vadd.f32 0.0, %v3748
  %3750 = vdwg.mxu0
  %3751 = vmatpush.msra.mxu0 0.0
  %3752 = vmatpush.msra.mxu0 0.0
  %3753 = vmatpush.msra.mxu0 0.0
  %3754 = vmatpush.msra.mxu0 0.0
  %3755 = vmatpush.msra.mxu0 0.0
  %3756 = vmatpush.msra.mxu0 0.0
  %3757 = vmatpush.msra.mxu0 0.0
  %3758 = vmatpush.msra.mxu0 0.0
  %3759 = vmatpush.msra.mxu0 0.0
  %3760 = vmatpush.msra.mxu0 0.0
  %3761 = vmatpush.msra.mxu0 0.0
  %3762 = vmatpush.msra.mxu0 0.0
  %3763 = vmatpush.msra.mxu0 0.0
  %3764 = vmatpush.msra.mxu0 0.0
  %3765 = vmatpush.msra.mxu0 %v3604
  %3766 = vmatpush.msra.mxu0 %v3601
  %3767 = vmatmul.f32.gmra.mxu0 %v2979
  %v3768 = vpop.f32.mrf.mxu0
  %v3769 = vadd.f32 0.0, %v3768
  %3770 = vmatmul.f32.gmra.mxu0 %v2982
  %v3771 = vpop.f32.mrf.mxu0
  %v3772 = vadd.f32 0.0, %v3771
  %3773 = vmatmul.f32.gmra.mxu0 %v2985
  %v3774 = vpop.f32.mrf.mxu0
  %v3775 = vadd.f32 0.0, %v3774
  %3776 = vmatmul.f32.gmra.mxu0 %v2988
  %v3777 = vpop.f32.mrf.mxu0
  %v3778 = vadd.f32 0.0, %v3777
  %3779 = vdwg.mxu0
  %3780 = vmatpush.msra.mxu0 0.0
  %3781 = vmatpush.msra.mxu0 0.0
  %3782 = vmatpush.msra.mxu0 0.0
  %3783 = vmatpush.msra.mxu0 0.0
  %3784 = vmatpush.msra.mxu0 0.0
  %3785 = vmatpush.msra.mxu0 0.0
  %3786 = vmatpush.msra.mxu0 0.0
  %3787 = vmatpush.msra.mxu0 0.0
  %3788 = vmatpush.msra.mxu0 0.0
  %3789 = vmatpush.msra.mxu0 0.0
  %3790 = vmatpush.msra.mxu0 0.0
  %3791 = vmatpush.msra.mxu0 0.0
  %3792 = vmatpush.msra.mxu0 0.0
  %3793 = vmatpush.msra.mxu0 0.0
  %3794 = vmatpush.msra.mxu0 %v3633
  %3795 = vmatpush.msra.mxu0 %v3630
  %3796 = vmatmul.f32.gmra.mxu0 %v2979
  %v3797 = vpop.f32.mrf.mxu0
  %v3798 = vadd.f32 0.0, %v3797
  %3799 = vmatmul.f32.gmra.mxu0 %v2982
  %v3800 = vpop.f32.mrf.mxu0
  %v3801 = vadd.f32 0.0, %v3800
  %3802 = vmatmul.f32.gmra.mxu0 %v2985
  %v3803 = vpop.f32.mrf.mxu0
  %v3804 = vadd.f32 0.0, %v3803
  %3805 = vmatmul.f32.gmra.mxu0 %v2988
  %v3806 = vpop.f32.mrf.mxu0
  %v3807 = vadd.f32 0.0, %v3806
  %3808 = vdwg.mxu0
  %3809 = vmatpush.msra.mxu0 0.0
  %3810 = vmatpush.msra.mxu0 0.0
  %3811 = vmatpush.msra.mxu0 0.0
  %3812 = vmatpush.msra.mxu0 0.0
  %3813 = vmatpush.msra.mxu0 0.0
  %3814 = vmatpush.msra.mxu0 0.0
  %3815 = vmatpush.msra.mxu0 0.0
  %3816 = vmatpush.msra.mxu0 0.0
  %3817 = vmatpush.msra.mxu0 0.0
  %3818 = vmatpush.msra.mxu0 0.0
  %3819 = vmatpush.msra.mxu0 0.0
  %3820 = vmatpush.msra.mxu0 0.0
  %3821 = vmatpush.msra.mxu0 0.0
  %3822 = vmatpush.msra.mxu0 0.0
  %3823 = vmatpush.msra.mxu0 %v3662
  %3824 = vmatpush.msra.mxu0 %v3659
  %3825 = vmatmul.f32.gmra.mxu0 %v2979
  %v3826 = vpop.f32.mrf.mxu0
  %v3827 = vadd.f32 0.0, %v3826
  %3828 = vmatmul.f32.gmra.mxu0 %v2982
  %v3829 = vpop.f32.mrf.mxu0
  %v3830 = vadd.f32 0.0, %v3829
  %3831 = vmatmul.f32.gmra.mxu0 %v2985
  %v3832 = vpop.f32.mrf.mxu0
  %v3833 = vadd.f32 0.0, %v3832
  %3834 = vmatmul.f32.gmra.mxu0 %v2988
  %v3835 = vpop.f32.mrf.mxu0
  %v3836 = vadd.f32 0.0, %v3835
  %3837 = vdwg.mxu0
  %3838 = vmatpush.msra.mxu0 0.0
  %3839 = vmatpush.msra.mxu0 0.0
  %3840 = vmatpush.msra.mxu0 0.0
  %3841 = vmatpush.msra.mxu0 0.0
  %3842 = vmatpush.msra.mxu0 0.0
  %3843 = vmatpush.msra.mxu0 0.0
  %3844 = vmatpush.msra.mxu0 0.0
  %3845 = vmatpush.msra.mxu0 0.0
  %3846 = vmatpush.msra.mxu0 0.0
  %3847 = vmatpush.msra.mxu0 0.0
  %3848 = vmatpush.msra.mxu0 0.0
  %3849 = vmatpush.msra.mxu0 0.0
  %3850 = vmatpush.msra.mxu0 0.0
  %3851 = vmatpush.msra.mxu0 0.0
  %3852 = vmatpush.msra.mxu0 %v3691
  %3853 = vmatpush.msra.mxu0 %v3688
  %3854 = vmatmul.f32.gmra.mxu0 %v2979
  %v3855 = vpop.f32.mrf.mxu0
  %v3856 = vadd.f32 0.0, %v3855
  %3857 = vmatmul.f32.gmra.mxu0 %v2982
  %v3858 = vpop.f32.mrf.mxu0
  %v3859 = vadd.f32 0.0, %v3858
  %3860 = vmatmul.f32.gmra.mxu0 %v2985
  %v3861 = vpop.f32.mrf.mxu0
  %v3862 = vadd.f32 0.0, %v3861
  %3863 = vmatmul.f32.gmra.mxu0 %v2988
  %v3864 = vpop.f32.mrf.mxu0
  %v3865 = vadd.f32 0.0, %v3864
  %3866 = vdwg.mxu0
  %3867 = vmatpush.msra.mxu0 0.0
  %3868 = vmatpush.msra.mxu0 0.0
  %3869 = vmatpush.msra.mxu0 0.0
  %3870 = vmatpush.msra.mxu0 0.0
  %3871 = vmatpush.msra.mxu0 0.0
  %3872 = vmatpush.msra.mxu0 0.0
  %3873 = vmatpush.msra.mxu0 0.0
  %3874 = vmatpush.msra.mxu0 0.0
  %3875 = vmatpush.msra.mxu0 0.0
  %3876 = vmatpush.msra.mxu0 0.0
  %3877 = vmatpush.msra.mxu0 0.0
  %3878 = vmatpush.msra.mxu0 0.0
  %3879 = vmatpush.msra.mxu0 0.0
  %3880 = vmatpush.msra.mxu0 0.0
  %3881 = vmatpush.msra.mxu0 %v3720
  %3882 = vmatpush.msra.mxu0 %v3717
  %3883 = vmatmul.f32.gmra.mxu0 %v2979
  %v3884 = vpop.f32.mrf.mxu0
  %v3885 = vadd.f32 0.0, %v3884
  %3886 = vmatmul.f32.gmra.mxu0 %v2982
  %v3887 = vpop.f32.mrf.mxu0
  %v3888 = vadd.f32 0.0, %v3887
  %3889 = vmatmul.f32.gmra.mxu0 %v2985
  %v3890 = vpop.f32.mrf.mxu0
  %v3891 = vadd.f32 0.0, %v3890
  %3892 = vmatmul.f32.gmra.mxu0 %v2988
  %v3893 = vpop.f32.mrf.mxu0
  %v3894 = vadd.f32 0.0, %v3893
  %3895 = vdwg.mxu0
  %v3897 = vsel %vm2977, %v3740, 0
  %v3900 = vsel %vm2977, %v3743, 0
  %v3903 = vsel %vm2977, %v3746, 0
  %v3906 = vsel %vm2977, %v3749, 0
  %3908 = vmatpush.msra.mxu0 0.0
  %3909 = vmatpush.msra.mxu0 0.0
  %3910 = vmatpush.msra.mxu0 0.0
  %3911 = vmatpush.msra.mxu0 0.0
  %3912 = vmatpush.msra.mxu0 0.0
  %3913 = vmatpush.msra.mxu0 0.0
  %3914 = vmatpush.msra.mxu0 0.0
  %3915 = vmatpush.msra.mxu0 0.0
  %3916 = vmatpush.msra.mxu0 0.0
  %3917 = vmatpush.msra.mxu0 0.0
  %3918 = vmatpush.msra.mxu0 0.0
  %3919 = vmatpush.msra.mxu0 0.0
  %3920 = vmatpush.msra.mxu0 0.0
  %3921 = vmatpush.msra.mxu0 0.0
  %3922 = vmatpush.msra.mxu0 %v2658
  %3923 = vmatpush.msra.mxu0 %v2657
  %3924 = vmatmul.f32.gmra.mxu0 %v3897
  %v3925 = vpop.f32.mrf.mxu0
  %v3926 = vadd.f32 0.0, %v3925
  %3927 = vmatmul.f32.gmra.mxu0 %v3900
  %v3928 = vpop.f32.mrf.mxu0
  %v3929 = vadd.f32 0.0, %v3928
  %3930 = vmatmul.f32.gmra.mxu0 %v3903
  %v3931 = vpop.f32.mrf.mxu0
  %v3932 = vadd.f32 0.0, %v3931
  %3933 = vmatmul.f32.gmra.mxu0 %v3906
  %v3934 = vpop.f32.mrf.mxu0
  %v3935 = vadd.f32 0.0, %v3934
  %3936 = vdwg.mxu0
  %v3938 = vsel %vm2977, %v3769, 0
  %v3941 = vsel %vm2977, %v3772, 0
  %v3944 = vsel %vm2977, %v3775, 0
  %v3947 = vsel %vm2977, %v3778, 0
  %3949 = vmatpush.msra.mxu0 0.0
  %3950 = vmatpush.msra.mxu0 0.0
  %3951 = vmatpush.msra.mxu0 0.0
  %3952 = vmatpush.msra.mxu0 0.0
  %3953 = vmatpush.msra.mxu0 0.0
  %3954 = vmatpush.msra.mxu0 0.0
  %3955 = vmatpush.msra.mxu0 0.0
  %3956 = vmatpush.msra.mxu0 0.0
  %3957 = vmatpush.msra.mxu0 0.0
  %3958 = vmatpush.msra.mxu0 0.0
  %3959 = vmatpush.msra.mxu0 0.0
  %3960 = vmatpush.msra.mxu0 0.0
  %3961 = vmatpush.msra.mxu0 0.0
  %3962 = vmatpush.msra.mxu0 0.0
  %3963 = vmatpush.msra.mxu0 %v2658
  %3964 = vmatpush.msra.mxu0 %v2657
  %3965 = vmatmul.f32.gmra.mxu0 %v3938
  %v3966 = vpop.f32.mrf.mxu0
  %v3967 = vadd.f32 0.0, %v3966
  %3968 = vmatmul.f32.gmra.mxu0 %v3941
  %v3969 = vpop.f32.mrf.mxu0
  %v3970 = vadd.f32 0.0, %v3969
  %3971 = vmatmul.f32.gmra.mxu0 %v3944
  %v3972 = vpop.f32.mrf.mxu0
  %v3973 = vadd.f32 0.0, %v3972
  %3974 = vmatmul.f32.gmra.mxu0 %v3947
  %v3975 = vpop.f32.mrf.mxu0
  %v3976 = vadd.f32 0.0, %v3975
  %3977 = vdwg.mxu0
  %v3979 = vsel %vm2977, %v3798, 0
  %v3982 = vsel %vm2977, %v3801, 0
  %v3985 = vsel %vm2977, %v3804, 0
  %v3988 = vsel %vm2977, %v3807, 0
  %3990 = vmatpush.msra.mxu0 0.0
  %3991 = vmatpush.msra.mxu0 0.0
  %3992 = vmatpush.msra.mxu0 0.0
  %3993 = vmatpush.msra.mxu0 0.0
  %3994 = vmatpush.msra.mxu0 0.0
  %3995 = vmatpush.msra.mxu0 0.0
  %3996 = vmatpush.msra.mxu0 0.0
  %3997 = vmatpush.msra.mxu0 0.0
  %3998 = vmatpush.msra.mxu0 0.0
  %3999 = vmatpush.msra.mxu0 0.0
  %4000 = vmatpush.msra.mxu0 0.0
  %4001 = vmatpush.msra.mxu0 0.0
  %4002 = vmatpush.msra.mxu0 0.0
  %4003 = vmatpush.msra.mxu0 0.0
  %4004 = vmatpush.msra.mxu0 %v2658
  %4005 = vmatpush.msra.mxu0 %v2657
  %4006 = vmatmul.f32.gmra.mxu0 %v3979
  %v4007 = vpop.f32.mrf.mxu0
  %v4008 = vadd.f32 0.0, %v4007
  %4009 = vmatmul.f32.gmra.mxu0 %v3982
  %v4010 = vpop.f32.mrf.mxu0
  %v4011 = vadd.f32 0.0, %v4010
  %4012 = vmatmul.f32.gmra.mxu0 %v3985
  %v4013 = vpop.f32.mrf.mxu0
  %v4014 = vadd.f32 0.0, %v4013
  %4015 = vmatmul.f32.gmra.mxu0 %v3988
  %v4016 = vpop.f32.mrf.mxu0
  %v4017 = vadd.f32 0.0, %v4016
  %4018 = vdwg.mxu0
  %v4020 = vsel %vm2977, %v3827, 0
  %v4023 = vsel %vm2977, %v3830, 0
  %v4026 = vsel %vm2977, %v3833, 0
  %v4029 = vsel %vm2977, %v3836, 0
  %4031 = vmatpush.msra.mxu0 0.0
  %4032 = vmatpush.msra.mxu0 0.0
  %4033 = vmatpush.msra.mxu0 0.0
  %4034 = vmatpush.msra.mxu0 0.0
  %4035 = vmatpush.msra.mxu0 0.0
  %4036 = vmatpush.msra.mxu0 0.0
  %4037 = vmatpush.msra.mxu0 0.0
  %4038 = vmatpush.msra.mxu0 0.0
  %4039 = vmatpush.msra.mxu0 0.0
  %4040 = vmatpush.msra.mxu0 0.0
  %4041 = vmatpush.msra.mxu0 0.0
  %4042 = vmatpush.msra.mxu0 0.0
  %4043 = vmatpush.msra.mxu0 0.0
  %4044 = vmatpush.msra.mxu0 0.0
  %4045 = vmatpush.msra.mxu0 %v2658
  %4046 = vmatpush.msra.mxu0 %v2657
  %4047 = vmatmul.f32.gmra.mxu0 %v4020
  %v4048 = vpop.f32.mrf.mxu0
  %v4049 = vadd.f32 0.0, %v4048
  %4050 = vmatmul.f32.gmra.mxu0 %v4023
  %v4051 = vpop.f32.mrf.mxu0
  %v4052 = vadd.f32 0.0, %v4051
  %4053 = vmatmul.f32.gmra.mxu0 %v4026
  %v4054 = vpop.f32.mrf.mxu0
  %v4055 = vadd.f32 0.0, %v4054
  %4056 = vmatmul.f32.gmra.mxu0 %v4029
  %v4057 = vpop.f32.mrf.mxu0
  %v4058 = vadd.f32 0.0, %v4057
  %4059 = vdwg.mxu0
  %v4061 = vsel %vm2977, %v3856, 0
  %v4064 = vsel %vm2977, %v3859, 0
  %v4067 = vsel %vm2977, %v3862, 0
  %v4070 = vsel %vm2977, %v3865, 0
  %4072 = vmatpush.msra.mxu0 0.0
  %4073 = vmatpush.msra.mxu0 0.0
  %4074 = vmatpush.msra.mxu0 0.0
  %4075 = vmatpush.msra.mxu0 0.0
  %4076 = vmatpush.msra.mxu0 0.0
  %4077 = vmatpush.msra.mxu0 0.0
  %4078 = vmatpush.msra.mxu0 0.0
  %4079 = vmatpush.msra.mxu0 0.0
  %4080 = vmatpush.msra.mxu0 0.0
  %4081 = vmatpush.msra.mxu0 0.0
  %4082 = vmatpush.msra.mxu0 0.0
  %4083 = vmatpush.msra.mxu0 0.0
  %4084 = vmatpush.msra.mxu0 0.0
  %4085 = vmatpush.msra.mxu0 0.0
  %4086 = vmatpush.msra.mxu0 %v2658
  %4087 = vmatpush.msra.mxu0 %v2657
  %4088 = vmatmul.f32.gmra.mxu0 %v4061
  %v4089 = vpop.f32.mrf.mxu0
  %v4090 = vadd.f32 0.0, %v4089
  %4091 = vmatmul.f32.gmra.mxu0 %v4064
  %v4092 = vpop.f32.mrf.mxu0
  %v4093 = vadd.f32 0.0, %v4092
  %4094 = vmatmul.f32.gmra.mxu0 %v4067
  %v4095 = vpop.f32.mrf.mxu0
  %v4096 = vadd.f32 0.0, %v4095
  %4097 = vmatmul.f32.gmra.mxu0 %v4070
  %v4098 = vpop.f32.mrf.mxu0
  %v4099 = vadd.f32 0.0, %v4098
  %4100 = vdwg.mxu0
  %v4102 = vsel %vm2977, %v3885, 0
  %v4105 = vsel %vm2977, %v3888, 0
  %v4108 = vsel %vm2977, %v3891, 0
  %v4111 = vsel %vm2977, %v3894, 0
  %4113 = vmatpush.msra.mxu0 0.0
  %4114 = vmatpush.msra.mxu0 0.0
  %4115 = vmatpush.msra.mxu0 0.0
  %4116 = vmatpush.msra.mxu0 0.0
  %4117 = vmatpush.msra.mxu0 0.0
  %4118 = vmatpush.msra.mxu0 0.0
  %4119 = vmatpush.msra.mxu0 0.0
  %4120 = vmatpush.msra.mxu0 0.0
  %4121 = vmatpush.msra.mxu0 0.0
  %4122 = vmatpush.msra.mxu0 0.0
  %4123 = vmatpush.msra.mxu0 0.0
  %4124 = vmatpush.msra.mxu0 0.0
  %4125 = vmatpush.msra.mxu0 0.0
  %4126 = vmatpush.msra.mxu0 0.0
  %4127 = vmatpush.msra.mxu0 %v2658
  %4128 = vmatpush.msra.mxu0 %v2657
  %4129 = vmatmul.f32.gmra.mxu0 %v4102
  %v4130 = vpop.f32.mrf.mxu0
  %v4131 = vadd.f32 0.0, %v4130
  %4132 = vmatmul.f32.gmra.mxu0 %v4105
  %v4133 = vpop.f32.mrf.mxu0
  %v4134 = vadd.f32 0.0, %v4133
  %4135 = vmatmul.f32.gmra.mxu0 %v4108
  %v4136 = vpop.f32.mrf.mxu0
  %v4137 = vadd.f32 0.0, %v4136
  %4138 = vmatmul.f32.gmra.mxu0 %v4111
  %v4139 = vpop.f32.mrf.mxu0
  %v4140 = vadd.f32 0.0, %v4139
  %4141 = vdwg.mxu0
  %v4142 = vsub.f32 %v408, %v3194
  %v4143 = vsub.f32 %v411, %v3197
  %v4144 = vsub.f32 %v414, %v3200
  %v4145 = vsub.f32 %v417, %v3203
  %v4146 = vsub.f32 %v449, %v3235
  %v4147 = vsub.f32 %v452, %v3238
  %v4148 = vsub.f32 %v455, %v3241
  %v4149 = vsub.f32 %v458, %v3244
  %v4150 = vsub.f32 %v490, %v3276
  %v4151 = vsub.f32 %v493, %v3279
  %v4152 = vsub.f32 %v496, %v3282
  %v4153 = vsub.f32 %v499, %v3285
  %v4154 = vsub.f32 %v531, %v3317
  %v4155 = vsub.f32 %v534, %v3320
  %v4156 = vsub.f32 %v537, %v3323
  %v4157 = vsub.f32 %v540, %v3326
  %v4158 = vsub.f32 %v572, %v3358
  %v4159 = vsub.f32 %v575, %v3361
  %v4160 = vsub.f32 %v578, %v3364
  %v4161 = vsub.f32 %v581, %v3367
  %v4162 = vsub.f32 %v613, %v3399
  %v4163 = vsub.f32 %v616, %v3402
  %v4164 = vsub.f32 %v619, %v3405
  %v4165 = vsub.f32 %v622, %v3408
  %v4166 = vsub.f32 %v1489, %v3926
  %v4167 = vsub.f32 %v1492, %v3929
  %v4168 = vsub.f32 %v1495, %v3932
  %v4169 = vsub.f32 %v1498, %v3935
  %v4170 = vsub.f32 %v1530, %v3967
  %v4171 = vsub.f32 %v1533, %v3970
  %v4172 = vsub.f32 %v1536, %v3973
  %v4173 = vsub.f32 %v1539, %v3976
  %v4174 = vsub.f32 %v1571, %v4008
  %v4175 = vsub.f32 %v1574, %v4011
  %v4176 = vsub.f32 %v1577, %v4014
  %v4177 = vsub.f32 %v1580, %v4017
  %v4178 = vsub.f32 %v1612, %v4049
  %v4179 = vsub.f32 %v1615, %v4052
  %v4180 = vsub.f32 %v1618, %v4055
  %v4181 = vsub.f32 %v1621, %v4058
  %v4182 = vsub.f32 %v1653, %v4090
  %v4183 = vsub.f32 %v1656, %v4093
  %v4184 = vsub.f32 %v1659, %v4096
  %v4185 = vsub.f32 %v1662, %v4099
  %v4186 = vsub.f32 %v1694, %v4131
  %v4187 = vsub.f32 %v1697, %v4134
  %v4188 = vsub.f32 %v1700, %v4137
  %v4189 = vsub.f32 %v1703, %v4140
  %v4190 = vsub.f32 %v4142, %v4166
  %v4191 = vsub.f32 %v4143, %v4167
  %v4192 = vsub.f32 %v4144, %v4168
  %v4193 = vsub.f32 %v4145, %v4169
  %v4194 = vsub.f32 %v4146, %v4170
  %v4195 = vsub.f32 %v4147, %v4171
  %v4196 = vsub.f32 %v4148, %v4172
  %v4197 = vsub.f32 %v4149, %v4173
  %v4198 = vsub.f32 %v4150, %v4174
  %v4199 = vsub.f32 %v4151, %v4175
  %v4200 = vsub.f32 %v4152, %v4176
  %v4201 = vsub.f32 %v4153, %v4177
  %v4202 = vsub.f32 %v4154, %v4178
  %v4203 = vsub.f32 %v4155, %v4179
  %v4204 = vsub.f32 %v4156, %v4180
  %v4205 = vsub.f32 %v4157, %v4181
  %v4206 = vsub.f32 %v4158, %v4182
  %v4207 = vsub.f32 %v4159, %v4183
  %v4208 = vsub.f32 %v4160, %v4184
  %v4209 = vsub.f32 %v4161, %v4185
  %v4210 = vsub.f32 %v4162, %v4186
  %v4211 = vsub.f32 %v4163, %v4187
  %v4212 = vsub.f32 %v4164, %v4188
  %v4213 = vsub.f32 %v4165, %v4189
  %v4214 = vand.u32 2147483647, %v4190
  %v4215 = vand.u32 2147483647, %v4191
  %v4216 = vand.u32 2147483647, %v4192
  %v4217 = vand.u32 2147483647, %v4193
  %v4218 = vand.u32 2147483647, %v4194
  %v4219 = vand.u32 2147483647, %v4195
  %v4220 = vand.u32 2147483647, %v4196
  %v4221 = vand.u32 2147483647, %v4197
  %v4222 = vand.u32 2147483647, %v4198
  %v4223 = vand.u32 2147483647, %v4199
  %v4224 = vand.u32 2147483647, %v4200
  %v4225 = vand.u32 2147483647, %v4201
  %v4226 = vand.u32 2147483647, %v4202
  %v4227 = vand.u32 2147483647, %v4203
  %v4228 = vand.u32 2147483647, %v4204
  %v4229 = vand.u32 2147483647, %v4205
  %v4230 = vand.u32 2147483647, %v4206
  %v4231 = vand.u32 2147483647, %v4207
  %v4232 = vand.u32 2147483647, %v4208
  %v4233 = vand.u32 2147483647, %v4209
  %v4234 = vand.u32 2147483647, %v4210
  %v4235 = vand.u32 2147483647, %v4211
  %v4236 = vand.u32 2147483647, %v4212
  %v4237 = vand.u32 2147483647, %v4213
  %v4238 = vsel %vm624, %v4214, 0.0
  %v4239 = vsel %vm624, %v4218, 0.0
  %v4240 = vadd.f32 %v4238, %v4239
  %v4241 = vsel %vm624, %v4222, 0.0
  %v4242 = vadd.f32 %v4240, %v4241
  %v4243 = vsel %vm624, %v4226, 0.0
  %v4244 = vadd.f32 %v4242, %v4243
  %v4245 = vsel %vm624, %v4230, 0.0
  %v4246 = vadd.f32 %v4244, %v4245
  %v4247 = vsel %vm624, %v4234, 0.0
  %v4248 = vadd.f32 %v4246, %v4247
  %v4249 = vsel %vm624, %v4215, 0.0
  %v4250 = vsel %vm624, %v4219, 0.0
  %v4251 = vadd.f32 %v4249, %v4250
  %v4252 = vsel %vm624, %v4223, 0.0
  %v4253 = vadd.f32 %v4251, %v4252
  %v4254 = vsel %vm624, %v4227, 0.0
  %v4255 = vadd.f32 %v4253, %v4254
  %v4256 = vsel %vm624, %v4231, 0.0
  %v4257 = vadd.f32 %v4255, %v4256
  %v4258 = vsel %vm624, %v4235, 0.0
  %v4259 = vadd.f32 %v4257, %v4258
  %v4260 = vsel %vm624, %v4216, 0.0
  %v4261 = vsel %vm624, %v4220, 0.0
  %v4262 = vadd.f32 %v4260, %v4261
  %v4263 = vsel %vm624, %v4224, 0.0
  %v4264 = vadd.f32 %v4262, %v4263
  %v4265 = vsel %vm624, %v4228, 0.0
  %v4266 = vadd.f32 %v4264, %v4265
  %v4267 = vsel %vm624, %v4232, 0.0
  %v4268 = vadd.f32 %v4266, %v4267
  %v4269 = vsel %vm624, %v4236, 0.0
  %v4270 = vadd.f32 %v4268, %v4269
  %v4271 = vsel %vm624, %v4217, 0.0
  %v4272 = vsel %vm624, %v4221, 0.0
  %v4273 = vadd.f32 %v4271, %v4272
  %v4274 = vsel %vm624, %v4225, 0.0
  %v4275 = vadd.f32 %v4273, %v4274
  %v4276 = vsel %vm624, %v4229, 0.0
  %v4277 = vadd.f32 %v4275, %v4276
  %v4278 = vsel %vm624, %v4233, 0.0
  %v4279 = vadd.f32 %v4277, %v4278
  %v4280 = vsel %vm624, %v4237, 0.0
  %v4281 = vadd.f32 %v4279, %v4280
  %v4282 = vsel %vm624, %v4248, 0.0
  %v4283 = vsel %vm624, %v4259, 0.0
  %v4284 = vadd.f32 %v4282, %v4283
  %v4285 = vsel %vm624, %v4270, 0.0
  %v4286 = vadd.f32 %v4284, %v4285
  %v4287 = vsel %vm624, %v4281, 0.0
  %v4288 = vadd.f32 %v4286, %v4287
  %4289 = vadd.xlane.f32.xlu0 %v4288
  %v4290 = vpop.xlane.xlu0 %4289
  %v4291 = vrot.slane %v4290, 4
  %v4292 = vadd.f32 %v4290, %v4291
  %v4293 = vrot.slane %v4292, 2
  %v4294 = vadd.f32 %v4292, %v4293
  %v4295 = vrot.slane %v4294, 1
  %v4296 = vadd.f32 %v4294, %v4295
  %s4297 = vtos %v4296
  %v4298 = vstv %s4297
  %v4299 = vmul.f32 %v4298, 2.0
  %v4300 = vadd.f32 %v2646, %v4299
  %v4301 = vld [vmem:[%s10] sm:$0xff]
  %v4302 = vld [vmem:[%s11] sm:$0xff]
  %v4303 = vld [vmem:[%s11 + $0x8] sm:$0xff]
  %v4304 = vld [vmem:[%s12] sm:$0xff]
  %v4305 = vld [vmem:[%s12 + $0x8] sm:$0xff]
  %v4306 = vld [vmem:[%s13] sm:$0xff]
  %v4308 = vsel %vm2977, %v4301, 0
  %4310 = vmatpush.msra.mxu0 0.0
  %4311 = vmatpush.msra.mxu0 0.0
  %4312 = vmatpush.msra.mxu0 0.0
  %4313 = vmatpush.msra.mxu0 0.0
  %4314 = vmatpush.msra.mxu0 0.0
  %4315 = vmatpush.msra.mxu0 0.0
  %4316 = vmatpush.msra.mxu0 0.0
  %4317 = vmatpush.msra.mxu0 0.0
  %4318 = vmatpush.msra.mxu0 0.0
  %4319 = vmatpush.msra.mxu0 0.0
  %4320 = vmatpush.msra.mxu0 0.0
  %4321 = vmatpush.msra.mxu0 0.0
  %4322 = vmatpush.msra.mxu0 0.0
  %4323 = vmatpush.msra.mxu0 0.0
  %4324 = vmatpush.msra.mxu0 %v2830
  %4325 = vmatpush.msra.mxu0 %v2827
  %4326 = vmatmul.f32.gmra.mxu0 %v4308
  %v4327 = vpop.f32.mrf.mxu0
  %v4328 = vadd.f32 0.0, %v4327
  %4329 = vdwg.mxu0
  %4330 = vmatpush.msra.mxu0 0.0
  %4331 = vmatpush.msra.mxu0 0.0
  %4332 = vmatpush.msra.mxu0 0.0
  %4333 = vmatpush.msra.mxu0 0.0
  %4334 = vmatpush.msra.mxu0 0.0
  %4335 = vmatpush.msra.mxu0 0.0
  %4336 = vmatpush.msra.mxu0 0.0
  %4337 = vmatpush.msra.mxu0 0.0
  %4338 = vmatpush.msra.mxu0 0.0
  %4339 = vmatpush.msra.mxu0 0.0
  %4340 = vmatpush.msra.mxu0 0.0
  %4341 = vmatpush.msra.mxu0 0.0
  %4342 = vmatpush.msra.mxu0 0.0
  %4343 = vmatpush.msra.mxu0 0.0
  %4344 = vmatpush.msra.mxu0 %v2859
  %4345 = vmatpush.msra.mxu0 %v2856
  %4346 = vmatmul.f32.gmra.mxu0 %v4308
  %v4347 = vpop.f32.mrf.mxu0
  %v4348 = vadd.f32 0.0, %v4347
  %4349 = vdwg.mxu0
  %4350 = vmatpush.msra.mxu0 0.0
  %4351 = vmatpush.msra.mxu0 0.0
  %4352 = vmatpush.msra.mxu0 0.0
  %4353 = vmatpush.msra.mxu0 0.0
  %4354 = vmatpush.msra.mxu0 0.0
  %4355 = vmatpush.msra.mxu0 0.0
  %4356 = vmatpush.msra.mxu0 0.0
  %4357 = vmatpush.msra.mxu0 0.0
  %4358 = vmatpush.msra.mxu0 0.0
  %4359 = vmatpush.msra.mxu0 0.0
  %4360 = vmatpush.msra.mxu0 0.0
  %4361 = vmatpush.msra.mxu0 0.0
  %4362 = vmatpush.msra.mxu0 0.0
  %4363 = vmatpush.msra.mxu0 0.0
  %4364 = vmatpush.msra.mxu0 %v2888
  %4365 = vmatpush.msra.mxu0 %v2885
  %4366 = vmatmul.f32.gmra.mxu0 %v4308
  %v4367 = vpop.f32.mrf.mxu0
  %v4368 = vadd.f32 0.0, %v4367
  %4369 = vdwg.mxu0
  %4370 = vmatpush.msra.mxu0 0.0
  %4371 = vmatpush.msra.mxu0 0.0
  %4372 = vmatpush.msra.mxu0 0.0
  %4373 = vmatpush.msra.mxu0 0.0
  %4374 = vmatpush.msra.mxu0 0.0
  %4375 = vmatpush.msra.mxu0 0.0
  %4376 = vmatpush.msra.mxu0 0.0
  %4377 = vmatpush.msra.mxu0 0.0
  %4378 = vmatpush.msra.mxu0 0.0
  %4379 = vmatpush.msra.mxu0 0.0
  %4380 = vmatpush.msra.mxu0 0.0
  %4381 = vmatpush.msra.mxu0 0.0
  %4382 = vmatpush.msra.mxu0 0.0
  %4383 = vmatpush.msra.mxu0 0.0
  %4384 = vmatpush.msra.mxu0 %v2917
  %4385 = vmatpush.msra.mxu0 %v2914
  %4386 = vmatmul.f32.gmra.mxu0 %v4308
  %v4387 = vpop.f32.mrf.mxu0
  %v4388 = vadd.f32 0.0, %v4387
  %4389 = vdwg.mxu0
  %4390 = vmatpush.msra.mxu0 0.0
  %4391 = vmatpush.msra.mxu0 0.0
  %4392 = vmatpush.msra.mxu0 0.0
  %4393 = vmatpush.msra.mxu0 0.0
  %4394 = vmatpush.msra.mxu0 0.0
  %4395 = vmatpush.msra.mxu0 0.0
  %4396 = vmatpush.msra.mxu0 0.0
  %4397 = vmatpush.msra.mxu0 0.0
  %4398 = vmatpush.msra.mxu0 0.0
  %4399 = vmatpush.msra.mxu0 0.0
  %4400 = vmatpush.msra.mxu0 0.0
  %4401 = vmatpush.msra.mxu0 0.0
  %4402 = vmatpush.msra.mxu0 0.0
  %4403 = vmatpush.msra.mxu0 0.0
  %4404 = vmatpush.msra.mxu0 %v2946
  %4405 = vmatpush.msra.mxu0 %v2943
  %4406 = vmatmul.f32.gmra.mxu0 %v4308
  %v4407 = vpop.f32.mrf.mxu0
  %v4408 = vadd.f32 0.0, %v4407
  %4409 = vdwg.mxu0
  %4410 = vmatpush.msra.mxu0 0.0
  %4411 = vmatpush.msra.mxu0 0.0
  %4412 = vmatpush.msra.mxu0 0.0
  %4413 = vmatpush.msra.mxu0 0.0
  %4414 = vmatpush.msra.mxu0 0.0
  %4415 = vmatpush.msra.mxu0 0.0
  %4416 = vmatpush.msra.mxu0 0.0
  %4417 = vmatpush.msra.mxu0 0.0
  %4418 = vmatpush.msra.mxu0 0.0
  %4419 = vmatpush.msra.mxu0 0.0
  %4420 = vmatpush.msra.mxu0 0.0
  %4421 = vmatpush.msra.mxu0 0.0
  %4422 = vmatpush.msra.mxu0 0.0
  %4423 = vmatpush.msra.mxu0 0.0
  %4424 = vmatpush.msra.mxu0 %v2975
  %4425 = vmatpush.msra.mxu0 %v2972
  %4426 = vmatmul.f32.gmra.mxu0 %v4308
  %v4427 = vpop.f32.mrf.mxu0
  %v4428 = vadd.f32 0.0, %v4427
  %4429 = vdwg.mxu0
  %v4431 = vsel %vm2977, %v4328, 0
  %4433 = vmatpush.msra.mxu0 0.0
  %4434 = vmatpush.msra.mxu0 0.0
  %4435 = vmatpush.msra.mxu0 0.0
  %4436 = vmatpush.msra.mxu0 0.0
  %4437 = vmatpush.msra.mxu0 0.0
  %4438 = vmatpush.msra.mxu0 0.0
  %4439 = vmatpush.msra.mxu0 0.0
  %4440 = vmatpush.msra.mxu0 0.0
  %4441 = vmatpush.msra.mxu0 0.0
  %4442 = vmatpush.msra.mxu0 0.0
  %4443 = vmatpush.msra.mxu0 0.0
  %4444 = vmatpush.msra.mxu0 0.0
  %4445 = vmatpush.msra.mxu0 0.0
  %4446 = vmatpush.msra.mxu0 0.0
  %4447 = vmatpush.msra.mxu0 %v4303
  %4448 = vmatpush.msra.mxu0 %v4302
  %4449 = vmatmul.f32.gmra.mxu0 %v4431
  %v4450 = vpop.f32.mrf.mxu0
  %v4451 = vadd.f32 0.0, %v4450
  %4452 = vdwg.mxu0
  %v4454 = vsel %vm2977, %v4348, 0
  %4456 = vmatpush.msra.mxu0 0.0
  %4457 = vmatpush.msra.mxu0 0.0
  %4458 = vmatpush.msra.mxu0 0.0
  %4459 = vmatpush.msra.mxu0 0.0
  %4460 = vmatpush.msra.mxu0 0.0
  %4461 = vmatpush.msra.mxu0 0.0
  %4462 = vmatpush.msra.mxu0 0.0
  %4463 = vmatpush.msra.mxu0 0.0
  %4464 = vmatpush.msra.mxu0 0.0
  %4465 = vmatpush.msra.mxu0 0.0
  %4466 = vmatpush.msra.mxu0 0.0
  %4467 = vmatpush.msra.mxu0 0.0
  %4468 = vmatpush.msra.mxu0 0.0
  %4469 = vmatpush.msra.mxu0 0.0
  %4470 = vmatpush.msra.mxu0 %v4303
  %4471 = vmatpush.msra.mxu0 %v4302
  %4472 = vmatmul.f32.gmra.mxu0 %v4454
  %v4473 = vpop.f32.mrf.mxu0
  %v4474 = vadd.f32 0.0, %v4473
  %4475 = vdwg.mxu0
  %v4477 = vsel %vm2977, %v4368, 0
  %4479 = vmatpush.msra.mxu0 0.0
  %4480 = vmatpush.msra.mxu0 0.0
  %4481 = vmatpush.msra.mxu0 0.0
  %4482 = vmatpush.msra.mxu0 0.0
  %4483 = vmatpush.msra.mxu0 0.0
  %4484 = vmatpush.msra.mxu0 0.0
  %4485 = vmatpush.msra.mxu0 0.0
  %4486 = vmatpush.msra.mxu0 0.0
  %4487 = vmatpush.msra.mxu0 0.0
  %4488 = vmatpush.msra.mxu0 0.0
  %4489 = vmatpush.msra.mxu0 0.0
  %4490 = vmatpush.msra.mxu0 0.0
  %4491 = vmatpush.msra.mxu0 0.0
  %4492 = vmatpush.msra.mxu0 0.0
  %4493 = vmatpush.msra.mxu0 %v4303
  %4494 = vmatpush.msra.mxu0 %v4302
  %4495 = vmatmul.f32.gmra.mxu0 %v4477
  %v4496 = vpop.f32.mrf.mxu0
  %v4497 = vadd.f32 0.0, %v4496
  %4498 = vdwg.mxu0
  %v4500 = vsel %vm2977, %v4388, 0
  %4502 = vmatpush.msra.mxu0 0.0
  %4503 = vmatpush.msra.mxu0 0.0
  %4504 = vmatpush.msra.mxu0 0.0
  %4505 = vmatpush.msra.mxu0 0.0
  %4506 = vmatpush.msra.mxu0 0.0
  %4507 = vmatpush.msra.mxu0 0.0
  %4508 = vmatpush.msra.mxu0 0.0
  %4509 = vmatpush.msra.mxu0 0.0
  %4510 = vmatpush.msra.mxu0 0.0
  %4511 = vmatpush.msra.mxu0 0.0
  %4512 = vmatpush.msra.mxu0 0.0
  %4513 = vmatpush.msra.mxu0 0.0
  %4514 = vmatpush.msra.mxu0 0.0
  %4515 = vmatpush.msra.mxu0 0.0
  %4516 = vmatpush.msra.mxu0 %v4303
  %4517 = vmatpush.msra.mxu0 %v4302
  %4518 = vmatmul.f32.gmra.mxu0 %v4500
  %v4519 = vpop.f32.mrf.mxu0
  %v4520 = vadd.f32 0.0, %v4519
  %4521 = vdwg.mxu0
  %v4523 = vsel %vm2977, %v4408, 0
  %4525 = vmatpush.msra.mxu0 0.0
  %4526 = vmatpush.msra.mxu0 0.0
  %4527 = vmatpush.msra.mxu0 0.0
  %4528 = vmatpush.msra.mxu0 0.0
  %4529 = vmatpush.msra.mxu0 0.0
  %4530 = vmatpush.msra.mxu0 0.0
  %4531 = vmatpush.msra.mxu0 0.0
  %4532 = vmatpush.msra.mxu0 0.0
  %4533 = vmatpush.msra.mxu0 0.0
  %4534 = vmatpush.msra.mxu0 0.0
  %4535 = vmatpush.msra.mxu0 0.0
  %4536 = vmatpush.msra.mxu0 0.0
  %4537 = vmatpush.msra.mxu0 0.0
  %4538 = vmatpush.msra.mxu0 0.0
  %4539 = vmatpush.msra.mxu0 %v4303
  %4540 = vmatpush.msra.mxu0 %v4302
  %4541 = vmatmul.f32.gmra.mxu0 %v4523
  %v4542 = vpop.f32.mrf.mxu0
  %v4543 = vadd.f32 0.0, %v4542
  %4544 = vdwg.mxu0
  %v4546 = vsel %vm2977, %v4428, 0
  %4548 = vmatpush.msra.mxu0 0.0
  %4549 = vmatpush.msra.mxu0 0.0
  %4550 = vmatpush.msra.mxu0 0.0
  %4551 = vmatpush.msra.mxu0 0.0
  %4552 = vmatpush.msra.mxu0 0.0
  %4553 = vmatpush.msra.mxu0 0.0
  %4554 = vmatpush.msra.mxu0 0.0
  %4555 = vmatpush.msra.mxu0 0.0
  %4556 = vmatpush.msra.mxu0 0.0
  %4557 = vmatpush.msra.mxu0 0.0
  %4558 = vmatpush.msra.mxu0 0.0
  %4559 = vmatpush.msra.mxu0 0.0
  %4560 = vmatpush.msra.mxu0 0.0
  %4561 = vmatpush.msra.mxu0 0.0
  %4562 = vmatpush.msra.mxu0 %v4303
  %4563 = vmatpush.msra.mxu0 %v4302
  %4564 = vmatmul.f32.gmra.mxu0 %v4546
  %v4565 = vpop.f32.mrf.mxu0
  %v4566 = vadd.f32 0.0, %v4565
  %4567 = vdwg.mxu0
  %vm4568 = vcmask 64512
  %v4570 = vsel %vm4568, %v4304, 0
  %v4573 = vsel %vm4568, %v4305, 0
  %4575 = vmatpush.msra.mxu0 0.0
  %4576 = vmatpush.msra.mxu0 0.0
  %4577 = vmatpush.msra.mxu0 0.0
  %4578 = vmatpush.msra.mxu0 0.0
  %4579 = vmatpush.msra.mxu0 0.0
  %4580 = vmatpush.msra.mxu0 0.0
  %4581 = vmatpush.msra.mxu0 0.0
  %4582 = vmatpush.msra.mxu0 0.0
  %4583 = vmatpush.msra.mxu0 0.0
  %4584 = vmatpush.msra.mxu0 0.0
  %4585 = vmatpush.msra.mxu0 0.0
  %4586 = vmatpush.msra.mxu0 0.0
  %4587 = vmatpush.msra.mxu0 0.0
  %4588 = vmatpush.msra.mxu0 0.0
  %4589 = vmatpush.msra.mxu0 0.0
  %4590 = vmatpush.msra.mxu0 %v4451
  %4591 = vmatmul.f32.gmra.mxu0 %v4570
  %v4592 = vpop.f32.mrf.mxu0
  %v4593 = vadd.f32 0.0, %v4592
  %4594 = vmatmul.f32.gmra.mxu0 %v4573
  %v4595 = vpop.f32.mrf.mxu0
  %v4596 = vadd.f32 0.0, %v4595
  %4597 = vdwg.mxu0
  %4598 = vmatpush.msra.mxu0 0.0
  %4599 = vmatpush.msra.mxu0 0.0
  %4600 = vmatpush.msra.mxu0 0.0
  %4601 = vmatpush.msra.mxu0 0.0
  %4602 = vmatpush.msra.mxu0 0.0
  %4603 = vmatpush.msra.mxu0 0.0
  %4604 = vmatpush.msra.mxu0 0.0
  %4605 = vmatpush.msra.mxu0 0.0
  %4606 = vmatpush.msra.mxu0 0.0
  %4607 = vmatpush.msra.mxu0 0.0
  %4608 = vmatpush.msra.mxu0 0.0
  %4609 = vmatpush.msra.mxu0 0.0
  %4610 = vmatpush.msra.mxu0 0.0
  %4611 = vmatpush.msra.mxu0 0.0
  %4612 = vmatpush.msra.mxu0 0.0
  %4613 = vmatpush.msra.mxu0 %v4474
  %4614 = vmatmul.f32.gmra.mxu0 %v4570
  %v4615 = vpop.f32.mrf.mxu0
  %v4616 = vadd.f32 0.0, %v4615
  %4617 = vmatmul.f32.gmra.mxu0 %v4573
  %v4618 = vpop.f32.mrf.mxu0
  %v4619 = vadd.f32 0.0, %v4618
  %4620 = vdwg.mxu0
  %4621 = vmatpush.msra.mxu0 0.0
  %4622 = vmatpush.msra.mxu0 0.0
  %4623 = vmatpush.msra.mxu0 0.0
  %4624 = vmatpush.msra.mxu0 0.0
  %4625 = vmatpush.msra.mxu0 0.0
  %4626 = vmatpush.msra.mxu0 0.0
  %4627 = vmatpush.msra.mxu0 0.0
  %4628 = vmatpush.msra.mxu0 0.0
  %4629 = vmatpush.msra.mxu0 0.0
  %4630 = vmatpush.msra.mxu0 0.0
  %4631 = vmatpush.msra.mxu0 0.0
  %4632 = vmatpush.msra.mxu0 0.0
  %4633 = vmatpush.msra.mxu0 0.0
  %4634 = vmatpush.msra.mxu0 0.0
  %4635 = vmatpush.msra.mxu0 0.0
  %4636 = vmatpush.msra.mxu0 %v4497
  %4637 = vmatmul.f32.gmra.mxu0 %v4570
  %v4638 = vpop.f32.mrf.mxu0
  %v4639 = vadd.f32 0.0, %v4638
  %4640 = vmatmul.f32.gmra.mxu0 %v4573
  %v4641 = vpop.f32.mrf.mxu0
  %v4642 = vadd.f32 0.0, %v4641
  %4643 = vdwg.mxu0
  %4644 = vmatpush.msra.mxu0 0.0
  %4645 = vmatpush.msra.mxu0 0.0
  %4646 = vmatpush.msra.mxu0 0.0
  %4647 = vmatpush.msra.mxu0 0.0
  %4648 = vmatpush.msra.mxu0 0.0
  %4649 = vmatpush.msra.mxu0 0.0
  %4650 = vmatpush.msra.mxu0 0.0
  %4651 = vmatpush.msra.mxu0 0.0
  %4652 = vmatpush.msra.mxu0 0.0
  %4653 = vmatpush.msra.mxu0 0.0
  %4654 = vmatpush.msra.mxu0 0.0
  %4655 = vmatpush.msra.mxu0 0.0
  %4656 = vmatpush.msra.mxu0 0.0
  %4657 = vmatpush.msra.mxu0 0.0
  %4658 = vmatpush.msra.mxu0 0.0
  %4659 = vmatpush.msra.mxu0 %v4520
  %4660 = vmatmul.f32.gmra.mxu0 %v4570
  %v4661 = vpop.f32.mrf.mxu0
  %v4662 = vadd.f32 0.0, %v4661
  %4663 = vmatmul.f32.gmra.mxu0 %v4573
  %v4664 = vpop.f32.mrf.mxu0
  %v4665 = vadd.f32 0.0, %v4664
  %4666 = vdwg.mxu0
  %4667 = vmatpush.msra.mxu0 0.0
  %4668 = vmatpush.msra.mxu0 0.0
  %4669 = vmatpush.msra.mxu0 0.0
  %4670 = vmatpush.msra.mxu0 0.0
  %4671 = vmatpush.msra.mxu0 0.0
  %4672 = vmatpush.msra.mxu0 0.0
  %4673 = vmatpush.msra.mxu0 0.0
  %4674 = vmatpush.msra.mxu0 0.0
  %4675 = vmatpush.msra.mxu0 0.0
  %4676 = vmatpush.msra.mxu0 0.0
  %4677 = vmatpush.msra.mxu0 0.0
  %4678 = vmatpush.msra.mxu0 0.0
  %4679 = vmatpush.msra.mxu0 0.0
  %4680 = vmatpush.msra.mxu0 0.0
  %4681 = vmatpush.msra.mxu0 0.0
  %4682 = vmatpush.msra.mxu0 %v4543
  %4683 = vmatmul.f32.gmra.mxu0 %v4570
  %v4684 = vpop.f32.mrf.mxu0
  %v4685 = vadd.f32 0.0, %v4684
  %4686 = vmatmul.f32.gmra.mxu0 %v4573
  %v4687 = vpop.f32.mrf.mxu0
  %v4688 = vadd.f32 0.0, %v4687
  %4689 = vdwg.mxu0
  %4690 = vmatpush.msra.mxu0 0.0
  %4691 = vmatpush.msra.mxu0 0.0
  %4692 = vmatpush.msra.mxu0 0.0
  %4693 = vmatpush.msra.mxu0 0.0
  %4694 = vmatpush.msra.mxu0 0.0
  %4695 = vmatpush.msra.mxu0 0.0
  %4696 = vmatpush.msra.mxu0 0.0
  %4697 = vmatpush.msra.mxu0 0.0
  %4698 = vmatpush.msra.mxu0 0.0
  %4699 = vmatpush.msra.mxu0 0.0
  %4700 = vmatpush.msra.mxu0 0.0
  %4701 = vmatpush.msra.mxu0 0.0
  %4702 = vmatpush.msra.mxu0 0.0
  %4703 = vmatpush.msra.mxu0 0.0
  %4704 = vmatpush.msra.mxu0 0.0
  %4705 = vmatpush.msra.mxu0 %v4566
  %4706 = vmatmul.f32.gmra.mxu0 %v4570
  %v4707 = vpop.f32.mrf.mxu0
  %v4708 = vadd.f32 0.0, %v4707
  %4709 = vmatmul.f32.gmra.mxu0 %v4573
  %v4710 = vpop.f32.mrf.mxu0
  %v4711 = vadd.f32 0.0, %v4710
  %4712 = vdwg.mxu0
  %v4714 = vsel %vm4568, %v4593, 0
  %v4717 = vsel %vm4568, %v4596, 0
  %4719 = vmatpush.msra.mxu0 0.0
  %4720 = vmatpush.msra.mxu0 0.0
  %4721 = vmatpush.msra.mxu0 0.0
  %4722 = vmatpush.msra.mxu0 0.0
  %4723 = vmatpush.msra.mxu0 0.0
  %4724 = vmatpush.msra.mxu0 0.0
  %4725 = vmatpush.msra.mxu0 0.0
  %4726 = vmatpush.msra.mxu0 0.0
  %4727 = vmatpush.msra.mxu0 0.0
  %4728 = vmatpush.msra.mxu0 0.0
  %4729 = vmatpush.msra.mxu0 0.0
  %4730 = vmatpush.msra.mxu0 0.0
  %4731 = vmatpush.msra.mxu0 0.0
  %4732 = vmatpush.msra.mxu0 0.0
  %4733 = vmatpush.msra.mxu0 0.0
  %4734 = vmatpush.msra.mxu0 %v4306
  %4735 = vmatmul.f32.gmra.mxu0 %v4714
  %v4736 = vpop.f32.mrf.mxu0
  %v4737 = vadd.f32 0.0, %v4736
  %4738 = vmatmul.f32.gmra.mxu0 %v4717
  %v4739 = vpop.f32.mrf.mxu0
  %v4740 = vadd.f32 0.0, %v4739
  %4741 = vdwg.mxu0
  %v4743 = vsel %vm4568, %v4616, 0
  %v4746 = vsel %vm4568, %v4619, 0
  %4748 = vmatpush.msra.mxu0 0.0
  %4749 = vmatpush.msra.mxu0 0.0
  %4750 = vmatpush.msra.mxu0 0.0
  %4751 = vmatpush.msra.mxu0 0.0
  %4752 = vmatpush.msra.mxu0 0.0
  %4753 = vmatpush.msra.mxu0 0.0
  %4754 = vmatpush.msra.mxu0 0.0
  %4755 = vmatpush.msra.mxu0 0.0
  %4756 = vmatpush.msra.mxu0 0.0
  %4757 = vmatpush.msra.mxu0 0.0
  %4758 = vmatpush.msra.mxu0 0.0
  %4759 = vmatpush.msra.mxu0 0.0
  %4760 = vmatpush.msra.mxu0 0.0
  %4761 = vmatpush.msra.mxu0 0.0
  %4762 = vmatpush.msra.mxu0 0.0
  %4763 = vmatpush.msra.mxu0 %v4306
  %4764 = vmatmul.f32.gmra.mxu0 %v4743
  %v4765 = vpop.f32.mrf.mxu0
  %v4766 = vadd.f32 0.0, %v4765
  %4767 = vmatmul.f32.gmra.mxu0 %v4746
  %v4768 = vpop.f32.mrf.mxu0
  %v4769 = vadd.f32 0.0, %v4768
  %4770 = vdwg.mxu0
  %v4772 = vsel %vm4568, %v4639, 0
  %v4775 = vsel %vm4568, %v4642, 0
  %4777 = vmatpush.msra.mxu0 0.0
  %4778 = vmatpush.msra.mxu0 0.0
  %4779 = vmatpush.msra.mxu0 0.0
  %4780 = vmatpush.msra.mxu0 0.0
  %4781 = vmatpush.msra.mxu0 0.0
  %4782 = vmatpush.msra.mxu0 0.0
  %4783 = vmatpush.msra.mxu0 0.0
  %4784 = vmatpush.msra.mxu0 0.0
  %4785 = vmatpush.msra.mxu0 0.0
  %4786 = vmatpush.msra.mxu0 0.0
  %4787 = vmatpush.msra.mxu0 0.0
  %4788 = vmatpush.msra.mxu0 0.0
  %4789 = vmatpush.msra.mxu0 0.0
  %4790 = vmatpush.msra.mxu0 0.0
  %4791 = vmatpush.msra.mxu0 0.0
  %4792 = vmatpush.msra.mxu0 %v4306
  %4793 = vmatmul.f32.gmra.mxu0 %v4772
  %v4794 = vpop.f32.mrf.mxu0
  %v4795 = vadd.f32 0.0, %v4794
  %4796 = vmatmul.f32.gmra.mxu0 %v4775
  %v4797 = vpop.f32.mrf.mxu0
  %v4798 = vadd.f32 0.0, %v4797
  %4799 = vdwg.mxu0
  %v4801 = vsel %vm4568, %v4662, 0
  %v4804 = vsel %vm4568, %v4665, 0
  %4806 = vmatpush.msra.mxu0 0.0
  %4807 = vmatpush.msra.mxu0 0.0
  %4808 = vmatpush.msra.mxu0 0.0
  %4809 = vmatpush.msra.mxu0 0.0
  %4810 = vmatpush.msra.mxu0 0.0
  %4811 = vmatpush.msra.mxu0 0.0
  %4812 = vmatpush.msra.mxu0 0.0
  %4813 = vmatpush.msra.mxu0 0.0
  %4814 = vmatpush.msra.mxu0 0.0
  %4815 = vmatpush.msra.mxu0 0.0
  %4816 = vmatpush.msra.mxu0 0.0
  %4817 = vmatpush.msra.mxu0 0.0
  %4818 = vmatpush.msra.mxu0 0.0
  %4819 = vmatpush.msra.mxu0 0.0
  %4820 = vmatpush.msra.mxu0 0.0
  %4821 = vmatpush.msra.mxu0 %v4306
  %4822 = vmatmul.f32.gmra.mxu0 %v4801
  %v4823 = vpop.f32.mrf.mxu0
  %v4824 = vadd.f32 0.0, %v4823
  %4825 = vmatmul.f32.gmra.mxu0 %v4804
  %v4826 = vpop.f32.mrf.mxu0
  %v4827 = vadd.f32 0.0, %v4826
  %4828 = vdwg.mxu0
  %v4830 = vsel %vm4568, %v4685, 0
  %v4833 = vsel %vm4568, %v4688, 0
  %4835 = vmatpush.msra.mxu0 0.0
  %4836 = vmatpush.msra.mxu0 0.0
  %4837 = vmatpush.msra.mxu0 0.0
  %4838 = vmatpush.msra.mxu0 0.0
  %4839 = vmatpush.msra.mxu0 0.0
  %4840 = vmatpush.msra.mxu0 0.0
  %4841 = vmatpush.msra.mxu0 0.0
  %4842 = vmatpush.msra.mxu0 0.0
  %4843 = vmatpush.msra.mxu0 0.0
  %4844 = vmatpush.msra.mxu0 0.0
  %4845 = vmatpush.msra.mxu0 0.0
  %4846 = vmatpush.msra.mxu0 0.0
  %4847 = vmatpush.msra.mxu0 0.0
  %4848 = vmatpush.msra.mxu0 0.0
  %4849 = vmatpush.msra.mxu0 0.0
  %4850 = vmatpush.msra.mxu0 %v4306
  %4851 = vmatmul.f32.gmra.mxu0 %v4830
  %v4852 = vpop.f32.mrf.mxu0
  %v4853 = vadd.f32 0.0, %v4852
  %4854 = vmatmul.f32.gmra.mxu0 %v4833
  %v4855 = vpop.f32.mrf.mxu0
  %v4856 = vadd.f32 0.0, %v4855
  %4857 = vdwg.mxu0
  %v4859 = vsel %vm4568, %v4708, 0
  %v4862 = vsel %vm4568, %v4711, 0
  %4864 = vmatpush.msra.mxu0 0.0
  %4865 = vmatpush.msra.mxu0 0.0
  %4866 = vmatpush.msra.mxu0 0.0
  %4867 = vmatpush.msra.mxu0 0.0
  %4868 = vmatpush.msra.mxu0 0.0
  %4869 = vmatpush.msra.mxu0 0.0
  %4870 = vmatpush.msra.mxu0 0.0
  %4871 = vmatpush.msra.mxu0 0.0
  %4872 = vmatpush.msra.mxu0 0.0
  %4873 = vmatpush.msra.mxu0 0.0
  %4874 = vmatpush.msra.mxu0 0.0
  %4875 = vmatpush.msra.mxu0 0.0
  %4876 = vmatpush.msra.mxu0 0.0
  %4877 = vmatpush.msra.mxu0 0.0
  %4878 = vmatpush.msra.mxu0 0.0
  %4879 = vmatpush.msra.mxu0 %v4306
  %4880 = vmatmul.f32.gmra.mxu0 %v4859
  %v4881 = vpop.f32.mrf.mxu0
  %v4882 = vadd.f32 0.0, %v4881
  %4883 = vmatmul.f32.gmra.mxu0 %v4862
  %v4884 = vpop.f32.mrf.mxu0
  %v4885 = vadd.f32 0.0, %v4884
  %4886 = vdwg.mxu0
  %4887 = vmatpush.msra.mxu0 0.0
  %4888 = vmatpush.msra.mxu0 0.0
  %4889 = vmatpush.msra.mxu0 0.0
  %4890 = vmatpush.msra.mxu0 0.0
  %4891 = vmatpush.msra.mxu0 0.0
  %4892 = vmatpush.msra.mxu0 0.0
  %4893 = vmatpush.msra.mxu0 0.0
  %4894 = vmatpush.msra.mxu0 0.0
  %4895 = vmatpush.msra.mxu0 0.0
  %4896 = vmatpush.msra.mxu0 0.0
  %4897 = vmatpush.msra.mxu0 0.0
  %4898 = vmatpush.msra.mxu0 0.0
  %4899 = vmatpush.msra.mxu0 0.0
  %4900 = vmatpush.msra.mxu0 0.0
  %4901 = vmatpush.msra.mxu0 %v3575
  %4902 = vmatpush.msra.mxu0 %v3572
  %4903 = vmatmul.f32.gmra.mxu0 %v4308
  %v4904 = vpop.f32.mrf.mxu0
  %v4905 = vadd.f32 0.0, %v4904
  %4906 = vdwg.mxu0
  %4907 = vmatpush.msra.mxu0 0.0
  %4908 = vmatpush.msra.mxu0 0.0
  %4909 = vmatpush.msra.mxu0 0.0
  %4910 = vmatpush.msra.mxu0 0.0
  %4911 = vmatpush.msra.mxu0 0.0
  %4912 = vmatpush.msra.mxu0 0.0
  %4913 = vmatpush.msra.mxu0 0.0
  %4914 = vmatpush.msra.mxu0 0.0
  %4915 = vmatpush.msra.mxu0 0.0
  %4916 = vmatpush.msra.mxu0 0.0
  %4917 = vmatpush.msra.mxu0 0.0
  %4918 = vmatpush.msra.mxu0 0.0
  %4919 = vmatpush.msra.mxu0 0.0
  %4920 = vmatpush.msra.mxu0 0.0
  %4921 = vmatpush.msra.mxu0 %v3604
  %4922 = vmatpush.msra.mxu0 %v3601
  %4923 = vmatmul.f32.gmra.mxu0 %v4308
  %v4924 = vpop.f32.mrf.mxu0
  %v4925 = vadd.f32 0.0, %v4924
  %4926 = vdwg.mxu0
  %4927 = vmatpush.msra.mxu0 0.0
  %4928 = vmatpush.msra.mxu0 0.0
  %4929 = vmatpush.msra.mxu0 0.0
  %4930 = vmatpush.msra.mxu0 0.0
  %4931 = vmatpush.msra.mxu0 0.0
  %4932 = vmatpush.msra.mxu0 0.0
  %4933 = vmatpush.msra.mxu0 0.0
  %4934 = vmatpush.msra.mxu0 0.0
  %4935 = vmatpush.msra.mxu0 0.0
  %4936 = vmatpush.msra.mxu0 0.0
  %4937 = vmatpush.msra.mxu0 0.0
  %4938 = vmatpush.msra.mxu0 0.0
  %4939 = vmatpush.msra.mxu0 0.0
  %4940 = vmatpush.msra.mxu0 0.0
  %4941 = vmatpush.msra.mxu0 %v3633
  %4942 = vmatpush.msra.mxu0 %v3630
  %4943 = vmatmul.f32.gmra.mxu0 %v4308
  %v4944 = vpop.f32.mrf.mxu0
  %v4945 = vadd.f32 0.0, %v4944
  %4946 = vdwg.mxu0
  %4947 = vmatpush.msra.mxu0 0.0
  %4948 = vmatpush.msra.mxu0 0.0
  %4949 = vmatpush.msra.mxu0 0.0
  %4950 = vmatpush.msra.mxu0 0.0
  %4951 = vmatpush.msra.mxu0 0.0
  %4952 = vmatpush.msra.mxu0 0.0
  %4953 = vmatpush.msra.mxu0 0.0
  %4954 = vmatpush.msra.mxu0 0.0
  %4955 = vmatpush.msra.mxu0 0.0
  %4956 = vmatpush.msra.mxu0 0.0
  %4957 = vmatpush.msra.mxu0 0.0
  %4958 = vmatpush.msra.mxu0 0.0
  %4959 = vmatpush.msra.mxu0 0.0
  %4960 = vmatpush.msra.mxu0 0.0
  %4961 = vmatpush.msra.mxu0 %v3662
  %4962 = vmatpush.msra.mxu0 %v3659
  %4963 = vmatmul.f32.gmra.mxu0 %v4308
  %v4964 = vpop.f32.mrf.mxu0
  %v4965 = vadd.f32 0.0, %v4964
  %4966 = vdwg.mxu0
  %4967 = vmatpush.msra.mxu0 0.0
  %4968 = vmatpush.msra.mxu0 0.0
  %4969 = vmatpush.msra.mxu0 0.0
  %4970 = vmatpush.msra.mxu0 0.0
  %4971 = vmatpush.msra.mxu0 0.0
  %4972 = vmatpush.msra.mxu0 0.0
  %4973 = vmatpush.msra.mxu0 0.0
  %4974 = vmatpush.msra.mxu0 0.0
  %4975 = vmatpush.msra.mxu0 0.0
  %4976 = vmatpush.msra.mxu0 0.0
  %4977 = vmatpush.msra.mxu0 0.0
  %4978 = vmatpush.msra.mxu0 0.0
  %4979 = vmatpush.msra.mxu0 0.0
  %4980 = vmatpush.msra.mxu0 0.0
  %4981 = vmatpush.msra.mxu0 %v3691
  %4982 = vmatpush.msra.mxu0 %v3688
  %4983 = vmatmul.f32.gmra.mxu0 %v4308
  %v4984 = vpop.f32.mrf.mxu0
  %v4985 = vadd.f32 0.0, %v4984
  %4986 = vdwg.mxu0
  %4987 = vmatpush.msra.mxu0 0.0
  %4988 = vmatpush.msra.mxu0 0.0
  %4989 = vmatpush.msra.mxu0 0.0
  %4990 = vmatpush.msra.mxu0 0.0
  %4991 = vmatpush.msra.mxu0 0.0
  %4992 = vmatpush.msra.mxu0 0.0
  %4993 = vmatpush.msra.mxu0 0.0
  %4994 = vmatpush.msra.mxu0 0.0
  %4995 = vmatpush.msra.mxu0 0.0
  %4996 = vmatpush.msra.mxu0 0.0
  %4997 = vmatpush.msra.mxu0 0.0
  %4998 = vmatpush.msra.mxu0 0.0
  %4999 = vmatpush.msra.mxu0 0.0
  %5000 = vmatpush.msra.mxu0 0.0
  %5001 = vmatpush.msra.mxu0 %v3720
  %5002 = vmatpush.msra.mxu0 %v3717
  %5003 = vmatmul.f32.gmra.mxu0 %v4308
  %v5004 = vpop.f32.mrf.mxu0
  %v5005 = vadd.f32 0.0, %v5004
  %5006 = vdwg.mxu0
  %v5008 = vsel %vm2977, %v4905, 0
  %5010 = vmatpush.msra.mxu0 0.0
  %5011 = vmatpush.msra.mxu0 0.0
  %5012 = vmatpush.msra.mxu0 0.0
  %5013 = vmatpush.msra.mxu0 0.0
  %5014 = vmatpush.msra.mxu0 0.0
  %5015 = vmatpush.msra.mxu0 0.0
  %5016 = vmatpush.msra.mxu0 0.0
  %5017 = vmatpush.msra.mxu0 0.0
  %5018 = vmatpush.msra.mxu0 0.0
  %5019 = vmatpush.msra.mxu0 0.0
  %5020 = vmatpush.msra.mxu0 0.0
  %5021 = vmatpush.msra.mxu0 0.0
  %5022 = vmatpush.msra.mxu0 0.0
  %5023 = vmatpush.msra.mxu0 0.0
  %5024 = vmatpush.msra.mxu0 %v4303
  %5025 = vmatpush.msra.mxu0 %v4302
  %5026 = vmatmul.f32.gmra.mxu0 %v5008
  %v5027 = vpop.f32.mrf.mxu0
  %v5028 = vadd.f32 0.0, %v5027
  %5029 = vdwg.mxu0
  %v5031 = vsel %vm2977, %v4925, 0
  %5033 = vmatpush.msra.mxu0 0.0
  %5034 = vmatpush.msra.mxu0 0.0
  %5035 = vmatpush.msra.mxu0 0.0
  %5036 = vmatpush.msra.mxu0 0.0
  %5037 = vmatpush.msra.mxu0 0.0
  %5038 = vmatpush.msra.mxu0 0.0
  %5039 = vmatpush.msra.mxu0 0.0
  %5040 = vmatpush.msra.mxu0 0.0
  %5041 = vmatpush.msra.mxu0 0.0
  %5042 = vmatpush.msra.mxu0 0.0
  %5043 = vmatpush.msra.mxu0 0.0
  %5044 = vmatpush.msra.mxu0 0.0
  %5045 = vmatpush.msra.mxu0 0.0
  %5046 = vmatpush.msra.mxu0 0.0
  %5047 = vmatpush.msra.mxu0 %v4303
  %5048 = vmatpush.msra.mxu0 %v4302
  %5049 = vmatmul.f32.gmra.mxu0 %v5031
  %v5050 = vpop.f32.mrf.mxu0
  %v5051 = vadd.f32 0.0, %v5050
  %5052 = vdwg.mxu0
  %v5054 = vsel %vm2977, %v4945, 0
  %5056 = vmatpush.msra.mxu0 0.0
  %5057 = vmatpush.msra.mxu0 0.0
  %5058 = vmatpush.msra.mxu0 0.0
  %5059 = vmatpush.msra.mxu0 0.0
  %5060 = vmatpush.msra.mxu0 0.0
  %5061 = vmatpush.msra.mxu0 0.0
  %5062 = vmatpush.msra.mxu0 0.0
  %5063 = vmatpush.msra.mxu0 0.0
  %5064 = vmatpush.msra.mxu0 0.0
  %5065 = vmatpush.msra.mxu0 0.0
  %5066 = vmatpush.msra.mxu0 0.0
  %5067 = vmatpush.msra.mxu0 0.0
  %5068 = vmatpush.msra.mxu0 0.0
  %5069 = vmatpush.msra.mxu0 0.0
  %5070 = vmatpush.msra.mxu0 %v4303
  %5071 = vmatpush.msra.mxu0 %v4302
  %5072 = vmatmul.f32.gmra.mxu0 %v5054
  %v5073 = vpop.f32.mrf.mxu0
  %v5074 = vadd.f32 0.0, %v5073
  %5075 = vdwg.mxu0
  %v5077 = vsel %vm2977, %v4965, 0
  %5079 = vmatpush.msra.mxu0 0.0
  %5080 = vmatpush.msra.mxu0 0.0
  %5081 = vmatpush.msra.mxu0 0.0
  %5082 = vmatpush.msra.mxu0 0.0
  %5083 = vmatpush.msra.mxu0 0.0
  %5084 = vmatpush.msra.mxu0 0.0
  %5085 = vmatpush.msra.mxu0 0.0
  %5086 = vmatpush.msra.mxu0 0.0
  %5087 = vmatpush.msra.mxu0 0.0
  %5088 = vmatpush.msra.mxu0 0.0
  %5089 = vmatpush.msra.mxu0 0.0
  %5090 = vmatpush.msra.mxu0 0.0
  %5091 = vmatpush.msra.mxu0 0.0
  %5092 = vmatpush.msra.mxu0 0.0
  %5093 = vmatpush.msra.mxu0 %v4303
  %5094 = vmatpush.msra.mxu0 %v4302
  %5095 = vmatmul.f32.gmra.mxu0 %v5077
  %v5096 = vpop.f32.mrf.mxu0
  %v5097 = vadd.f32 0.0, %v5096
  %5098 = vdwg.mxu0
  %v5100 = vsel %vm2977, %v4985, 0
  %5102 = vmatpush.msra.mxu0 0.0
  %5103 = vmatpush.msra.mxu0 0.0
  %5104 = vmatpush.msra.mxu0 0.0
  %5105 = vmatpush.msra.mxu0 0.0
  %5106 = vmatpush.msra.mxu0 0.0
  %5107 = vmatpush.msra.mxu0 0.0
  %5108 = vmatpush.msra.mxu0 0.0
  %5109 = vmatpush.msra.mxu0 0.0
  %5110 = vmatpush.msra.mxu0 0.0
  %5111 = vmatpush.msra.mxu0 0.0
  %5112 = vmatpush.msra.mxu0 0.0
  %5113 = vmatpush.msra.mxu0 0.0
  %5114 = vmatpush.msra.mxu0 0.0
  %5115 = vmatpush.msra.mxu0 0.0
  %5116 = vmatpush.msra.mxu0 %v4303
  %5117 = vmatpush.msra.mxu0 %v4302
  %5118 = vmatmul.f32.gmra.mxu0 %v5100
  %v5119 = vpop.f32.mrf.mxu0
  %v5120 = vadd.f32 0.0, %v5119
  %5121 = vdwg.mxu0
  %v5123 = vsel %vm2977, %v5005, 0
  %5125 = vmatpush.msra.mxu0 0.0
  %5126 = vmatpush.msra.mxu0 0.0
  %5127 = vmatpush.msra.mxu0 0.0
  %5128 = vmatpush.msra.mxu0 0.0
  %5129 = vmatpush.msra.mxu0 0.0
  %5130 = vmatpush.msra.mxu0 0.0
  %5131 = vmatpush.msra.mxu0 0.0
  %5132 = vmatpush.msra.mxu0 0.0
  %5133 = vmatpush.msra.mxu0 0.0
  %5134 = vmatpush.msra.mxu0 0.0
  %5135 = vmatpush.msra.mxu0 0.0
  %5136 = vmatpush.msra.mxu0 0.0
  %5137 = vmatpush.msra.mxu0 0.0
  %5138 = vmatpush.msra.mxu0 0.0
  %5139 = vmatpush.msra.mxu0 %v4303
  %5140 = vmatpush.msra.mxu0 %v4302
  %5141 = vmatmul.f32.gmra.mxu0 %v5123
  %v5142 = vpop.f32.mrf.mxu0
  %v5143 = vadd.f32 0.0, %v5142
  %5144 = vdwg.mxu0
  %5145 = vmatpush.msra.mxu0 0.0
  %5146 = vmatpush.msra.mxu0 0.0
  %5147 = vmatpush.msra.mxu0 0.0
  %5148 = vmatpush.msra.mxu0 0.0
  %5149 = vmatpush.msra.mxu0 0.0
  %5150 = vmatpush.msra.mxu0 0.0
  %5151 = vmatpush.msra.mxu0 0.0
  %5152 = vmatpush.msra.mxu0 0.0
  %5153 = vmatpush.msra.mxu0 0.0
  %5154 = vmatpush.msra.mxu0 0.0
  %5155 = vmatpush.msra.mxu0 0.0
  %5156 = vmatpush.msra.mxu0 0.0
  %5157 = vmatpush.msra.mxu0 0.0
  %5158 = vmatpush.msra.mxu0 0.0
  %5159 = vmatpush.msra.mxu0 0.0
  %5160 = vmatpush.msra.mxu0 %v5028
  %5161 = vmatmul.f32.gmra.mxu0 %v4570
  %v5162 = vpop.f32.mrf.mxu0
  %v5163 = vadd.f32 0.0, %v5162
  %5164 = vmatmul.f32.gmra.mxu0 %v4573
  %v5165 = vpop.f32.mrf.mxu0
  %v5166 = vadd.f32 0.0, %v5165
  %5167 = vdwg.mxu0
  %5168 = vmatpush.msra.mxu0 0.0
  %5169 = vmatpush.msra.mxu0 0.0
  %5170 = vmatpush.msra.mxu0 0.0
  %5171 = vmatpush.msra.mxu0 0.0
  %5172 = vmatpush.msra.mxu0 0.0
  %5173 = vmatpush.msra.mxu0 0.0
  %5174 = vmatpush.msra.mxu0 0.0
  %5175 = vmatpush.msra.mxu0 0.0
  %5176 = vmatpush.msra.mxu0 0.0
  %5177 = vmatpush.msra.mxu0 0.0
  %5178 = vmatpush.msra.mxu0 0.0
  %5179 = vmatpush.msra.mxu0 0.0
  %5180 = vmatpush.msra.mxu0 0.0
  %5181 = vmatpush.msra.mxu0 0.0
  %5182 = vmatpush.msra.mxu0 0.0
  %5183 = vmatpush.msra.mxu0 %v5051
  %5184 = vmatmul.f32.gmra.mxu0 %v4570
  %v5185 = vpop.f32.mrf.mxu0
  %v5186 = vadd.f32 0.0, %v5185
  %5187 = vmatmul.f32.gmra.mxu0 %v4573
  %v5188 = vpop.f32.mrf.mxu0
  %v5189 = vadd.f32 0.0, %v5188
  %5190 = vdwg.mxu0
  %5191 = vmatpush.msra.mxu0 0.0
  %5192 = vmatpush.msra.mxu0 0.0
  %5193 = vmatpush.msra.mxu0 0.0
  %5194 = vmatpush.msra.mxu0 0.0
  %5195 = vmatpush.msra.mxu0 0.0
  %5196 = vmatpush.msra.mxu0 0.0
  %5197 = vmatpush.msra.mxu0 0.0
  %5198 = vmatpush.msra.mxu0 0.0
  %5199 = vmatpush.msra.mxu0 0.0
  %5200 = vmatpush.msra.mxu0 0.0
  %5201 = vmatpush.msra.mxu0 0.0
  %5202 = vmatpush.msra.mxu0 0.0
  %5203 = vmatpush.msra.mxu0 0.0
  %5204 = vmatpush.msra.mxu0 0.0
  %5205 = vmatpush.msra.mxu0 0.0
  %5206 = vmatpush.msra.mxu0 %v5074
  %5207 = vmatmul.f32.gmra.mxu0 %v4570
  %v5208 = vpop.f32.mrf.mxu0
  %v5209 = vadd.f32 0.0, %v5208
  %5210 = vmatmul.f32.gmra.mxu0 %v4573
  %v5211 = vpop.f32.mrf.mxu0
  %v5212 = vadd.f32 0.0, %v5211
  %5213 = vdwg.mxu0
  %5214 = vmatpush.msra.mxu0 0.0
  %5215 = vmatpush.msra.mxu0 0.0
  %5216 = vmatpush.msra.mxu0 0.0
  %5217 = vmatpush.msra.mxu0 0.0
  %5218 = vmatpush.msra.mxu0 0.0
  %5219 = vmatpush.msra.mxu0 0.0
  %5220 = vmatpush.msra.mxu0 0.0
  %5221 = vmatpush.msra.mxu0 0.0
  %5222 = vmatpush.msra.mxu0 0.0
  %5223 = vmatpush.msra.mxu0 0.0
  %5224 = vmatpush.msra.mxu0 0.0
  %5225 = vmatpush.msra.mxu0 0.0
  %5226 = vmatpush.msra.mxu0 0.0
  %5227 = vmatpush.msra.mxu0 0.0
  %5228 = vmatpush.msra.mxu0 0.0
  %5229 = vmatpush.msra.mxu0 %v5097
  %5230 = vmatmul.f32.gmra.mxu0 %v4570
  %v5231 = vpop.f32.mrf.mxu0
  %v5232 = vadd.f32 0.0, %v5231
  %5233 = vmatmul.f32.gmra.mxu0 %v4573
  %v5234 = vpop.f32.mrf.mxu0
  %v5235 = vadd.f32 0.0, %v5234
  %5236 = vdwg.mxu0
  %5237 = vmatpush.msra.mxu0 0.0
  %5238 = vmatpush.msra.mxu0 0.0
  %5239 = vmatpush.msra.mxu0 0.0
  %5240 = vmatpush.msra.mxu0 0.0
  %5241 = vmatpush.msra.mxu0 0.0
  %5242 = vmatpush.msra.mxu0 0.0
  %5243 = vmatpush.msra.mxu0 0.0
  %5244 = vmatpush.msra.mxu0 0.0
  %5245 = vmatpush.msra.mxu0 0.0
  %5246 = vmatpush.msra.mxu0 0.0
  %5247 = vmatpush.msra.mxu0 0.0
  %5248 = vmatpush.msra.mxu0 0.0
  %5249 = vmatpush.msra.mxu0 0.0
  %5250 = vmatpush.msra.mxu0 0.0
  %5251 = vmatpush.msra.mxu0 0.0
  %5252 = vmatpush.msra.mxu0 %v5120
  %5253 = vmatmul.f32.gmra.mxu0 %v4570
  %v5254 = vpop.f32.mrf.mxu0
  %v5255 = vadd.f32 0.0, %v5254
  %5256 = vmatmul.f32.gmra.mxu0 %v4573
  %v5257 = vpop.f32.mrf.mxu0
  %v5258 = vadd.f32 0.0, %v5257
  %5259 = vdwg.mxu0
  %5260 = vmatpush.msra.mxu0 0.0
  %5261 = vmatpush.msra.mxu0 0.0
  %5262 = vmatpush.msra.mxu0 0.0
  %5263 = vmatpush.msra.mxu0 0.0
  %5264 = vmatpush.msra.mxu0 0.0
  %5265 = vmatpush.msra.mxu0 0.0
  %5266 = vmatpush.msra.mxu0 0.0
  %5267 = vmatpush.msra.mxu0 0.0
  %5268 = vmatpush.msra.mxu0 0.0
  %5269 = vmatpush.msra.mxu0 0.0
  %5270 = vmatpush.msra.mxu0 0.0
  %5271 = vmatpush.msra.mxu0 0.0
  %5272 = vmatpush.msra.mxu0 0.0
  %5273 = vmatpush.msra.mxu0 0.0
  %5274 = vmatpush.msra.mxu0 0.0
  %5275 = vmatpush.msra.mxu0 %v5143
  %5276 = vmatmul.f32.gmra.mxu0 %v4570
  %v5277 = vpop.f32.mrf.mxu0
  %v5278 = vadd.f32 0.0, %v5277
  %5279 = vmatmul.f32.gmra.mxu0 %v4573
  %v5280 = vpop.f32.mrf.mxu0
  %v5281 = vadd.f32 0.0, %v5280
  %5282 = vdwg.mxu0
  %v5284 = vsel %vm4568, %v5163, 0
  %v5287 = vsel %vm4568, %v5166, 0
  %5289 = vmatpush.msra.mxu0 0.0
  %5290 = vmatpush.msra.mxu0 0.0
  %5291 = vmatpush.msra.mxu0 0.0
  %5292 = vmatpush.msra.mxu0 0.0
  %5293 = vmatpush.msra.mxu0 0.0
  %5294 = vmatpush.msra.mxu0 0.0
  %5295 = vmatpush.msra.mxu0 0.0
  %5296 = vmatpush.msra.mxu0 0.0
  %5297 = vmatpush.msra.mxu0 0.0
  %5298 = vmatpush.msra.mxu0 0.0
  %5299 = vmatpush.msra.mxu0 0.0
  %5300 = vmatpush.msra.mxu0 0.0
  %5301 = vmatpush.msra.mxu0 0.0
  %5302 = vmatpush.msra.mxu0 0.0
  %5303 = vmatpush.msra.mxu0 0.0
  %5304 = vmatpush.msra.mxu0 %v4306
  %5305 = vmatmul.f32.gmra.mxu0 %v5284
  %v5306 = vpop.f32.mrf.mxu0
  %v5307 = vadd.f32 0.0, %v5306
  %5308 = vmatmul.f32.gmra.mxu0 %v5287
  %v5309 = vpop.f32.mrf.mxu0
  %v5310 = vadd.f32 0.0, %v5309
  %5311 = vdwg.mxu0
  %v5313 = vsel %vm4568, %v5186, 0
  %v5316 = vsel %vm4568, %v5189, 0
  %5318 = vmatpush.msra.mxu0 0.0
  %5319 = vmatpush.msra.mxu0 0.0
  %5320 = vmatpush.msra.mxu0 0.0
  %5321 = vmatpush.msra.mxu0 0.0
  %5322 = vmatpush.msra.mxu0 0.0
  %5323 = vmatpush.msra.mxu0 0.0
  %5324 = vmatpush.msra.mxu0 0.0
  %5325 = vmatpush.msra.mxu0 0.0
  %5326 = vmatpush.msra.mxu0 0.0
  %5327 = vmatpush.msra.mxu0 0.0
  %5328 = vmatpush.msra.mxu0 0.0
  %5329 = vmatpush.msra.mxu0 0.0
  %5330 = vmatpush.msra.mxu0 0.0
  %5331 = vmatpush.msra.mxu0 0.0
  %5332 = vmatpush.msra.mxu0 0.0
  %5333 = vmatpush.msra.mxu0 %v4306
  %5334 = vmatmul.f32.gmra.mxu0 %v5313
  %v5335 = vpop.f32.mrf.mxu0
  %v5336 = vadd.f32 0.0, %v5335
  %5337 = vmatmul.f32.gmra.mxu0 %v5316
  %v5338 = vpop.f32.mrf.mxu0
  %v5339 = vadd.f32 0.0, %v5338
  %5340 = vdwg.mxu0
  %v5342 = vsel %vm4568, %v5209, 0
  %v5345 = vsel %vm4568, %v5212, 0
  %5347 = vmatpush.msra.mxu0 0.0
  %5348 = vmatpush.msra.mxu0 0.0
  %5349 = vmatpush.msra.mxu0 0.0
  %5350 = vmatpush.msra.mxu0 0.0
  %5351 = vmatpush.msra.mxu0 0.0
  %5352 = vmatpush.msra.mxu0 0.0
  %5353 = vmatpush.msra.mxu0 0.0
  %5354 = vmatpush.msra.mxu0 0.0
  %5355 = vmatpush.msra.mxu0 0.0
  %5356 = vmatpush.msra.mxu0 0.0
  %5357 = vmatpush.msra.mxu0 0.0
  %5358 = vmatpush.msra.mxu0 0.0
  %5359 = vmatpush.msra.mxu0 0.0
  %5360 = vmatpush.msra.mxu0 0.0
  %5361 = vmatpush.msra.mxu0 0.0
  %5362 = vmatpush.msra.mxu0 %v4306
  %5363 = vmatmul.f32.gmra.mxu0 %v5342
  %v5364 = vpop.f32.mrf.mxu0
  %v5365 = vadd.f32 0.0, %v5364
  %5366 = vmatmul.f32.gmra.mxu0 %v5345
  %v5367 = vpop.f32.mrf.mxu0
  %v5368 = vadd.f32 0.0, %v5367
  %5369 = vdwg.mxu0
  %v5371 = vsel %vm4568, %v5232, 0
  %v5374 = vsel %vm4568, %v5235, 0
  %5376 = vmatpush.msra.mxu0 0.0
  %5377 = vmatpush.msra.mxu0 0.0
  %5378 = vmatpush.msra.mxu0 0.0
  %5379 = vmatpush.msra.mxu0 0.0
  %5380 = vmatpush.msra.mxu0 0.0
  %5381 = vmatpush.msra.mxu0 0.0
  %5382 = vmatpush.msra.mxu0 0.0
  %5383 = vmatpush.msra.mxu0 0.0
  %5384 = vmatpush.msra.mxu0 0.0
  %5385 = vmatpush.msra.mxu0 0.0
  %5386 = vmatpush.msra.mxu0 0.0
  %5387 = vmatpush.msra.mxu0 0.0
  %5388 = vmatpush.msra.mxu0 0.0
  %5389 = vmatpush.msra.mxu0 0.0
  %5390 = vmatpush.msra.mxu0 0.0
  %5391 = vmatpush.msra.mxu0 %v4306
  %5392 = vmatmul.f32.gmra.mxu0 %v5371
  %v5393 = vpop.f32.mrf.mxu0
  %v5394 = vadd.f32 0.0, %v5393
  %5395 = vmatmul.f32.gmra.mxu0 %v5374
  %v5396 = vpop.f32.mrf.mxu0
  %v5397 = vadd.f32 0.0, %v5396
  %5398 = vdwg.mxu0
  %v5400 = vsel %vm4568, %v5255, 0
  %v5403 = vsel %vm4568, %v5258, 0
  %5405 = vmatpush.msra.mxu0 0.0
  %5406 = vmatpush.msra.mxu0 0.0
  %5407 = vmatpush.msra.mxu0 0.0
  %5408 = vmatpush.msra.mxu0 0.0
  %5409 = vmatpush.msra.mxu0 0.0
  %5410 = vmatpush.msra.mxu0 0.0
  %5411 = vmatpush.msra.mxu0 0.0
  %5412 = vmatpush.msra.mxu0 0.0
  %5413 = vmatpush.msra.mxu0 0.0
  %5414 = vmatpush.msra.mxu0 0.0
  %5415 = vmatpush.msra.mxu0 0.0
  %5416 = vmatpush.msra.mxu0 0.0
  %5417 = vmatpush.msra.mxu0 0.0
  %5418 = vmatpush.msra.mxu0 0.0
  %5419 = vmatpush.msra.mxu0 0.0
  %5420 = vmatpush.msra.mxu0 %v4306
  %5421 = vmatmul.f32.gmra.mxu0 %v5400
  %v5422 = vpop.f32.mrf.mxu0
  %v5423 = vadd.f32 0.0, %v5422
  %5424 = vmatmul.f32.gmra.mxu0 %v5403
  %v5425 = vpop.f32.mrf.mxu0
  %v5426 = vadd.f32 0.0, %v5425
  %5427 = vdwg.mxu0
  %v5429 = vsel %vm4568, %v5278, 0
  %v5432 = vsel %vm4568, %v5281, 0
  %5434 = vmatpush.msra.mxu0 0.0
  %5435 = vmatpush.msra.mxu0 0.0
  %5436 = vmatpush.msra.mxu0 0.0
  %5437 = vmatpush.msra.mxu0 0.0
  %5438 = vmatpush.msra.mxu0 0.0
  %5439 = vmatpush.msra.mxu0 0.0
  %5440 = vmatpush.msra.mxu0 0.0
  %5441 = vmatpush.msra.mxu0 0.0
  %5442 = vmatpush.msra.mxu0 0.0
  %5443 = vmatpush.msra.mxu0 0.0
  %5444 = vmatpush.msra.mxu0 0.0
  %5445 = vmatpush.msra.mxu0 0.0
  %5446 = vmatpush.msra.mxu0 0.0
  %5447 = vmatpush.msra.mxu0 0.0
  %5448 = vmatpush.msra.mxu0 0.0
  %5449 = vmatpush.msra.mxu0 %v4306
  %5450 = vmatmul.f32.gmra.mxu0 %v5429
  %v5451 = vpop.f32.mrf.mxu0
  %v5452 = vadd.f32 0.0, %v5451
  %5453 = vmatmul.f32.gmra.mxu0 %v5432
  %v5454 = vpop.f32.mrf.mxu0
  %v5455 = vadd.f32 0.0, %v5454
  %5456 = vdwg.mxu0
  %v5457 = vsub.f32 %v2827, %v4737
  %v5458 = vsub.f32 %v2830, %v4740
  %v5459 = vsub.f32 %v2856, %v4766
  %v5460 = vsub.f32 %v2859, %v4769
  %v5461 = vsub.f32 %v2885, %v4795
  %v5462 = vsub.f32 %v2888, %v4798
  %v5463 = vsub.f32 %v2914, %v4824
  %v5464 = vsub.f32 %v2917, %v4827
  %v5465 = vsub.f32 %v2943, %v4853
  %v5466 = vsub.f32 %v2946, %v4856
  %v5467 = vsub.f32 %v2972, %v4882
  %v5468 = vsub.f32 %v2975, %v4885
  %v5469 = vsub.f32 %v3572, %v5307
  %v5470 = vsub.f32 %v3575, %v5310
  %v5471 = vsub.f32 %v3601, %v5336
  %v5472 = vsub.f32 %v3604, %v5339
  %v5473 = vsub.f32 %v3630, %v5365
  %v5474 = vsub.f32 %v3633, %v5368
  %v5475 = vsub.f32 %v3659, %v5394
  %v5476 = vsub.f32 %v3662, %v5397
  %v5477 = vsub.f32 %v3688, %v5423
  %v5478 = vsub.f32 %v3691, %v5426
  %v5479 = vsub.f32 %v3717, %v5452
  %v5480 = vsub.f32 %v3720, %v5455
  %v5481 = vsub.f32 %v5457, %v5469
  %v5482 = vsub.f32 %v5458, %v5470
  %v5483 = vsub.f32 %v5459, %v5471
  %v5484 = vsub.f32 %v5460, %v5472
  %v5485 = vsub.f32 %v5461, %v5473
  %v5486 = vsub.f32 %v5462, %v5474
  %v5487 = vsub.f32 %v5463, %v5475
  %v5488 = vsub.f32 %v5464, %v5476
  %v5489 = vsub.f32 %v5465, %v5477
  %v5490 = vsub.f32 %v5466, %v5478
  %v5491 = vsub.f32 %v5467, %v5479
  %v5492 = vsub.f32 %v5468, %v5480
  %v5493 = vand.u32 2147483647, %v5481
  %v5494 = vand.u32 2147483647, %v5482
  %v5495 = vand.u32 2147483647, %v5483
  %v5496 = vand.u32 2147483647, %v5484
  %v5497 = vand.u32 2147483647, %v5485
  %v5498 = vand.u32 2147483647, %v5486
  %v5499 = vand.u32 2147483647, %v5487
  %v5500 = vand.u32 2147483647, %v5488
  %v5501 = vand.u32 2147483647, %v5489
  %v5502 = vand.u32 2147483647, %v5490
  %v5503 = vand.u32 2147483647, %v5491
  %v5504 = vand.u32 2147483647, %v5492
  %v5505 = vsel %vm2977, %v5493, 0.0
  %v5506 = vsel %vm2977, %v5495, 0.0
  %v5507 = vadd.f32 %v5505, %v5506
  %v5508 = vsel %vm2977, %v5497, 0.0
  %v5509 = vadd.f32 %v5507, %v5508
  %v5510 = vsel %vm2977, %v5499, 0.0
  %v5511 = vadd.f32 %v5509, %v5510
  %v5512 = vsel %vm2977, %v5501, 0.0
  %v5513 = vadd.f32 %v5511, %v5512
  %v5514 = vsel %vm2977, %v5503, 0.0
  %v5515 = vadd.f32 %v5513, %v5514
  %v5516 = vsel %vm2977, %v5494, 0.0
  %v5517 = vsel %vm2977, %v5496, 0.0
  %v5518 = vadd.f32 %v5516, %v5517
  %v5519 = vsel %vm2977, %v5498, 0.0
  %v5520 = vadd.f32 %v5518, %v5519
  %v5521 = vsel %vm2977, %v5500, 0.0
  %v5522 = vadd.f32 %v5520, %v5521
  %v5523 = vsel %vm2977, %v5502, 0.0
  %v5524 = vadd.f32 %v5522, %v5523
  %v5525 = vsel %vm2977, %v5504, 0.0
  %v5526 = vadd.f32 %v5524, %v5525
  %v5527 = vsel %vm2977, %v5515, 0.0
  %v5528 = vsel %vm2977, %v5526, 0.0
  %v5529 = vadd.f32 %v5527, %v5528
  %5530 = vadd.xlane.f32.xlu0 %v5529
  %v5531 = vpop.xlane.xlu0 %5530
  %v5532 = vrot.slane %v5531, 4
  %v5533 = vadd.f32 %v5531, %v5532
  %v5534 = vrot.slane %v5533, 2
  %v5535 = vadd.f32 %v5533, %v5534
  %v5536 = vrot.slane %v5535, 1
  %v5537 = vadd.f32 %v5535, %v5536
  %s5538 = vtos %v5537
  %v5539 = vstv %s5538
  %v5540 = vmul.f32 %v5539, 4.0
  %v5541 = vadd.f32 %v4300, %v5540
  %v5542 = vld [vmem:[%s14] sm:$0xf]
  %v5543 = vld [vmem:[%s15] sm:$0xff]
  %v5544 = vld [vmem:[%s16] sm:$0xff]
  %v5545 = vld [vmem:[%s17] sm:$0xf]
  %v5547 = vsel %vm4568, %v5542, 0
  %5549 = vmatpush.msra.mxu0 0.0
  %5550 = vmatpush.msra.mxu0 0.0
  %5551 = vmatpush.msra.mxu0 0.0
  %5552 = vmatpush.msra.mxu0 0.0
  %5553 = vmatpush.msra.mxu0 0.0
  %5554 = vmatpush.msra.mxu0 0.0
  %5555 = vmatpush.msra.mxu0 0.0
  %5556 = vmatpush.msra.mxu0 0.0
  %5557 = vmatpush.msra.mxu0 0.0
  %5558 = vmatpush.msra.mxu0 0.0
  %5559 = vmatpush.msra.mxu0 0.0
  %5560 = vmatpush.msra.mxu0 0.0
  %5561 = vmatpush.msra.mxu0 0.0
  %5562 = vmatpush.msra.mxu0 0.0
  %5563 = vmatpush.msra.mxu0 0.0
  %5564 = vmatpush.msra.mxu0 %v4451
  %5565 = vmatmul.f32.gmra.mxu0 %v5547
  %v5566 = vpop.f32.mrf.mxu0
  %v5567 = vadd.f32 0.0, %v5566
  %5568 = vdwg.mxu0
  %5569 = vmatpush.msra.mxu0 0.0
  %5570 = vmatpush.msra.mxu0 0.0
  %5571 = vmatpush.msra.mxu0 0.0
  %5572 = vmatpush.msra.mxu0 0.0
  %5573 = vmatpush.msra.mxu0 0.0
  %5574 = vmatpush.msra.mxu0 0.0
  %5575 = vmatpush.msra.mxu0 0.0
  %5576 = vmatpush.msra.mxu0 0.0
  %5577 = vmatpush.msra.mxu0 0.0
  %5578 = vmatpush.msra.mxu0 0.0
  %5579 = vmatpush.msra.mxu0 0.0
  %5580 = vmatpush.msra.mxu0 0.0
  %5581 = vmatpush.msra.mxu0 0.0
  %5582 = vmatpush.msra.mxu0 0.0
  %5583 = vmatpush.msra.mxu0 0.0
  %5584 = vmatpush.msra.mxu0 %v4474
  %5585 = vmatmul.f32.gmra.mxu0 %v5547
  %v5586 = vpop.f32.mrf.mxu0
  %v5587 = vadd.f32 0.0, %v5586
  %5588 = vdwg.mxu0
  %5589 = vmatpush.msra.mxu0 0.0
  %5590 = vmatpush.msra.mxu0 0.0
  %5591 = vmatpush.msra.mxu0 0.0
  %5592 = vmatpush.msra.mxu0 0.0
  %5593 = vmatpush.msra.mxu0 0.0
  %5594 = vmatpush.msra.mxu0 0.0
  %5595 = vmatpush.msra.mxu0 0.0
  %5596 = vmatpush.msra.mxu0 0.0
  %5597 = vmatpush.msra.mxu0 0.0
  %5598 = vmatpush.msra.mxu0 0.0
  %5599 = vmatpush.msra.mxu0 0.0
  %5600 = vmatpush.msra.mxu0 0.0
  %5601 = vmatpush.msra.mxu0 0.0
  %5602 = vmatpush.msra.mxu0 0.0
  %5603 = vmatpush.msra.mxu0 0.0
  %5604 = vmatpush.msra.mxu0 %v4497
  %5605 = vmatmul.f32.gmra.mxu0 %v5547
  %v5606 = vpop.f32.mrf.mxu0
  %v5607 = vadd.f32 0.0, %v5606
  %5608 = vdwg.mxu0
  %5609 = vmatpush.msra.mxu0 0.0
  %5610 = vmatpush.msra.mxu0 0.0
  %5611 = vmatpush.msra.mxu0 0.0
  %5612 = vmatpush.msra.mxu0 0.0
  %5613 = vmatpush.msra.mxu0 0.0
  %5614 = vmatpush.msra.mxu0 0.0
  %5615 = vmatpush.msra.mxu0 0.0
  %5616 = vmatpush.msra.mxu0 0.0
  %5617 = vmatpush.msra.mxu0 0.0
  %5618 = vmatpush.msra.mxu0 0.0
  %5619 = vmatpush.msra.mxu0 0.0
  %5620 = vmatpush.msra.mxu0 0.0
  %5621 = vmatpush.msra.mxu0 0.0
  %5622 = vmatpush.msra.mxu0 0.0
  %5623 = vmatpush.msra.mxu0 0.0
  %5624 = vmatpush.msra.mxu0 %v4520
  %5625 = vmatmul.f32.gmra.mxu0 %v5547
  %v5626 = vpop.f32.mrf.mxu0
  %v5627 = vadd.f32 0.0, %v5626
  %5628 = vdwg.mxu0
  %5629 = vmatpush.msra.mxu0 0.0
  %5630 = vmatpush.msra.mxu0 0.0
  %5631 = vmatpush.msra.mxu0 0.0
  %5632 = vmatpush.msra.mxu0 0.0
  %5633 = vmatpush.msra.mxu0 0.0
  %5634 = vmatpush.msra.mxu0 0.0
  %5635 = vmatpush.msra.mxu0 0.0
  %5636 = vmatpush.msra.mxu0 0.0
  %5637 = vmatpush.msra.mxu0 0.0
  %5638 = vmatpush.msra.mxu0 0.0
  %5639 = vmatpush.msra.mxu0 0.0
  %5640 = vmatpush.msra.mxu0 0.0
  %5641 = vmatpush.msra.mxu0 0.0
  %5642 = vmatpush.msra.mxu0 0.0
  %5643 = vmatpush.msra.mxu0 0.0
  %5644 = vmatpush.msra.mxu0 %v4543
  %5645 = vmatmul.f32.gmra.mxu0 %v5547
  %v5646 = vpop.f32.mrf.mxu0
  %v5647 = vadd.f32 0.0, %v5646
  %5648 = vdwg.mxu0
  %5649 = vmatpush.msra.mxu0 0.0
  %5650 = vmatpush.msra.mxu0 0.0
  %5651 = vmatpush.msra.mxu0 0.0
  %5652 = vmatpush.msra.mxu0 0.0
  %5653 = vmatpush.msra.mxu0 0.0
  %5654 = vmatpush.msra.mxu0 0.0
  %5655 = vmatpush.msra.mxu0 0.0
  %5656 = vmatpush.msra.mxu0 0.0
  %5657 = vmatpush.msra.mxu0 0.0
  %5658 = vmatpush.msra.mxu0 0.0
  %5659 = vmatpush.msra.mxu0 0.0
  %5660 = vmatpush.msra.mxu0 0.0
  %5661 = vmatpush.msra.mxu0 0.0
  %5662 = vmatpush.msra.mxu0 0.0
  %5663 = vmatpush.msra.mxu0 0.0
  %5664 = vmatpush.msra.mxu0 %v4566
  %5665 = vmatmul.f32.gmra.mxu0 %v5547
  %v5666 = vpop.f32.mrf.mxu0
  %v5667 = vadd.f32 0.0, %v5666
  %5668 = vdwg.mxu0
  %v5670 = vsel %vm4568, %v5567, 0
  %5672 = vmatpush.msra.mxu0 0.0
  %5673 = vmatpush.msra.mxu0 0.0
  %5674 = vmatpush.msra.mxu0 0.0
  %5675 = vmatpush.msra.mxu0 0.0
  %5676 = vmatpush.msra.mxu0 0.0
  %5677 = vmatpush.msra.mxu0 0.0
  %5678 = vmatpush.msra.mxu0 0.0
  %5679 = vmatpush.msra.mxu0 0.0
  %5680 = vmatpush.msra.mxu0 0.0
  %5681 = vmatpush.msra.mxu0 0.0
  %5682 = vmatpush.msra.mxu0 0.0
  %5683 = vmatpush.msra.mxu0 0.0
  %5684 = vmatpush.msra.mxu0 0.0
  %5685 = vmatpush.msra.mxu0 0.0
  %5686 = vmatpush.msra.mxu0 0.0
  %5687 = vmatpush.msra.mxu0 %v5543
  %5688 = vmatmul.f32.gmra.mxu0 %v5670
  %v5689 = vpop.f32.mrf.mxu0
  %v5690 = vadd.f32 0.0, %v5689
  %5691 = vdwg.mxu0
  %v5693 = vsel %vm4568, %v5587, 0
  %5695 = vmatpush.msra.mxu0 0.0
  %5696 = vmatpush.msra.mxu0 0.0
  %5697 = vmatpush.msra.mxu0 0.0
  %5698 = vmatpush.msra.mxu0 0.0
  %5699 = vmatpush.msra.mxu0 0.0
  %5700 = vmatpush.msra.mxu0 0.0
  %5701 = vmatpush.msra.mxu0 0.0
  %5702 = vmatpush.msra.mxu0 0.0
  %5703 = vmatpush.msra.mxu0 0.0
  %5704 = vmatpush.msra.mxu0 0.0
  %5705 = vmatpush.msra.mxu0 0.0
  %5706 = vmatpush.msra.mxu0 0.0
  %5707 = vmatpush.msra.mxu0 0.0
  %5708 = vmatpush.msra.mxu0 0.0
  %5709 = vmatpush.msra.mxu0 0.0
  %5710 = vmatpush.msra.mxu0 %v5543
  %5711 = vmatmul.f32.gmra.mxu0 %v5693
  %v5712 = vpop.f32.mrf.mxu0
  %v5713 = vadd.f32 0.0, %v5712
  %5714 = vdwg.mxu0
  %v5716 = vsel %vm4568, %v5607, 0
  %5718 = vmatpush.msra.mxu0 0.0
  %5719 = vmatpush.msra.mxu0 0.0
  %5720 = vmatpush.msra.mxu0 0.0
  %5721 = vmatpush.msra.mxu0 0.0
  %5722 = vmatpush.msra.mxu0 0.0
  %5723 = vmatpush.msra.mxu0 0.0
  %5724 = vmatpush.msra.mxu0 0.0
  %5725 = vmatpush.msra.mxu0 0.0
  %5726 = vmatpush.msra.mxu0 0.0
  %5727 = vmatpush.msra.mxu0 0.0
  %5728 = vmatpush.msra.mxu0 0.0
  %5729 = vmatpush.msra.mxu0 0.0
  %5730 = vmatpush.msra.mxu0 0.0
  %5731 = vmatpush.msra.mxu0 0.0
  %5732 = vmatpush.msra.mxu0 0.0
  %5733 = vmatpush.msra.mxu0 %v5543
  %5734 = vmatmul.f32.gmra.mxu0 %v5716
  %v5735 = vpop.f32.mrf.mxu0
  %v5736 = vadd.f32 0.0, %v5735
  %5737 = vdwg.mxu0
  %v5739 = vsel %vm4568, %v5627, 0
  %5741 = vmatpush.msra.mxu0 0.0
  %5742 = vmatpush.msra.mxu0 0.0
  %5743 = vmatpush.msra.mxu0 0.0
  %5744 = vmatpush.msra.mxu0 0.0
  %5745 = vmatpush.msra.mxu0 0.0
  %5746 = vmatpush.msra.mxu0 0.0
  %5747 = vmatpush.msra.mxu0 0.0
  %5748 = vmatpush.msra.mxu0 0.0
  %5749 = vmatpush.msra.mxu0 0.0
  %5750 = vmatpush.msra.mxu0 0.0
  %5751 = vmatpush.msra.mxu0 0.0
  %5752 = vmatpush.msra.mxu0 0.0
  %5753 = vmatpush.msra.mxu0 0.0
  %5754 = vmatpush.msra.mxu0 0.0
  %5755 = vmatpush.msra.mxu0 0.0
  %5756 = vmatpush.msra.mxu0 %v5543
  %5757 = vmatmul.f32.gmra.mxu0 %v5739
  %v5758 = vpop.f32.mrf.mxu0
  %v5759 = vadd.f32 0.0, %v5758
  %5760 = vdwg.mxu0
  %v5762 = vsel %vm4568, %v5647, 0
  %5764 = vmatpush.msra.mxu0 0.0
  %5765 = vmatpush.msra.mxu0 0.0
  %5766 = vmatpush.msra.mxu0 0.0
  %5767 = vmatpush.msra.mxu0 0.0
  %5768 = vmatpush.msra.mxu0 0.0
  %5769 = vmatpush.msra.mxu0 0.0
  %5770 = vmatpush.msra.mxu0 0.0
  %5771 = vmatpush.msra.mxu0 0.0
  %5772 = vmatpush.msra.mxu0 0.0
  %5773 = vmatpush.msra.mxu0 0.0
  %5774 = vmatpush.msra.mxu0 0.0
  %5775 = vmatpush.msra.mxu0 0.0
  %5776 = vmatpush.msra.mxu0 0.0
  %5777 = vmatpush.msra.mxu0 0.0
  %5778 = vmatpush.msra.mxu0 0.0
  %5779 = vmatpush.msra.mxu0 %v5543
  %5780 = vmatmul.f32.gmra.mxu0 %v5762
  %v5781 = vpop.f32.mrf.mxu0
  %v5782 = vadd.f32 0.0, %v5781
  %5783 = vdwg.mxu0
  %v5785 = vsel %vm4568, %v5667, 0
  %5787 = vmatpush.msra.mxu0 0.0
  %5788 = vmatpush.msra.mxu0 0.0
  %5789 = vmatpush.msra.mxu0 0.0
  %5790 = vmatpush.msra.mxu0 0.0
  %5791 = vmatpush.msra.mxu0 0.0
  %5792 = vmatpush.msra.mxu0 0.0
  %5793 = vmatpush.msra.mxu0 0.0
  %5794 = vmatpush.msra.mxu0 0.0
  %5795 = vmatpush.msra.mxu0 0.0
  %5796 = vmatpush.msra.mxu0 0.0
  %5797 = vmatpush.msra.mxu0 0.0
  %5798 = vmatpush.msra.mxu0 0.0
  %5799 = vmatpush.msra.mxu0 0.0
  %5800 = vmatpush.msra.mxu0 0.0
  %5801 = vmatpush.msra.mxu0 0.0
  %5802 = vmatpush.msra.mxu0 %v5543
  %5803 = vmatmul.f32.gmra.mxu0 %v5785
  %v5804 = vpop.f32.mrf.mxu0
  %v5805 = vadd.f32 0.0, %v5804
  %5806 = vdwg.mxu0
  %vm5807 = vcmask 31744
  %v5809 = vsel %vm5807, %v5544, 0
  %vm5811 = vcmask 1043456
  %v5813 = vsel %vm5811, %v5690, 0
  %5815 = vmatpush.msra.mxu0 0.0
  %5816 = vmatpush.msra.mxu0 0.0
  %5817 = vmatpush.msra.mxu0 0.0
  %5818 = vmatpush.msra.mxu0 0.0
  %5819 = vmatpush.msra.mxu0 0.0
  %5820 = vmatpush.msra.mxu0 0.0
  %5821 = vmatpush.msra.mxu0 0.0
  %5822 = vmatpush.msra.mxu0 0.0
  %5823 = vmatpush.msra.mxu0 0.0
  %5824 = vmatpush.msra.mxu0 0.0
  %5825 = vmatpush.msra.mxu0 0.0
  %5826 = vmatpush.msra.mxu0 0.0
  %5827 = vmatpush.msra.mxu0 0.0
  %5828 = vmatpush.msra.mxu0 0.0
  %5829 = vmatpush.msra.mxu0 0.0
  %5830 = vmatpush.msra.mxu0 %v5813
  %5831 = vmatmul.f32.gmra.mxu0 %v5809
  %v5832 = vpop.f32.mrf.mxu0
  %v5833 = vadd.f32 0.0, %v5832
  %5834 = vdwg.mxu0
  %v5836 = vsel %vm5811, %v5713, 0
  %5838 = vmatpush.msra.mxu0 0.0
  %5839 = vmatpush.msra.mxu0 0.0
  %5840 = vmatpush.msra.mxu0 0.0
  %5841 = vmatpush.msra.mxu0 0.0
  %5842 = vmatpush.msra.mxu0 0.0
  %5843 = vmatpush.msra.mxu0 0.0
  %5844 = vmatpush.msra.mxu0 0.0
  %5845 = vmatpush.msra.mxu0 0.0
  %5846 = vmatpush.msra.mxu0 0.0
  %5847 = vmatpush.msra.mxu0 0.0
  %5848 = vmatpush.msra.mxu0 0.0
  %5849 = vmatpush.msra.mxu0 0.0
  %5850 = vmatpush.msra.mxu0 0.0
  %5851 = vmatpush.msra.mxu0 0.0
  %5852 = vmatpush.msra.mxu0 0.0
  %5853 = vmatpush.msra.mxu0 %v5836
  %5854 = vmatmul.f32.gmra.mxu0 %v5809
  %v5855 = vpop.f32.mrf.mxu0
  %v5856 = vadd.f32 0.0, %v5855
  %5857 = vdwg.mxu0
  %v5859 = vsel %vm5811, %v5736, 0
  %5861 = vmatpush.msra.mxu0 0.0
  %5862 = vmatpush.msra.mxu0 0.0
  %5863 = vmatpush.msra.mxu0 0.0
  %5864 = vmatpush.msra.mxu0 0.0
  %5865 = vmatpush.msra.mxu0 0.0
  %5866 = vmatpush.msra.mxu0 0.0
  %5867 = vmatpush.msra.mxu0 0.0
  %5868 = vmatpush.msra.mxu0 0.0
  %5869 = vmatpush.msra.mxu0 0.0
  %5870 = vmatpush.msra.mxu0 0.0
  %5871 = vmatpush.msra.mxu0 0.0
  %5872 = vmatpush.msra.mxu0 0.0
  %5873 = vmatpush.msra.mxu0 0.0
  %5874 = vmatpush.msra.mxu0 0.0
  %5875 = vmatpush.msra.mxu0 0.0
  %5876 = vmatpush.msra.mxu0 %v5859
  %5877 = vmatmul.f32.gmra.mxu0 %v5809
  %v5878 = vpop.f32.mrf.mxu0
  %v5879 = vadd.f32 0.0, %v5878
  %5880 = vdwg.mxu0
  %v5882 = vsel %vm5811, %v5759, 0
  %5884 = vmatpush.msra.mxu0 0.0
  %5885 = vmatpush.msra.mxu0 0.0
  %5886 = vmatpush.msra.mxu0 0.0
  %5887 = vmatpush.msra.mxu0 0.0
  %5888 = vmatpush.msra.mxu0 0.0
  %5889 = vmatpush.msra.mxu0 0.0
  %5890 = vmatpush.msra.mxu0 0.0
  %5891 = vmatpush.msra.mxu0 0.0
  %5892 = vmatpush.msra.mxu0 0.0
  %5893 = vmatpush.msra.mxu0 0.0
  %5894 = vmatpush.msra.mxu0 0.0
  %5895 = vmatpush.msra.mxu0 0.0
  %5896 = vmatpush.msra.mxu0 0.0
  %5897 = vmatpush.msra.mxu0 0.0
  %5898 = vmatpush.msra.mxu0 0.0
  %5899 = vmatpush.msra.mxu0 %v5882
  %5900 = vmatmul.f32.gmra.mxu0 %v5809
  %v5901 = vpop.f32.mrf.mxu0
  %v5902 = vadd.f32 0.0, %v5901
  %5903 = vdwg.mxu0
  %v5905 = vsel %vm5811, %v5782, 0
  %5907 = vmatpush.msra.mxu0 0.0
  %5908 = vmatpush.msra.mxu0 0.0
  %5909 = vmatpush.msra.mxu0 0.0
  %5910 = vmatpush.msra.mxu0 0.0
  %5911 = vmatpush.msra.mxu0 0.0
  %5912 = vmatpush.msra.mxu0 0.0
  %5913 = vmatpush.msra.mxu0 0.0
  %5914 = vmatpush.msra.mxu0 0.0
  %5915 = vmatpush.msra.mxu0 0.0
  %5916 = vmatpush.msra.mxu0 0.0
  %5917 = vmatpush.msra.mxu0 0.0
  %5918 = vmatpush.msra.mxu0 0.0
  %5919 = vmatpush.msra.mxu0 0.0
  %5920 = vmatpush.msra.mxu0 0.0
  %5921 = vmatpush.msra.mxu0 0.0
  %5922 = vmatpush.msra.mxu0 %v5905
  %5923 = vmatmul.f32.gmra.mxu0 %v5809
  %v5924 = vpop.f32.mrf.mxu0
  %v5925 = vadd.f32 0.0, %v5924
  %5926 = vdwg.mxu0
  %v5928 = vsel %vm5811, %v5805, 0
  %5930 = vmatpush.msra.mxu0 0.0
  %5931 = vmatpush.msra.mxu0 0.0
  %5932 = vmatpush.msra.mxu0 0.0
  %5933 = vmatpush.msra.mxu0 0.0
  %5934 = vmatpush.msra.mxu0 0.0
  %5935 = vmatpush.msra.mxu0 0.0
  %5936 = vmatpush.msra.mxu0 0.0
  %5937 = vmatpush.msra.mxu0 0.0
  %5938 = vmatpush.msra.mxu0 0.0
  %5939 = vmatpush.msra.mxu0 0.0
  %5940 = vmatpush.msra.mxu0 0.0
  %5941 = vmatpush.msra.mxu0 0.0
  %5942 = vmatpush.msra.mxu0 0.0
  %5943 = vmatpush.msra.mxu0 0.0
  %5944 = vmatpush.msra.mxu0 0.0
  %5945 = vmatpush.msra.mxu0 %v5928
  %5946 = vmatmul.f32.gmra.mxu0 %v5809
  %v5947 = vpop.f32.mrf.mxu0
  %v5948 = vadd.f32 0.0, %v5947
  %5949 = vdwg.mxu0
  %v5951 = vsel %vm5807, %v5833, 0
  %v5954 = vsel %vm5811, %v5545, 0
  %5956 = vmatpush.msra.mxu0 0.0
  %5957 = vmatpush.msra.mxu0 0.0
  %5958 = vmatpush.msra.mxu0 0.0
  %5959 = vmatpush.msra.mxu0 0.0
  %5960 = vmatpush.msra.mxu0 0.0
  %5961 = vmatpush.msra.mxu0 0.0
  %5962 = vmatpush.msra.mxu0 0.0
  %5963 = vmatpush.msra.mxu0 0.0
  %5964 = vmatpush.msra.mxu0 0.0
  %5965 = vmatpush.msra.mxu0 0.0
  %5966 = vmatpush.msra.mxu0 0.0
  %5967 = vmatpush.msra.mxu0 0.0
  %5968 = vmatpush.msra.mxu0 0.0
  %5969 = vmatpush.msra.mxu0 0.0
  %5970 = vmatpush.msra.mxu0 0.0
  %5971 = vmatpush.msra.mxu0 %v5954
  %5972 = vmatmul.f32.gmra.mxu0 %v5951
  %v5973 = vpop.f32.mrf.mxu0
  %v5974 = vadd.f32 0.0, %v5973
  %5975 = vdwg.mxu0
  %v5977 = vsel %vm5807, %v5856, 0
  %5979 = vmatpush.msra.mxu0 0.0
  %5980 = vmatpush.msra.mxu0 0.0
  %5981 = vmatpush.msra.mxu0 0.0
  %5982 = vmatpush.msra.mxu0 0.0
  %5983 = vmatpush.msra.mxu0 0.0
  %5984 = vmatpush.msra.mxu0 0.0
  %5985 = vmatpush.msra.mxu0 0.0
  %5986 = vmatpush.msra.mxu0 0.0
  %5987 = vmatpush.msra.mxu0 0.0
  %5988 = vmatpush.msra.mxu0 0.0
  %5989 = vmatpush.msra.mxu0 0.0
  %5990 = vmatpush.msra.mxu0 0.0
  %5991 = vmatpush.msra.mxu0 0.0
  %5992 = vmatpush.msra.mxu0 0.0
  %5993 = vmatpush.msra.mxu0 0.0
  %5994 = vmatpush.msra.mxu0 %v5954
  %5995 = vmatmul.f32.gmra.mxu0 %v5977
  %v5996 = vpop.f32.mrf.mxu0
  %v5997 = vadd.f32 0.0, %v5996
  %5998 = vdwg.mxu0
  %v6000 = vsel %vm5807, %v5879, 0
  %6002 = vmatpush.msra.mxu0 0.0
  %6003 = vmatpush.msra.mxu0 0.0
  %6004 = vmatpush.msra.mxu0 0.0
  %6005 = vmatpush.msra.mxu0 0.0
  %6006 = vmatpush.msra.mxu0 0.0
  %6007 = vmatpush.msra.mxu0 0.0
  %6008 = vmatpush.msra.mxu0 0.0
  %6009 = vmatpush.msra.mxu0 0.0
  %6010 = vmatpush.msra.mxu0 0.0
  %6011 = vmatpush.msra.mxu0 0.0
  %6012 = vmatpush.msra.mxu0 0.0
  %6013 = vmatpush.msra.mxu0 0.0
  %6014 = vmatpush.msra.mxu0 0.0
  %6015 = vmatpush.msra.mxu0 0.0
  %6016 = vmatpush.msra.mxu0 0.0
  %6017 = vmatpush.msra.mxu0 %v5954
  %6018 = vmatmul.f32.gmra.mxu0 %v6000
  %v6019 = vpop.f32.mrf.mxu0
  %v6020 = vadd.f32 0.0, %v6019
  %6021 = vdwg.mxu0
  %v6023 = vsel %vm5807, %v5902, 0
  %6025 = vmatpush.msra.mxu0 0.0
  %6026 = vmatpush.msra.mxu0 0.0
  %6027 = vmatpush.msra.mxu0 0.0
  %6028 = vmatpush.msra.mxu0 0.0
  %6029 = vmatpush.msra.mxu0 0.0
  %6030 = vmatpush.msra.mxu0 0.0
  %6031 = vmatpush.msra.mxu0 0.0
  %6032 = vmatpush.msra.mxu0 0.0
  %6033 = vmatpush.msra.mxu0 0.0
  %6034 = vmatpush.msra.mxu0 0.0
  %6035 = vmatpush.msra.mxu0 0.0
  %6036 = vmatpush.msra.mxu0 0.0
  %6037 = vmatpush.msra.mxu0 0.0
  %6038 = vmatpush.msra.mxu0 0.0
  %6039 = vmatpush.msra.mxu0 0.0
  %6040 = vmatpush.msra.mxu0 %v5954
  %6041 = vmatmul.f32.gmra.mxu0 %v6023
  %v6042 = vpop.f32.mrf.mxu0
  %v6043 = vadd.f32 0.0, %v6042
  %6044 = vdwg.mxu0
  %v6046 = vsel %vm5807, %v5925, 0
  %6048 = vmatpush.msra.mxu0 0.0
  %6049 = vmatpush.msra.mxu0 0.0
  %6050 = vmatpush.msra.mxu0 0.0
  %6051 = vmatpush.msra.mxu0 0.0
  %6052 = vmatpush.msra.mxu0 0.0
  %6053 = vmatpush.msra.mxu0 0.0
  %6054 = vmatpush.msra.mxu0 0.0
  %6055 = vmatpush.msra.mxu0 0.0
  %6056 = vmatpush.msra.mxu0 0.0
  %6057 = vmatpush.msra.mxu0 0.0
  %6058 = vmatpush.msra.mxu0 0.0
  %6059 = vmatpush.msra.mxu0 0.0
  %6060 = vmatpush.msra.mxu0 0.0
  %6061 = vmatpush.msra.mxu0 0.0
  %6062 = vmatpush.msra.mxu0 0.0
  %6063 = vmatpush.msra.mxu0 %v5954
  %6064 = vmatmul.f32.gmra.mxu0 %v6046
  %v6065 = vpop.f32.mrf.mxu0
  %v6066 = vadd.f32 0.0, %v6065
  %6067 = vdwg.mxu0
  %v6069 = vsel %vm5807, %v5948, 0
  %6071 = vmatpush.msra.mxu0 0.0
  %6072 = vmatpush.msra.mxu0 0.0
  %6073 = vmatpush.msra.mxu0 0.0
  %6074 = vmatpush.msra.mxu0 0.0
  %6075 = vmatpush.msra.mxu0 0.0
  %6076 = vmatpush.msra.mxu0 0.0
  %6077 = vmatpush.msra.mxu0 0.0
  %6078 = vmatpush.msra.mxu0 0.0
  %6079 = vmatpush.msra.mxu0 0.0
  %6080 = vmatpush.msra.mxu0 0.0
  %6081 = vmatpush.msra.mxu0 0.0
  %6082 = vmatpush.msra.mxu0 0.0
  %6083 = vmatpush.msra.mxu0 0.0
  %6084 = vmatpush.msra.mxu0 0.0
  %6085 = vmatpush.msra.mxu0 0.0
  %6086 = vmatpush.msra.mxu0 %v5954
  %6087 = vmatmul.f32.gmra.mxu0 %v6069
  %v6088 = vpop.f32.mrf.mxu0
  %v6089 = vadd.f32 0.0, %v6088
  %6090 = vdwg.mxu0
  %6091 = vmatpush.msra.mxu0 0.0
  %6092 = vmatpush.msra.mxu0 0.0
  %6093 = vmatpush.msra.mxu0 0.0
  %6094 = vmatpush.msra.mxu0 0.0
  %6095 = vmatpush.msra.mxu0 0.0
  %6096 = vmatpush.msra.mxu0 0.0
  %6097 = vmatpush.msra.mxu0 0.0
  %6098 = vmatpush.msra.mxu0 0.0
  %6099 = vmatpush.msra.mxu0 0.0
  %6100 = vmatpush.msra.mxu0 0.0
  %6101 = vmatpush.msra.mxu0 0.0
  %6102 = vmatpush.msra.mxu0 0.0
  %6103 = vmatpush.msra.mxu0 0.0
  %6104 = vmatpush.msra.mxu0 0.0
  %6105 = vmatpush.msra.mxu0 0.0
  %6106 = vmatpush.msra.mxu0 %v5028
  %6107 = vmatmul.f32.gmra.mxu0 %v5547
  %v6108 = vpop.f32.mrf.mxu0
  %v6109 = vadd.f32 0.0, %v6108
  %6110 = vdwg.mxu0
  %6111 = vmatpush.msra.mxu0 0.0
  %6112 = vmatpush.msra.mxu0 0.0
  %6113 = vmatpush.msra.mxu0 0.0
  %6114 = vmatpush.msra.mxu0 0.0
  %6115 = vmatpush.msra.mxu0 0.0
  %6116 = vmatpush.msra.mxu0 0.0
  %6117 = vmatpush.msra.mxu0 0.0
  %6118 = vmatpush.msra.mxu0 0.0
  %6119 = vmatpush.msra.mxu0 0.0
  %6120 = vmatpush.msra.mxu0 0.0
  %6121 = vmatpush.msra.mxu0 0.0
  %6122 = vmatpush.msra.mxu0 0.0
  %6123 = vmatpush.msra.mxu0 0.0
  %6124 = vmatpush.msra.mxu0 0.0
  %6125 = vmatpush.msra.mxu0 0.0
  %6126 = vmatpush.msra.mxu0 %v5051
  %6127 = vmatmul.f32.gmra.mxu0 %v5547
  %v6128 = vpop.f32.mrf.mxu0
  %v6129 = vadd.f32 0.0, %v6128
  %6130 = vdwg.mxu0
  %6131 = vmatpush.msra.mxu0 0.0
  %6132 = vmatpush.msra.mxu0 0.0
  %6133 = vmatpush.msra.mxu0 0.0
  %6134 = vmatpush.msra.mxu0 0.0
  %6135 = vmatpush.msra.mxu0 0.0
  %6136 = vmatpush.msra.mxu0 0.0
  %6137 = vmatpush.msra.mxu0 0.0
  %6138 = vmatpush.msra.mxu0 0.0
  %6139 = vmatpush.msra.mxu0 0.0
  %6140 = vmatpush.msra.mxu0 0.0
  %6141 = vmatpush.msra.mxu0 0.0
  %6142 = vmatpush.msra.mxu0 0.0
  %6143 = vmatpush.msra.mxu0 0.0
  %6144 = vmatpush.msra.mxu0 0.0
  %6145 = vmatpush.msra.mxu0 0.0
  %6146 = vmatpush.msra.mxu0 %v5074
  %6147 = vmatmul.f32.gmra.mxu0 %v5547
  %v6148 = vpop.f32.mrf.mxu0
  %v6149 = vadd.f32 0.0, %v6148
  %6150 = vdwg.mxu0
  %6151 = vmatpush.msra.mxu0 0.0
  %6152 = vmatpush.msra.mxu0 0.0
  %6153 = vmatpush.msra.mxu0 0.0
  %6154 = vmatpush.msra.mxu0 0.0
  %6155 = vmatpush.msra.mxu0 0.0
  %6156 = vmatpush.msra.mxu0 0.0
  %6157 = vmatpush.msra.mxu0 0.0
  %6158 = vmatpush.msra.mxu0 0.0
  %6159 = vmatpush.msra.mxu0 0.0
  %6160 = vmatpush.msra.mxu0 0.0
  %6161 = vmatpush.msra.mxu0 0.0
  %6162 = vmatpush.msra.mxu0 0.0
  %6163 = vmatpush.msra.mxu0 0.0
  %6164 = vmatpush.msra.mxu0 0.0
  %6165 = vmatpush.msra.mxu0 0.0
  %6166 = vmatpush.msra.mxu0 %v5097
  %6167 = vmatmul.f32.gmra.mxu0 %v5547
  %v6168 = vpop.f32.mrf.mxu0
  %v6169 = vadd.f32 0.0, %v6168
  %6170 = vdwg.mxu0
  %6171 = vmatpush.msra.mxu0 0.0
  %6172 = vmatpush.msra.mxu0 0.0
  %6173 = vmatpush.msra.mxu0 0.0
  %6174 = vmatpush.msra.mxu0 0.0
  %6175 = vmatpush.msra.mxu0 0.0
  %6176 = vmatpush.msra.mxu0 0.0
  %6177 = vmatpush.msra.mxu0 0.0
  %6178 = vmatpush.msra.mxu0 0.0
  %6179 = vmatpush.msra.mxu0 0.0
  %6180 = vmatpush.msra.mxu0 0.0
  %6181 = vmatpush.msra.mxu0 0.0
  %6182 = vmatpush.msra.mxu0 0.0
  %6183 = vmatpush.msra.mxu0 0.0
  %6184 = vmatpush.msra.mxu0 0.0
  %6185 = vmatpush.msra.mxu0 0.0
  %6186 = vmatpush.msra.mxu0 %v5120
  %6187 = vmatmul.f32.gmra.mxu0 %v5547
  %v6188 = vpop.f32.mrf.mxu0
  %v6189 = vadd.f32 0.0, %v6188
  %6190 = vdwg.mxu0
  %6191 = vmatpush.msra.mxu0 0.0
  %6192 = vmatpush.msra.mxu0 0.0
  %6193 = vmatpush.msra.mxu0 0.0
  %6194 = vmatpush.msra.mxu0 0.0
  %6195 = vmatpush.msra.mxu0 0.0
  %6196 = vmatpush.msra.mxu0 0.0
  %6197 = vmatpush.msra.mxu0 0.0
  %6198 = vmatpush.msra.mxu0 0.0
  %6199 = vmatpush.msra.mxu0 0.0
  %6200 = vmatpush.msra.mxu0 0.0
  %6201 = vmatpush.msra.mxu0 0.0
  %6202 = vmatpush.msra.mxu0 0.0
  %6203 = vmatpush.msra.mxu0 0.0
  %6204 = vmatpush.msra.mxu0 0.0
  %6205 = vmatpush.msra.mxu0 0.0
  %6206 = vmatpush.msra.mxu0 %v5143
  %6207 = vmatmul.f32.gmra.mxu0 %v5547
  %v6208 = vpop.f32.mrf.mxu0
  %v6209 = vadd.f32 0.0, %v6208
  %6210 = vdwg.mxu0
  %v6212 = vsel %vm4568, %v6109, 0
  %6214 = vmatpush.msra.mxu0 0.0
  %6215 = vmatpush.msra.mxu0 0.0
  %6216 = vmatpush.msra.mxu0 0.0
  %6217 = vmatpush.msra.mxu0 0.0
  %6218 = vmatpush.msra.mxu0 0.0
  %6219 = vmatpush.msra.mxu0 0.0
  %6220 = vmatpush.msra.mxu0 0.0
  %6221 = vmatpush.msra.mxu0 0.0
  %6222 = vmatpush.msra.mxu0 0.0
  %6223 = vmatpush.msra.mxu0 0.0
  %6224 = vmatpush.msra.mxu0 0.0
  %6225 = vmatpush.msra.mxu0 0.0
  %6226 = vmatpush.msra.mxu0 0.0
  %6227 = vmatpush.msra.mxu0 0.0
  %6228 = vmatpush.msra.mxu0 0.0
  %6229 = vmatpush.msra.mxu0 %v5543
  %6230 = vmatmul.f32.gmra.mxu0 %v6212
  %v6231 = vpop.f32.mrf.mxu0
  %v6232 = vadd.f32 0.0, %v6231
  %6233 = vdwg.mxu0
  %v6235 = vsel %vm4568, %v6129, 0
  %6237 = vmatpush.msra.mxu0 0.0
  %6238 = vmatpush.msra.mxu0 0.0
  %6239 = vmatpush.msra.mxu0 0.0
  %6240 = vmatpush.msra.mxu0 0.0
  %6241 = vmatpush.msra.mxu0 0.0
  %6242 = vmatpush.msra.mxu0 0.0
  %6243 = vmatpush.msra.mxu0 0.0
  %6244 = vmatpush.msra.mxu0 0.0
  %6245 = vmatpush.msra.mxu0 0.0
  %6246 = vmatpush.msra.mxu0 0.0
  %6247 = vmatpush.msra.mxu0 0.0
  %6248 = vmatpush.msra.mxu0 0.0
  %6249 = vmatpush.msra.mxu0 0.0
  %6250 = vmatpush.msra.mxu0 0.0
  %6251 = vmatpush.msra.mxu0 0.0
  %6252 = vmatpush.msra.mxu0 %v5543
  %6253 = vmatmul.f32.gmra.mxu0 %v6235
  %v6254 = vpop.f32.mrf.mxu0
  %v6255 = vadd.f32 0.0, %v6254
  %6256 = vdwg.mxu0
  %v6258 = vsel %vm4568, %v6149, 0
  %6260 = vmatpush.msra.mxu0 0.0
  %6261 = vmatpush.msra.mxu0 0.0
  %6262 = vmatpush.msra.mxu0 0.0
  %6263 = vmatpush.msra.mxu0 0.0
  %6264 = vmatpush.msra.mxu0 0.0
  %6265 = vmatpush.msra.mxu0 0.0
  %6266 = vmatpush.msra.mxu0 0.0
  %6267 = vmatpush.msra.mxu0 0.0
  %6268 = vmatpush.msra.mxu0 0.0
  %6269 = vmatpush.msra.mxu0 0.0
  %6270 = vmatpush.msra.mxu0 0.0
  %6271 = vmatpush.msra.mxu0 0.0
  %6272 = vmatpush.msra.mxu0 0.0
  %6273 = vmatpush.msra.mxu0 0.0
  %6274 = vmatpush.msra.mxu0 0.0
  %6275 = vmatpush.msra.mxu0 %v5543
  %6276 = vmatmul.f32.gmra.mxu0 %v6258
  %v6277 = vpop.f32.mrf.mxu0
  %v6278 = vadd.f32 0.0, %v6277
  %6279 = vdwg.mxu0
  %v6281 = vsel %vm4568, %v6169, 0
  %6283 = vmatpush.msra.mxu0 0.0
  %6284 = vmatpush.msra.mxu0 0.0
  %6285 = vmatpush.msra.mxu0 0.0
  %6286 = vmatpush.msra.mxu0 0.0
  %6287 = vmatpush.msra.mxu0 0.0
  %6288 = vmatpush.msra.mxu0 0.0
  %6289 = vmatpush.msra.mxu0 0.0
  %6290 = vmatpush.msra.mxu0 0.0
  %6291 = vmatpush.msra.mxu0 0.0
  %6292 = vmatpush.msra.mxu0 0.0
  %6293 = vmatpush.msra.mxu0 0.0
  %6294 = vmatpush.msra.mxu0 0.0
  %6295 = vmatpush.msra.mxu0 0.0
  %6296 = vmatpush.msra.mxu0 0.0
  %6297 = vmatpush.msra.mxu0 0.0
  %6298 = vmatpush.msra.mxu0 %v5543
  %6299 = vmatmul.f32.gmra.mxu0 %v6281
  %v6300 = vpop.f32.mrf.mxu0
  %v6301 = vadd.f32 0.0, %v6300
  %6302 = vdwg.mxu0
  %v6304 = vsel %vm4568, %v6189, 0
  %6306 = vmatpush.msra.mxu0 0.0
  %6307 = vmatpush.msra.mxu0 0.0
  %6308 = vmatpush.msra.mxu0 0.0
  %6309 = vmatpush.msra.mxu0 0.0
  %6310 = vmatpush.msra.mxu0 0.0
  %6311 = vmatpush.msra.mxu0 0.0
  %6312 = vmatpush.msra.mxu0 0.0
  %6313 = vmatpush.msra.mxu0 0.0
  %6314 = vmatpush.msra.mxu0 0.0
  %6315 = vmatpush.msra.mxu0 0.0
  %6316 = vmatpush.msra.mxu0 0.0
  %6317 = vmatpush.msra.mxu0 0.0
  %6318 = vmatpush.msra.mxu0 0.0
  %6319 = vmatpush.msra.mxu0 0.0
  %6320 = vmatpush.msra.mxu0 0.0
  %6321 = vmatpush.msra.mxu0 %v5543
  %6322 = vmatmul.f32.gmra.mxu0 %v6304
  %v6323 = vpop.f32.mrf.mxu0
  %v6324 = vadd.f32 0.0, %v6323
  %6325 = vdwg.mxu0
  %v6327 = vsel %vm4568, %v6209, 0
  %6329 = vmatpush.msra.mxu0 0.0
  %6330 = vmatpush.msra.mxu0 0.0
  %6331 = vmatpush.msra.mxu0 0.0
  %6332 = vmatpush.msra.mxu0 0.0
  %6333 = vmatpush.msra.mxu0 0.0
  %6334 = vmatpush.msra.mxu0 0.0
  %6335 = vmatpush.msra.mxu0 0.0
  %6336 = vmatpush.msra.mxu0 0.0
  %6337 = vmatpush.msra.mxu0 0.0
  %6338 = vmatpush.msra.mxu0 0.0
  %6339 = vmatpush.msra.mxu0 0.0
  %6340 = vmatpush.msra.mxu0 0.0
  %6341 = vmatpush.msra.mxu0 0.0
  %6342 = vmatpush.msra.mxu0 0.0
  %6343 = vmatpush.msra.mxu0 0.0
  %6344 = vmatpush.msra.mxu0 %v5543
  %6345 = vmatmul.f32.gmra.mxu0 %v6327
  %v6346 = vpop.f32.mrf.mxu0
  %v6347 = vadd.f32 0.0, %v6346
  %6348 = vdwg.mxu0
  %v6350 = vsel %vm5811, %v6232, 0
  %6352 = vmatpush.msra.mxu0 0.0
  %6353 = vmatpush.msra.mxu0 0.0
  %6354 = vmatpush.msra.mxu0 0.0
  %6355 = vmatpush.msra.mxu0 0.0
  %6356 = vmatpush.msra.mxu0 0.0
  %6357 = vmatpush.msra.mxu0 0.0
  %6358 = vmatpush.msra.mxu0 0.0
  %6359 = vmatpush.msra.mxu0 0.0
  %6360 = vmatpush.msra.mxu0 0.0
  %6361 = vmatpush.msra.mxu0 0.0
  %6362 = vmatpush.msra.mxu0 0.0
  %6363 = vmatpush.msra.mxu0 0.0
  %6364 = vmatpush.msra.mxu0 0.0
  %6365 = vmatpush.msra.mxu0 0.0
  %6366 = vmatpush.msra.mxu0 0.0
  %6367 = vmatpush.msra.mxu0 %v6350
  %6368 = vmatmul.f32.gmra.mxu0 %v5809
  %v6369 = vpop.f32.mrf.mxu0
  %v6370 = vadd.f32 0.0, %v6369
  %6371 = vdwg.mxu0
  %v6373 = vsel %vm5811, %v6255, 0
  %6375 = vmatpush.msra.mxu0 0.0
  %6376 = vmatpush.msra.mxu0 0.0
  %6377 = vmatpush.msra.mxu0 0.0
  %6378 = vmatpush.msra.mxu0 0.0
  %6379 = vmatpush.msra.mxu0 0.0
  %6380 = vmatpush.msra.mxu0 0.0
  %6381 = vmatpush.msra.mxu0 0.0
  %6382 = vmatpush.msra.mxu0 0.0
  %6383 = vmatpush.msra.mxu0 0.0
  %6384 = vmatpush.msra.mxu0 0.0
  %6385 = vmatpush.msra.mxu0 0.0
  %6386 = vmatpush.msra.mxu0 0.0
  %6387 = vmatpush.msra.mxu0 0.0
  %6388 = vmatpush.msra.mxu0 0.0
  %6389 = vmatpush.msra.mxu0 0.0
  %6390 = vmatpush.msra.mxu0 %v6373
  %6391 = vmatmul.f32.gmra.mxu0 %v5809
  %v6392 = vpop.f32.mrf.mxu0
  %v6393 = vadd.f32 0.0, %v6392
  %6394 = vdwg.mxu0
  %v6396 = vsel %vm5811, %v6278, 0
  %6398 = vmatpush.msra.mxu0 0.0
  %6399 = vmatpush.msra.mxu0 0.0
  %6400 = vmatpush.msra.mxu0 0.0
  %6401 = vmatpush.msra.mxu0 0.0
  %6402 = vmatpush.msra.mxu0 0.0
  %6403 = vmatpush.msra.mxu0 0.0
  %6404 = vmatpush.msra.mxu0 0.0
  %6405 = vmatpush.msra.mxu0 0.0
  %6406 = vmatpush.msra.mxu0 0.0
  %6407 = vmatpush.msra.mxu0 0.0
  %6408 = vmatpush.msra.mxu0 0.0
  %6409 = vmatpush.msra.mxu0 0.0
  %6410 = vmatpush.msra.mxu0 0.0
  %6411 = vmatpush.msra.mxu0 0.0
  %6412 = vmatpush.msra.mxu0 0.0
  %6413 = vmatpush.msra.mxu0 %v6396
  %6414 = vmatmul.f32.gmra.mxu0 %v5809
  %v6415 = vpop.f32.mrf.mxu0
  %v6416 = vadd.f32 0.0, %v6415
  %6417 = vdwg.mxu0
  %v6419 = vsel %vm5811, %v6301, 0
  %6421 = vmatpush.msra.mxu0 0.0
  %6422 = vmatpush.msra.mxu0 0.0
  %6423 = vmatpush.msra.mxu0 0.0
  %6424 = vmatpush.msra.mxu0 0.0
  %6425 = vmatpush.msra.mxu0 0.0
  %6426 = vmatpush.msra.mxu0 0.0
  %6427 = vmatpush.msra.mxu0 0.0
  %6428 = vmatpush.msra.mxu0 0.0
  %6429 = vmatpush.msra.mxu0 0.0
  %6430 = vmatpush.msra.mxu0 0.0
  %6431 = vmatpush.msra.mxu0 0.0
  %6432 = vmatpush.msra.mxu0 0.0
  %6433 = vmatpush.msra.mxu0 0.0
  %6434 = vmatpush.msra.mxu0 0.0
  %6435 = vmatpush.msra.mxu0 0.0
  %6436 = vmatpush.msra.mxu0 %v6419
  %6437 = vmatmul.f32.gmra.mxu0 %v5809
  %v6438 = vpop.f32.mrf.mxu0
  %v6439 = vadd.f32 0.0, %v6438
  %6440 = vdwg.mxu0
  %v6442 = vsel %vm5811, %v6324, 0
  %6444 = vmatpush.msra.mxu0 0.0
  %6445 = vmatpush.msra.mxu0 0.0
  %6446 = vmatpush.msra.mxu0 0.0
  %6447 = vmatpush.msra.mxu0 0.0
  %6448 = vmatpush.msra.mxu0 0.0
  %6449 = vmatpush.msra.mxu0 0.0
  %6450 = vmatpush.msra.mxu0 0.0
  %6451 = vmatpush.msra.mxu0 0.0
  %6452 = vmatpush.msra.mxu0 0.0
  %6453 = vmatpush.msra.mxu0 0.0
  %6454 = vmatpush.msra.mxu0 0.0
  %6455 = vmatpush.msra.mxu0 0.0
  %6456 = vmatpush.msra.mxu0 0.0
  %6457 = vmatpush.msra.mxu0 0.0
  %6458 = vmatpush.msra.mxu0 0.0
  %6459 = vmatpush.msra.mxu0 %v6442
  %6460 = vmatmul.f32.gmra.mxu0 %v5809
  %v6461 = vpop.f32.mrf.mxu0
  %v6462 = vadd.f32 0.0, %v6461
  %6463 = vdwg.mxu0
  %v6465 = vsel %vm5811, %v6347, 0
  %6467 = vmatpush.msra.mxu0 0.0
  %6468 = vmatpush.msra.mxu0 0.0
  %6469 = vmatpush.msra.mxu0 0.0
  %6470 = vmatpush.msra.mxu0 0.0
  %6471 = vmatpush.msra.mxu0 0.0
  %6472 = vmatpush.msra.mxu0 0.0
  %6473 = vmatpush.msra.mxu0 0.0
  %6474 = vmatpush.msra.mxu0 0.0
  %6475 = vmatpush.msra.mxu0 0.0
  %6476 = vmatpush.msra.mxu0 0.0
  %6477 = vmatpush.msra.mxu0 0.0
  %6478 = vmatpush.msra.mxu0 0.0
  %6479 = vmatpush.msra.mxu0 0.0
  %6480 = vmatpush.msra.mxu0 0.0
  %6481 = vmatpush.msra.mxu0 0.0
  %6482 = vmatpush.msra.mxu0 %v6465
  %6483 = vmatmul.f32.gmra.mxu0 %v5809
  %v6484 = vpop.f32.mrf.mxu0
  %v6485 = vadd.f32 0.0, %v6484
  %6486 = vdwg.mxu0
  %v6488 = vsel %vm5807, %v6370, 0
  %6490 = vmatpush.msra.mxu0 0.0
  %6491 = vmatpush.msra.mxu0 0.0
  %6492 = vmatpush.msra.mxu0 0.0
  %6493 = vmatpush.msra.mxu0 0.0
  %6494 = vmatpush.msra.mxu0 0.0
  %6495 = vmatpush.msra.mxu0 0.0
  %6496 = vmatpush.msra.mxu0 0.0
  %6497 = vmatpush.msra.mxu0 0.0
  %6498 = vmatpush.msra.mxu0 0.0
  %6499 = vmatpush.msra.mxu0 0.0
  %6500 = vmatpush.msra.mxu0 0.0
  %6501 = vmatpush.msra.mxu0 0.0
  %6502 = vmatpush.msra.mxu0 0.0
  %6503 = vmatpush.msra.mxu0 0.0
  %6504 = vmatpush.msra.mxu0 0.0
  %6505 = vmatpush.msra.mxu0 %v5954
  %6506 = vmatmul.f32.gmra.mxu0 %v6488
  %v6507 = vpop.f32.mrf.mxu0
  %v6508 = vadd.f32 0.0, %v6507
  %6509 = vdwg.mxu0
  %v6511 = vsel %vm5807, %v6393, 0
  %6513 = vmatpush.msra.mxu0 0.0
  %6514 = vmatpush.msra.mxu0 0.0
  %6515 = vmatpush.msra.mxu0 0.0
  %6516 = vmatpush.msra.mxu0 0.0
  %6517 = vmatpush.msra.mxu0 0.0
  %6518 = vmatpush.msra.mxu0 0.0
  %6519 = vmatpush.msra.mxu0 0.0
  %6520 = vmatpush.msra.mxu0 0.0
  %6521 = vmatpush.msra.mxu0 0.0
  %6522 = vmatpush.msra.mxu0 0.0
  %6523 = vmatpush.msra.mxu0 0.0
  %6524 = vmatpush.msra.mxu0 0.0
  %6525 = vmatpush.msra.mxu0 0.0
  %6526 = vmatpush.msra.mxu0 0.0
  %6527 = vmatpush.msra.mxu0 0.0
  %6528 = vmatpush.msra.mxu0 %v5954
  %6529 = vmatmul.f32.gmra.mxu0 %v6511
  %v6530 = vpop.f32.mrf.mxu0
  %v6531 = vadd.f32 0.0, %v6530
  %6532 = vdwg.mxu0
  %v6534 = vsel %vm5807, %v6416, 0
  %6536 = vmatpush.msra.mxu0 0.0
  %6537 = vmatpush.msra.mxu0 0.0
  %6538 = vmatpush.msra.mxu0 0.0
  %6539 = vmatpush.msra.mxu0 0.0
  %6540 = vmatpush.msra.mxu0 0.0
  %6541 = vmatpush.msra.mxu0 0.0
  %6542 = vmatpush.msra.mxu0 0.0
  %6543 = vmatpush.msra.mxu0 0.0
  %6544 = vmatpush.msra.mxu0 0.0
  %6545 = vmatpush.msra.mxu0 0.0
  %6546 = vmatpush.msra.mxu0 0.0
  %6547 = vmatpush.msra.mxu0 0.0
  %6548 = vmatpush.msra.mxu0 0.0
  %6549 = vmatpush.msra.mxu0 0.0
  %6550 = vmatpush.msra.mxu0 0.0
  %6551 = vmatpush.msra.mxu0 %v5954
  %6552 = vmatmul.f32.gmra.mxu0 %v6534
  %v6553 = vpop.f32.mrf.mxu0
  %v6554 = vadd.f32 0.0, %v6553
  %6555 = vdwg.mxu0
  %v6557 = vsel %vm5807, %v6439, 0
  %6559 = vmatpush.msra.mxu0 0.0
  %6560 = vmatpush.msra.mxu0 0.0
  %6561 = vmatpush.msra.mxu0 0.0
  %6562 = vmatpush.msra.mxu0 0.0
  %6563 = vmatpush.msra.mxu0 0.0
  %6564 = vmatpush.msra.mxu0 0.0
  %6565 = vmatpush.msra.mxu0 0.0
  %6566 = vmatpush.msra.mxu0 0.0
  %6567 = vmatpush.msra.mxu0 0.0
  %6568 = vmatpush.msra.mxu0 0.0
  %6569 = vmatpush.msra.mxu0 0.0
  %6570 = vmatpush.msra.mxu0 0.0
  %6571 = vmatpush.msra.mxu0 0.0
  %6572 = vmatpush.msra.mxu0 0.0
  %6573 = vmatpush.msra.mxu0 0.0
  %6574 = vmatpush.msra.mxu0 %v5954
  %6575 = vmatmul.f32.gmra.mxu0 %v6557
  %v6576 = vpop.f32.mrf.mxu0
  %v6577 = vadd.f32 0.0, %v6576
  %6578 = vdwg.mxu0
  %v6580 = vsel %vm5807, %v6462, 0
  %6582 = vmatpush.msra.mxu0 0.0
  %6583 = vmatpush.msra.mxu0 0.0
  %6584 = vmatpush.msra.mxu0 0.0
  %6585 = vmatpush.msra.mxu0 0.0
  %6586 = vmatpush.msra.mxu0 0.0
  %6587 = vmatpush.msra.mxu0 0.0
  %6588 = vmatpush.msra.mxu0 0.0
  %6589 = vmatpush.msra.mxu0 0.0
  %6590 = vmatpush.msra.mxu0 0.0
  %6591 = vmatpush.msra.mxu0 0.0
  %6592 = vmatpush.msra.mxu0 0.0
  %6593 = vmatpush.msra.mxu0 0.0
  %6594 = vmatpush.msra.mxu0 0.0
  %6595 = vmatpush.msra.mxu0 0.0
  %6596 = vmatpush.msra.mxu0 0.0
  %6597 = vmatpush.msra.mxu0 %v5954
  %6598 = vmatmul.f32.gmra.mxu0 %v6580
  %v6599 = vpop.f32.mrf.mxu0
  %v6600 = vadd.f32 0.0, %v6599
  %6601 = vdwg.mxu0
  %v6603 = vsel %vm5807, %v6485, 0
  %6605 = vmatpush.msra.mxu0 0.0
  %6606 = vmatpush.msra.mxu0 0.0
  %6607 = vmatpush.msra.mxu0 0.0
  %6608 = vmatpush.msra.mxu0 0.0
  %6609 = vmatpush.msra.mxu0 0.0
  %6610 = vmatpush.msra.mxu0 0.0
  %6611 = vmatpush.msra.mxu0 0.0
  %6612 = vmatpush.msra.mxu0 0.0
  %6613 = vmatpush.msra.mxu0 0.0
  %6614 = vmatpush.msra.mxu0 0.0
  %6615 = vmatpush.msra.mxu0 0.0
  %6616 = vmatpush.msra.mxu0 0.0
  %6617 = vmatpush.msra.mxu0 0.0
  %6618 = vmatpush.msra.mxu0 0.0
  %6619 = vmatpush.msra.mxu0 0.0
  %6620 = vmatpush.msra.mxu0 %v5954
  %6621 = vmatmul.f32.gmra.mxu0 %v6603
  %v6622 = vpop.f32.mrf.mxu0
  %v6623 = vadd.f32 0.0, %v6622
  %6624 = vdwg.mxu0
  %v6625 = vsub.f32 %v4451, %v5974
  %v6626 = vsub.f32 %v4474, %v5997
  %v6627 = vsub.f32 %v4497, %v6020
  %v6628 = vsub.f32 %v4520, %v6043
  %v6629 = vsub.f32 %v4543, %v6066
  %v6630 = vsub.f32 %v4566, %v6089
  %v6631 = vsub.f32 %v5028, %v6508
  %v6632 = vsub.f32 %v5051, %v6531
  %v6633 = vsub.f32 %v5074, %v6554
  %v6634 = vsub.f32 %v5097, %v6577
  %v6635 = vsub.f32 %v5120, %v6600
  %v6636 = vsub.f32 %v5143, %v6623
  %v6637 = vsub.f32 %v6625, %v6631
  %v6638 = vsub.f32 %v6626, %v6632
  %v6639 = vsub.f32 %v6627, %v6633
  %v6640 = vsub.f32 %v6628, %v6634
  %v6641 = vsub.f32 %v6629, %v6635
  %v6642 = vsub.f32 %v6630, %v6636
  %v6643 = vand.u32 2147483647, %v6637
  %v6644 = vand.u32 2147483647, %v6638
  %v6645 = vand.u32 2147483647, %v6639
  %v6646 = vand.u32 2147483647, %v6640
  %v6647 = vand.u32 2147483647, %v6641
  %v6648 = vand.u32 2147483647, %v6642
  %v6649 = vsel %vm4568, %v6643, 0.0
  %v6650 = vsel %vm4568, %v6644, 0.0
  %v6651 = vadd.f32 %v6649, %v6650
  %v6652 = vsel %vm4568, %v6645, 0.0
  %v6653 = vadd.f32 %v6651, %v6652
  %v6654 = vsel %vm4568, %v6646, 0.0
  %v6655 = vadd.f32 %v6653, %v6654
  %v6656 = vsel %vm4568, %v6647, 0.0
  %v6657 = vadd.f32 %v6655, %v6656
  %v6658 = vsel %vm4568, %v6648, 0.0
  %v6659 = vadd.f32 %v6657, %v6658
  %v6660 = vsel %vm4568, %v6659, 0.0
  %6661 = vadd.xlane.f32.xlu0 %v6660
  %v6662 = vpop.xlane.xlu0 %6661
  %v6663 = vrot.slane %v6662, 4
  %v6664 = vadd.f32 %v6662, %v6663
  %v6665 = vrot.slane %v6664, 2
  %v6666 = vadd.f32 %v6664, %v6665
  %v6667 = vrot.slane %v6666, 1
  %v6668 = vadd.f32 %v6666, %v6667
  %s6669 = vtos %v6668
  %v6670 = vstv %s6669
  %v6671 = vmul.f32 %v6670, 8.0
  %v6672 = vadd.f32 %v5541, %v6671
  %v6673 = vld [vmem:[%s18] sm:$0x3]
  %v6674 = vld [vmem:[%s19] sm:$0xf]
  %v6675 = vld [vmem:[%s20] sm:$0xf]
  %v6676 = vld [vmem:[%s21] sm:$0x3]
  %v6678 = vsel %vm5807, %v6673, 0
  %6680 = vmatpush.msra.mxu0 0.0
  %6681 = vmatpush.msra.mxu0 0.0
  %6682 = vmatpush.msra.mxu0 0.0
  %6683 = vmatpush.msra.mxu0 0.0
  %6684 = vmatpush.msra.mxu0 0.0
  %6685 = vmatpush.msra.mxu0 0.0
  %6686 = vmatpush.msra.mxu0 0.0
  %6687 = vmatpush.msra.mxu0 0.0
  %6688 = vmatpush.msra.mxu0 0.0
  %6689 = vmatpush.msra.mxu0 0.0
  %6690 = vmatpush.msra.mxu0 0.0
  %6691 = vmatpush.msra.mxu0 0.0
  %6692 = vmatpush.msra.mxu0 0.0
  %6693 = vmatpush.msra.mxu0 0.0
  %6694 = vmatpush.msra.mxu0 0.0
  %6695 = vmatpush.msra.mxu0 %v5813
  %6696 = vmatmul.f32.gmra.mxu0 %v6678
  %v6697 = vpop.f32.mrf.mxu0
  %v6698 = vadd.f32 0.0, %v6697
  %6699 = vdwg.mxu0
  %6700 = vmatpush.msra.mxu0 0.0
  %6701 = vmatpush.msra.mxu0 0.0
  %6702 = vmatpush.msra.mxu0 0.0
  %6703 = vmatpush.msra.mxu0 0.0
  %6704 = vmatpush.msra.mxu0 0.0
  %6705 = vmatpush.msra.mxu0 0.0
  %6706 = vmatpush.msra.mxu0 0.0
  %6707 = vmatpush.msra.mxu0 0.0
  %6708 = vmatpush.msra.mxu0 0.0
  %6709 = vmatpush.msra.mxu0 0.0
  %6710 = vmatpush.msra.mxu0 0.0
  %6711 = vmatpush.msra.mxu0 0.0
  %6712 = vmatpush.msra.mxu0 0.0
  %6713 = vmatpush.msra.mxu0 0.0
  %6714 = vmatpush.msra.mxu0 0.0
  %6715 = vmatpush.msra.mxu0 %v5836
  %6716 = vmatmul.f32.gmra.mxu0 %v6678
  %v6717 = vpop.f32.mrf.mxu0
  %v6718 = vadd.f32 0.0, %v6717
  %6719 = vdwg.mxu0
  %6720 = vmatpush.msra.mxu0 0.0
  %6721 = vmatpush.msra.mxu0 0.0
  %6722 = vmatpush.msra.mxu0 0.0
  %6723 = vmatpush.msra.mxu0 0.0
  %6724 = vmatpush.msra.mxu0 0.0
  %6725 = vmatpush.msra.mxu0 0.0
  %6726 = vmatpush.msra.mxu0 0.0
  %6727 = vmatpush.msra.mxu0 0.0
  %6728 = vmatpush.msra.mxu0 0.0
  %6729 = vmatpush.msra.mxu0 0.0
  %6730 = vmatpush.msra.mxu0 0.0
  %6731 = vmatpush.msra.mxu0 0.0
  %6732 = vmatpush.msra.mxu0 0.0
  %6733 = vmatpush.msra.mxu0 0.0
  %6734 = vmatpush.msra.mxu0 0.0
  %6735 = vmatpush.msra.mxu0 %v5859
  %6736 = vmatmul.f32.gmra.mxu0 %v6678
  %v6737 = vpop.f32.mrf.mxu0
  %v6738 = vadd.f32 0.0, %v6737
  %6739 = vdwg.mxu0
  %6740 = vmatpush.msra.mxu0 0.0
  %6741 = vmatpush.msra.mxu0 0.0
  %6742 = vmatpush.msra.mxu0 0.0
  %6743 = vmatpush.msra.mxu0 0.0
  %6744 = vmatpush.msra.mxu0 0.0
  %6745 = vmatpush.msra.mxu0 0.0
  %6746 = vmatpush.msra.mxu0 0.0
  %6747 = vmatpush.msra.mxu0 0.0
  %6748 = vmatpush.msra.mxu0 0.0
  %6749 = vmatpush.msra.mxu0 0.0
  %6750 = vmatpush.msra.mxu0 0.0
  %6751 = vmatpush.msra.mxu0 0.0
  %6752 = vmatpush.msra.mxu0 0.0
  %6753 = vmatpush.msra.mxu0 0.0
  %6754 = vmatpush.msra.mxu0 0.0
  %6755 = vmatpush.msra.mxu0 %v5882
  %6756 = vmatmul.f32.gmra.mxu0 %v6678
  %v6757 = vpop.f32.mrf.mxu0
  %v6758 = vadd.f32 0.0, %v6757
  %6759 = vdwg.mxu0
  %6760 = vmatpush.msra.mxu0 0.0
  %6761 = vmatpush.msra.mxu0 0.0
  %6762 = vmatpush.msra.mxu0 0.0
  %6763 = vmatpush.msra.mxu0 0.0
  %6764 = vmatpush.msra.mxu0 0.0
  %6765 = vmatpush.msra.mxu0 0.0
  %6766 = vmatpush.msra.mxu0 0.0
  %6767 = vmatpush.msra.mxu0 0.0
  %6768 = vmatpush.msra.mxu0 0.0
  %6769 = vmatpush.msra.mxu0 0.0
  %6770 = vmatpush.msra.mxu0 0.0
  %6771 = vmatpush.msra.mxu0 0.0
  %6772 = vmatpush.msra.mxu0 0.0
  %6773 = vmatpush.msra.mxu0 0.0
  %6774 = vmatpush.msra.mxu0 0.0
  %6775 = vmatpush.msra.mxu0 %v5905
  %6776 = vmatmul.f32.gmra.mxu0 %v6678
  %v6777 = vpop.f32.mrf.mxu0
  %v6778 = vadd.f32 0.0, %v6777
  %6779 = vdwg.mxu0
  %6780 = vmatpush.msra.mxu0 0.0
  %6781 = vmatpush.msra.mxu0 0.0
  %6782 = vmatpush.msra.mxu0 0.0
  %6783 = vmatpush.msra.mxu0 0.0
  %6784 = vmatpush.msra.mxu0 0.0
  %6785 = vmatpush.msra.mxu0 0.0
  %6786 = vmatpush.msra.mxu0 0.0
  %6787 = vmatpush.msra.mxu0 0.0
  %6788 = vmatpush.msra.mxu0 0.0
  %6789 = vmatpush.msra.mxu0 0.0
  %6790 = vmatpush.msra.mxu0 0.0
  %6791 = vmatpush.msra.mxu0 0.0
  %6792 = vmatpush.msra.mxu0 0.0
  %6793 = vmatpush.msra.mxu0 0.0
  %6794 = vmatpush.msra.mxu0 0.0
  %6795 = vmatpush.msra.mxu0 %v5928
  %6796 = vmatmul.f32.gmra.mxu0 %v6678
  %v6797 = vpop.f32.mrf.mxu0
  %v6798 = vadd.f32 0.0, %v6797
  %6799 = vdwg.mxu0
  %v6801 = vsel %vm5807, %v6698, 0
  %v6804 = vsel %vm5811, %v6674, 0
  %6806 = vmatpush.msra.mxu0 0.0
  %6807 = vmatpush.msra.mxu0 0.0
  %6808 = vmatpush.msra.mxu0 0.0
  %6809 = vmatpush.msra.mxu0 0.0
  %6810 = vmatpush.msra.mxu0 0.0
  %6811 = vmatpush.msra.mxu0 0.0
  %6812 = vmatpush.msra.mxu0 0.0
  %6813 = vmatpush.msra.mxu0 0.0
  %6814 = vmatpush.msra.mxu0 0.0
  %6815 = vmatpush.msra.mxu0 0.0
  %6816 = vmatpush.msra.mxu0 0.0
  %6817 = vmatpush.msra.mxu0 0.0
  %6818 = vmatpush.msra.mxu0 0.0
  %6819 = vmatpush.msra.mxu0 0.0
  %6820 = vmatpush.msra.mxu0 0.0
  %6821 = vmatpush.msra.mxu0 %v6804
  %6822 = vmatmul.f32.gmra.mxu0 %v6801
  %v6823 = vpop.f32.mrf.mxu0
  %v6824 = vadd.f32 0.0, %v6823
  %6825 = vdwg.mxu0
  %v6827 = vsel %vm5807, %v6718, 0
  %6829 = vmatpush.msra.mxu0 0.0
  %6830 = vmatpush.msra.mxu0 0.0
  %6831 = vmatpush.msra.mxu0 0.0
  %6832 = vmatpush.msra.mxu0 0.0
  %6833 = vmatpush.msra.mxu0 0.0
  %6834 = vmatpush.msra.mxu0 0.0
  %6835 = vmatpush.msra.mxu0 0.0
  %6836 = vmatpush.msra.mxu0 0.0
  %6837 = vmatpush.msra.mxu0 0.0
  %6838 = vmatpush.msra.mxu0 0.0
  %6839 = vmatpush.msra.mxu0 0.0
  %6840 = vmatpush.msra.mxu0 0.0
  %6841 = vmatpush.msra.mxu0 0.0
  %6842 = vmatpush.msra.mxu0 0.0
  %6843 = vmatpush.msra.mxu0 0.0
  %6844 = vmatpush.msra.mxu0 %v6804
  %6845 = vmatmul.f32.gmra.mxu0 %v6827
  %v6846 = vpop.f32.mrf.mxu0
  %v6847 = vadd.f32 0.0, %v6846
  %6848 = vdwg.mxu0
  %v6850 = vsel %vm5807, %v6738, 0
  %6852 = vmatpush.msra.mxu0 0.0
  %6853 = vmatpush.msra.mxu0 0.0
  %6854 = vmatpush.msra.mxu0 0.0
  %6855 = vmatpush.msra.mxu0 0.0
  %6856 = vmatpush.msra.mxu0 0.0
  %6857 = vmatpush.msra.mxu0 0.0
  %6858 = vmatpush.msra.mxu0 0.0
  %6859 = vmatpush.msra.mxu0 0.0
  %6860 = vmatpush.msra.mxu0 0.0
  %6861 = vmatpush.msra.mxu0 0.0
  %6862 = vmatpush.msra.mxu0 0.0
  %6863 = vmatpush.msra.mxu0 0.0
  %6864 = vmatpush.msra.mxu0 0.0
  %6865 = vmatpush.msra.mxu0 0.0
  %6866 = vmatpush.msra.mxu0 0.0
  %6867 = vmatpush.msra.mxu0 %v6804
  %6868 = vmatmul.f32.gmra.mxu0 %v6850
  %v6869 = vpop.f32.mrf.mxu0
  %v6870 = vadd.f32 0.0, %v6869
  %6871 = vdwg.mxu0
  %v6873 = vsel %vm5807, %v6758, 0
  %6875 = vmatpush.msra.mxu0 0.0
  %6876 = vmatpush.msra.mxu0 0.0
  %6877 = vmatpush.msra.mxu0 0.0
  %6878 = vmatpush.msra.mxu0 0.0
  %6879 = vmatpush.msra.mxu0 0.0
  %6880 = vmatpush.msra.mxu0 0.0
  %6881 = vmatpush.msra.mxu0 0.0
  %6882 = vmatpush.msra.mxu0 0.0
  %6883 = vmatpush.msra.mxu0 0.0
  %6884 = vmatpush.msra.mxu0 0.0
  %6885 = vmatpush.msra.mxu0 0.0
  %6886 = vmatpush.msra.mxu0 0.0
  %6887 = vmatpush.msra.mxu0 0.0
  %6888 = vmatpush.msra.mxu0 0.0
  %6889 = vmatpush.msra.mxu0 0.0
  %6890 = vmatpush.msra.mxu0 %v6804
  %6891 = vmatmul.f32.gmra.mxu0 %v6873
  %v6892 = vpop.f32.mrf.mxu0
  %v6893 = vadd.f32 0.0, %v6892
  %6894 = vdwg.mxu0
  %v6896 = vsel %vm5807, %v6778, 0
  %6898 = vmatpush.msra.mxu0 0.0
  %6899 = vmatpush.msra.mxu0 0.0
  %6900 = vmatpush.msra.mxu0 0.0
  %6901 = vmatpush.msra.mxu0 0.0
  %6902 = vmatpush.msra.mxu0 0.0
  %6903 = vmatpush.msra.mxu0 0.0
  %6904 = vmatpush.msra.mxu0 0.0
  %6905 = vmatpush.msra.mxu0 0.0
  %6906 = vmatpush.msra.mxu0 0.0
  %6907 = vmatpush.msra.mxu0 0.0
  %6908 = vmatpush.msra.mxu0 0.0
  %6909 = vmatpush.msra.mxu0 0.0
  %6910 = vmatpush.msra.mxu0 0.0
  %6911 = vmatpush.msra.mxu0 0.0
  %6912 = vmatpush.msra.mxu0 0.0
  %6913 = vmatpush.msra.mxu0 %v6804
  %6914 = vmatmul.f32.gmra.mxu0 %v6896
  %v6915 = vpop.f32.mrf.mxu0
  %v6916 = vadd.f32 0.0, %v6915
  %6917 = vdwg.mxu0
  %v6919 = vsel %vm5807, %v6798, 0
  %6921 = vmatpush.msra.mxu0 0.0
  %6922 = vmatpush.msra.mxu0 0.0
  %6923 = vmatpush.msra.mxu0 0.0
  %6924 = vmatpush.msra.mxu0 0.0
  %6925 = vmatpush.msra.mxu0 0.0
  %6926 = vmatpush.msra.mxu0 0.0
  %6927 = vmatpush.msra.mxu0 0.0
  %6928 = vmatpush.msra.mxu0 0.0
  %6929 = vmatpush.msra.mxu0 0.0
  %6930 = vmatpush.msra.mxu0 0.0
  %6931 = vmatpush.msra.mxu0 0.0
  %6932 = vmatpush.msra.mxu0 0.0
  %6933 = vmatpush.msra.mxu0 0.0
  %6934 = vmatpush.msra.mxu0 0.0
  %6935 = vmatpush.msra.mxu0 0.0
  %6936 = vmatpush.msra.mxu0 %v6804
  %6937 = vmatmul.f32.gmra.mxu0 %v6919
  %v6938 = vpop.f32.mrf.mxu0
  %v6939 = vadd.f32 0.0, %v6938
  %6940 = vdwg.mxu0
  %vm6941 = vcmask 15360
  %v6943 = vsel %vm6941, %v6675, 0
  %vm6945 = vcmask 1041408
  %v6947 = vsel %vm6945, %v6824, 0
  %6949 = vmatpush.msra.mxu0 0.0
  %6950 = vmatpush.msra.mxu0 0.0
  %6951 = vmatpush.msra.mxu0 0.0
  %6952 = vmatpush.msra.mxu0 0.0
  %6953 = vmatpush.msra.mxu0 0.0
  %6954 = vmatpush.msra.mxu0 0.0
  %6955 = vmatpush.msra.mxu0 0.0
  %6956 = vmatpush.msra.mxu0 0.0
  %6957 = vmatpush.msra.mxu0 0.0
  %6958 = vmatpush.msra.mxu0 0.0
  %6959 = vmatpush.msra.mxu0 0.0
  %6960 = vmatpush.msra.mxu0 0.0
  %6961 = vmatpush.msra.mxu0 0.0
  %6962 = vmatpush.msra.mxu0 0.0
  %6963 = vmatpush.msra.mxu0 0.0
  %6964 = vmatpush.msra.mxu0 %v6947
  %6965 = vmatmul.f32.gmra.mxu0 %v6943
  %v6966 = vpop.f32.mrf.mxu0
  %v6967 = vadd.f32 0.0, %v6966
  %6968 = vdwg.mxu0
  %v6970 = vsel %vm6945, %v6847, 0
  %6972 = vmatpush.msra.mxu0 0.0
  %6973 = vmatpush.msra.mxu0 0.0
  %6974 = vmatpush.msra.mxu0 0.0
  %6975 = vmatpush.msra.mxu0 0.0
  %6976 = vmatpush.msra.mxu0 0.0
  %6977 = vmatpush.msra.mxu0 0.0
  %6978 = vmatpush.msra.mxu0 0.0
  %6979 = vmatpush.msra.mxu0 0.0
  %6980 = vmatpush.msra.mxu0 0.0
  %6981 = vmatpush.msra.mxu0 0.0
  %6982 = vmatpush.msra.mxu0 0.0
  %6983 = vmatpush.msra.mxu0 0.0
  %6984 = vmatpush.msra.mxu0 0.0
  %6985 = vmatpush.msra.mxu0 0.0
  %6986 = vmatpush.msra.mxu0 0.0
  %6987 = vmatpush.msra.mxu0 %v6970
  %6988 = vmatmul.f32.gmra.mxu0 %v6943
  %v6989 = vpop.f32.mrf.mxu0
  %v6990 = vadd.f32 0.0, %v6989
  %6991 = vdwg.mxu0
  %v6993 = vsel %vm6945, %v6870, 0
  %6995 = vmatpush.msra.mxu0 0.0
  %6996 = vmatpush.msra.mxu0 0.0
  %6997 = vmatpush.msra.mxu0 0.0
  %6998 = vmatpush.msra.mxu0 0.0
  %6999 = vmatpush.msra.mxu0 0.0
  %7000 = vmatpush.msra.mxu0 0.0
  %7001 = vmatpush.msra.mxu0 0.0
  %7002 = vmatpush.msra.mxu0 0.0
  %7003 = vmatpush.msra.mxu0 0.0
  %7004 = vmatpush.msra.mxu0 0.0
  %7005 = vmatpush.msra.mxu0 0.0
  %7006 = vmatpush.msra.mxu0 0.0
  %7007 = vmatpush.msra.mxu0 0.0
  %7008 = vmatpush.msra.mxu0 0.0
  %7009 = vmatpush.msra.mxu0 0.0
  %7010 = vmatpush.msra.mxu0 %v6993
  %7011 = vmatmul.f32.gmra.mxu0 %v6943
  %v7012 = vpop.f32.mrf.mxu0
  %v7013 = vadd.f32 0.0, %v7012
  %7014 = vdwg.mxu0
  %v7016 = vsel %vm6945, %v6893, 0
  %7018 = vmatpush.msra.mxu0 0.0
  %7019 = vmatpush.msra.mxu0 0.0
  %7020 = vmatpush.msra.mxu0 0.0
  %7021 = vmatpush.msra.mxu0 0.0
  %7022 = vmatpush.msra.mxu0 0.0
  %7023 = vmatpush.msra.mxu0 0.0
  %7024 = vmatpush.msra.mxu0 0.0
  %7025 = vmatpush.msra.mxu0 0.0
  %7026 = vmatpush.msra.mxu0 0.0
  %7027 = vmatpush.msra.mxu0 0.0
  %7028 = vmatpush.msra.mxu0 0.0
  %7029 = vmatpush.msra.mxu0 0.0
  %7030 = vmatpush.msra.mxu0 0.0
  %7031 = vmatpush.msra.mxu0 0.0
  %7032 = vmatpush.msra.mxu0 0.0
  %7033 = vmatpush.msra.mxu0 %v7016
  %7034 = vmatmul.f32.gmra.mxu0 %v6943
  %v7035 = vpop.f32.mrf.mxu0
  %v7036 = vadd.f32 0.0, %v7035
  %7037 = vdwg.mxu0
  %v7039 = vsel %vm6945, %v6916, 0
  %7041 = vmatpush.msra.mxu0 0.0
  %7042 = vmatpush.msra.mxu0 0.0
  %7043 = vmatpush.msra.mxu0 0.0
  %7044 = vmatpush.msra.mxu0 0.0
  %7045 = vmatpush.msra.mxu0 0.0
  %7046 = vmatpush.msra.mxu0 0.0
  %7047 = vmatpush.msra.mxu0 0.0
  %7048 = vmatpush.msra.mxu0 0.0
  %7049 = vmatpush.msra.mxu0 0.0
  %7050 = vmatpush.msra.mxu0 0.0
  %7051 = vmatpush.msra.mxu0 0.0
  %7052 = vmatpush.msra.mxu0 0.0
  %7053 = vmatpush.msra.mxu0 0.0
  %7054 = vmatpush.msra.mxu0 0.0
  %7055 = vmatpush.msra.mxu0 0.0
  %7056 = vmatpush.msra.mxu0 %v7039
  %7057 = vmatmul.f32.gmra.mxu0 %v6943
  %v7058 = vpop.f32.mrf.mxu0
  %v7059 = vadd.f32 0.0, %v7058
  %7060 = vdwg.mxu0
  %v7062 = vsel %vm6945, %v6939, 0
  %7064 = vmatpush.msra.mxu0 0.0
  %7065 = vmatpush.msra.mxu0 0.0
  %7066 = vmatpush.msra.mxu0 0.0
  %7067 = vmatpush.msra.mxu0 0.0
  %7068 = vmatpush.msra.mxu0 0.0
  %7069 = vmatpush.msra.mxu0 0.0
  %7070 = vmatpush.msra.mxu0 0.0
  %7071 = vmatpush.msra.mxu0 0.0
  %7072 = vmatpush.msra.mxu0 0.0
  %7073 = vmatpush.msra.mxu0 0.0
  %7074 = vmatpush.msra.mxu0 0.0
  %7075 = vmatpush.msra.mxu0 0.0
  %7076 = vmatpush.msra.mxu0 0.0
  %7077 = vmatpush.msra.mxu0 0.0
  %7078 = vmatpush.msra.mxu0 0.0
  %7079 = vmatpush.msra.mxu0 %v7062
  %7080 = vmatmul.f32.gmra.mxu0 %v6943
  %v7081 = vpop.f32.mrf.mxu0
  %v7082 = vadd.f32 0.0, %v7081
  %7083 = vdwg.mxu0
  %v7085 = vsel %vm6941, %v6967, 0
  %v7088 = vsel %vm6945, %v6676, 0
  %7090 = vmatpush.msra.mxu0 0.0
  %7091 = vmatpush.msra.mxu0 0.0
  %7092 = vmatpush.msra.mxu0 0.0
  %7093 = vmatpush.msra.mxu0 0.0
  %7094 = vmatpush.msra.mxu0 0.0
  %7095 = vmatpush.msra.mxu0 0.0
  %7096 = vmatpush.msra.mxu0 0.0
  %7097 = vmatpush.msra.mxu0 0.0
  %7098 = vmatpush.msra.mxu0 0.0
  %7099 = vmatpush.msra.mxu0 0.0
  %7100 = vmatpush.msra.mxu0 0.0
  %7101 = vmatpush.msra.mxu0 0.0
  %7102 = vmatpush.msra.mxu0 0.0
  %7103 = vmatpush.msra.mxu0 0.0
  %7104 = vmatpush.msra.mxu0 0.0
  %7105 = vmatpush.msra.mxu0 %v7088
  %7106 = vmatmul.f32.gmra.mxu0 %v7085
  %v7107 = vpop.f32.mrf.mxu0
  %v7108 = vadd.f32 0.0, %v7107
  %7109 = vdwg.mxu0
  %v7111 = vsel %vm6941, %v6990, 0
  %7113 = vmatpush.msra.mxu0 0.0
  %7114 = vmatpush.msra.mxu0 0.0
  %7115 = vmatpush.msra.mxu0 0.0
  %7116 = vmatpush.msra.mxu0 0.0
  %7117 = vmatpush.msra.mxu0 0.0
  %7118 = vmatpush.msra.mxu0 0.0
  %7119 = vmatpush.msra.mxu0 0.0
  %7120 = vmatpush.msra.mxu0 0.0
  %7121 = vmatpush.msra.mxu0 0.0
  %7122 = vmatpush.msra.mxu0 0.0
  %7123 = vmatpush.msra.mxu0 0.0
  %7124 = vmatpush.msra.mxu0 0.0
  %7125 = vmatpush.msra.mxu0 0.0
  %7126 = vmatpush.msra.mxu0 0.0
  %7127 = vmatpush.msra.mxu0 0.0
  %7128 = vmatpush.msra.mxu0 %v7088
  %7129 = vmatmul.f32.gmra.mxu0 %v7111
  %v7130 = vpop.f32.mrf.mxu0
  %v7131 = vadd.f32 0.0, %v7130
  %7132 = vdwg.mxu0
  %v7134 = vsel %vm6941, %v7013, 0
  %7136 = vmatpush.msra.mxu0 0.0
  %7137 = vmatpush.msra.mxu0 0.0
  %7138 = vmatpush.msra.mxu0 0.0
  %7139 = vmatpush.msra.mxu0 0.0
  %7140 = vmatpush.msra.mxu0 0.0
  %7141 = vmatpush.msra.mxu0 0.0
  %7142 = vmatpush.msra.mxu0 0.0
  %7143 = vmatpush.msra.mxu0 0.0
  %7144 = vmatpush.msra.mxu0 0.0
  %7145 = vmatpush.msra.mxu0 0.0
  %7146 = vmatpush.msra.mxu0 0.0
  %7147 = vmatpush.msra.mxu0 0.0
  %7148 = vmatpush.msra.mxu0 0.0
  %7149 = vmatpush.msra.mxu0 0.0
  %7150 = vmatpush.msra.mxu0 0.0
  %7151 = vmatpush.msra.mxu0 %v7088
  %7152 = vmatmul.f32.gmra.mxu0 %v7134
  %v7153 = vpop.f32.mrf.mxu0
  %v7154 = vadd.f32 0.0, %v7153
  %7155 = vdwg.mxu0
  %v7157 = vsel %vm6941, %v7036, 0
  %7159 = vmatpush.msra.mxu0 0.0
  %7160 = vmatpush.msra.mxu0 0.0
  %7161 = vmatpush.msra.mxu0 0.0
  %7162 = vmatpush.msra.mxu0 0.0
  %7163 = vmatpush.msra.mxu0 0.0
  %7164 = vmatpush.msra.mxu0 0.0
  %7165 = vmatpush.msra.mxu0 0.0
  %7166 = vmatpush.msra.mxu0 0.0
  %7167 = vmatpush.msra.mxu0 0.0
  %7168 = vmatpush.msra.mxu0 0.0
  %7169 = vmatpush.msra.mxu0 0.0
  %7170 = vmatpush.msra.mxu0 0.0
  %7171 = vmatpush.msra.mxu0 0.0
  %7172 = vmatpush.msra.mxu0 0.0
  %7173 = vmatpush.msra.mxu0 0.0
  %7174 = vmatpush.msra.mxu0 %v7088
  %7175 = vmatmul.f32.gmra.mxu0 %v7157
  %v7176 = vpop.f32.mrf.mxu0
  %v7177 = vadd.f32 0.0, %v7176
  %7178 = vdwg.mxu0
  %v7180 = vsel %vm6941, %v7059, 0
  %7182 = vmatpush.msra.mxu0 0.0
  %7183 = vmatpush.msra.mxu0 0.0
  %7184 = vmatpush.msra.mxu0 0.0
  %7185 = vmatpush.msra.mxu0 0.0
  %7186 = vmatpush.msra.mxu0 0.0
  %7187 = vmatpush.msra.mxu0 0.0
  %7188 = vmatpush.msra.mxu0 0.0
  %7189 = vmatpush.msra.mxu0 0.0
  %7190 = vmatpush.msra.mxu0 0.0
  %7191 = vmatpush.msra.mxu0 0.0
  %7192 = vmatpush.msra.mxu0 0.0
  %7193 = vmatpush.msra.mxu0 0.0
  %7194 = vmatpush.msra.mxu0 0.0
  %7195 = vmatpush.msra.mxu0 0.0
  %7196 = vmatpush.msra.mxu0 0.0
  %7197 = vmatpush.msra.mxu0 %v7088
  %7198 = vmatmul.f32.gmra.mxu0 %v7180
  %v7199 = vpop.f32.mrf.mxu0
  %v7200 = vadd.f32 0.0, %v7199
  %7201 = vdwg.mxu0
  %v7203 = vsel %vm6941, %v7082, 0
  %7205 = vmatpush.msra.mxu0 0.0
  %7206 = vmatpush.msra.mxu0 0.0
  %7207 = vmatpush.msra.mxu0 0.0
  %7208 = vmatpush.msra.mxu0 0.0
  %7209 = vmatpush.msra.mxu0 0.0
  %7210 = vmatpush.msra.mxu0 0.0
  %7211 = vmatpush.msra.mxu0 0.0
  %7212 = vmatpush.msra.mxu0 0.0
  %7213 = vmatpush.msra.mxu0 0.0
  %7214 = vmatpush.msra.mxu0 0.0
  %7215 = vmatpush.msra.mxu0 0.0
  %7216 = vmatpush.msra.mxu0 0.0
  %7217 = vmatpush.msra.mxu0 0.0
  %7218 = vmatpush.msra.mxu0 0.0
  %7219 = vmatpush.msra.mxu0 0.0
  %7220 = vmatpush.msra.mxu0 %v7088
  %7221 = vmatmul.f32.gmra.mxu0 %v7203
  %v7222 = vpop.f32.mrf.mxu0
  %v7223 = vadd.f32 0.0, %v7222
  %7224 = vdwg.mxu0
  %7225 = vmatpush.msra.mxu0 0.0
  %7226 = vmatpush.msra.mxu0 0.0
  %7227 = vmatpush.msra.mxu0 0.0
  %7228 = vmatpush.msra.mxu0 0.0
  %7229 = vmatpush.msra.mxu0 0.0
  %7230 = vmatpush.msra.mxu0 0.0
  %7231 = vmatpush.msra.mxu0 0.0
  %7232 = vmatpush.msra.mxu0 0.0
  %7233 = vmatpush.msra.mxu0 0.0
  %7234 = vmatpush.msra.mxu0 0.0
  %7235 = vmatpush.msra.mxu0 0.0
  %7236 = vmatpush.msra.mxu0 0.0
  %7237 = vmatpush.msra.mxu0 0.0
  %7238 = vmatpush.msra.mxu0 0.0
  %7239 = vmatpush.msra.mxu0 0.0
  %7240 = vmatpush.msra.mxu0 %v6350
  %7241 = vmatmul.f32.gmra.mxu0 %v6678
  %v7242 = vpop.f32.mrf.mxu0
  %v7243 = vadd.f32 0.0, %v7242
  %7244 = vdwg.mxu0
  %7245 = vmatpush.msra.mxu0 0.0
  %7246 = vmatpush.msra.mxu0 0.0
  %7247 = vmatpush.msra.mxu0 0.0
  %7248 = vmatpush.msra.mxu0 0.0
  %7249 = vmatpush.msra.mxu0 0.0
  %7250 = vmatpush.msra.mxu0 0.0
  %7251 = vmatpush.msra.mxu0 0.0
  %7252 = vmatpush.msra.mxu0 0.0
  %7253 = vmatpush.msra.mxu0 0.0
  %7254 = vmatpush.msra.mxu0 0.0
  %7255 = vmatpush.msra.mxu0 0.0
  %7256 = vmatpush.msra.mxu0 0.0
  %7257 = vmatpush.msra.mxu0 0.0
  %7258 = vmatpush.msra.mxu0 0.0
  %7259 = vmatpush.msra.mxu0 0.0
  %7260 = vmatpush.msra.mxu0 %v6373
  %7261 = vmatmul.f32.gmra.mxu0 %v6678
  %v7262 = vpop.f32.mrf.mxu0
  %v7263 = vadd.f32 0.0, %v7262
  %7264 = vdwg.mxu0
  %7265 = vmatpush.msra.mxu0 0.0
  %7266 = vmatpush.msra.mxu0 0.0
  %7267 = vmatpush.msra.mxu0 0.0
  %7268 = vmatpush.msra.mxu0 0.0
  %7269 = vmatpush.msra.mxu0 0.0
  %7270 = vmatpush.msra.mxu0 0.0
  %7271 = vmatpush.msra.mxu0 0.0
  %7272 = vmatpush.msra.mxu0 0.0
  %7273 = vmatpush.msra.mxu0 0.0
  %7274 = vmatpush.msra.mxu0 0.0
  %7275 = vmatpush.msra.mxu0 0.0
  %7276 = vmatpush.msra.mxu0 0.0
  %7277 = vmatpush.msra.mxu0 0.0
  %7278 = vmatpush.msra.mxu0 0.0
  %7279 = vmatpush.msra.mxu0 0.0
  %7280 = vmatpush.msra.mxu0 %v6396
  %7281 = vmatmul.f32.gmra.mxu0 %v6678
  %v7282 = vpop.f32.mrf.mxu0
  %v7283 = vadd.f32 0.0, %v7282
  %7284 = vdwg.mxu0
  %7285 = vmatpush.msra.mxu0 0.0
  %7286 = vmatpush.msra.mxu0 0.0
  %7287 = vmatpush.msra.mxu0 0.0
  %7288 = vmatpush.msra.mxu0 0.0
  %7289 = vmatpush.msra.mxu0 0.0
  %7290 = vmatpush.msra.mxu0 0.0
  %7291 = vmatpush.msra.mxu0 0.0
  %7292 = vmatpush.msra.mxu0 0.0
  %7293 = vmatpush.msra.mxu0 0.0
  %7294 = vmatpush.msra.mxu0 0.0
  %7295 = vmatpush.msra.mxu0 0.0
  %7296 = vmatpush.msra.mxu0 0.0
  %7297 = vmatpush.msra.mxu0 0.0
  %7298 = vmatpush.msra.mxu0 0.0
  %7299 = vmatpush.msra.mxu0 0.0
  %7300 = vmatpush.msra.mxu0 %v6419
  %7301 = vmatmul.f32.gmra.mxu0 %v6678
  %v7302 = vpop.f32.mrf.mxu0
  %v7303 = vadd.f32 0.0, %v7302
  %7304 = vdwg.mxu0
  %7305 = vmatpush.msra.mxu0 0.0
  %7306 = vmatpush.msra.mxu0 0.0
  %7307 = vmatpush.msra.mxu0 0.0
  %7308 = vmatpush.msra.mxu0 0.0
  %7309 = vmatpush.msra.mxu0 0.0
  %7310 = vmatpush.msra.mxu0 0.0
  %7311 = vmatpush.msra.mxu0 0.0
  %7312 = vmatpush.msra.mxu0 0.0
  %7313 = vmatpush.msra.mxu0 0.0
  %7314 = vmatpush.msra.mxu0 0.0
  %7315 = vmatpush.msra.mxu0 0.0
  %7316 = vmatpush.msra.mxu0 0.0
  %7317 = vmatpush.msra.mxu0 0.0
  %7318 = vmatpush.msra.mxu0 0.0
  %7319 = vmatpush.msra.mxu0 0.0
  %7320 = vmatpush.msra.mxu0 %v6442
  %7321 = vmatmul.f32.gmra.mxu0 %v6678
  %v7322 = vpop.f32.mrf.mxu0
  %v7323 = vadd.f32 0.0, %v7322
  %7324 = vdwg.mxu0
  %7325 = vmatpush.msra.mxu0 0.0
  %7326 = vmatpush.msra.mxu0 0.0
  %7327 = vmatpush.msra.mxu0 0.0
  %7328 = vmatpush.msra.mxu0 0.0
  %7329 = vmatpush.msra.mxu0 0.0
  %7330 = vmatpush.msra.mxu0 0.0
  %7331 = vmatpush.msra.mxu0 0.0
  %7332 = vmatpush.msra.mxu0 0.0
  %7333 = vmatpush.msra.mxu0 0.0
  %7334 = vmatpush.msra.mxu0 0.0
  %7335 = vmatpush.msra.mxu0 0.0
  %7336 = vmatpush.msra.mxu0 0.0
  %7337 = vmatpush.msra.mxu0 0.0
  %7338 = vmatpush.msra.mxu0 0.0
  %7339 = vmatpush.msra.mxu0 0.0
  %7340 = vmatpush.msra.mxu0 %v6465
  %7341 = vmatmul.f32.gmra.mxu0 %v6678
  %v7342 = vpop.f32.mrf.mxu0
  %v7343 = vadd.f32 0.0, %v7342
  %7344 = vdwg.mxu0
  %v7346 = vsel %vm5807, %v7243, 0
  %7348 = vmatpush.msra.mxu0 0.0
  %7349 = vmatpush.msra.mxu0 0.0
  %7350 = vmatpush.msra.mxu0 0.0
  %7351 = vmatpush.msra.mxu0 0.0
  %7352 = vmatpush.msra.mxu0 0.0
  %7353 = vmatpush.msra.mxu0 0.0
  %7354 = vmatpush.msra.mxu0 0.0
  %7355 = vmatpush.msra.mxu0 0.0
  %7356 = vmatpush.msra.mxu0 0.0
  %7357 = vmatpush.msra.mxu0 0.0
  %7358 = vmatpush.msra.mxu0 0.0
  %7359 = vmatpush.msra.mxu0 0.0
  %7360 = vmatpush.msra.mxu0 0.0
  %7361 = vmatpush.msra.mxu0 0.0
  %7362 = vmatpush.msra.mxu0 0.0
  %7363 = vmatpush.msra.mxu0 %v6804
  %7364 = vmatmul.f32.gmra.mxu0 %v7346
  %v7365 = vpop.f32.mrf.mxu0
  %v7366 = vadd.f32 0.0, %v7365
  %7367 = vdwg.mxu0
  %v7369 = vsel %vm5807, %v7263, 0
  %7371 = vmatpush.msra.mxu0 0.0
  %7372 = vmatpush.msra.mxu0 0.0
  %7373 = vmatpush.msra.mxu0 0.0
  %7374 = vmatpush.msra.mxu0 0.0
  %7375 = vmatpush.msra.mxu0 0.0
  %7376 = vmatpush.msra.mxu0 0.0
  %7377 = vmatpush.msra.mxu0 0.0
  %7378 = vmatpush.msra.mxu0 0.0
  %7379 = vmatpush.msra.mxu0 0.0
  %7380 = vmatpush.msra.mxu0 0.0
  %7381 = vmatpush.msra.mxu0 0.0
  %7382 = vmatpush.msra.mxu0 0.0
  %7383 = vmatpush.msra.mxu0 0.0
  %7384 = vmatpush.msra.mxu0 0.0
  %7385 = vmatpush.msra.mxu0 0.0
  %7386 = vmatpush.msra.mxu0 %v6804
  %7387 = vmatmul.f32.gmra.mxu0 %v7369
  %v7388 = vpop.f32.mrf.mxu0
  %v7389 = vadd.f32 0.0, %v7388
  %7390 = vdwg.mxu0
  %v7392 = vsel %vm5807, %v7283, 0
  %7394 = vmatpush.msra.mxu0 0.0
  %7395 = vmatpush.msra.mxu0 0.0
  %7396 = vmatpush.msra.mxu0 0.0
  %7397 = vmatpush.msra.mxu0 0.0
  %7398 = vmatpush.msra.mxu0 0.0
  %7399 = vmatpush.msra.mxu0 0.0
  %7400 = vmatpush.msra.mxu0 0.0
  %7401 = vmatpush.msra.mxu0 0.0
  %7402 = vmatpush.msra.mxu0 0.0
  %7403 = vmatpush.msra.mxu0 0.0
  %7404 = vmatpush.msra.mxu0 0.0
  %7405 = vmatpush.msra.mxu0 0.0
  %7406 = vmatpush.msra.mxu0 0.0
  %7407 = vmatpush.msra.mxu0 0.0
  %7408 = vmatpush.msra.mxu0 0.0
  %7409 = vmatpush.msra.mxu0 %v6804
  %7410 = vmatmul.f32.gmra.mxu0 %v7392
  %v7411 = vpop.f32.mrf.mxu0
  %v7412 = vadd.f32 0.0, %v7411
  %7413 = vdwg.mxu0
  %v7415 = vsel %vm5807, %v7303, 0
  %7417 = vmatpush.msra.mxu0 0.0
  %7418 = vmatpush.msra.mxu0 0.0
  %7419 = vmatpush.msra.mxu0 0.0
  %7420 = vmatpush.msra.mxu0 0.0
  %7421 = vmatpush.msra.mxu0 0.0
  %7422 = vmatpush.msra.mxu0 0.0
  %7423 = vmatpush.msra.mxu0 0.0
  %7424 = vmatpush.msra.mxu0 0.0
  %7425 = vmatpush.msra.mxu0 0.0
  %7426 = vmatpush.msra.mxu0 0.0
  %7427 = vmatpush.msra.mxu0 0.0
  %7428 = vmatpush.msra.mxu0 0.0
  %7429 = vmatpush.msra.mxu0 0.0
  %7430 = vmatpush.msra.mxu0 0.0
  %7431 = vmatpush.msra.mxu0 0.0
  %7432 = vmatpush.msra.mxu0 %v6804
  %7433 = vmatmul.f32.gmra.mxu0 %v7415
  %v7434 = vpop.f32.mrf.mxu0
  %v7435 = vadd.f32 0.0, %v7434
  %7436 = vdwg.mxu0
  %v7438 = vsel %vm5807, %v7323, 0
  %7440 = vmatpush.msra.mxu0 0.0
  %7441 = vmatpush.msra.mxu0 0.0
  %7442 = vmatpush.msra.mxu0 0.0
  %7443 = vmatpush.msra.mxu0 0.0
  %7444 = vmatpush.msra.mxu0 0.0
  %7445 = vmatpush.msra.mxu0 0.0
  %7446 = vmatpush.msra.mxu0 0.0
  %7447 = vmatpush.msra.mxu0 0.0
  %7448 = vmatpush.msra.mxu0 0.0
  %7449 = vmatpush.msra.mxu0 0.0
  %7450 = vmatpush.msra.mxu0 0.0
  %7451 = vmatpush.msra.mxu0 0.0
  %7452 = vmatpush.msra.mxu0 0.0
  %7453 = vmatpush.msra.mxu0 0.0
  %7454 = vmatpush.msra.mxu0 0.0
  %7455 = vmatpush.msra.mxu0 %v6804
  %7456 = vmatmul.f32.gmra.mxu0 %v7438
  %v7457 = vpop.f32.mrf.mxu0
  %v7458 = vadd.f32 0.0, %v7457
  %7459 = vdwg.mxu0
  %v7461 = vsel %vm5807, %v7343, 0
  %7463 = vmatpush.msra.mxu0 0.0
  %7464 = vmatpush.msra.mxu0 0.0
  %7465 = vmatpush.msra.mxu0 0.0
  %7466 = vmatpush.msra.mxu0 0.0
  %7467 = vmatpush.msra.mxu0 0.0
  %7468 = vmatpush.msra.mxu0 0.0
  %7469 = vmatpush.msra.mxu0 0.0
  %7470 = vmatpush.msra.mxu0 0.0
  %7471 = vmatpush.msra.mxu0 0.0
  %7472 = vmatpush.msra.mxu0 0.0
  %7473 = vmatpush.msra.mxu0 0.0
  %7474 = vmatpush.msra.mxu0 0.0
  %7475 = vmatpush.msra.mxu0 0.0
  %7476 = vmatpush.msra.mxu0 0.0
  %7477 = vmatpush.msra.mxu0 0.0
  %7478 = vmatpush.msra.mxu0 %v6804
  %7479 = vmatmul.f32.gmra.mxu0 %v7461
  %v7480 = vpop.f32.mrf.mxu0
  %v7481 = vadd.f32 0.0, %v7480
  %7482 = vdwg.mxu0
  %v7484 = vsel %vm6945, %v7366, 0
  %7486 = vmatpush.msra.mxu0 0.0
  %7487 = vmatpush.msra.mxu0 0.0
  %7488 = vmatpush.msra.mxu0 0.0
  %7489 = vmatpush.msra.mxu0 0.0
  %7490 = vmatpush.msra.mxu0 0.0
  %7491 = vmatpush.msra.mxu0 0.0
  %7492 = vmatpush.msra.mxu0 0.0
  %7493 = vmatpush.msra.mxu0 0.0
  %7494 = vmatpush.msra.mxu0 0.0
  %7495 = vmatpush.msra.mxu0 0.0
  %7496 = vmatpush.msra.mxu0 0.0
  %7497 = vmatpush.msra.mxu0 0.0
  %7498 = vmatpush.msra.mxu0 0.0
  %7499 = vmatpush.msra.mxu0 0.0
  %7500 = vmatpush.msra.mxu0 0.0
  %7501 = vmatpush.msra.mxu0 %v7484
  %7502 = vmatmul.f32.gmra.mxu0 %v6943
  %v7503 = vpop.f32.mrf.mxu0
  %v7504 = vadd.f32 0.0, %v7503
  %7505 = vdwg.mxu0
  %v7507 = vsel %vm6945, %v7389, 0
  %7509 = vmatpush.msra.mxu0 0.0
  %7510 = vmatpush.msra.mxu0 0.0
  %7511 = vmatpush.msra.mxu0 0.0
  %7512 = vmatpush.msra.mxu0 0.0
  %7513 = vmatpush.msra.mxu0 0.0
  %7514 = vmatpush.msra.mxu0 0.0
  %7515 = vmatpush.msra.mxu0 0.0
  %7516 = vmatpush.msra.mxu0 0.0
  %7517 = vmatpush.msra.mxu0 0.0
  %7518 = vmatpush.msra.mxu0 0.0
  %7519 = vmatpush.msra.mxu0 0.0
  %7520 = vmatpush.msra.mxu0 0.0
  %7521 = vmatpush.msra.mxu0 0.0
  %7522 = vmatpush.msra.mxu0 0.0
  %7523 = vmatpush.msra.mxu0 0.0
  %7524 = vmatpush.msra.mxu0 %v7507
  %7525 = vmatmul.f32.gmra.mxu0 %v6943
  %v7526 = vpop.f32.mrf.mxu0
  %v7527 = vadd.f32 0.0, %v7526
  %7528 = vdwg.mxu0
  %v7530 = vsel %vm6945, %v7412, 0
  %7532 = vmatpush.msra.mxu0 0.0
  %7533 = vmatpush.msra.mxu0 0.0
  %7534 = vmatpush.msra.mxu0 0.0
  %7535 = vmatpush.msra.mxu0 0.0
  %7536 = vmatpush.msra.mxu0 0.0
  %7537 = vmatpush.msra.mxu0 0.0
  %7538 = vmatpush.msra.mxu0 0.0
  %7539 = vmatpush.msra.mxu0 0.0
  %7540 = vmatpush.msra.mxu0 0.0
  %7541 = vmatpush.msra.mxu0 0.0
  %7542 = vmatpush.msra.mxu0 0.0
  %7543 = vmatpush.msra.mxu0 0.0
  %7544 = vmatpush.msra.mxu0 0.0
  %7545 = vmatpush.msra.mxu0 0.0
  %7546 = vmatpush.msra.mxu0 0.0
  %7547 = vmatpush.msra.mxu0 %v7530
  %7548 = vmatmul.f32.gmra.mxu0 %v6943
  %v7549 = vpop.f32.mrf.mxu0
  %v7550 = vadd.f32 0.0, %v7549
  %7551 = vdwg.mxu0
  %v7553 = vsel %vm6945, %v7435, 0
  %7555 = vmatpush.msra.mxu0 0.0
  %7556 = vmatpush.msra.mxu0 0.0
  %7557 = vmatpush.msra.mxu0 0.0
  %7558 = vmatpush.msra.mxu0 0.0
  %7559 = vmatpush.msra.mxu0 0.0
  %7560 = vmatpush.msra.mxu0 0.0
  %7561 = vmatpush.msra.mxu0 0.0
  %7562 = vmatpush.msra.mxu0 0.0
  %7563 = vmatpush.msra.mxu0 0.0
  %7564 = vmatpush.msra.mxu0 0.0
  %7565 = vmatpush.msra.mxu0 0.0
  %7566 = vmatpush.msra.mxu0 0.0
  %7567 = vmatpush.msra.mxu0 0.0
  %7568 = vmatpush.msra.mxu0 0.0
  %7569 = vmatpush.msra.mxu0 0.0
  %7570 = vmatpush.msra.mxu0 %v7553
  %7571 = vmatmul.f32.gmra.mxu0 %v6943
  %v7572 = vpop.f32.mrf.mxu0
  %v7573 = vadd.f32 0.0, %v7572
  %7574 = vdwg.mxu0
  %v7576 = vsel %vm6945, %v7458, 0
  %7578 = vmatpush.msra.mxu0 0.0
  %7579 = vmatpush.msra.mxu0 0.0
  %7580 = vmatpush.msra.mxu0 0.0
  %7581 = vmatpush.msra.mxu0 0.0
  %7582 = vmatpush.msra.mxu0 0.0
  %7583 = vmatpush.msra.mxu0 0.0
  %7584 = vmatpush.msra.mxu0 0.0
  %7585 = vmatpush.msra.mxu0 0.0
  %7586 = vmatpush.msra.mxu0 0.0
  %7587 = vmatpush.msra.mxu0 0.0
  %7588 = vmatpush.msra.mxu0 0.0
  %7589 = vmatpush.msra.mxu0 0.0
  %7590 = vmatpush.msra.mxu0 0.0
  %7591 = vmatpush.msra.mxu0 0.0
  %7592 = vmatpush.msra.mxu0 0.0
  %7593 = vmatpush.msra.mxu0 %v7576
  %7594 = vmatmul.f32.gmra.mxu0 %v6943
  %v7595 = vpop.f32.mrf.mxu0
  %v7596 = vadd.f32 0.0, %v7595
  %7597 = vdwg.mxu0
  %v7599 = vsel %vm6945, %v7481, 0
  %7601 = vmatpush.msra.mxu0 0.0
  %7602 = vmatpush.msra.mxu0 0.0
  %7603 = vmatpush.msra.mxu0 0.0
  %7604 = vmatpush.msra.mxu0 0.0
  %7605 = vmatpush.msra.mxu0 0.0
  %7606 = vmatpush.msra.mxu0 0.0
  %7607 = vmatpush.msra.mxu0 0.0
  %7608 = vmatpush.msra.mxu0 0.0
  %7609 = vmatpush.msra.mxu0 0.0
  %7610 = vmatpush.msra.mxu0 0.0
  %7611 = vmatpush.msra.mxu0 0.0
  %7612 = vmatpush.msra.mxu0 0.0
  %7613 = vmatpush.msra.mxu0 0.0
  %7614 = vmatpush.msra.mxu0 0.0
  %7615 = vmatpush.msra.mxu0 0.0
  %7616 = vmatpush.msra.mxu0 %v7599
  %7617 = vmatmul.f32.gmra.mxu0 %v6943
  %v7618 = vpop.f32.mrf.mxu0
  %v7619 = vadd.f32 0.0, %v7618
  %7620 = vdwg.mxu0
  %v7622 = vsel %vm6941, %v7504, 0
  %7624 = vmatpush.msra.mxu0 0.0
  %7625 = vmatpush.msra.mxu0 0.0
  %7626 = vmatpush.msra.mxu0 0.0
  %7627 = vmatpush.msra.mxu0 0.0
  %7628 = vmatpush.msra.mxu0 0.0
  %7629 = vmatpush.msra.mxu0 0.0
  %7630 = vmatpush.msra.mxu0 0.0
  %7631 = vmatpush.msra.mxu0 0.0
  %7632 = vmatpush.msra.mxu0 0.0
  %7633 = vmatpush.msra.mxu0 0.0
  %7634 = vmatpush.msra.mxu0 0.0
  %7635 = vmatpush.msra.mxu0 0.0
  %7636 = vmatpush.msra.mxu0 0.0
  %7637 = vmatpush.msra.mxu0 0.0
  %7638 = vmatpush.msra.mxu0 0.0
  %7639 = vmatpush.msra.mxu0 %v7088
  %7640 = vmatmul.f32.gmra.mxu0 %v7622
  %v7641 = vpop.f32.mrf.mxu0
  %v7642 = vadd.f32 0.0, %v7641
  %7643 = vdwg.mxu0
  %v7645 = vsel %vm6941, %v7527, 0
  %7647 = vmatpush.msra.mxu0 0.0
  %7648 = vmatpush.msra.mxu0 0.0
  %7649 = vmatpush.msra.mxu0 0.0
  %7650 = vmatpush.msra.mxu0 0.0
  %7651 = vmatpush.msra.mxu0 0.0
  %7652 = vmatpush.msra.mxu0 0.0
  %7653 = vmatpush.msra.mxu0 0.0
  %7654 = vmatpush.msra.mxu0 0.0
  %7655 = vmatpush.msra.mxu0 0.0
  %7656 = vmatpush.msra.mxu0 0.0
  %7657 = vmatpush.msra.mxu0 0.0
  %7658 = vmatpush.msra.mxu0 0.0
  %7659 = vmatpush.msra.mxu0 0.0
  %7660 = vmatpush.msra.mxu0 0.0
  %7661 = vmatpush.msra.mxu0 0.0
  %7662 = vmatpush.msra.mxu0 %v7088
  %7663 = vmatmul.f32.gmra.mxu0 %v7645
  %v7664 = vpop.f32.mrf.mxu0
  %v7665 = vadd.f32 0.0, %v7664
  %7666 = vdwg.mxu0
  %v7668 = vsel %vm6941, %v7550, 0
  %7670 = vmatpush.msra.mxu0 0.0
  %7671 = vmatpush.msra.mxu0 0.0
  %7672 = vmatpush.msra.mxu0 0.0
  %7673 = vmatpush.msra.mxu0 0.0
  %7674 = vmatpush.msra.mxu0 0.0
  %7675 = vmatpush.msra.mxu0 0.0
  %7676 = vmatpush.msra.mxu0 0.0
  %7677 = vmatpush.msra.mxu0 0.0
  %7678 = vmatpush.msra.mxu0 0.0
  %7679 = vmatpush.msra.mxu0 0.0
  %7680 = vmatpush.msra.mxu0 0.0
  %7681 = vmatpush.msra.mxu0 0.0
  %7682 = vmatpush.msra.mxu0 0.0
  %7683 = vmatpush.msra.mxu0 0.0
  %7684 = vmatpush.msra.mxu0 0.0
  %7685 = vmatpush.msra.mxu0 %v7088
  %7686 = vmatmul.f32.gmra.mxu0 %v7668
  %v7687 = vpop.f32.mrf.mxu0
  %v7688 = vadd.f32 0.0, %v7687
  %7689 = vdwg.mxu0
  %v7691 = vsel %vm6941, %v7573, 0
  %7693 = vmatpush.msra.mxu0 0.0
  %7694 = vmatpush.msra.mxu0 0.0
  %7695 = vmatpush.msra.mxu0 0.0
  %7696 = vmatpush.msra.mxu0 0.0
  %7697 = vmatpush.msra.mxu0 0.0
  %7698 = vmatpush.msra.mxu0 0.0
  %7699 = vmatpush.msra.mxu0 0.0
  %7700 = vmatpush.msra.mxu0 0.0
  %7701 = vmatpush.msra.mxu0 0.0
  %7702 = vmatpush.msra.mxu0 0.0
  %7703 = vmatpush.msra.mxu0 0.0
  %7704 = vmatpush.msra.mxu0 0.0
  %7705 = vmatpush.msra.mxu0 0.0
  %7706 = vmatpush.msra.mxu0 0.0
  %7707 = vmatpush.msra.mxu0 0.0
  %7708 = vmatpush.msra.mxu0 %v7088
  %7709 = vmatmul.f32.gmra.mxu0 %v7691
  %v7710 = vpop.f32.mrf.mxu0
  %v7711 = vadd.f32 0.0, %v7710
  %7712 = vdwg.mxu0
  %v7714 = vsel %vm6941, %v7596, 0
  %7716 = vmatpush.msra.mxu0 0.0
  %7717 = vmatpush.msra.mxu0 0.0
  %7718 = vmatpush.msra.mxu0 0.0
  %7719 = vmatpush.msra.mxu0 0.0
  %7720 = vmatpush.msra.mxu0 0.0
  %7721 = vmatpush.msra.mxu0 0.0
  %7722 = vmatpush.msra.mxu0 0.0
  %7723 = vmatpush.msra.mxu0 0.0
  %7724 = vmatpush.msra.mxu0 0.0
  %7725 = vmatpush.msra.mxu0 0.0
  %7726 = vmatpush.msra.mxu0 0.0
  %7727 = vmatpush.msra.mxu0 0.0
  %7728 = vmatpush.msra.mxu0 0.0
  %7729 = vmatpush.msra.mxu0 0.0
  %7730 = vmatpush.msra.mxu0 0.0
  %7731 = vmatpush.msra.mxu0 %v7088
  %7732 = vmatmul.f32.gmra.mxu0 %v7714
  %v7733 = vpop.f32.mrf.mxu0
  %v7734 = vadd.f32 0.0, %v7733
  %7735 = vdwg.mxu0
  %v7737 = vsel %vm6941, %v7619, 0
  %7739 = vmatpush.msra.mxu0 0.0
  %7740 = vmatpush.msra.mxu0 0.0
  %7741 = vmatpush.msra.mxu0 0.0
  %7742 = vmatpush.msra.mxu0 0.0
  %7743 = vmatpush.msra.mxu0 0.0
  %7744 = vmatpush.msra.mxu0 0.0
  %7745 = vmatpush.msra.mxu0 0.0
  %7746 = vmatpush.msra.mxu0 0.0
  %7747 = vmatpush.msra.mxu0 0.0
  %7748 = vmatpush.msra.mxu0 0.0
  %7749 = vmatpush.msra.mxu0 0.0
  %7750 = vmatpush.msra.mxu0 0.0
  %7751 = vmatpush.msra.mxu0 0.0
  %7752 = vmatpush.msra.mxu0 0.0
  %7753 = vmatpush.msra.mxu0 0.0
  %7754 = vmatpush.msra.mxu0 %v7088
  %7755 = vmatmul.f32.gmra.mxu0 %v7737
  %v7756 = vpop.f32.mrf.mxu0
  %v7757 = vadd.f32 0.0, %v7756
  %7758 = vdwg.mxu0
  %v7759 = vsub.f32 %v5690, %v7108
  %v7760 = vsub.f32 %v5713, %v7131
  %v7761 = vsub.f32 %v5736, %v7154
  %v7762 = vsub.f32 %v5759, %v7177
  %v7763 = vsub.f32 %v5782, %v7200
  %v7764 = vsub.f32 %v5805, %v7223
  %v7765 = vsub.f32 %v6232, %v7642
  %v7766 = vsub.f32 %v6255, %v7665
  %v7767 = vsub.f32 %v6278, %v7688
  %v7768 = vsub.f32 %v6301, %v7711
  %v7769 = vsub.f32 %v6324, %v7734
  %v7770 = vsub.f32 %v6347, %v7757
  %v7771 = vsub.f32 %v7759, %v7765
  %v7772 = vsub.f32 %v7760, %v7766
  %v7773 = vsub.f32 %v7761, %v7767
  %v7774 = vsub.f32 %v7762, %v7768
  %v7775 = vsub.f32 %v7763, %v7769
  %v7776 = vsub.f32 %v7764, %v7770
  %v7777 = vand.u32 2147483647, %v7771
  %v7778 = vand.u32 2147483647, %v7772
  %v7779 = vand.u32 2147483647, %v7773
  %v7780 = vand.u32 2147483647, %v7774
  %v7781 = vand.u32 2147483647, %v7775
  %v7782 = vand.u32 2147483647, %v7776
  %vm7783 = vcmask 27648
  %v7784 = vsel %vm7783, %v7777, 0.0
  %v7785 = vsel %vm7783, %v7778, 0.0
  %v7786 = vadd.f32 %v7784, %v7785
  %v7787 = vsel %vm7783, %v7779, 0.0
  %v7788 = vadd.f32 %v7786, %v7787
  %v7789 = vsel %vm7783, %v7780, 0.0
  %v7790 = vadd.f32 %v7788, %v7789
  %v7791 = vsel %vm7783, %v7781, 0.0
  %v7792 = vadd.f32 %v7790, %v7791
  %v7793 = vsel %vm7783, %v7782, 0.0
  %v7794 = vadd.f32 %v7792, %v7793
  %v7795 = vsel %vm7783, %v7794, 0.0
  %7796 = vadd.xlane.f32.xlu0 %v7795
  %v7797 = vpop.xlane.xlu0 %7796
  %v7798 = vrot.slane %v7797, 4
  %v7799 = vadd.f32 %v7797, %v7798
  %v7800 = vrot.slane %v7799, 2
  %v7801 = vadd.f32 %v7799, %v7800
  %v7802 = vrot.slane %v7801, 1
  %v7803 = vadd.f32 %v7801, %v7802
  %s7804 = vtos %v7803
  %v7805 = vstv %s7804
  %v7806 = vmul.f32 %v7805, 16.0
  %v7807 = vadd.f32 %v6672, %v7806
  %7808 = vst [vmem:[%s22] sm:$0xff] %v7807
  // Predicated region
  $region90: #{lap_loss.1} parent=0 // pred_check
    _
  $region91: #{lap_loss.1} parent=0 // pred_check_branch
    %7810 = sbr.rel (0) target = $region93
  $region92: #{lap_loss.1} parent=0 // pred_region
    _
  $region93: #{lap_loss.1} parent=0 // pred_fallthru
    _
  // Predicated region
  $region94: #{lap_loss.1} parent=0 // pred_check
    _
  $region95: #{lap_loss.1} parent=0 // pred_check_branch
    %7812 = sbr.rel (0) target = $region97
  $region96: #{lap_loss.1} parent=0 // pred_region
    _
  $region97: #{lap_loss.1} parent=0 // pred_fallthru
    _

</llo_original>
